<compile_context>
chip_gen: v6e
topology: v6e:2x2x1
jax: 0.10.0
libtpu: 0.0.40
codegen_flags: <defaults>
</compile_context>

<pallas_src>
import jax
import jax.numpy as jnp
from jax import lax
from jax.experimental import pallas as pl
from jax.experimental.pallas import tpu as pltpu

EPS = 1e-5


def _make_kernel(N, H, W, CW):
    NHW = N * H * W

    def bn_act(h, g, b, relu=True):
        # Training-mode BatchNorm over the N*H*W rows, biased variance,
        # centered two-pass form; normalization collapses to one fused
        # mul + add per element, with the ReLU.
        inv_n = 1.0 / NHW
        mu = jnp.sum(h, axis=0, keepdims=True) * inv_n
        d = h - mu
        var = jnp.sum(d * d, axis=0, keepdims=True) * inv_n
        scale = g * lax.rsqrt(var + EPS)
        y = d * scale + b
        return jnp.maximum(y, 0.0) if relu else y

    def kernel(x_ref, w1_ref, g1_ref, b1_ref, w2_ref, g2_ref, b2_ref,
               w3_ref, g3_ref, b3_ref, out_ref, col_ref):
        # ---- conv1 (1x1) + BN1 + ReLU ---------------------------------------
        # x_ref is read where needed (here and at the residual add) instead of
        # being hoisted, to avoid keeping a (NHW, Cin) f32 value live across
        # all three matmuls / BN passes.
        h = jnp.dot(x_ref[...].astype(jnp.bfloat16), w1_ref[...],
                    preferred_element_type=jnp.float32)       # (NHW, CW) f32
        h = bn_act(h, g1_ref[...], b1_ref[...])

        # ---- conv2 (3x3, stride 1, pad 1) via im2col -------------------------
        # bf16 im2col scratch: cast once, write the nine shifted tap copies,
        # zero only the halo strips each tap leaves untouched, then do ONE
        # K = 9*CW MXU matmul fed straight from the ref.
        hv = h.astype(jnp.bfloat16).reshape(N, H, W, CW)
        for kh in range(3):
            for kw in range(3):
                dh, dw = kh - 1, kw - 1
                tap = kh * 3 + kw
                c0, c1 = tap * CW, (tap + 1) * CW
                sh0, sh1 = max(0, dh), H + min(0, dh)
                sw0, sw1 = max(0, dw), W + min(0, dw)
                th0, th1 = max(0, -dh), H + min(0, -dh)
                tw0, tw1 = max(0, -dw), W + min(0, -dw)
                col_ref[:, th0:th1, tw0:tw1, c0:c1] = hv[:, sh0:sh1, sw0:sw1, :]
                # halo strips (never overlap the region written above)
                if dh == -1:
                    col_ref[:, 0:1, :, c0:c1] = jnp.zeros((N, 1, W, CW), jnp.bfloat16)
                if dh == 1:
                    col_ref[:, H - 1:H, :, c0:c1] = jnp.zeros((N, 1, W, CW), jnp.bfloat16)
                if dw == -1:
                    col_ref[:, :, 0:1, c0:c1] = jnp.zeros((N, H, 1, CW), jnp.bfloat16)
                if dw == 1:
                    col_ref[:, :, W - 1:W, c0:c1] = jnp.zeros((N, H, 1, CW), jnp.bfloat16)

        h = jnp.dot(col_ref[...].reshape(NHW, 9 * CW), w2_ref[...],
                    preferred_element_type=jnp.float32)       # (NHW, CW) f32
        h = bn_act(h, g2_ref[...], b2_ref[...])

        # ---- conv3 (1x1) + BN3, residual add, ReLU ---------------------------
        h = jnp.dot(h.astype(jnp.bfloat16), w3_ref[...],
                    preferred_element_type=jnp.float32)       # (NHW, Cout)
        h = bn_act(h, g3_ref[...], b3_ref[...], relu=False)
        out_ref[...] = jnp.maximum(h + x_ref[...], 0.0)       # lane-dense (128) store

    return kernel


def bottleneck_pallas(x_nhwc, params):
    """x_nhwc: (N, H, W, Cin) f32. Params use PyTorch OIHW conv weights."""
    N, H, W, Cin = x_nhwc.shape
    CW = params["w2"].shape[0]            # width
    Cout = params["w3"].shape[0]          # planes * expansion
    assert Cin == Cout, "identity path requires inplanes == planes * 4"
    NHW = N * H * W

    # NHWC is kept throughout -> reshape only (no full-tensor transposes).
    x_flat = x_nhwc.reshape(NHW, Cin)

    bf16 = jnp.bfloat16
    # Conv weights (OIHW) -> bf16 matmul matrices.
    w1m = jnp.transpose(params["w1"][:, :, 0, 0]).astype(bf16)                       # (Cin, CW)
    w2m = jnp.transpose(params["w2"], (2, 3, 1, 0)).reshape(9 * CW, CW).astype(bf16) # (9*CW, CW)
    w3m = jnp.transpose(params["w3"][:, :, 0, 0]).astype(bf16)                       # (CW, Cout)

    g1 = params["g1"].reshape(1, CW)
    b1 = params["b1"].reshape(1, CW)
    g2 = params["g2"].reshape(1, CW)
    b2 = params["b2"].reshape(1, CW)
    g3 = params["g3"].reshape(1, Cout)
    b3 = params["b3"].reshape(1, Cout)

    # Advisory cost + explicit VMEM budget (cheap insurance once shapes grow).
    matmul_flops = 2 * NHW * (Cin * CW + 9 * CW * CW + CW * Cout)
    elementwise_flops = 12 * NHW * (2 * CW + Cout)
    cost = pl.CostEstimate(
        flops=matmul_flops + elementwise_flops,
        transcendentals=2 * CW + Cout,                       # rsqrt per channel
        bytes_accessed=(4 * NHW * (Cin + Cout)               # x in, out
                        + 2 * (Cin * CW + 9 * CW * CW + CW * Cout)  # bf16 weights
                        + 4 * (4 * CW + 2 * Cout)))          # BN affine params

    vmem = pl.BlockSpec(memory_space=pltpu.MemorySpace.VMEM)
    out_flat = pl.pallas_call(
        _make_kernel(N, H, W, CW),
        out_shape=jax.ShapeDtypeStruct((NHW, Cout), jnp.float32),
        in_specs=[vmem] * 10,
        out_specs=vmem,
        scratch_shapes=[pltpu.VMEM((N, H, W, 9 * CW), jnp.bfloat16)],  # bf16 im2col buffer
        cost_estimate=cost,
        compiler_params=pltpu.CompilerParams(vmem_limit_bytes=32 * 1024 * 1024),
    )(x_flat, w1m, g1, b1, w2m, g2, b2, w3m, g3, b3)

    return out_flat.reshape(N, H, W, Cout)


def _bottleneck_ref_generic(x, params, cast_bf16):
    """Pure-JAX NHWC reference mirroring the PyTorch forward.

    cast_bf16=False: full f32 reference (HIGHEST precision convs).
    cast_bf16=True : conv operands quantized to bf16 (f32 accumulation),
                     approximating the kernel's MXU precision choice.
    """
    def conv(h, w_oihw, pad):
        w_hwio = jnp.transpose(w_oihw, (2, 3, 1, 0))
        if cast_bf16:
            h = h.astype(jnp.bfloat16)
            w_hwio = w_hwio.astype(jnp.bfloat16)
        return lax.conv_general_dilated(
            h, w_hwio, (1, 1), pad,
            dimension_numbers=("NHWC", "HWIO", "NHWC"),
            precision=lax.Precision.HIGHEST,
            preferred_element_type=jnp.float32)

    def bn(y, g, b):
        mu = y.mean(axis=(0, 1, 2), keepdims=True)
        var = ((y - mu) ** 2).mean(axis=(0, 1, 2), keepdims=True)
        return (y - mu) / jnp.sqrt(var + EPS) * g.reshape(1, 1, 1, -1) \
            + b.reshape(1, 1, 1, -1)

    relu = lambda t: jnp.maximum(t, 0.0)
    h = relu(bn(conv(x, params["w1"], "VALID"), params["g1"], params["b1"]))
    h = relu(bn(conv(h, params["w2"], ((1, 1), (1, 1))), params["g2"], params["b2"]))
    h = bn(conv(h, params["w3"], "VALID"), params["g3"], params["b3"])
    return relu(h + x)


if __name__ == "__main__":
    # Bottleneck(inplanes=128, planes=32): width=32, out channels=32*4=128
    N, H, W = 2, 16, 16
    planes = 32
    width = planes
    inplanes = planes * 4  # identity add requires Cin == Cout

    key = jax.random.PRNGKey(0)
    kx, k1, k2, k3 = jax.random.split(key, 4)
    x = jax.random.normal(kx, (N, H, W, inplanes), jnp.float32)   # NHWC layout

    params = dict(
        w1=jax.random.normal(k1, (width, inplanes, 1, 1), jnp.float32) * 0.1,
        w2=jax.random.normal(k2, (width, width, 3, 3), jnp.float32) * 0.1,
        w3=jax.random.normal(k3, (inplanes, width, 1, 1), jnp.float32) * 0.1,
        # BatchNorm affine params at their PyTorch init (gamma=1, beta=0)
        g1=jnp.ones((width,), jnp.float32), b1=jnp.zeros((width,), jnp.float32),
        g2=jnp.ones((width,), jnp.float32), b2=jnp.zeros((width,), jnp.float32),
        g3=jnp.ones((inplanes,), jnp.float32), b3=jnp.zeros((inplanes,), jnp.float32),
    )

    out = jax.block_until_ready(bottleneck_pallas(x, params))
    assert out.shape == x.shape
    assert bool(jnp.all(jnp.isfinite(out)))

    # Structural check against a bf16-operand reference.  Any tap-alignment /
    # BN / indexing bug produces O(1) errors; pure bf16 + accumulation-order
    # noise (amplified by two per-batch normalizations) measures ~7e-3, so a
    # 4e-2 tolerance separates the two regimes with margin.
    ref_bf16 = jax.block_until_ready(_bottleneck_ref_generic(x, params, cast_bf16=True))
    err_struct = float(jnp.max(jnp.abs(out - ref_bf16)))
    assert err_struct < 4e-2, f"structural mismatch vs bf16 reference: {err_struct}"

    # Precision check against the full-f32 reference with bf16-appropriate
    # tolerances (bf16 MXU operands, f32 accumulation, three BatchNorms).
    ref_f32 = jax.block_until_ready(_bottleneck_ref_generic(x, params, cast_bf16=False))
    abs_err = jnp.abs(out - ref_f32)
    max_err = float(jnp.max(abs_err))
    rms_err = float(jnp.sqrt(jnp.mean(abs_err ** 2)))
    assert max_err < 1.5e-1, f"max abs error vs f32 reference too large: {max_err}"
    assert rms_err < 4e-2, f"rms error vs f32 reference too large: {rms_err}"

    print("KERNEL_OK")
</pallas_src>

<mosaic_0001>
module attributes {stable_mosaic.version = 11 : i64} {
  func.func @kernel(%arg0: memref<512x128xf32, #tpu.memory_space<vmem>>, %arg1: memref<128x32xbf16, #tpu.memory_space<vmem>>, %arg2: memref<1x32xf32, #tpu.memory_space<vmem>>, %arg3: memref<1x32xf32, #tpu.memory_space<vmem>>, %arg4: memref<288x32xbf16, #tpu.memory_space<vmem>>, %arg5: memref<1x32xf32, #tpu.memory_space<vmem>>, %arg6: memref<1x32xf32, #tpu.memory_space<vmem>>, %arg7: memref<32x128xbf16, #tpu.memory_space<vmem>>, %arg8: memref<1x128xf32, #tpu.memory_space<vmem>>, %arg9: memref<1x128xf32, #tpu.memory_space<vmem>>, %arg10: memref<512x128xf32, #tpu.memory_space<vmem>>, %arg11: memref<2x16x16x288xbf16, #tpu.memory_space<vmem>>) attributes {dimension_semantics = [], scalar_prefetch = 0 : i64, scratch_operands = 1 : i64, tpu.core_type = #tpu.core_type<tc>} {
    %c0 = arith.constant 0 : index
    %c0_0 = arith.constant 0 : index
    %0 = vector.load %arg0[%c0, %c0_0] : memref<512x128xf32, #tpu.memory_space<vmem>>, vector<512x128xf32>
    %1 = arith.truncf %0 : vector<512x128xf32> to vector<512x128xbf16>
    %c0_1 = arith.constant 0 : index
    %c0_2 = arith.constant 0 : index
    %2 = vector.load %arg1[%c0_1, %c0_2] : memref<128x32xbf16, #tpu.memory_space<vmem>>, vector<128x32xbf16>
    %cst = arith.constant dense<0.000000e+00> : vector<512x32xf32>
    %3 = tpu.matmul %1, %2, %cst {dimension_numbers = #tpu.dot_dimension_numbers<[1], [0], [0], [1], [0, 0, 1, 1], [], []>} : vector<512x128xbf16>, vector<128x32xbf16>, vector<512x32xf32> -> vector<512x32xf32>
    %c0_3 = arith.constant 0 : index
    %c0_4 = arith.constant 0 : index
    %4 = vector.load %arg2[%c0_3, %c0_4] : memref<1x32xf32, #tpu.memory_space<vmem>>, vector<1x32xf32>
    %c0_5 = arith.constant 0 : index
    %c0_6 = arith.constant 0 : index
    %5 = vector.load %arg3[%c0_5, %c0_6] : memref<1x32xf32, #tpu.memory_space<vmem>>, vector<1x32xf32>
    %cst_7 = arith.constant dense<0.000000e+00> : vector<32xf32>
    %6 = vector.multi_reduction <add>, %3, %cst_7 [0] : vector<512x32xf32> to vector<32xf32>
    %7 = vector.shape_cast %6 : vector<32xf32> to vector<1x32xf32>
    %cst_8 = arith.constant 0.001953125 : f32
    %8 = vector.broadcast %cst_8 : f32 to vector<1x32xf32>
    %9 = arith.mulf %7, %8 : vector<1x32xf32>
    %10 = vector.broadcast %9 : vector<1x32xf32> to vector<512x32xf32>
    %11 = arith.subf %3, %10 : vector<512x32xf32>
    %12 = arith.mulf %11, %11 : vector<512x32xf32>
    %cst_9 = arith.constant dense<0.000000e+00> : vector<32xf32>
    %13 = vector.multi_reduction <add>, %12, %cst_9 [0] : vector<512x32xf32> to vector<32xf32>
    %14 = vector.shape_cast %13 : vector<32xf32> to vector<1x32xf32>
    %cst_10 = arith.constant 0.001953125 : f32
    %15 = vector.broadcast %cst_10 : f32 to vector<1x32xf32>
    %16 = arith.mulf %14, %15 : vector<1x32xf32>
    %cst_11 = arith.constant 9.99999974E-6 : f32
    %17 = vector.broadcast %cst_11 : f32 to vector<1x32xf32>
    %18 = arith.addf %16, %17 : vector<1x32xf32>
    %19 = math.rsqrt %18 : vector<1x32xf32>
    %20 = arith.mulf %4, %19 : vector<1x32xf32>
    %21 = vector.broadcast %20 : vector<1x32xf32> to vector<512x32xf32>
    %22 = arith.mulf %11, %21 : vector<512x32xf32>
    %23 = vector.broadcast %5 : vector<1x32xf32> to vector<512x32xf32>
    %24 = arith.addf %22, %23 : vector<512x32xf32>
    %cst_12 = arith.constant 0.000000e+00 : f32
    %25 = vector.broadcast %cst_12 : f32 to vector<512x32xf32>
    %26 = arith.maximumf %24, %25 : vector<512x32xf32>
    %27 = arith.truncf %26 : vector<512x32xf32> to vector<512x32xbf16>
    %28 = vector.shape_cast %27 : vector<512x32xbf16> to vector<2x16x16x32xbf16>
    %29 = vector.extract_strided_slice %28 {offsets = [0, 0, 0, 0], sizes = [2, 15, 15, 32], strides = [1, 1, 1, 1]} : vector<2x16x16x32xbf16> to vector<2x15x15x32xbf16>
    %c0_13 = arith.constant 0 : index
    %c1 = arith.constant 1 : index
    %c1_14 = arith.constant 1 : index
    %c0_15 = arith.constant 0 : index
    %30 = vector.load %arg11[%c0_13, %c1, %c1_14, %c0_15] : memref<2x16x16x288xbf16, #tpu.memory_space<vmem>>, vector<2x15x15x32xbf16>
    tpu.vector_store %arg11[%c0_13, %c1, %c1_14, %c0_15], %29 {strides = array<i32>} : memref<2x16x16x288xbf16, #tpu.memory_space<vmem>>, vector<2x15x15x32xbf16>,
    %cst_16 = arith.constant 0.000000e+00 : bf16
    %31 = vector.broadcast %cst_16 : bf16 to vector<2x1x16x32xbf16>
    %c0_17 = arith.constant 0 : index
    %c0_18 = arith.constant 0 : index
    %c0_19 = arith.constant 0 : index
    %c0_20 = arith.constant 0 : index
    %32 = vector.load %arg11[%c0_17, %c0_18, %c0_19, %c0_20] : memref<2x16x16x288xbf16, #tpu.memory_space<vmem>>, vector<2x1x16x32xbf16>
    tpu.vector_store %arg11[%c0_17, %c0_18, %c0_19, %c0_20], %31 {strides = array<i32>} : memref<2x16x16x288xbf16, #tpu.memory_space<vmem>>, vector<2x1x16x32xbf16>,
    %cst_21 = arith.constant 0.000000e+00 : bf16
    %33 = vector.broadcast %cst_21 : bf16 to vector<2x16x1x32xbf16>
    %c0_22 = arith.constant 0 : index
    %c0_23 = arith.constant 0 : index
    %c0_24 = arith.constant 0 : index
    %c0_25 = arith.constant 0 : index
    %34 = vector.load %arg11[%c0_22, %c0_23, %c0_24, %c0_25] : memref<2x16x16x288xbf16, #tpu.memory_space<vmem>>, vector<2x16x1x32xbf16>
    tpu.vector_store %arg11[%c0_22, %c0_23, %c0_24, %c0_25], %33 {strides = array<i32>} : memref<2x16x16x288xbf16, #tpu.memory_space<vmem>>, vector<2x16x1x32xbf16>,
    %35 = vector.extract_strided_slice %28 {offsets = [0, 0, 0, 0], sizes = [2, 15, 16, 32], strides = [1, 1, 1, 1]} : vector<2x16x16x32xbf16> to vector<2x15x16x32xbf16>
    %c0_26 = arith.constant 0 : index
    %c1_27 = arith.constant 1 : index
    %c0_28 = arith.constant 0 : index
    %c32 = arith.constant 32 : index
    %36 = vector.load %arg11[%c0_26, %c1_27, %c0_28, %c32] : memref<2x16x16x288xbf16, #tpu.memory_space<vmem>>, vector<2x15x16x32xbf16>
    tpu.vector_store %arg11[%c0_26, %c1_27, %c0_28, %c32], %35 {strides = array<i32>} : memref<2x16x16x288xbf16, #tpu.memory_space<vmem>>, vector<2x15x16x32xbf16>,
    %cst_29 = arith.constant 0.000000e+00 : bf16
    %37 = vector.broadcast %cst_29 : bf16 to vector<2x1x16x32xbf16>
    %c0_30 = arith.constant 0 : index
    %c0_31 = arith.constant 0 : index
    %c0_32 = arith.constant 0 : index
    %c32_33 = arith.constant 32 : index
    %38 = vector.load %arg11[%c0_30, %c0_31, %c0_32, %c32_33] : memref<2x16x16x288xbf16, #tpu.memory_space<vmem>>, vector<2x1x16x32xbf16>
    tpu.vector_store %arg11[%c0_30, %c0_31, %c0_32, %c32_33], %37 {strides = array<i32>} : memref<2x16x16x288xbf16, #tpu.memory_space<vmem>>, vector<2x1x16x32xbf16>,
    %39 = vector.extract_strided_slice %28 {offsets = [0, 0, 1, 0], sizes = [2, 15, 15, 32], strides = [1, 1, 1, 1]} : vector<2x16x16x32xbf16> to vector<2x15x15x32xbf16>
    %c0_34 = arith.constant 0 : index
    %c1_35 = arith.constant 1 : index
    %c0_36 = arith.constant 0 : index
    %c64 = arith.constant 64 : index
    %40 = vector.load %arg11[%c0_34, %c1_35, %c0_36, %c64] : memref<2x16x16x288xbf16, #tpu.memory_space<vmem>>, vector<2x15x15x32xbf16>
    tpu.vector_store %arg11[%c0_34, %c1_35, %c0_36, %c64], %39 {strides = array<i32>} : memref<2x16x16x288xbf16, #tpu.memory_space<vmem>>, vector<2x15x15x32xbf16>,
    %cst_37 = arith.constant 0.000000e+00 : bf16
    %41 = vector.broadcast %cst_37 : bf16 to vector<2x1x16x32xbf16>
    %c0_38 = arith.constant 0 : index
    %c0_39 = arith.constant 0 : index
    %c0_40 = arith.constant 0 : index
    %c64_41 = arith.constant 64 : index
    %42 = vector.load %arg11[%c0_38, %c0_39, %c0_40, %c64_41] : memref<2x16x16x288xbf16, #tpu.memory_space<vmem>>, vector<2x1x16x32xbf16>
    tpu.vector_store %arg11[%c0_38, %c0_39, %c0_40, %c64_41], %41 {strides = array<i32>} : memref<2x16x16x288xbf16, #tpu.memory_space<vmem>>, vector<2x1x16x32xbf16>,
    %cst_42 = arith.constant 0.000000e+00 : bf16
    %43 = vector.broadcast %cst_42 : bf16 to vector<2x16x1x32xbf16>
    %c0_43 = arith.constant 0 : index
    %c0_44 = arith.constant 0 : index
    %c15 = arith.constant 15 : index
    %c64_45 = arith.constant 64 : index
    %44 = vector.load %arg11[%c0_43, %c0_44, %c15, %c64_45] : memref<2x16x16x288xbf16, #tpu.memory_space<vmem>>, vector<2x16x1x32xbf16>
    tpu.vector_store %arg11[%c0_43, %c0_44, %c15, %c64_45], %43 {strides = array<i32>} : memref<2x16x16x288xbf16, #tpu.memory_space<vmem>>, vector<2x16x1x32xbf16>,
    %45 = vector.extract_strided_slice %28 {offsets = [0, 0, 0, 0], sizes = [2, 16, 15, 32], strides = [1, 1, 1, 1]} : vector<2x16x16x32xbf16> to vector<2x16x15x32xbf16>
    %c0_46 = arith.constant 0 : index
    %c0_47 = arith.constant 0 : index
    %c1_48 = arith.constant 1 : index
    %c96 = arith.constant 96 : index
    %46 = vector.load %arg11[%c0_46, %c0_47, %c1_48, %c96] : memref<2x16x16x288xbf16, #tpu.memory_space<vmem>>, vector<2x16x15x32xbf16>
    tpu.vector_store %arg11[%c0_46, %c0_47, %c1_48, %c96], %45 {strides = array<i32>} : memref<2x16x16x288xbf16, #tpu.memory_space<vmem>>, vector<2x16x15x32xbf16>,
    %cst_49 = arith.constant 0.000000e+00 : bf16
    %47 = vector.broadcast %cst_49 : bf16 to vector<2x16x1x32xbf16>
    %c0_50 = arith.constant 0 : index
    %c0_51 = arith.constant 0 : index
    %c0_52 = arith.constant 0 : index
    %c96_53 = arith.constant 96 : index
    %48 = vector.load %arg11[%c0_50, %c0_51, %c0_52, %c96_53] : memref<2x16x16x288xbf16, #tpu.memory_space<vmem>>, vector<2x16x1x32xbf16>
    tpu.vector_store %arg11[%c0_50, %c0_51, %c0_52, %c96_53], %47 {strides = array<i32>} : memref<2x16x16x288xbf16, #tpu.memory_space<vmem>>, vector<2x16x1x32xbf16>,
    %c0_54 = arith.constant 0 : index
    %c0_55 = arith.constant 0 : index
    %c0_56 = arith.constant 0 : index
    %c128 = arith.constant 128 : index
    %49 = vector.load %arg11[%c0_54, %c0_55, %c0_56, %c128] : memref<2x16x16x288xbf16, #tpu.memory_space<vmem>>, vector<2x16x16x32xbf16>
    tpu.vector_store %arg11[%c0_54, %c0_55, %c0_56, %c128], %28 {strides = array<i32>} : memref<2x16x16x288xbf16, #tpu.memory_space<vmem>>, vector<2x16x16x32xbf16>,
    %50 = vector.extract_strided_slice %28 {offsets = [0, 0, 1, 0], sizes = [2, 16, 15, 32], strides = [1, 1, 1, 1]} : vector<2x16x16x32xbf16> to vector<2x16x15x32xbf16>
    %c0_57 = arith.constant 0 : index
    %c0_58 = arith.constant 0 : index
    %c0_59 = arith.constant 0 : index
    %c160 = arith.constant 160 : index
    %51 = vector.load %arg11[%c0_57, %c0_58, %c0_59, %c160] : memref<2x16x16x288xbf16, #tpu.memory_space<vmem>>, vector<2x16x15x32xbf16>
    tpu.vector_store %arg11[%c0_57, %c0_58, %c0_59, %c160], %50 {strides = array<i32>} : memref<2x16x16x288xbf16, #tpu.memory_space<vmem>>, vector<2x16x15x32xbf16>,
    %cst_60 = arith.constant 0.000000e+00 : bf16
    %52 = vector.broadcast %cst_60 : bf16 to vector<2x16x1x32xbf16>
    %c0_61 = arith.constant 0 : index
    %c0_62 = arith.constant 0 : index
    %c15_63 = arith.constant 15 : index
    %c160_64 = arith.constant 160 : index
    %53 = vector.load %arg11[%c0_61, %c0_62, %c15_63, %c160_64] : memref<2x16x16x288xbf16, #tpu.memory_space<vmem>>, vector<2x16x1x32xbf16>
    tpu.vector_store %arg11[%c0_61, %c0_62, %c15_63, %c160_64], %52 {strides = array<i32>} : memref<2x16x16x288xbf16, #tpu.memory_space<vmem>>, vector<2x16x1x32xbf16>,
    %54 = vector.extract_strided_slice %28 {offsets = [0, 1, 0, 0], sizes = [2, 15, 15, 32], strides = [1, 1, 1, 1]} : vector<2x16x16x32xbf16> to vector<2x15x15x32xbf16>
    %c0_65 = arith.constant 0 : index
    %c0_66 = arith.constant 0 : index
    %c1_67 = arith.constant 1 : index
    %c192 = arith.constant 192 : index
    %55 = vector.load %arg11[%c0_65, %c0_66, %c1_67, %c192] : memref<2x16x16x288xbf16, #tpu.memory_space<vmem>>, vector<2x15x15x32xbf16>
    tpu.vector_store %arg11[%c0_65, %c0_66, %c1_67, %c192], %54 {strides = array<i32>} : memref<2x16x16x288xbf16, #tpu.memory_space<vmem>>, vector<2x15x15x32xbf16>,
    %cst_68 = arith.constant 0.000000e+00 : bf16
    %56 = vector.broadcast %cst_68 : bf16 to vector<2x1x16x32xbf16>
    %c0_69 = arith.constant 0 : index
    %c15_70 = arith.constant 15 : index
    %c0_71 = arith.constant 0 : index
    %c192_72 = arith.constant 192 : index
    %57 = vector.load %arg11[%c0_69, %c15_70, %c0_71, %c192_72] : memref<2x16x16x288xbf16, #tpu.memory_space<vmem>>, vector<2x1x16x32xbf16>
    tpu.vector_store %arg11[%c0_69, %c15_70, %c0_71, %c192_72], %56 {strides = array<i32>} : memref<2x16x16x288xbf16, #tpu.memory_space<vmem>>, vector<2x1x16x32xbf16>,
    %cst_73 = arith.constant 0.000000e+00 : bf16
    %58 = vector.broadcast %cst_73 : bf16 to vector<2x16x1x32xbf16>
    %c0_74 = arith.constant 0 : index
    %c0_75 = arith.constant 0 : index
    %c0_76 = arith.constant 0 : index
    %c192_77 = arith.constant 192 : index
    %59 = vector.load %arg11[%c0_74, %c0_75, %c0_76, %c192_77] : memref<2x16x16x288xbf16, #tpu.memory_space<vmem>>, vector<2x16x1x32xbf16>
    tpu.vector_store %arg11[%c0_74, %c0_75, %c0_76, %c192_77], %58 {strides = array<i32>} : memref<2x16x16x288xbf16, #tpu.memory_space<vmem>>, vector<2x16x1x32xbf16>,
    %60 = vector.extract_strided_slice %28 {offsets = [0, 1, 0, 0], sizes = [2, 15, 16, 32], strides = [1, 1, 1, 1]} : vector<2x16x16x32xbf16> to vector<2x15x16x32xbf16>
    %c0_78 = arith.constant 0 : index
    %c0_79 = arith.constant 0 : index
    %c0_80 = arith.constant 0 : index
    %c224 = arith.constant 224 : index
    %61 = vector.load %arg11[%c0_78, %c0_79, %c0_80, %c224] : memref<2x16x16x288xbf16, #tpu.memory_space<vmem>>, vector<2x15x16x32xbf16>
    tpu.vector_store %arg11[%c0_78, %c0_79, %c0_80, %c224], %60 {strides = array<i32>} : memref<2x16x16x288xbf16, #tpu.memory_space<vmem>>, vector<2x15x16x32xbf16>,
    %cst_81 = arith.constant 0.000000e+00 : bf16
    %62 = vector.broadcast %cst_81 : bf16 to vector<2x1x16x32xbf16>
    %c0_82 = arith.constant 0 : index
    %c15_83 = arith.constant 15 : index
    %c0_84 = arith.constant 0 : index
    %c224_85 = arith.constant 224 : index
    %63 = vector.load %arg11[%c0_82, %c15_83, %c0_84, %c224_85] : memref<2x16x16x288xbf16, #tpu.memory_space<vmem>>, vector<2x1x16x32xbf16>
    tpu.vector_store %arg11[%c0_82, %c15_83, %c0_84, %c224_85], %62 {strides = array<i32>} : memref<2x16x16x288xbf16, #tpu.memory_space<vmem>>, vector<2x1x16x32xbf16>,
    %64 = vector.extract_strided_slice %28 {offsets = [0, 1, 1, 0], sizes = [2, 15, 15, 32], strides = [1, 1, 1, 1]} : vector<2x16x16x32xbf16> to vector<2x15x15x32xbf16>
    %c0_86 = arith.constant 0 : index
    %c0_87 = arith.constant 0 : index
    %c0_88 = arith.constant 0 : index
    %c256 = arith.constant 256 : index
    %65 = vector.load %arg11[%c0_86, %c0_87, %c0_88, %c256] : memref<2x16x16x288xbf16, #tpu.memory_space<vmem>>, vector<2x15x15x32xbf16>
    tpu.vector_store %arg11[%c0_86, %c0_87, %c0_88, %c256], %64 {strides = array<i32>} : memref<2x16x16x288xbf16, #tpu.memory_space<vmem>>, vector<2x15x15x32xbf16>,
    %cst_89 = arith.constant 0.000000e+00 : bf16
    %66 = vector.broadcast %cst_89 : bf16 to vector<2x1x16x32xbf16>
    %c0_90 = arith.constant 0 : index
    %c15_91 = arith.constant 15 : index
    %c0_92 = arith.constant 0 : index
    %c256_93 = arith.constant 256 : index
    %67 = vector.load %arg11[%c0_90, %c15_91, %c0_92, %c256_93] : memref<2x16x16x288xbf16, #tpu.memory_space<vmem>>, vector<2x1x16x32xbf16>
    tpu.vector_store %arg11[%c0_90, %c15_91, %c0_92, %c256_93], %66 {strides = array<i32>} : memref<2x16x16x288xbf16, #tpu.memory_space<vmem>>, vector<2x1x16x32xbf16>,
    %cst_94 = arith.constant 0.000000e+00 : bf16
    %68 = vector.broadcast %cst_94 : bf16 to vector<2x16x1x32xbf16>
    %c0_95 = arith.constant 0 : index
    %c0_96 = arith.constant 0 : index
    %c15_97 = arith.constant 15 : index
    %c256_98 = arith.constant 256 : index
    %69 = vector.load %arg11[%c0_95, %c0_96, %c15_97, %c256_98] : memref<2x16x16x288xbf16, #tpu.memory_space<vmem>>, vector<2x16x1x32xbf16>
    tpu.vector_store %arg11[%c0_95, %c0_96, %c15_97, %c256_98], %68 {strides = array<i32>} : memref<2x16x16x288xbf16, #tpu.memory_space<vmem>>, vector<2x16x1x32xbf16>,
    %c0_99 = arith.constant 0 : index
    %c0_100 = arith.constant 0 : index
    %c0_101 = arith.constant 0 : index
    %c0_102 = arith.constant 0 : index
    %70 = vector.load %arg11[%c0_99, %c0_100, %c0_101, %c0_102] : memref<2x16x16x288xbf16, #tpu.memory_space<vmem>>, vector<2x16x16x288xbf16>
    %71 = vector.shape_cast %70 : vector<2x16x16x288xbf16> to vector<512x288xbf16>
    %c0_103 = arith.constant 0 : index
    %c0_104 = arith.constant 0 : index
    %72 = vector.load %arg4[%c0_103, %c0_104] : memref<288x32xbf16, #tpu.memory_space<vmem>>, vector<288x32xbf16>
    %cst_105 = arith.constant dense<0.000000e+00> : vector<512x32xf32>
    %73 = tpu.matmul %71, %72, %cst_105 {dimension_numbers = #tpu.dot_dimension_numbers<[1], [0], [0], [1], [0, 0, 1, 1], [], []>} : vector<512x288xbf16>, vector<288x32xbf16>, vector<512x32xf32> -> vector<512x32xf32>
    %c0_106 = arith.constant 0 : index
    %c0_107 = arith.constant 0 : index
    %74 = vector.load %arg5[%c0_106, %c0_107] : memref<1x32xf32, #tpu.memory_space<vmem>>, vector<1x32xf32>
    %c0_108 = arith.constant 0 : index
    %c0_109 = arith.constant 0 : index
    %75 = vector.load %arg6[%c0_108, %c0_109] : memref<1x32xf32, #tpu.memory_space<vmem>>, vector<1x32xf32>
    %cst_110 = arith.constant dense<0.000000e+00> : vector<32xf32>
    %76 = vector.multi_reduction <add>, %73, %cst_110 [0] : vector<512x32xf32> to vector<32xf32>
    %77 = vector.shape_cast %76 : vector<32xf32> to vector<1x32xf32>
    %cst_111 = arith.constant 0.001953125 : f32
    %78 = vector.broadcast %cst_111 : f32 to vector<1x32xf32>
    %79 = arith.mulf %77, %78 : vector<1x32xf32>
    %80 = vector.broadcast %79 : vector<1x32xf32> to vector<512x32xf32>
    %81 = arith.subf %73, %80 : vector<512x32xf32>
    %82 = arith.mulf %81, %81 : vector<512x32xf32>
    %cst_112 = arith.constant dense<0.000000e+00> : vector<32xf32>
    %83 = vector.multi_reduction <add>, %82, %cst_112 [0] : vector<512x32xf32> to vector<32xf32>
    %84 = vector.shape_cast %83 : vector<32xf32> to vector<1x32xf32>
    %cst_113 = arith.constant 0.001953125 : f32
    %85 = vector.broadcast %cst_113 : f32 to vector<1x32xf32>
    %86 = arith.mulf %84, %85 : vector<1x32xf32>
    %cst_114 = arith.constant 9.99999974E-6 : f32
    %87 = vector.broadcast %cst_114 : f32 to vector<1x32xf32>
    %88 = arith.addf %86, %87 : vector<1x32xf32>
    %89 = math.rsqrt %88 : vector<1x32xf32>
    %90 = arith.mulf %74, %89 : vector<1x32xf32>
    %91 = vector.broadcast %90 : vector<1x32xf32> to vector<512x32xf32>
    %92 = arith.mulf %81, %91 : vector<512x32xf32>
    %93 = vector.broadcast %75 : vector<1x32xf32> to vector<512x32xf32>
    %94 = arith.addf %92, %93 : vector<512x32xf32>
    %cst_115 = arith.constant 0.000000e+00 : f32
    %95 = vector.broadcast %cst_115 : f32 to vector<512x32xf32>
    %96 = arith.maximumf %94, %95 : vector<512x32xf32>
    %97 = arith.truncf %96 : vector<512x32xf32> to vector<512x32xbf16>
    %c0_116 = arith.constant 0 : index
    %c0_117 = arith.constant 0 : index
    %98 = vector.load %arg7[%c0_116, %c0_117] : memref<32x128xbf16, #tpu.memory_space<vmem>>, vector<32x128xbf16>
    %cst_118 = arith.constant dense<0.000000e+00> : vector<512x128xf32>
    %99 = tpu.matmul %97, %98, %cst_118 {dimension_numbers = #tpu.dot_dimension_numbers<[1], [0], [0], [1], [0, 0, 1, 1], [], []>} : vector<512x32xbf16>, vector<32x128xbf16>, vector<512x128xf32> -> vector<512x128xf32>
    %c0_119 = arith.constant 0 : index
    %c0_120 = arith.constant 0 : index
    %100 = vector.load %arg8[%c0_119, %c0_120] : memref<1x128xf32, #tpu.memory_space<vmem>>, vector<1x128xf32>
    %c0_121 = arith.constant 0 : index
    %c0_122 = arith.constant 0 : index
    %101 = vector.load %arg9[%c0_121, %c0_122] : memref<1x128xf32, #tpu.memory_space<vmem>>, vector<1x128xf32>
    %cst_123 = arith.constant dense<0.000000e+00> : vector<128xf32>
    %102 = vector.multi_reduction <add>, %99, %cst_123 [0] : vector<512x128xf32> to vector<128xf32>
    %103 = vector.shape_cast %102 : vector<128xf32> to vector<1x128xf32>
    %cst_124 = arith.constant 0.001953125 : f32
    %104 = vector.broadcast %cst_124 : f32 to vector<1x128xf32>
    %105 = arith.mulf %103, %104 : vector<1x128xf32>
    %106 = vector.broadcast %105 : vector<1x128xf32> to vector<512x128xf32>
    %107 = arith.subf %99, %106 : vector<512x128xf32>
    %108 = arith.mulf %107, %107 : vector<512x128xf32>
    %cst_125 = arith.constant dense<0.000000e+00> : vector<128xf32>
    %109 = vector.multi_reduction <add>, %108, %cst_125 [0] : vector<512x128xf32> to vector<128xf32>
    %110 = vector.shape_cast %109 : vector<128xf32> to vector<1x128xf32>
    %cst_126 = arith.constant 0.001953125 : f32
    %111 = vector.broadcast %cst_126 : f32 to vector<1x128xf32>
    %112 = arith.mulf %110, %111 : vector<1x128xf32>
    %cst_127 = arith.constant 9.99999974E-6 : f32
    %113 = vector.broadcast %cst_127 : f32 to vector<1x128xf32>
    %114 = arith.addf %112, %113 : vector<1x128xf32>
    %115 = math.rsqrt %114 : vector<1x128xf32>
    %116 = arith.mulf %100, %115 : vector<1x128xf32>
    %117 = vector.broadcast %116 : vector<1x128xf32> to vector<512x128xf32>
    %118 = arith.mulf %107, %117 : vector<512x128xf32>
    %119 = vector.broadcast %101 : vector<1x128xf32> to vector<512x128xf32>
    %120 = arith.addf %118, %119 : vector<512x128xf32>
    %c0_128 = arith.constant 0 : index
    %c0_129 = arith.constant 0 : index
    %121 = vector.load %arg0[%c0_128, %c0_129] : memref<512x128xf32, #tpu.memory_space<vmem>>, vector<512x128xf32>
    %122 = arith.addf %120, %121 : vector<512x128xf32>
    %cst_130 = arith.constant 0.000000e+00 : f32
    %123 = vector.broadcast %cst_130 : f32 to vector<512x128xf32>
    %124 = arith.maximumf %122, %123 : vector<512x128xf32>
    %c0_131 = arith.constant 0 : index
    %c0_132 = arith.constant 0 : index
    %125 = vector.load %arg10[%c0_131, %c0_132] : memref<512x128xf32, #tpu.memory_space<vmem>>, vector<512x128xf32>
    tpu.vector_store %arg10[%c0_131, %c0_132], %124 {strides = array<i32>} : memref<512x128xf32, #tpu.memory_space<vmem>>, vector<512x128xf32>,
    return
  }
}

</mosaic_0001>

<llo_original>
// kernel: tpu_custom_call.1
$region0: #{tpu_custom_call.1}
  #allocation0 [shape = 'u32[]', space=smem, size = 0x4, offset = 0x4, fixed_abs, tag = 'smem constant byte address 0x4 - core index']
  #allocation1 [shape = 'u32[144,128]{1,0:T(1,128)}', space=vmem, size = 0x12000, scoped, tag = 'internal scratch']
  #allocation2 [shape = 'bf16[2,16,16,288]{3,2,1,0:T(8,128)(2,1)}', space=vmem, size = 0x60000, scoped, tag = 'scratch operand']
  %s0 = inlined_call_operand.hbm [shape: f32[512,128], index: 0, kind: input, shape index: {}]
  %s1 = inlined_call_operand.vmem [shape: bf16[128,32], index: 1, kind: input, shape index: {}]
  %s2 = inlined_call_operand.vmem [shape: f32[1,32], index: 2, kind: input, shape index: {}]
  %s3 = inlined_call_operand.vmem [shape: f32[1,32], index: 3, kind: input, shape index: {}]
  %s4 = inlined_call_operand.vmem [shape: bf16[288,32], index: 4, kind: input, shape index: {}]
  %s5 = inlined_call_operand.vmem [shape: f32[1,32], index: 5, kind: input, shape index: {}]
  %s6 = inlined_call_operand.vmem [shape: f32[1,32], index: 6, kind: input, shape index: {}]
  %s7 = inlined_call_operand.vmem [shape: bf16[32,128], index: 7, kind: input, shape index: {}]
  %s8 = inlined_call_operand.vmem [shape: f32[1,128], index: 8, kind: input, shape index: {}]
  %s9 = inlined_call_operand.vmem [shape: f32[1,128], index: 9, kind: input, shape index: {}]
  %s10 = inlined_call_operand.hbm [shape: f32[512,128], index: 10, kind: output, shape index: {}]
  %s11 = sld [smem:[#allocation0]]
  $region54: #{tpu_custom_call.1} parent=0
    _
  %s13 = ssub.s32 1, %s11
  %s14 = scalar_select 0, %s13, %s11
  $region1: #{tpu_custom_call.1} parent=0
    #allocation3 [shape = 'u8[262144]{0}', space=vmem, size = 0x40000, scoped, tag = 'input window, operand 0, single buffered']
    #allocation4 [shape = 's32[1]{0}', space=sflag, size = 0x4, scoped, tag = 'scoped memory for tpu_custom_call.1']
    #allocation5 [shape = 's32[1]{0}', space=sflag, size = 0x4, scoped, tag = 'scoped memory for tpu_custom_call.1']
    #allocation6 [shape = 'u8[262144]{0}', space=vmem, size = 0x40000, scoped, tag = 'output window, operand 0, single buffered']
    %15 = vsyncpa [#allocation4], 0
    %16 = vsyncpa [#allocation5], 0
    // Predicated region
    $region2: #{tpu_custom_call.1} parent=1 // pred_check
      _
    $region3: #{tpu_custom_call.1} parent=1 // pred_check_branch
      %18 = sbr.rel (0) target = $region5
    $region4: #{tpu_custom_call.1} parent=1 // pred_region
      %s20 = ssub.s32 8192, 8192
      %21 = vsyncadd [#allocation4], %s20
      %s22 = sshll.u32 [#allocation3], 4
      %s23 = int_to_ptr.vmem [resolvable:$true] %s22
      %28 = dma.hbm_to_vmem [thread:$0]  %s0, 8192, %s23, [#allocation4], 128, 128, 8
    $region5: #{tpu_custom_call.1} parent=1 // pred_fallthru
      _
    // Predicated region
    $region6: #{tpu_custom_call.1} parent=1 // pred_check
      _
    $region7: #{tpu_custom_call.1} parent=1 // pred_check_branch
      %30 = sbr.rel (0) target = $region9
    $region8: #{tpu_custom_call.1} parent=1 // pred_region
      _
    $region9: #{tpu_custom_call.1} parent=1 // pred_fallthru
      _
    // Predicated region
    $region10: #{tpu_custom_call.1} parent=1 // pred_check
      _
    $region11: #{tpu_custom_call.1} parent=1 // pred_check_branch
      %32 = sbr.rel (0) target = $region13
    $region12: #{tpu_custom_call.1} parent=1 // pred_region
      _
    $region13: #{tpu_custom_call.1} parent=1 // pred_fallthru
      _
    // Predicated region
    $region14: #{tpu_custom_call.1} parent=1 // pred_check
      _
    $region15: #{tpu_custom_call.1} parent=1 // pred_check_branch
      %34 = sbr.rel (0) target = $region17
    $region16: #{tpu_custom_call.1} parent=1 // pred_region
      _
    $region17: #{tpu_custom_call.1} parent=1 // pred_fallthru
      _
    // Predicated region
    $region18: #{tpu_custom_call.1} parent=1 // pred_check
      _
    $region19: #{tpu_custom_call.1} parent=1 // pred_check_branch
      %36 = sbr.rel (0) target = $region21
    $region20: #{tpu_custom_call.1} parent=1 // pred_region
      _
    $region21: #{tpu_custom_call.1} parent=1 // pred_fallthru
      _
    // Predicated region
    $region22: #{tpu_custom_call.1} parent=1 // pred_check
      _
    $region23: #{tpu_custom_call.1} parent=1 // pred_check_branch
      %38 = sbr.rel (0) target = $region25
    $region24: #{tpu_custom_call.1} parent=1 // pred_region
      _
    $region25: #{tpu_custom_call.1} parent=1 // pred_fallthru
      _
    // Predicated region
    $region26: #{tpu_custom_call.1} parent=1 // pred_check
      _
    $region27: #{tpu_custom_call.1} parent=1 // pred_check_branch
      %40 = sbr.rel (0) target = $region29
    $region28: #{tpu_custom_call.1} parent=1 // pred_region
      _
    $region29: #{tpu_custom_call.1} parent=1 // pred_fallthru
      _
    // Predicated region
    $region30: #{tpu_custom_call.1} parent=1 // pred_check
      _
    $region31: #{tpu_custom_call.1} parent=1 // pred_check_branch
      %42 = sbr.rel (0) target = $region33
    $region32: #{tpu_custom_call.1} parent=1 // pred_region
      _
    $region33: #{tpu_custom_call.1} parent=1 // pred_fallthru
      _
    // Predicated region
    $region34: #{tpu_custom_call.1} parent=1 // pred_check
      _
    $region35: #{tpu_custom_call.1} parent=1 // pred_check_branch
      %44 = sbr.rel (0) target = $region37
    $region36: #{tpu_custom_call.1} parent=1 // pred_region
      _
    $region37: #{tpu_custom_call.1} parent=1 // pred_fallthru
      _
    // Predicated region
    $region38: #{tpu_custom_call.1} parent=1 // pred_check
      _
    $region39: #{tpu_custom_call.1} parent=1 // pred_check_branch
      %46 = sbr.rel (0) target = $region41
    $region40: #{tpu_custom_call.1} parent=1 // pred_region
      _
    $region41: #{tpu_custom_call.1} parent=1 // pred_fallthru
      _
    // Predicated region
    $region42: #{tpu_custom_call.1} parent=1 // pred_check
      _
    $region43: #{tpu_custom_call.1} parent=1 // pred_check_branch
      %48 = sbr.rel (0) target = $region45
    $region44: #{tpu_custom_call.1} parent=1 // pred_region
      %49 = dma.done [#allocation4], 8192
    $region45: #{tpu_custom_call.1} parent=1 // pred_fallthru
      _
    %v51 = vld [vmem:[#allocation3] sm:$0xff]
    %v52 = vld [vmem:[#allocation3 + $0x8] sm:$0xff]
    %v53 = vld [vmem:[#allocation3 + $0x10] sm:$0xff]
    %v54 = vld [vmem:[#allocation3 + $0x18] sm:$0xff]
    %v55 = vld [vmem:[#allocation3 + $0x20] sm:$0xff]
    %v56 = vld [vmem:[#allocation3 + $0x28] sm:$0xff]
    %v57 = vld [vmem:[#allocation3 + $0x30] sm:$0xff]
    %v58 = vld [vmem:[#allocation3 + $0x38] sm:$0xff]
    %v59 = vld [vmem:[#allocation3 + $0x40] sm:$0xff]
    %v60 = vld [vmem:[#allocation3 + $0x48] sm:$0xff]
    %v61 = vld [vmem:[#allocation3 + $0x50] sm:$0xff]
    %v62 = vld [vmem:[#allocation3 + $0x58] sm:$0xff]
    %v63 = vld [vmem:[#allocation3 + $0x60] sm:$0xff]
    %v64 = vld [vmem:[#allocation3 + $0x68] sm:$0xff]
    %v65 = vld [vmem:[#allocation3 + $0x70] sm:$0xff]
    %v66 = vld [vmem:[#allocation3 + $0x78] sm:$0xff]
    %v67 = vld [vmem:[#allocation3 + $0x80] sm:$0xff]
    %v68 = vld [vmem:[#allocation3 + $0x88] sm:$0xff]
    %v69 = vld [vmem:[#allocation3 + $0x90] sm:$0xff]
    %v70 = vld [vmem:[#allocation3 + $0x98] sm:$0xff]
    %v71 = vld [vmem:[#allocation3 + $0xa0] sm:$0xff]
    %v72 = vld [vmem:[#allocation3 + $0xa8] sm:$0xff]
    %v73 = vld [vmem:[#allocation3 + $0xb0] sm:$0xff]
    %v74 = vld [vmem:[#allocation3 + $0xb8] sm:$0xff]
    %v75 = vld [vmem:[#allocation3 + $0xc0] sm:$0xff]
    %v76 = vld [vmem:[#allocation3 + $0xc8] sm:$0xff]
    %v77 = vld [vmem:[#allocation3 + $0xd0] sm:$0xff]
    %v78 = vld [vmem:[#allocation3 + $0xd8] sm:$0xff]
    %v79 = vld [vmem:[#allocation3 + $0xe0] sm:$0xff]
    %v80 = vld [vmem:[#allocation3 + $0xe8] sm:$0xff]
    %v81 = vld [vmem:[#allocation3 + $0xf0] sm:$0xff]
    %v82 = vld [vmem:[#allocation3 + $0xf8] sm:$0xff]
    %v83 = vld [vmem:[#allocation3 + $0x100] sm:$0xff]
    %v84 = vld [vmem:[#allocation3 + $0x108] sm:$0xff]
    %v85 = vld [vmem:[#allocation3 + $0x110] sm:$0xff]
    %v86 = vld [vmem:[#allocation3 + $0x118] sm:$0xff]
    %v87 = vld [vmem:[#allocation3 + $0x120] sm:$0xff]
    %v88 = vld [vmem:[#allocation3 + $0x128] sm:$0xff]
    %v89 = vld [vmem:[#allocation3 + $0x130] sm:$0xff]
    %v90 = vld [vmem:[#allocation3 + $0x138] sm:$0xff]
    %v91 = vld [vmem:[#allocation3 + $0x140] sm:$0xff]
    %v92 = vld [vmem:[#allocation3 + $0x148] sm:$0xff]
    %v93 = vld [vmem:[#allocation3 + $0x150] sm:$0xff]
    %v94 = vld [vmem:[#allocation3 + $0x158] sm:$0xff]
    %v95 = vld [vmem:[#allocation3 + $0x160] sm:$0xff]
    %v96 = vld [vmem:[#allocation3 + $0x168] sm:$0xff]
    %v97 = vld [vmem:[#allocation3 + $0x170] sm:$0xff]
    %v98 = vld [vmem:[#allocation3 + $0x178] sm:$0xff]
    %v99 = vld [vmem:[#allocation3 + $0x180] sm:$0xff]
    %v100 = vld [vmem:[#allocation3 + $0x188] sm:$0xff]
    %v101 = vld [vmem:[#allocation3 + $0x190] sm:$0xff]
    %v102 = vld [vmem:[#allocation3 + $0x198] sm:$0xff]
    %v103 = vld [vmem:[#allocation3 + $0x1a0] sm:$0xff]
    %v104 = vld [vmem:[#allocation3 + $0x1a8] sm:$0xff]
    %v105 = vld [vmem:[#allocation3 + $0x1b0] sm:$0xff]
    %v106 = vld [vmem:[#allocation3 + $0x1b8] sm:$0xff]
    %v107 = vld [vmem:[#allocation3 + $0x1c0] sm:$0xff]
    %v108 = vld [vmem:[#allocation3 + $0x1c8] sm:$0xff]
    %v109 = vld [vmem:[#allocation3 + $0x1d0] sm:$0xff]
    %v110 = vld [vmem:[#allocation3 + $0x1d8] sm:$0xff]
    %v111 = vld [vmem:[#allocation3 + $0x1e0] sm:$0xff]
    %v112 = vld [vmem:[#allocation3 + $0x1e8] sm:$0xff]
    %v113 = vld [vmem:[#allocation3 + $0x1f0] sm:$0xff]
    %v114 = vld [vmem:[#allocation3 + $0x1f8] sm:$0xff]
    %v115 = vpack.c.bf16 %v52, %v51
    %v116 = vpack.c.bf16 %v54, %v53
    %v117 = vpack.c.bf16 %v56, %v55
    %v118 = vpack.c.bf16 %v58, %v57
    %v119 = vpack.c.bf16 %v60, %v59
    %v120 = vpack.c.bf16 %v62, %v61
    %v121 = vpack.c.bf16 %v64, %v63
    %v122 = vpack.c.bf16 %v66, %v65
    %v123 = vpack.c.bf16 %v68, %v67
    %v124 = vpack.c.bf16 %v70, %v69
    %v125 = vpack.c.bf16 %v72, %v71
    %v126 = vpack.c.bf16 %v74, %v73
    %v127 = vpack.c.bf16 %v76, %v75
    %v128 = vpack.c.bf16 %v78, %v77
    %v129 = vpack.c.bf16 %v80, %v79
    %v130 = vpack.c.bf16 %v82, %v81
    %v131 = vpack.c.bf16 %v84, %v83
    %v132 = vpack.c.bf16 %v86, %v85
    %v133 = vpack.c.bf16 %v88, %v87
    %v134 = vpack.c.bf16 %v90, %v89
    %v135 = vpack.c.bf16 %v92, %v91
    %v136 = vpack.c.bf16 %v94, %v93
    %v137 = vpack.c.bf16 %v96, %v95
    %v138 = vpack.c.bf16 %v98, %v97
    %v139 = vpack.c.bf16 %v100, %v99
    %v140 = vpack.c.bf16 %v102, %v101
    %v141 = vpack.c.bf16 %v104, %v103
    %v142 = vpack.c.bf16 %v106, %v105
    %v143 = vpack.c.bf16 %v108, %v107
    %v144 = vpack.c.bf16 %v110, %v109
    %v145 = vpack.c.bf16 %v112, %v111
    %v146 = vpack.c.bf16 %v114, %v113
    %v147 = vld [vmem:[%s1] sm:$0xf]
    %v148 = vld [vmem:[%s1 + $0x4] sm:$0xf]
    %v149 = vld [vmem:[%s1 + $0x8] sm:$0xf]
    %v150 = vld [vmem:[%s1 + $0xc] sm:$0xf]
    %v151 = vld [vmem:[%s1 + $0x10] sm:$0xf]
    %v152 = vld [vmem:[%s1 + $0x14] sm:$0xf]
    %v153 = vld [vmem:[%s1 + $0x18] sm:$0xf]
    %v154 = vld [vmem:[%s1 + $0x1c] sm:$0xf]
    %v155 = vld [vmem:[%s1 + $0x20] sm:$0xf]
    %v156 = vld [vmem:[%s1 + $0x24] sm:$0xf]
    %v157 = vld [vmem:[%s1 + $0x28] sm:$0xf]
    %v158 = vld [vmem:[%s1 + $0x2c] sm:$0xf]
    %v159 = vld [vmem:[%s1 + $0x30] sm:$0xf]
    %v160 = vld [vmem:[%s1 + $0x34] sm:$0xf]
    %v161 = vld [vmem:[%s1 + $0x38] sm:$0xf]
    %v162 = vld [vmem:[%s1 + $0x3c] sm:$0xf]
    %v179 = vunpack.c.l.b16 %v147
    %v180 = vunpack.c.l.b16 %v148
    %v181 = vunpack.c.l.b16 %v149
    %v182 = vunpack.c.l.b16 %v150
    %v183 = vunpack.c.l.b16 %v151
    %v184 = vunpack.c.l.b16 %v152
    %v185 = vunpack.c.l.b16 %v153
    %v186 = vunpack.c.l.b16 %v154
    %v187 = vunpack.c.l.b16 %v155
    %v188 = vunpack.c.l.b16 %v156
    %v189 = vunpack.c.l.b16 %v157
    %v190 = vunpack.c.l.b16 %v158
    %v191 = vunpack.c.l.b16 %v159
    %v192 = vunpack.c.l.b16 %v160
    %v193 = vunpack.c.l.b16 %v161
    %v194 = vunpack.c.l.b16 %v162
    %v195 = vpack.c.b16 %v180, %v179
    %v196 = vpack.c.b16 %v182, %v181
    %v197 = vpack.c.b16 %v184, %v183
    %v198 = vpack.c.b16 %v186, %v185
    %v199 = vpack.c.b16 %v188, %v187
    %v200 = vpack.c.b16 %v190, %v189
    %v201 = vpack.c.b16 %v192, %v191
    %v202 = vpack.c.b16 %v194, %v193
    %211 = vmatprep.subr.bf16.mxu0 0
    %212 = vmatpush1.bf16.msra.mxu0 %v202
    %213 = vmatprep.subr.bf16.mxu0 0
    %214 = vmatpush1.bf16.msra.mxu0 %v201
    %215 = vmatprep.subr.bf16.mxu0 0
    %216 = vmatpush1.bf16.msra.mxu0 %v200
    %217 = vmatprep.subr.bf16.mxu0 0
    %218 = vmatpush1.bf16.msra.mxu0 %v199
    %219 = vmatprep.subr.bf16.mxu0 0
    %220 = vmatpush1.bf16.msra.mxu0 %v198
    %221 = vmatprep.subr.bf16.mxu0 0
    %222 = vmatpush1.bf16.msra.mxu0 %v197
    %223 = vmatprep.subr.bf16.mxu0 0
    %224 = vmatpush1.bf16.msra.mxu0 %v196
    %225 = vmatprep.subr.bf16.mxu0 0
    %226 = vmatpush1.bf16.msra.mxu0 %v195
    %227 = vmatprep.subr.bf16.mxu0 0
    %228 = vmatpush2.bf16.msra.mxu0 0
    %229 = vmatprep.subr.bf16.mxu0 0
    %230 = vmatpush2.bf16.msra.mxu0 0
    %231 = vmatprep.subr.bf16.mxu0 0
    %232 = vmatpush2.bf16.msra.mxu0 0
    %233 = vmatprep.subr.bf16.mxu0 0
    %234 = vmatpush2.bf16.msra.mxu0 0
    %235 = vmatprep.subr.bf16.mxu0 0
    %236 = vmatpush2.bf16.msra.mxu0 0
    %237 = vmatprep.subr.bf16.mxu0 0
    %238 = vmatpush2.bf16.msra.mxu0 0
    %239 = vmatprep.subr.bf16.mxu0 0
    %240 = vmatpush2.bf16.msra.mxu0 0
    %241 = vmatprep.subr.bf16.mxu0 0
    %242 = vmatpush2.bf16.msra.mxu0 0
    %243 = vmatprep.mubr.bf16.mxu0 0
    %244 = vmatmul.mubr.bf16.gmra.mxu0 %v115
    %v245 = vpop.f32.mrf.mxu0
    %v246 = vadd.f32 0.0, %v245
    %v247 = vpop.f32.mrf.mxu0
    %v248 = vpop.f32.mrf.mxu0
    %v249 = vadd.f32 0.0, %v248
    %v250 = vpop.f32.mrf.mxu0
    %251 = vmatprep.mubr.bf16.mxu0 0
    %252 = vmatmul.mubr.bf16.gmra.mxu0 %v116
    %v253 = vpop.f32.mrf.mxu0
    %v254 = vadd.f32 0.0, %v253
    %v255 = vpop.f32.mrf.mxu0
    %v256 = vpop.f32.mrf.mxu0
    %v257 = vadd.f32 0.0, %v256
    %v258 = vpop.f32.mrf.mxu0
    %259 = vmatprep.mubr.bf16.mxu0 0
    %260 = vmatmul.mubr.bf16.gmra.mxu0 %v117
    %v261 = vpop.f32.mrf.mxu0
    %v262 = vadd.f32 0.0, %v261
    %v263 = vpop.f32.mrf.mxu0
    %v264 = vpop.f32.mrf.mxu0
    %v265 = vadd.f32 0.0, %v264
    %v266 = vpop.f32.mrf.mxu0
    %267 = vmatprep.mubr.bf16.mxu0 0
    %268 = vmatmul.mubr.bf16.gmra.mxu0 %v118
    %v269 = vpop.f32.mrf.mxu0
    %v270 = vadd.f32 0.0, %v269
    %v271 = vpop.f32.mrf.mxu0
    %v272 = vpop.f32.mrf.mxu0
    %v273 = vadd.f32 0.0, %v272
    %v274 = vpop.f32.mrf.mxu0
    %275 = vmatprep.mubr.bf16.mxu0 0
    %276 = vmatmul.mubr.bf16.gmra.mxu0 %v119
    %v277 = vpop.f32.mrf.mxu0
    %v278 = vadd.f32 0.0, %v277
    %v279 = vpop.f32.mrf.mxu0
    %v280 = vpop.f32.mrf.mxu0
    %v281 = vadd.f32 0.0, %v280
    %v282 = vpop.f32.mrf.mxu0
    %283 = vmatprep.mubr.bf16.mxu0 0
    %284 = vmatmul.mubr.bf16.gmra.mxu0 %v120
    %v285 = vpop.f32.mrf.mxu0
    %v286 = vadd.f32 0.0, %v285
    %v287 = vpop.f32.mrf.mxu0
    %v288 = vpop.f32.mrf.mxu0
    %v289 = vadd.f32 0.0, %v288
    %v290 = vpop.f32.mrf.mxu0
    %291 = vmatprep.mubr.bf16.mxu0 0
    %292 = vmatmul.mubr.bf16.gmra.mxu0 %v121
    %v293 = vpop.f32.mrf.mxu0
    %v294 = vadd.f32 0.0, %v293
    %v295 = vpop.f32.mrf.mxu0
    %v296 = vpop.f32.mrf.mxu0
    %v297 = vadd.f32 0.0, %v296
    %v298 = vpop.f32.mrf.mxu0
    %299 = vmatprep.mubr.bf16.mxu0 0
    %300 = vmatmul.mubr.bf16.gmra.mxu0 %v122
    %v301 = vpop.f32.mrf.mxu0
    %v302 = vadd.f32 0.0, %v301
    %v303 = vpop.f32.mrf.mxu0
    %v304 = vpop.f32.mrf.mxu0
    %v305 = vadd.f32 0.0, %v304
    %v306 = vpop.f32.mrf.mxu0
    %307 = vmatprep.mubr.bf16.mxu0 0
    %308 = vmatmul.mubr.bf16.gmra.mxu0 %v123
    %v309 = vpop.f32.mrf.mxu0
    %v310 = vadd.f32 0.0, %v309
    %v311 = vpop.f32.mrf.mxu0
    %v312 = vpop.f32.mrf.mxu0
    %v313 = vadd.f32 0.0, %v312
    %v314 = vpop.f32.mrf.mxu0
    %315 = vmatprep.mubr.bf16.mxu0 0
    %316 = vmatmul.mubr.bf16.gmra.mxu0 %v124
    %v317 = vpop.f32.mrf.mxu0
    %v318 = vadd.f32 0.0, %v317
    %v319 = vpop.f32.mrf.mxu0
    %v320 = vpop.f32.mrf.mxu0
    %v321 = vadd.f32 0.0, %v320
    %v322 = vpop.f32.mrf.mxu0
    %323 = vmatprep.mubr.bf16.mxu0 0
    %324 = vmatmul.mubr.bf16.gmra.mxu0 %v125
    %v325 = vpop.f32.mrf.mxu0
    %v326 = vadd.f32 0.0, %v325
    %v327 = vpop.f32.mrf.mxu0
    %v328 = vpop.f32.mrf.mxu0
    %v329 = vadd.f32 0.0, %v328
    %v330 = vpop.f32.mrf.mxu0
    %331 = vmatprep.mubr.bf16.mxu0 0
    %332 = vmatmul.mubr.bf16.gmra.mxu0 %v126
    %v333 = vpop.f32.mrf.mxu0
    %v334 = vadd.f32 0.0, %v333
    %v335 = vpop.f32.mrf.mxu0
    %v336 = vpop.f32.mrf.mxu0
    %v337 = vadd.f32 0.0, %v336
    %v338 = vpop.f32.mrf.mxu0
    %339 = vmatprep.mubr.bf16.mxu0 0
    %340 = vmatmul.mubr.bf16.gmra.mxu0 %v127
    %v341 = vpop.f32.mrf.mxu0
    %v342 = vadd.f32 0.0, %v341
    %v343 = vpop.f32.mrf.mxu0
    %v344 = vpop.f32.mrf.mxu0
    %v345 = vadd.f32 0.0, %v344
    %v346 = vpop.f32.mrf.mxu0
    %347 = vmatprep.mubr.bf16.mxu0 0
    %348 = vmatmul.mubr.bf16.gmra.mxu0 %v128
    %v349 = vpop.f32.mrf.mxu0
    %v350 = vadd.f32 0.0, %v349
    %v351 = vpop.f32.mrf.mxu0
    %v352 = vpop.f32.mrf.mxu0
    %v353 = vadd.f32 0.0, %v352
    %v354 = vpop.f32.mrf.mxu0
    %355 = vmatprep.mubr.bf16.mxu0 0
    %356 = vmatmul.mubr.bf16.gmra.mxu0 %v129
    %v357 = vpop.f32.mrf.mxu0
    %v358 = vadd.f32 0.0, %v357
    %v359 = vpop.f32.mrf.mxu0
    %v360 = vpop.f32.mrf.mxu0
    %v361 = vadd.f32 0.0, %v360
    %v362 = vpop.f32.mrf.mxu0
    %363 = vmatprep.mubr.bf16.mxu0 0
    %364 = vmatmul.mubr.bf16.gmra.mxu0 %v130
    %v365 = vpop.f32.mrf.mxu0
    %v366 = vadd.f32 0.0, %v365
    %v367 = vpop.f32.mrf.mxu0
    %v368 = vpop.f32.mrf.mxu0
    %v369 = vadd.f32 0.0, %v368
    %v370 = vpop.f32.mrf.mxu0
    %371 = vmatprep.mubr.bf16.mxu0 0
    %372 = vmatmul.mubr.bf16.gmra.mxu0 %v131
    %v373 = vpop.f32.mrf.mxu0
    %v374 = vadd.f32 0.0, %v373
    %v375 = vpop.f32.mrf.mxu0
    %v376 = vpop.f32.mrf.mxu0
    %v377 = vadd.f32 0.0, %v376
    %v378 = vpop.f32.mrf.mxu0
    %379 = vmatprep.mubr.bf16.mxu0 0
    %380 = vmatmul.mubr.bf16.gmra.mxu0 %v132
    %v381 = vpop.f32.mrf.mxu0
    %v382 = vadd.f32 0.0, %v381
    %v383 = vpop.f32.mrf.mxu0
    %v384 = vpop.f32.mrf.mxu0
    %v385 = vadd.f32 0.0, %v384
    %v386 = vpop.f32.mrf.mxu0
    %387 = vmatprep.mubr.bf16.mxu0 0
    %388 = vmatmul.mubr.bf16.gmra.mxu0 %v133
    %v389 = vpop.f32.mrf.mxu0
    %v390 = vadd.f32 0.0, %v389
    %v391 = vpop.f32.mrf.mxu0
    %v392 = vpop.f32.mrf.mxu0
    %v393 = vadd.f32 0.0, %v392
    %v394 = vpop.f32.mrf.mxu0
    %395 = vmatprep.mubr.bf16.mxu0 0
    %396 = vmatmul.mubr.bf16.gmra.mxu0 %v134
    %v397 = vpop.f32.mrf.mxu0
    %v398 = vadd.f32 0.0, %v397
    %v399 = vpop.f32.mrf.mxu0
    %v400 = vpop.f32.mrf.mxu0
    %v401 = vadd.f32 0.0, %v400
    %v402 = vpop.f32.mrf.mxu0
    %403 = vmatprep.mubr.bf16.mxu0 0
    %404 = vmatmul.mubr.bf16.gmra.mxu0 %v135
    %v405 = vpop.f32.mrf.mxu0
    %v406 = vadd.f32 0.0, %v405
    %v407 = vpop.f32.mrf.mxu0
    %v408 = vpop.f32.mrf.mxu0
    %v409 = vadd.f32 0.0, %v408
    %v410 = vpop.f32.mrf.mxu0
    %411 = vmatprep.mubr.bf16.mxu0 0
    %412 = vmatmul.mubr.bf16.gmra.mxu0 %v136
    %v413 = vpop.f32.mrf.mxu0
    %v414 = vadd.f32 0.0, %v413
    %v415 = vpop.f32.mrf.mxu0
    %v416 = vpop.f32.mrf.mxu0
    %v417 = vadd.f32 0.0, %v416
    %v418 = vpop.f32.mrf.mxu0
    %419 = vmatprep.mubr.bf16.mxu0 0
    %420 = vmatmul.mubr.bf16.gmra.mxu0 %v137
    %v421 = vpop.f32.mrf.mxu0
    %v422 = vadd.f32 0.0, %v421
    %v423 = vpop.f32.mrf.mxu0
    %v424 = vpop.f32.mrf.mxu0
    %v425 = vadd.f32 0.0, %v424
    %v426 = vpop.f32.mrf.mxu0
    %427 = vmatprep.mubr.bf16.mxu0 0
    %428 = vmatmul.mubr.bf16.gmra.mxu0 %v138
    %v429 = vpop.f32.mrf.mxu0
    %v430 = vadd.f32 0.0, %v429
    %v431 = vpop.f32.mrf.mxu0
    %v432 = vpop.f32.mrf.mxu0
    %v433 = vadd.f32 0.0, %v432
    %v434 = vpop.f32.mrf.mxu0
    %435 = vmatprep.mubr.bf16.mxu0 0
    %436 = vmatmul.mubr.bf16.gmra.mxu0 %v139
    %v437 = vpop.f32.mrf.mxu0
    %v438 = vadd.f32 0.0, %v437
    %v439 = vpop.f32.mrf.mxu0
    %v440 = vpop.f32.mrf.mxu0
    %v441 = vadd.f32 0.0, %v440
    %v442 = vpop.f32.mrf.mxu0
    %443 = vmatprep.mubr.bf16.mxu0 0
    %444 = vmatmul.mubr.bf16.gmra.mxu0 %v140
    %v445 = vpop.f32.mrf.mxu0
    %v446 = vadd.f32 0.0, %v445
    %v447 = vpop.f32.mrf.mxu0
    %v448 = vpop.f32.mrf.mxu0
    %v449 = vadd.f32 0.0, %v448
    %v450 = vpop.f32.mrf.mxu0
    %451 = vmatprep.mubr.bf16.mxu0 0
    %452 = vmatmul.mubr.bf16.gmra.mxu0 %v141
    %v453 = vpop.f32.mrf.mxu0
    %v454 = vadd.f32 0.0, %v453
    %v455 = vpop.f32.mrf.mxu0
    %v456 = vpop.f32.mrf.mxu0
    %v457 = vadd.f32 0.0, %v456
    %v458 = vpop.f32.mrf.mxu0
    %459 = vmatprep.mubr.bf16.mxu0 0
    %460 = vmatmul.mubr.bf16.gmra.mxu0 %v142
    %v461 = vpop.f32.mrf.mxu0
    %v462 = vadd.f32 0.0, %v461
    %v463 = vpop.f32.mrf.mxu0
    %v464 = vpop.f32.mrf.mxu0
    %v465 = vadd.f32 0.0, %v464
    %v466 = vpop.f32.mrf.mxu0
    %467 = vmatprep.mubr.bf16.mxu0 0
    %468 = vmatmul.mubr.bf16.gmra.mxu0 %v143
    %v469 = vpop.f32.mrf.mxu0
    %v470 = vadd.f32 0.0, %v469
    %v471 = vpop.f32.mrf.mxu0
    %v472 = vpop.f32.mrf.mxu0
    %v473 = vadd.f32 0.0, %v472
    %v474 = vpop.f32.mrf.mxu0
    %475 = vmatprep.mubr.bf16.mxu0 0
    %476 = vmatmul.mubr.bf16.gmra.mxu0 %v144
    %v477 = vpop.f32.mrf.mxu0
    %v478 = vadd.f32 0.0, %v477
    %v479 = vpop.f32.mrf.mxu0
    %v480 = vpop.f32.mrf.mxu0
    %v481 = vadd.f32 0.0, %v480
    %v482 = vpop.f32.mrf.mxu0
    %483 = vmatprep.mubr.bf16.mxu0 0
    %484 = vmatmul.mubr.bf16.gmra.mxu0 %v145
    %v485 = vpop.f32.mrf.mxu0
    %v486 = vadd.f32 0.0, %v485
    %v487 = vpop.f32.mrf.mxu0
    %v488 = vpop.f32.mrf.mxu0
    %v489 = vadd.f32 0.0, %v488
    %v490 = vpop.f32.mrf.mxu0
    %491 = vmatprep.mubr.bf16.mxu0 0
    %492 = vmatmul.mubr.bf16.gmra.mxu0 %v146
    %v493 = vpop.f32.mrf.mxu0
    %v494 = vadd.f32 0.0, %v493
    %v495 = vpop.f32.mrf.mxu0
    %v496 = vpop.f32.mrf.mxu0
    %v497 = vadd.f32 0.0, %v496
    %v498 = vpop.f32.mrf.mxu0
    %499 = vdwg.mxu0
    %v500 = vld [vmem:[%s2] sm:$0x1]
    %v501 = vld [vmem:[%s3] sm:$0x1]
    %vm502 = vcmask 261120
    %v503 = vsel %vm502, %v246, 0.0
    %v504 = vsel %vm502, %v249, 0.0
    %v505 = vadd.f32 %v503, %v504
    %v506 = vsel %vm502, %v254, 0.0
    %v507 = vadd.f32 %v505, %v506
    %v508 = vsel %vm502, %v257, 0.0
    %v509 = vadd.f32 %v507, %v508
    %v510 = vsel %vm502, %v262, 0.0
    %v511 = vadd.f32 %v509, %v510
    %v512 = vsel %vm502, %v265, 0.0
    %v513 = vadd.f32 %v511, %v512
    %v514 = vsel %vm502, %v270, 0.0
    %v515 = vadd.f32 %v513, %v514
    %v516 = vsel %vm502, %v273, 0.0
    %v517 = vadd.f32 %v515, %v516
    %v518 = vsel %vm502, %v278, 0.0
    %v519 = vadd.f32 %v517, %v518
    %v520 = vsel %vm502, %v281, 0.0
    %v521 = vadd.f32 %v519, %v520
    %v522 = vsel %vm502, %v286, 0.0
    %v523 = vadd.f32 %v521, %v522
    %v524 = vsel %vm502, %v289, 0.0
    %v525 = vadd.f32 %v523, %v524
    %v526 = vsel %vm502, %v294, 0.0
    %v527 = vadd.f32 %v525, %v526
    %v528 = vsel %vm502, %v297, 0.0
    %v529 = vadd.f32 %v527, %v528
    %v530 = vsel %vm502, %v302, 0.0
    %v531 = vadd.f32 %v529, %v530
    %v532 = vsel %vm502, %v305, 0.0
    %v533 = vadd.f32 %v531, %v532
    %v534 = vsel %vm502, %v310, 0.0
    %v535 = vadd.f32 %v533, %v534
    %v536 = vsel %vm502, %v313, 0.0
    %v537 = vadd.f32 %v535, %v536
    %v538 = vsel %vm502, %v318, 0.0
    %v539 = vadd.f32 %v537, %v538
    %v540 = vsel %vm502, %v321, 0.0
    %v541 = vadd.f32 %v539, %v540
    %v542 = vsel %vm502, %v326, 0.0
    %v543 = vadd.f32 %v541, %v542
    %v544 = vsel %vm502, %v329, 0.0
    %v545 = vadd.f32 %v543, %v544
    %v546 = vsel %vm502, %v334, 0.0
    %v547 = vadd.f32 %v545, %v546
    %v548 = vsel %vm502, %v337, 0.0
    %v549 = vadd.f32 %v547, %v548
    %v550 = vsel %vm502, %v342, 0.0
    %v551 = vadd.f32 %v549, %v550
    %v552 = vsel %vm502, %v345, 0.0
    %v553 = vadd.f32 %v551, %v552
    %v554 = vsel %vm502, %v350, 0.0
    %v555 = vadd.f32 %v553, %v554
    %v556 = vsel %vm502, %v353, 0.0
    %v557 = vadd.f32 %v555, %v556
    %v558 = vsel %vm502, %v358, 0.0
    %v559 = vadd.f32 %v557, %v558
    %v560 = vsel %vm502, %v361, 0.0
    %v561 = vadd.f32 %v559, %v560
    %v562 = vsel %vm502, %v366, 0.0
    %v563 = vadd.f32 %v561, %v562
    %v564 = vsel %vm502, %v369, 0.0
    %v565 = vadd.f32 %v563, %v564
    %v566 = vsel %vm502, %v374, 0.0
    %v567 = vadd.f32 %v565, %v566
    %v568 = vsel %vm502, %v377, 0.0
    %v569 = vadd.f32 %v567, %v568
    %v570 = vsel %vm502, %v382, 0.0
    %v571 = vadd.f32 %v569, %v570
    %v572 = vsel %vm502, %v385, 0.0
    %v573 = vadd.f32 %v571, %v572
    %v574 = vsel %vm502, %v390, 0.0
    %v575 = vadd.f32 %v573, %v574
    %v576 = vsel %vm502, %v393, 0.0
    %v577 = vadd.f32 %v575, %v576
    %v578 = vsel %vm502, %v398, 0.0
    %v579 = vadd.f32 %v577, %v578
    %v580 = vsel %vm502, %v401, 0.0
    %v581 = vadd.f32 %v579, %v580
    %v582 = vsel %vm502, %v406, 0.0
    %v583 = vadd.f32 %v581, %v582
    %v584 = vsel %vm502, %v409, 0.0
    %v585 = vadd.f32 %v583, %v584
    %v586 = vsel %vm502, %v414, 0.0
    %v587 = vadd.f32 %v585, %v586
    %v588 = vsel %vm502, %v417, 0.0
    %v589 = vadd.f32 %v587, %v588
    %v590 = vsel %vm502, %v422, 0.0
    %v591 = vadd.f32 %v589, %v590
    %v592 = vsel %vm502, %v425, 0.0
    %v593 = vadd.f32 %v591, %v592
    %v594 = vsel %vm502, %v430, 0.0
    %v595 = vadd.f32 %v593, %v594
    %v596 = vsel %vm502, %v433, 0.0
    %v597 = vadd.f32 %v595, %v596
    %v598 = vsel %vm502, %v438, 0.0
    %v599 = vadd.f32 %v597, %v598
    %v600 = vsel %vm502, %v441, 0.0
    %v601 = vadd.f32 %v599, %v600
    %v602 = vsel %vm502, %v446, 0.0
    %v603 = vadd.f32 %v601, %v602
    %v604 = vsel %vm502, %v449, 0.0
    %v605 = vadd.f32 %v603, %v604
    %v606 = vsel %vm502, %v454, 0.0
    %v607 = vadd.f32 %v605, %v606
    %v608 = vsel %vm502, %v457, 0.0
    %v609 = vadd.f32 %v607, %v608
    %v610 = vsel %vm502, %v462, 0.0
    %v611 = vadd.f32 %v609, %v610
    %v612 = vsel %vm502, %v465, 0.0
    %v613 = vadd.f32 %v611, %v612
    %v614 = vsel %vm502, %v470, 0.0
    %v615 = vadd.f32 %v613, %v614
    %v616 = vsel %vm502, %v473, 0.0
    %v617 = vadd.f32 %v615, %v616
    %v618 = vsel %vm502, %v478, 0.0
    %v619 = vadd.f32 %v617, %v618
    %v620 = vsel %vm502, %v481, 0.0
    %v621 = vadd.f32 %v619, %v620
    %v622 = vsel %vm502, %v486, 0.0
    %v623 = vadd.f32 %v621, %v622
    %v624 = vsel %vm502, %v489, 0.0
    %v625 = vadd.f32 %v623, %v624
    %v626 = vsel %vm502, %v494, 0.0
    %v627 = vadd.f32 %v625, %v626
    %v628 = vsel %vm502, %v497, 0.0
    %v629 = vadd.f32 %v627, %v628
    %v630 = vrot.slane %v629, 4
    %v631 = vadd.f32 %v629, %v630
    %v632 = vrot.slane %v631, 2
    %v633 = vadd.f32 %v631, %v632
    %v634 = vrot.slane %v633, 1
    %v635 = vadd.f32 %v633, %v634
    %v636 = vmul.f32 %v635, 0.001953125
    %v637 = vsub.f32 %v246, %v636
    %v638 = vsub.f32 %v249, %v636
    %v639 = vsub.f32 %v254, %v636
    %v640 = vsub.f32 %v257, %v636
    %v641 = vsub.f32 %v262, %v636
    %v642 = vsub.f32 %v265, %v636
    %v643 = vsub.f32 %v270, %v636
    %v644 = vsub.f32 %v273, %v636
    %v645 = vsub.f32 %v278, %v636
    %v646 = vsub.f32 %v281, %v636
    %v647 = vsub.f32 %v286, %v636
    %v648 = vsub.f32 %v289, %v636
    %v649 = vsub.f32 %v294, %v636
    %v650 = vsub.f32 %v297, %v636
    %v651 = vsub.f32 %v302, %v636
    %v652 = vsub.f32 %v305, %v636
    %v653 = vsub.f32 %v310, %v636
    %v654 = vsub.f32 %v313, %v636
    %v655 = vsub.f32 %v318, %v636
    %v656 = vsub.f32 %v321, %v636
    %v657 = vsub.f32 %v326, %v636
    %v658 = vsub.f32 %v329, %v636
    %v659 = vsub.f32 %v334, %v636
    %v660 = vsub.f32 %v337, %v636
    %v661 = vsub.f32 %v342, %v636
    %v662 = vsub.f32 %v345, %v636
    %v663 = vsub.f32 %v350, %v636
    %v664 = vsub.f32 %v353, %v636
    %v665 = vsub.f32 %v358, %v636
    %v666 = vsub.f32 %v361, %v636
    %v667 = vsub.f32 %v366, %v636
    %v668 = vsub.f32 %v369, %v636
    %v669 = vsub.f32 %v374, %v636
    %v670 = vsub.f32 %v377, %v636
    %v671 = vsub.f32 %v382, %v636
    %v672 = vsub.f32 %v385, %v636
    %v673 = vsub.f32 %v390, %v636
    %v674 = vsub.f32 %v393, %v636
    %v675 = vsub.f32 %v398, %v636
    %v676 = vsub.f32 %v401, %v636
    %v677 = vsub.f32 %v406, %v636
    %v678 = vsub.f32 %v409, %v636
    %v679 = vsub.f32 %v414, %v636
    %v680 = vsub.f32 %v417, %v636
    %v681 = vsub.f32 %v422, %v636
    %v682 = vsub.f32 %v425, %v636
    %v683 = vsub.f32 %v430, %v636
    %v684 = vsub.f32 %v433, %v636
    %v685 = vsub.f32 %v438, %v636
    %v686 = vsub.f32 %v441, %v636
    %v687 = vsub.f32 %v446, %v636
    %v688 = vsub.f32 %v449, %v636
    %v689 = vsub.f32 %v454, %v636
    %v690 = vsub.f32 %v457, %v636
    %v691 = vsub.f32 %v462, %v636
    %v692 = vsub.f32 %v465, %v636
    %v693 = vsub.f32 %v470, %v636
    %v694 = vsub.f32 %v473, %v636
    %v695 = vsub.f32 %v478, %v636
    %v696 = vsub.f32 %v481, %v636
    %v697 = vsub.f32 %v486, %v636
    %v698 = vsub.f32 %v489, %v636
    %v699 = vsub.f32 %v494, %v636
    %v700 = vsub.f32 %v497, %v636
    %v701 = vmul.f32 %v637, %v637
    %v702 = vmul.f32 %v638, %v638
    %v703 = vmul.f32 %v639, %v639
    %v704 = vmul.f32 %v640, %v640
    %v705 = vmul.f32 %v641, %v641
    %v706 = vmul.f32 %v642, %v642
    %v707 = vmul.f32 %v643, %v643
    %v708 = vmul.f32 %v644, %v644
    %v709 = vmul.f32 %v645, %v645
    %v710 = vmul.f32 %v646, %v646
    %v711 = vmul.f32 %v647, %v647
    %v712 = vmul.f32 %v648, %v648
    %v713 = vmul.f32 %v649, %v649
    %v714 = vmul.f32 %v650, %v650
    %v715 = vmul.f32 %v651, %v651
    %v716 = vmul.f32 %v652, %v652
    %v717 = vmul.f32 %v653, %v653
    %v718 = vmul.f32 %v654, %v654
    %v719 = vmul.f32 %v655, %v655
    %v720 = vmul.f32 %v656, %v656
    %v721 = vmul.f32 %v657, %v657
    %v722 = vmul.f32 %v658, %v658
    %v723 = vmul.f32 %v659, %v659
    %v724 = vmul.f32 %v660, %v660
    %v725 = vmul.f32 %v661, %v661
    %v726 = vmul.f32 %v662, %v662
    %v727 = vmul.f32 %v663, %v663
    %v728 = vmul.f32 %v664, %v664
    %v729 = vmul.f32 %v665, %v665
    %v730 = vmul.f32 %v666, %v666
    %v731 = vmul.f32 %v667, %v667
    %v732 = vmul.f32 %v668, %v668
    %v733 = vmul.f32 %v669, %v669
    %v734 = vmul.f32 %v670, %v670
    %v735 = vmul.f32 %v671, %v671
    %v736 = vmul.f32 %v672, %v672
    %v737 = vmul.f32 %v673, %v673
    %v738 = vmul.f32 %v674, %v674
    %v739 = vmul.f32 %v675, %v675
    %v740 = vmul.f32 %v676, %v676
    %v741 = vmul.f32 %v677, %v677
    %v742 = vmul.f32 %v678, %v678
    %v743 = vmul.f32 %v679, %v679
    %v744 = vmul.f32 %v680, %v680
    %v745 = vmul.f32 %v681, %v681
    %v746 = vmul.f32 %v682, %v682
    %v747 = vmul.f32 %v683, %v683
    %v748 = vmul.f32 %v684, %v684
    %v749 = vmul.f32 %v685, %v685
    %v750 = vmul.f32 %v686, %v686
    %v751 = vmul.f32 %v687, %v687
    %v752 = vmul.f32 %v688, %v688
    %v753 = vmul.f32 %v689, %v689
    %v754 = vmul.f32 %v690, %v690
    %v755 = vmul.f32 %v691, %v691
    %v756 = vmul.f32 %v692, %v692
    %v757 = vmul.f32 %v693, %v693
    %v758 = vmul.f32 %v694, %v694
    %v759 = vmul.f32 %v695, %v695
    %v760 = vmul.f32 %v696, %v696
    %v761 = vmul.f32 %v697, %v697
    %v762 = vmul.f32 %v698, %v698
    %v763 = vmul.f32 %v699, %v699
    %v764 = vmul.f32 %v700, %v700
    %v765 = vsel %vm502, %v701, 0.0
    %v766 = vsel %vm502, %v702, 0.0
    %v767 = vadd.f32 %v765, %v766
    %v768 = vsel %vm502, %v703, 0.0
    %v769 = vadd.f32 %v767, %v768
    %v770 = vsel %vm502, %v704, 0.0
    %v771 = vadd.f32 %v769, %v770
    %v772 = vsel %vm502, %v705, 0.0
    %v773 = vadd.f32 %v771, %v772
    %v774 = vsel %vm502, %v706, 0.0
    %v775 = vadd.f32 %v773, %v774
    %v776 = vsel %vm502, %v707, 0.0
    %v777 = vadd.f32 %v775, %v776
    %v778 = vsel %vm502, %v708, 0.0
    %v779 = vadd.f32 %v777, %v778
    %v780 = vsel %vm502, %v709, 0.0
    %v781 = vadd.f32 %v779, %v780
    %v782 = vsel %vm502, %v710, 0.0
    %v783 = vadd.f32 %v781, %v782
    %v784 = vsel %vm502, %v711, 0.0
    %v785 = vadd.f32 %v783, %v784
    %v786 = vsel %vm502, %v712, 0.0
    %v787 = vadd.f32 %v785, %v786
    %v788 = vsel %vm502, %v713, 0.0
    %v789 = vadd.f32 %v787, %v788
    %v790 = vsel %vm502, %v714, 0.0
    %v791 = vadd.f32 %v789, %v790
    %v792 = vsel %vm502, %v715, 0.0
    %v793 = vadd.f32 %v791, %v792
    %v794 = vsel %vm502, %v716, 0.0
    %v795 = vadd.f32 %v793, %v794
    %v796 = vsel %vm502, %v717, 0.0
    %v797 = vadd.f32 %v795, %v796
    %v798 = vsel %vm502, %v718, 0.0
    %v799 = vadd.f32 %v797, %v798
    %v800 = vsel %vm502, %v719, 0.0
    %v801 = vadd.f32 %v799, %v800
    %v802 = vsel %vm502, %v720, 0.0
    %v803 = vadd.f32 %v801, %v802
    %v804 = vsel %vm502, %v721, 0.0
    %v805 = vadd.f32 %v803, %v804
    %v806 = vsel %vm502, %v722, 0.0
    %v807 = vadd.f32 %v805, %v806
    %v808 = vsel %vm502, %v723, 0.0
    %v809 = vadd.f32 %v807, %v808
    %v810 = vsel %vm502, %v724, 0.0
    %v811 = vadd.f32 %v809, %v810
    %v812 = vsel %vm502, %v725, 0.0
    %v813 = vadd.f32 %v811, %v812
    %v814 = vsel %vm502, %v726, 0.0
    %v815 = vadd.f32 %v813, %v814
    %v816 = vsel %vm502, %v727, 0.0
    %v817 = vadd.f32 %v815, %v816
    %v818 = vsel %vm502, %v728, 0.0
    %v819 = vadd.f32 %v817, %v818
    %v820 = vsel %vm502, %v729, 0.0
    %v821 = vadd.f32 %v819, %v820
    %v822 = vsel %vm502, %v730, 0.0
    %v823 = vadd.f32 %v821, %v822
    %v824 = vsel %vm502, %v731, 0.0
    %v825 = vadd.f32 %v823, %v824
    %v826 = vsel %vm502, %v732, 0.0
    %v827 = vadd.f32 %v825, %v826
    %v828 = vsel %vm502, %v733, 0.0
    %v829 = vadd.f32 %v827, %v828
    %v830 = vsel %vm502, %v734, 0.0
    %v831 = vadd.f32 %v829, %v830
    %v832 = vsel %vm502, %v735, 0.0
    %v833 = vadd.f32 %v831, %v832
    %v834 = vsel %vm502, %v736, 0.0
    %v835 = vadd.f32 %v833, %v834
    %v836 = vsel %vm502, %v737, 0.0
    %v837 = vadd.f32 %v835, %v836
    %v838 = vsel %vm502, %v738, 0.0
    %v839 = vadd.f32 %v837, %v838
    %v840 = vsel %vm502, %v739, 0.0
    %v841 = vadd.f32 %v839, %v840
    %v842 = vsel %vm502, %v740, 0.0
    %v843 = vadd.f32 %v841, %v842
    %v844 = vsel %vm502, %v741, 0.0
    %v845 = vadd.f32 %v843, %v844
    %v846 = vsel %vm502, %v742, 0.0
    %v847 = vadd.f32 %v845, %v846
    %v848 = vsel %vm502, %v743, 0.0
    %v849 = vadd.f32 %v847, %v848
    %v850 = vsel %vm502, %v744, 0.0
    %v851 = vadd.f32 %v849, %v850
    %v852 = vsel %vm502, %v745, 0.0
    %v853 = vadd.f32 %v851, %v852
    %v854 = vsel %vm502, %v746, 0.0
    %v855 = vadd.f32 %v853, %v854
    %v856 = vsel %vm502, %v747, 0.0
    %v857 = vadd.f32 %v855, %v856
    %v858 = vsel %vm502, %v748, 0.0
    %v859 = vadd.f32 %v857, %v858
    %v860 = vsel %vm502, %v749, 0.0
    %v861 = vadd.f32 %v859, %v860
    %v862 = vsel %vm502, %v750, 0.0
    %v863 = vadd.f32 %v861, %v862
    %v864 = vsel %vm502, %v751, 0.0
    %v865 = vadd.f32 %v863, %v864
    %v866 = vsel %vm502, %v752, 0.0
    %v867 = vadd.f32 %v865, %v866
    %v868 = vsel %vm502, %v753, 0.0
    %v869 = vadd.f32 %v867, %v868
    %v870 = vsel %vm502, %v754, 0.0
    %v871 = vadd.f32 %v869, %v870
    %v872 = vsel %vm502, %v755, 0.0
    %v873 = vadd.f32 %v871, %v872
    %v874 = vsel %vm502, %v756, 0.0
    %v875 = vadd.f32 %v873, %v874
    %v876 = vsel %vm502, %v757, 0.0
    %v877 = vadd.f32 %v875, %v876
    %v878 = vsel %vm502, %v758, 0.0
    %v879 = vadd.f32 %v877, %v878
    %v880 = vsel %vm502, %v759, 0.0
    %v881 = vadd.f32 %v879, %v880
    %v882 = vsel %vm502, %v760, 0.0
    %v883 = vadd.f32 %v881, %v882
    %v884 = vsel %vm502, %v761, 0.0
    %v885 = vadd.f32 %v883, %v884
    %v886 = vsel %vm502, %v762, 0.0
    %v887 = vadd.f32 %v885, %v886
    %v888 = vsel %vm502, %v763, 0.0
    %v889 = vadd.f32 %v887, %v888
    %v890 = vsel %vm502, %v764, 0.0
    %v891 = vadd.f32 %v889, %v890
    %v892 = vrot.slane %v891, 4
    %v893 = vadd.f32 %v891, %v892
    %v894 = vrot.slane %v893, 2
    %v895 = vadd.f32 %v893, %v894
    %v896 = vrot.slane %v895, 1
    %v897 = vadd.f32 %v895, %v896
    %v898 = vmul.f32 %v897, 0.001953125
    %v899 = vadd.f32 %v898, 1e-05
    %v900 = vrsqrt.pop %v899
    %v901 = vmul.f32 %v500, %v900
    %v903 = vlaneseq
    %v904 = vshrl.u32 %v903, 7
    %v905 = vsub.s32 0, %v904
    %v906 = vrot.slane %v901, %v905
    %v908 = vmul.f32 %v637, %v906
    %v909 = vmul.f32 %v638, %v906
    %v910 = vmul.f32 %v639, %v906
    %v911 = vmul.f32 %v640, %v906
    %v912 = vmul.f32 %v641, %v906
    %v913 = vmul.f32 %v642, %v906
    %v914 = vmul.f32 %v643, %v906
    %v915 = vmul.f32 %v644, %v906
    %v916 = vmul.f32 %v645, %v906
    %v917 = vmul.f32 %v646, %v906
    %v918 = vmul.f32 %v647, %v906
    %v919 = vmul.f32 %v648, %v906
    %v920 = vmul.f32 %v649, %v906
    %v921 = vmul.f32 %v650, %v906
    %v922 = vmul.f32 %v651, %v906
    %v923 = vmul.f32 %v652, %v906
    %v924 = vmul.f32 %v653, %v906
    %v925 = vmul.f32 %v654, %v906
    %v926 = vmul.f32 %v655, %v906
    %v927 = vmul.f32 %v656, %v906
    %v928 = vmul.f32 %v657, %v906
    %v929 = vmul.f32 %v658, %v906
    %v930 = vmul.f32 %v659, %v906
    %v931 = vmul.f32 %v660, %v906
    %v932 = vmul.f32 %v661, %v906
    %v933 = vmul.f32 %v662, %v906
    %v934 = vmul.f32 %v663, %v906
    %v935 = vmul.f32 %v664, %v906
    %v936 = vmul.f32 %v665, %v906
    %v937 = vmul.f32 %v666, %v906
    %v938 = vmul.f32 %v667, %v906
    %v939 = vmul.f32 %v668, %v906
    %v940 = vmul.f32 %v669, %v906
    %v941 = vmul.f32 %v670, %v906
    %v942 = vmul.f32 %v671, %v906
    %v943 = vmul.f32 %v672, %v906
    %v944 = vmul.f32 %v673, %v906
    %v945 = vmul.f32 %v674, %v906
    %v946 = vmul.f32 %v675, %v906
    %v947 = vmul.f32 %v676, %v906
    %v948 = vmul.f32 %v677, %v906
    %v949 = vmul.f32 %v678, %v906
    %v950 = vmul.f32 %v679, %v906
    %v951 = vmul.f32 %v680, %v906
    %v952 = vmul.f32 %v681, %v906
    %v953 = vmul.f32 %v682, %v906
    %v954 = vmul.f32 %v683, %v906
    %v955 = vmul.f32 %v684, %v906
    %v956 = vmul.f32 %v685, %v906
    %v957 = vmul.f32 %v686, %v906
    %v958 = vmul.f32 %v687, %v906
    %v959 = vmul.f32 %v688, %v906
    %v960 = vmul.f32 %v689, %v906
    %v961 = vmul.f32 %v690, %v906
    %v962 = vmul.f32 %v691, %v906
    %v963 = vmul.f32 %v692, %v906
    %v964 = vmul.f32 %v693, %v906
    %v965 = vmul.f32 %v694, %v906
    %v966 = vmul.f32 %v695, %v906
    %v967 = vmul.f32 %v696, %v906
    %v968 = vmul.f32 %v697, %v906
    %v969 = vmul.f32 %v698, %v906
    %v970 = vmul.f32 %v699, %v906
    %v971 = vmul.f32 %v700, %v906
    %v973 = vlaneseq
    %v974 = vshrl.u32 %v973, 7
    %v975 = vsub.s32 0, %v974
    %v976 = vrot.slane %v501, %v975
    %v978 = vadd.f32 %v908, %v976
    %v979 = vadd.f32 %v909, %v976
    %v980 = vadd.f32 %v910, %v976
    %v981 = vadd.f32 %v911, %v976
    %v982 = vadd.f32 %v912, %v976
    %v983 = vadd.f32 %v913, %v976
    %v984 = vadd.f32 %v914, %v976
    %v985 = vadd.f32 %v915, %v976
    %v986 = vadd.f32 %v916, %v976
    %v987 = vadd.f32 %v917, %v976
    %v988 = vadd.f32 %v918, %v976
    %v989 = vadd.f32 %v919, %v976
    %v990 = vadd.f32 %v920, %v976
    %v991 = vadd.f32 %v921, %v976
    %v992 = vadd.f32 %v922, %v976
    %v993 = vadd.f32 %v923, %v976
    %v994 = vadd.f32 %v924, %v976
    %v995 = vadd.f32 %v925, %v976
    %v996 = vadd.f32 %v926, %v976
    %v997 = vadd.f32 %v927, %v976
    %v998 = vadd.f32 %v928, %v976
    %v999 = vadd.f32 %v929, %v976
    %v1000 = vadd.f32 %v930, %v976
    %v1001 = vadd.f32 %v931, %v976
    %v1002 = vadd.f32 %v932, %v976
    %v1003 = vadd.f32 %v933, %v976
    %v1004 = vadd.f32 %v934, %v976
    %v1005 = vadd.f32 %v935, %v976
    %v1006 = vadd.f32 %v936, %v976
    %v1007 = vadd.f32 %v937, %v976
    %v1008 = vadd.f32 %v938, %v976
    %v1009 = vadd.f32 %v939, %v976
    %v1010 = vadd.f32 %v940, %v976
    %v1011 = vadd.f32 %v941, %v976
    %v1012 = vadd.f32 %v942, %v976
    %v1013 = vadd.f32 %v943, %v976
    %v1014 = vadd.f32 %v944, %v976
    %v1015 = vadd.f32 %v945, %v976
    %v1016 = vadd.f32 %v946, %v976
    %v1017 = vadd.f32 %v947, %v976
    %v1018 = vadd.f32 %v948, %v976
    %v1019 = vadd.f32 %v949, %v976
    %v1020 = vadd.f32 %v950, %v976
    %v1021 = vadd.f32 %v951, %v976
    %v1022 = vadd.f32 %v952, %v976
    %v1023 = vadd.f32 %v953, %v976
    %v1024 = vadd.f32 %v954, %v976
    %v1025 = vadd.f32 %v955, %v976
    %v1026 = vadd.f32 %v956, %v976
    %v1027 = vadd.f32 %v957, %v976
    %v1028 = vadd.f32 %v958, %v976
    %v1029 = vadd.f32 %v959, %v976
    %v1030 = vadd.f32 %v960, %v976
    %v1031 = vadd.f32 %v961, %v976
    %v1032 = vadd.f32 %v962, %v976
    %v1033 = vadd.f32 %v963, %v976
    %v1034 = vadd.f32 %v964, %v976
    %v1035 = vadd.f32 %v965, %v976
    %v1036 = vadd.f32 %v966, %v976
    %v1037 = vadd.f32 %v967, %v976
    %v1038 = vadd.f32 %v968, %v976
    %v1039 = vadd.f32 %v969, %v976
    %v1040 = vadd.f32 %v970, %v976
    %v1041 = vadd.f32 %v971, %v976
    %v1042 = vmax.f32 %v978, 0.0
    %v1043 = vmax.f32 %v979, 0.0
    %v1044 = vmax.f32 %v980, 0.0
    %v1045 = vmax.f32 %v981, 0.0
    %v1046 = vmax.f32 %v982, 0.0
    %v1047 = vmax.f32 %v983, 0.0
    %v1048 = vmax.f32 %v984, 0.0
    %v1049 = vmax.f32 %v985, 0.0
    %v1050 = vmax.f32 %v986, 0.0
    %v1051 = vmax.f32 %v987, 0.0
    %v1052 = vmax.f32 %v988, 0.0
    %v1053 = vmax.f32 %v989, 0.0
    %v1054 = vmax.f32 %v990, 0.0
    %v1055 = vmax.f32 %v991, 0.0
    %v1056 = vmax.f32 %v992, 0.0
    %v1057 = vmax.f32 %v993, 0.0
    %v1058 = vmax.f32 %v994, 0.0
    %v1059 = vmax.f32 %v995, 0.0
    %v1060 = vmax.f32 %v996, 0.0
    %v1061 = vmax.f32 %v997, 0.0
    %v1062 = vmax.f32 %v998, 0.0
    %v1063 = vmax.f32 %v999, 0.0
    %v1064 = vmax.f32 %v1000, 0.0
    %v1065 = vmax.f32 %v1001, 0.0
    %v1066 = vmax.f32 %v1002, 0.0
    %v1067 = vmax.f32 %v1003, 0.0
    %v1068 = vmax.f32 %v1004, 0.0
    %v1069 = vmax.f32 %v1005, 0.0
    %v1070 = vmax.f32 %v1006, 0.0
    %v1071 = vmax.f32 %v1007, 0.0
    %v1072 = vmax.f32 %v1008, 0.0
    %v1073 = vmax.f32 %v1009, 0.0
    %v1074 = vmax.f32 %v1010, 0.0
    %v1075 = vmax.f32 %v1011, 0.0
    %v1076 = vmax.f32 %v1012, 0.0
    %v1077 = vmax.f32 %v1013, 0.0
    %v1078 = vmax.f32 %v1014, 0.0
    %v1079 = vmax.f32 %v1015, 0.0
    %v1080 = vmax.f32 %v1016, 0.0
    %v1081 = vmax.f32 %v1017, 0.0
    %v1082 = vmax.f32 %v1018, 0.0
    %v1083 = vmax.f32 %v1019, 0.0
    %v1084 = vmax.f32 %v1020, 0.0
    %v1085 = vmax.f32 %v1021, 0.0
    %v1086 = vmax.f32 %v1022, 0.0
    %v1087 = vmax.f32 %v1023, 0.0
    %v1088 = vmax.f32 %v1024, 0.0
    %v1089 = vmax.f32 %v1025, 0.0
    %v1090 = vmax.f32 %v1026, 0.0
    %v1091 = vmax.f32 %v1027, 0.0
    %v1092 = vmax.f32 %v1028, 0.0
    %v1093 = vmax.f32 %v1029, 0.0
    %v1094 = vmax.f32 %v1030, 0.0
    %v1095 = vmax.f32 %v1031, 0.0
    %v1096 = vmax.f32 %v1032, 0.0
    %v1097 = vmax.f32 %v1033, 0.0
    %v1098 = vmax.f32 %v1034, 0.0
    %v1099 = vmax.f32 %v1035, 0.0
    %v1100 = vmax.f32 %v1036, 0.0
    %v1101 = vmax.f32 %v1037, 0.0
    %v1102 = vmax.f32 %v1038, 0.0
    %v1103 = vmax.f32 %v1039, 0.0
    %v1104 = vmax.f32 %v1040, 0.0
    %v1105 = vmax.f32 %v1041, 0.0
    %v1106 = vpack.c.bf16 %v1043, %v1042
    %v1107 = vpack.c.bf16 %v1045, %v1044
    %v1108 = vpack.c.bf16 %v1047, %v1046
    %v1109 = vpack.c.bf16 %v1049, %v1048
    %v1110 = vpack.c.bf16 %v1051, %v1050
    %v1111 = vpack.c.bf16 %v1053, %v1052
    %v1112 = vpack.c.bf16 %v1055, %v1054
    %v1113 = vpack.c.bf16 %v1057, %v1056
    %v1114 = vpack.c.bf16 %v1059, %v1058
    %v1115 = vpack.c.bf16 %v1061, %v1060
    %v1116 = vpack.c.bf16 %v1063, %v1062
    %v1117 = vpack.c.bf16 %v1065, %v1064
    %v1118 = vpack.c.bf16 %v1067, %v1066
    %v1119 = vpack.c.bf16 %v1069, %v1068
    %v1120 = vpack.c.bf16 %v1071, %v1070
    %v1121 = vpack.c.bf16 %v1073, %v1072
    %v1122 = vpack.c.bf16 %v1075, %v1074
    %v1123 = vpack.c.bf16 %v1077, %v1076
    %v1124 = vpack.c.bf16 %v1079, %v1078
    %v1125 = vpack.c.bf16 %v1081, %v1080
    %v1126 = vpack.c.bf16 %v1083, %v1082
    %v1127 = vpack.c.bf16 %v1085, %v1084
    %v1128 = vpack.c.bf16 %v1087, %v1086
    %v1129 = vpack.c.bf16 %v1089, %v1088
    %v1130 = vpack.c.bf16 %v1091, %v1090
    %v1131 = vpack.c.bf16 %v1093, %v1092
    %v1132 = vpack.c.bf16 %v1095, %v1094
    %v1133 = vpack.c.bf16 %v1097, %v1096
    %v1134 = vpack.c.bf16 %v1099, %v1098
    %v1135 = vpack.c.bf16 %v1101, %v1100
    %v1136 = vpack.c.bf16 %v1103, %v1102
    %v1137 = vpack.c.bf16 %v1105, %v1104
    %v1168 = vunpack.c.l.b16 %v1106
    %v1169 = vunpack.c.h.b16 %v1106
    %v1170 = vunpack.c.l.b16 %v1107
    %v1171 = vunpack.c.h.b16 %v1107
    %v1172 = vunpack.c.l.b16 %v1108
    %v1173 = vunpack.c.h.b16 %v1108
    %v1174 = vunpack.c.l.b16 %v1109
    %v1175 = vunpack.c.h.b16 %v1109
    %v1176 = vunpack.c.l.b16 %v1110
    %v1177 = vunpack.c.h.b16 %v1110
    %v1178 = vunpack.c.l.b16 %v1111
    %v1179 = vunpack.c.h.b16 %v1111
    %v1180 = vunpack.c.l.b16 %v1112
    %v1181 = vunpack.c.h.b16 %v1112
    %v1182 = vunpack.c.l.b16 %v1113
    %v1183 = vunpack.c.h.b16 %v1113
    %v1184 = vunpack.c.l.b16 %v1114
    %v1185 = vunpack.c.h.b16 %v1114
    %v1186 = vunpack.c.l.b16 %v1115
    %v1187 = vunpack.c.h.b16 %v1115
    %v1188 = vunpack.c.l.b16 %v1116
    %v1189 = vunpack.c.h.b16 %v1116
    %v1190 = vunpack.c.l.b16 %v1117
    %v1191 = vunpack.c.h.b16 %v1117
    %v1192 = vunpack.c.l.b16 %v1118
    %v1193 = vunpack.c.h.b16 %v1118
    %v1194 = vunpack.c.l.b16 %v1119
    %v1195 = vunpack.c.h.b16 %v1119
    %v1196 = vunpack.c.l.b16 %v1120
    %v1197 = vunpack.c.h.b16 %v1120
    %v1198 = vunpack.c.l.b16 %v1122
    %v1199 = vunpack.c.h.b16 %v1122
    %v1200 = vunpack.c.l.b16 %v1123
    %v1201 = vunpack.c.h.b16 %v1123
    %v1202 = vunpack.c.l.b16 %v1124
    %v1203 = vunpack.c.h.b16 %v1124
    %v1204 = vunpack.c.l.b16 %v1125
    %v1205 = vunpack.c.h.b16 %v1125
    %v1206 = vunpack.c.l.b16 %v1126
    %v1207 = vunpack.c.h.b16 %v1126
    %v1208 = vunpack.c.l.b16 %v1127
    %v1209 = vunpack.c.h.b16 %v1127
    %v1210 = vunpack.c.l.b16 %v1128
    %v1211 = vunpack.c.h.b16 %v1128
    %v1212 = vunpack.c.l.b16 %v1129
    %v1213 = vunpack.c.h.b16 %v1129
    %v1214 = vunpack.c.l.b16 %v1130
    %v1215 = vunpack.c.h.b16 %v1130
    %v1216 = vunpack.c.l.b16 %v1131
    %v1217 = vunpack.c.h.b16 %v1131
    %v1218 = vunpack.c.l.b16 %v1132
    %v1219 = vunpack.c.h.b16 %v1132
    %v1220 = vunpack.c.l.b16 %v1133
    %v1221 = vunpack.c.h.b16 %v1133
    %v1222 = vunpack.c.l.b16 %v1134
    %v1223 = vunpack.c.h.b16 %v1134
    %v1224 = vunpack.c.l.b16 %v1135
    %v1225 = vunpack.c.h.b16 %v1135
    %v1226 = vunpack.c.l.b16 %v1136
    %v1227 = vunpack.c.h.b16 %v1136
    %v1228 = vpack.c.b16 %v1168, %v1168
    %v1229 = vpack.c.b16 %v1169, %v1169
    %v1230 = vpack.c.b16 %v1170, %v1170
    %v1231 = vpack.c.b16 %v1171, %v1171
    %v1232 = vpack.c.b16 %v1172, %v1172
    %v1233 = vpack.c.b16 %v1173, %v1173
    %v1234 = vpack.c.b16 %v1174, %v1174
    %v1235 = vpack.c.b16 %v1175, %v1175
    %v1236 = vpack.c.b16 %v1176, %v1176
    %v1237 = vpack.c.b16 %v1177, %v1177
    %v1238 = vpack.c.b16 %v1178, %v1178
    %v1239 = vpack.c.b16 %v1179, %v1179
    %v1240 = vpack.c.b16 %v1180, %v1180
    %v1241 = vpack.c.b16 %v1181, %v1181
    %v1242 = vpack.c.b16 %v1182, %v1182
    %v1243 = vpack.c.b16 %v1183, %v1183
    %v1244 = vpack.c.b16 %v1184, %v1184
    %v1245 = vpack.c.b16 %v1185, %v1185
    %v1246 = vpack.c.b16 %v1186, %v1186
    %v1247 = vpack.c.b16 %v1187, %v1187
    %v1248 = vpack.c.b16 %v1188, %v1188
    %v1249 = vpack.c.b16 %v1189, %v1189
    %v1250 = vpack.c.b16 %v1190, %v1190
    %v1251 = vpack.c.b16 %v1191, %v1191
    %v1252 = vpack.c.b16 %v1192, %v1192
    %v1253 = vpack.c.b16 %v1193, %v1193
    %v1254 = vpack.c.b16 %v1194, %v1194
    %v1255 = vpack.c.b16 %v1195, %v1195
    %v1256 = vpack.c.b16 %v1196, %v1196
    %v1257 = vpack.c.b16 %v1197, %v1197
    %v1258 = vpack.c.b16 %v1198, %v1198
    %v1259 = vpack.c.b16 %v1199, %v1199
    %v1260 = vpack.c.b16 %v1200, %v1200
    %v1261 = vpack.c.b16 %v1201, %v1201
    %v1262 = vpack.c.b16 %v1202, %v1202
    %v1263 = vpack.c.b16 %v1203, %v1203
    %v1264 = vpack.c.b16 %v1204, %v1204
    %v1265 = vpack.c.b16 %v1205, %v1205
    %v1266 = vpack.c.b16 %v1206, %v1206
    %v1267 = vpack.c.b16 %v1207, %v1207
    %v1268 = vpack.c.b16 %v1208, %v1208
    %v1269 = vpack.c.b16 %v1209, %v1209
    %v1270 = vpack.c.b16 %v1210, %v1210
    %v1271 = vpack.c.b16 %v1211, %v1211
    %v1272 = vpack.c.b16 %v1212, %v1212
    %v1273 = vpack.c.b16 %v1213, %v1213
    %v1274 = vpack.c.b16 %v1214, %v1214
    %v1275 = vpack.c.b16 %v1215, %v1215
    %v1276 = vpack.c.b16 %v1216, %v1216
    %v1277 = vpack.c.b16 %v1217, %v1217
    %v1278 = vpack.c.b16 %v1218, %v1218
    %v1279 = vpack.c.b16 %v1219, %v1219
    %v1280 = vpack.c.b16 %v1220, %v1220
    %v1281 = vpack.c.b16 %v1221, %v1221
    %v1282 = vpack.c.b16 %v1222, %v1222
    %v1283 = vpack.c.b16 %v1223, %v1223
    %v1284 = vpack.c.b16 %v1224, %v1224
    %v1285 = vpack.c.b16 %v1225, %v1225
    %v1286 = vpack.c.b16 %v1226, %v1226
    %v1287 = vpack.c.b16 %v1227, %v1227
    %vm1288 = vsmask.f32 256
    %vm1289 = vsmask.f32 4368
    %vm1290 = vmor %vm1288, %vm1289
    %v1292 = vshrl.u32 %v1228, 16
    %v1294 = vrot.slane %v1292, 7
    %v1295 = vshll.u32 %v1228, 16
    %v1297 = vor.u32 %v1294, %v1295
    %v1298 = vrot.slane %v1294, 4
    %v1300 = vshrl.u32 %v1229, 16
    %v1302 = vrot.slane %v1300, 7
    %v1303 = vshll.u32 %v1229, 16
    %v1305 = vor.u32 %v1302, %v1303
    %v1306 = vsel %vm1290, %v1298, %v1305
    %v1308 = vshrl.u32 %v1230, 16
    %v1310 = vrot.slane %v1308, 7
    %v1311 = vshll.u32 %v1230, 16
    %v1313 = vor.u32 %v1310, %v1311
    %v1314 = vrot.slane %v1310, 4
    %v1316 = vshrl.u32 %v1231, 16
    %v1318 = vrot.slane %v1316, 7
    %v1319 = vshll.u32 %v1231, 16
    %v1321 = vor.u32 %v1318, %v1319
    %v1322 = vsel %vm1290, %v1314, %v1321
    %v1324 = vshrl.u32 %v1232, 16
    %v1326 = vrot.slane %v1324, 7
    %v1327 = vshll.u32 %v1232, 16
    %v1329 = vor.u32 %v1326, %v1327
    %v1330 = vrot.slane %v1326, 4
    %v1332 = vshrl.u32 %v1233, 16
    %v1334 = vrot.slane %v1332, 7
    %v1335 = vshll.u32 %v1233, 16
    %v1337 = vor.u32 %v1334, %v1335
    %v1338 = vsel %vm1290, %v1330, %v1337
    %v1340 = vshrl.u32 %v1234, 16
    %v1342 = vrot.slane %v1340, 7
    %v1343 = vshll.u32 %v1234, 16
    %v1345 = vor.u32 %v1342, %v1343
    %v1346 = vrot.slane %v1342, 4
    %v1348 = vshrl.u32 %v1235, 16
    %v1350 = vrot.slane %v1348, 7
    %v1351 = vshll.u32 %v1235, 16
    %v1353 = vor.u32 %v1350, %v1351
    %v1354 = vsel %vm1290, %v1346, %v1353
    %v1356 = vshrl.u32 %v1236, 16
    %v1358 = vrot.slane %v1356, 7
    %v1359 = vshll.u32 %v1236, 16
    %v1361 = vor.u32 %v1358, %v1359
    %v1362 = vrot.slane %v1358, 4
    %v1364 = vshrl.u32 %v1237, 16
    %v1366 = vrot.slane %v1364, 7
    %v1367 = vshll.u32 %v1237, 16
    %v1369 = vor.u32 %v1366, %v1367
    %v1370 = vsel %vm1290, %v1362, %v1369
    %v1372 = vshrl.u32 %v1238, 16
    %v1374 = vrot.slane %v1372, 7
    %v1375 = vshll.u32 %v1238, 16
    %v1377 = vor.u32 %v1374, %v1375
    %v1378 = vrot.slane %v1374, 4
    %v1380 = vshrl.u32 %v1239, 16
    %v1382 = vrot.slane %v1380, 7
    %v1383 = vshll.u32 %v1239, 16
    %v1385 = vor.u32 %v1382, %v1383
    %v1386 = vsel %vm1290, %v1378, %v1385
    %v1388 = vshrl.u32 %v1240, 16
    %v1390 = vrot.slane %v1388, 7
    %v1391 = vshll.u32 %v1240, 16
    %v1393 = vor.u32 %v1390, %v1391
    %v1394 = vrot.slane %v1390, 4
    %v1396 = vshrl.u32 %v1241, 16
    %v1398 = vrot.slane %v1396, 7
    %v1399 = vshll.u32 %v1241, 16
    %v1401 = vor.u32 %v1398, %v1399
    %v1402 = vsel %vm1290, %v1394, %v1401
    %v1404 = vshrl.u32 %v1242, 16
    %v1406 = vrot.slane %v1404, 7
    %v1407 = vshll.u32 %v1242, 16
    %v1409 = vor.u32 %v1406, %v1407
    %v1410 = vrot.slane %v1406, 4
    %v1412 = vshrl.u32 %v1243, 16
    %v1414 = vrot.slane %v1412, 7
    %v1415 = vshll.u32 %v1243, 16
    %v1417 = vor.u32 %v1414, %v1415
    %v1418 = vsel %vm1290, %v1410, %v1417
    %v1420 = vshrl.u32 %v1244, 16
    %v1422 = vrot.slane %v1420, 7
    %v1423 = vshll.u32 %v1244, 16
    %v1425 = vor.u32 %v1422, %v1423
    %v1426 = vrot.slane %v1422, 4
    %v1428 = vshrl.u32 %v1245, 16
    %v1430 = vrot.slane %v1428, 7
    %v1431 = vshll.u32 %v1245, 16
    %v1433 = vor.u32 %v1430, %v1431
    %v1434 = vsel %vm1290, %v1426, %v1433
    %v1436 = vshrl.u32 %v1246, 16
    %v1438 = vrot.slane %v1436, 7
    %v1439 = vshll.u32 %v1246, 16
    %v1441 = vor.u32 %v1438, %v1439
    %v1442 = vrot.slane %v1438, 4
    %v1444 = vshrl.u32 %v1247, 16
    %v1446 = vrot.slane %v1444, 7
    %v1447 = vshll.u32 %v1247, 16
    %v1449 = vor.u32 %v1446, %v1447
    %v1450 = vsel %vm1290, %v1442, %v1449
    %v1452 = vshrl.u32 %v1248, 16
    %v1454 = vrot.slane %v1452, 7
    %v1455 = vshll.u32 %v1248, 16
    %v1457 = vor.u32 %v1454, %v1455
    %v1458 = vrot.slane %v1454, 4
    %v1460 = vshrl.u32 %v1249, 16
    %v1462 = vrot.slane %v1460, 7
    %v1463 = vshll.u32 %v1249, 16
    %v1465 = vor.u32 %v1462, %v1463
    %v1466 = vsel %vm1290, %v1458, %v1465
    %v1468 = vshrl.u32 %v1250, 16
    %v1470 = vrot.slane %v1468, 7
    %v1471 = vshll.u32 %v1250, 16
    %v1473 = vor.u32 %v1470, %v1471
    %v1474 = vrot.slane %v1470, 4
    %v1476 = vshrl.u32 %v1251, 16
    %v1478 = vrot.slane %v1476, 7
    %v1479 = vshll.u32 %v1251, 16
    %v1481 = vor.u32 %v1478, %v1479
    %v1482 = vsel %vm1290, %v1474, %v1481
    %v1484 = vshrl.u32 %v1252, 16
    %v1486 = vrot.slane %v1484, 7
    %v1487 = vshll.u32 %v1252, 16
    %v1489 = vor.u32 %v1486, %v1487
    %v1490 = vrot.slane %v1486, 4
    %v1492 = vshrl.u32 %v1253, 16
    %v1494 = vrot.slane %v1492, 7
    %v1495 = vshll.u32 %v1253, 16
    %v1497 = vor.u32 %v1494, %v1495
    %v1498 = vsel %vm1290, %v1490, %v1497
    %v1500 = vshrl.u32 %v1254, 16
    %v1502 = vrot.slane %v1500, 7
    %v1503 = vshll.u32 %v1254, 16
    %v1505 = vor.u32 %v1502, %v1503
    %v1506 = vrot.slane %v1502, 4
    %v1508 = vshrl.u32 %v1255, 16
    %v1510 = vrot.slane %v1508, 7
    %v1511 = vshll.u32 %v1255, 16
    %v1513 = vor.u32 %v1510, %v1511
    %v1514 = vsel %vm1290, %v1506, %v1513
    %v1516 = vshrl.u32 %v1256, 16
    %v1518 = vrot.slane %v1516, 7
    %v1519 = vshll.u32 %v1256, 16
    %v1521 = vor.u32 %v1518, %v1519
    %v1522 = vrot.slane %v1518, 4
    %v1524 = vshrl.u32 %v1257, 16
    %v1526 = vrot.slane %v1524, 7
    %v1527 = vshll.u32 %v1257, 16
    %v1529 = vor.u32 %v1526, %v1527
    %v1530 = vsel %vm1290, %v1522, %v1529
    %v1532 = vshrl.u32 %v1258, 16
    %v1534 = vrot.slane %v1532, 7
    %v1535 = vshll.u32 %v1258, 16
    %v1537 = vor.u32 %v1534, %v1535
    %v1538 = vrot.slane %v1534, 4
    %v1540 = vshrl.u32 %v1259, 16
    %v1542 = vrot.slane %v1540, 7
    %v1543 = vshll.u32 %v1259, 16
    %v1545 = vor.u32 %v1542, %v1543
    %v1546 = vsel %vm1290, %v1538, %v1545
    %v1548 = vshrl.u32 %v1260, 16
    %v1550 = vrot.slane %v1548, 7
    %v1551 = vshll.u32 %v1260, 16
    %v1553 = vor.u32 %v1550, %v1551
    %v1554 = vrot.slane %v1550, 4
    %v1556 = vshrl.u32 %v1261, 16
    %v1558 = vrot.slane %v1556, 7
    %v1559 = vshll.u32 %v1261, 16
    %v1561 = vor.u32 %v1558, %v1559
    %v1562 = vsel %vm1290, %v1554, %v1561
    %v1564 = vshrl.u32 %v1262, 16
    %v1566 = vrot.slane %v1564, 7
    %v1567 = vshll.u32 %v1262, 16
    %v1569 = vor.u32 %v1566, %v1567
    %v1570 = vrot.slane %v1566, 4
    %v1572 = vshrl.u32 %v1263, 16
    %v1574 = vrot.slane %v1572, 7
    %v1575 = vshll.u32 %v1263, 16
    %v1577 = vor.u32 %v1574, %v1575
    %v1578 = vsel %vm1290, %v1570, %v1577
    %v1580 = vshrl.u32 %v1264, 16
    %v1582 = vrot.slane %v1580, 7
    %v1583 = vshll.u32 %v1264, 16
    %v1585 = vor.u32 %v1582, %v1583
    %v1586 = vrot.slane %v1582, 4
    %v1588 = vshrl.u32 %v1265, 16
    %v1590 = vrot.slane %v1588, 7
    %v1591 = vshll.u32 %v1265, 16
    %v1593 = vor.u32 %v1590, %v1591
    %v1594 = vsel %vm1290, %v1586, %v1593
    %v1596 = vshrl.u32 %v1266, 16
    %v1598 = vrot.slane %v1596, 7
    %v1599 = vshll.u32 %v1266, 16
    %v1601 = vor.u32 %v1598, %v1599
    %v1602 = vrot.slane %v1598, 4
    %v1604 = vshrl.u32 %v1267, 16
    %v1606 = vrot.slane %v1604, 7
    %v1607 = vshll.u32 %v1267, 16
    %v1609 = vor.u32 %v1606, %v1607
    %v1610 = vsel %vm1290, %v1602, %v1609
    %v1612 = vshrl.u32 %v1268, 16
    %v1614 = vrot.slane %v1612, 7
    %v1615 = vshll.u32 %v1268, 16
    %v1617 = vor.u32 %v1614, %v1615
    %v1618 = vrot.slane %v1614, 4
    %v1620 = vshrl.u32 %v1269, 16
    %v1622 = vrot.slane %v1620, 7
    %v1623 = vshll.u32 %v1269, 16
    %v1625 = vor.u32 %v1622, %v1623
    %v1626 = vsel %vm1290, %v1618, %v1625
    %v1628 = vshrl.u32 %v1270, 16
    %v1630 = vrot.slane %v1628, 7
    %v1631 = vshll.u32 %v1270, 16
    %v1633 = vor.u32 %v1630, %v1631
    %v1634 = vrot.slane %v1630, 4
    %v1636 = vshrl.u32 %v1271, 16
    %v1638 = vrot.slane %v1636, 7
    %v1639 = vshll.u32 %v1271, 16
    %v1641 = vor.u32 %v1638, %v1639
    %v1642 = vsel %vm1290, %v1634, %v1641
    %v1644 = vshrl.u32 %v1272, 16
    %v1646 = vrot.slane %v1644, 7
    %v1647 = vshll.u32 %v1272, 16
    %v1649 = vor.u32 %v1646, %v1647
    %v1650 = vrot.slane %v1646, 4
    %v1652 = vshrl.u32 %v1273, 16
    %v1654 = vrot.slane %v1652, 7
    %v1655 = vshll.u32 %v1273, 16
    %v1657 = vor.u32 %v1654, %v1655
    %v1658 = vsel %vm1290, %v1650, %v1657
    %v1660 = vshrl.u32 %v1274, 16
    %v1662 = vrot.slane %v1660, 7
    %v1663 = vshll.u32 %v1274, 16
    %v1665 = vor.u32 %v1662, %v1663
    %v1666 = vrot.slane %v1662, 4
    %v1668 = vshrl.u32 %v1275, 16
    %v1670 = vrot.slane %v1668, 7
    %v1671 = vshll.u32 %v1275, 16
    %v1673 = vor.u32 %v1670, %v1671
    %v1674 = vsel %vm1290, %v1666, %v1673
    %v1676 = vshrl.u32 %v1276, 16
    %v1678 = vrot.slane %v1676, 7
    %v1679 = vshll.u32 %v1276, 16
    %v1681 = vor.u32 %v1678, %v1679
    %v1682 = vrot.slane %v1678, 4
    %v1684 = vshrl.u32 %v1277, 16
    %v1686 = vrot.slane %v1684, 7
    %v1687 = vshll.u32 %v1277, 16
    %v1689 = vor.u32 %v1686, %v1687
    %v1690 = vsel %vm1290, %v1682, %v1689
    %v1692 = vshrl.u32 %v1278, 16
    %v1694 = vrot.slane %v1692, 7
    %v1695 = vshll.u32 %v1278, 16
    %v1697 = vor.u32 %v1694, %v1695
    %v1698 = vrot.slane %v1694, 4
    %v1700 = vshrl.u32 %v1279, 16
    %v1702 = vrot.slane %v1700, 7
    %v1703 = vshll.u32 %v1279, 16
    %v1705 = vor.u32 %v1702, %v1703
    %v1706 = vsel %vm1290, %v1698, %v1705
    %v1708 = vshrl.u32 %v1280, 16
    %v1710 = vrot.slane %v1708, 7
    %v1711 = vshll.u32 %v1280, 16
    %v1713 = vor.u32 %v1710, %v1711
    %v1714 = vrot.slane %v1710, 4
    %v1716 = vshrl.u32 %v1281, 16
    %v1718 = vrot.slane %v1716, 7
    %v1719 = vshll.u32 %v1281, 16
    %v1721 = vor.u32 %v1718, %v1719
    %v1722 = vsel %vm1290, %v1714, %v1721
    %v1724 = vshrl.u32 %v1282, 16
    %v1726 = vrot.slane %v1724, 7
    %v1727 = vshll.u32 %v1282, 16
    %v1729 = vor.u32 %v1726, %v1727
    %v1730 = vrot.slane %v1726, 4
    %v1732 = vshrl.u32 %v1283, 16
    %v1734 = vrot.slane %v1732, 7
    %v1735 = vshll.u32 %v1283, 16
    %v1737 = vor.u32 %v1734, %v1735
    %v1738 = vsel %vm1290, %v1730, %v1737
    %v1740 = vshrl.u32 %v1284, 16
    %v1742 = vrot.slane %v1740, 7
    %v1743 = vshll.u32 %v1284, 16
    %v1745 = vor.u32 %v1742, %v1743
    %v1746 = vrot.slane %v1742, 4
    %v1748 = vshrl.u32 %v1285, 16
    %v1750 = vrot.slane %v1748, 7
    %v1751 = vshll.u32 %v1285, 16
    %v1753 = vor.u32 %v1750, %v1751
    %v1754 = vsel %vm1290, %v1746, %v1753
    %v1756 = vshrl.u32 %v1286, 16
    %v1758 = vrot.slane %v1756, 7
    %v1759 = vshll.u32 %v1286, 16
    %v1761 = vor.u32 %v1758, %v1759
    %v1762 = vrot.slane %v1758, 4
    %v1764 = vshrl.u32 %v1287, 16
    %v1766 = vrot.slane %v1764, 7
    %v1767 = vshll.u32 %v1287, 16
    %v1769 = vor.u32 %v1766, %v1767
    %v1770 = vsel %vm1290, %v1762, %v1769
    %s1831 = scalar_lea.vmem [#allocation2], 24
    %vm1832 = vcmask 257024
    %vm1833 = vsmask.f32 7938
    %vm1834 = vmand %vm1832, %vm1833
    %v1835 = vld [vmem:[%s1831] sm:$0xf]
    %v1836 = vsel %vm1834, %v1297, %v1835
    %1837 = vst [vmem:[%s1831] sm:$0xf] %v1836
    %vm1838 = vcmask 257024
    %1839 = vst.msk [vmem:[%s1831 + $0xc] sm:$0xf] %vm1838, %v1306
    %v1840 = vld [vmem:[%s1831 + $0x18] sm:$0xf]
    %v1841 = vsel %vm1834, %v1313, %v1840
    %1842 = vst [vmem:[%s1831 + $0x18] sm:$0xf] %v1841
    %1843 = vst.msk [vmem:[%s1831 + $0x24] sm:$0xf] %vm1838, %v1322
    %v1844 = vld [vmem:[%s1831 + $0x30] sm:$0xf]
    %v1845 = vsel %vm1834, %v1329, %v1844
    %1846 = vst [vmem:[%s1831 + $0x30] sm:$0xf] %v1845
    %1847 = vst.msk [vmem:[%s1831 + $0x3c] sm:$0xf] %vm1838, %v1338
    %v1848 = vld [vmem:[%s1831 + $0x48] sm:$0xf]
    %v1849 = vsel %vm1834, %v1345, %v1848
    %1850 = vst [vmem:[%s1831 + $0x48] sm:$0xf] %v1849
    %1851 = vst.msk [vmem:[%s1831 + $0x54] sm:$0xf] %vm1838, %v1354
    %v1852 = vld [vmem:[%s1831 + $0x60] sm:$0xf]
    %v1853 = vsel %vm1834, %v1361, %v1852
    %1854 = vst [vmem:[%s1831 + $0x60] sm:$0xf] %v1853
    %1855 = vst.msk [vmem:[%s1831 + $0x6c] sm:$0xf] %vm1838, %v1370
    %v1856 = vld [vmem:[%s1831 + $0x78] sm:$0xf]
    %v1857 = vsel %vm1834, %v1377, %v1856
    %1858 = vst [vmem:[%s1831 + $0x78] sm:$0xf] %v1857
    %1859 = vst.msk [vmem:[%s1831 + $0x84] sm:$0xf] %vm1838, %v1386
    %v1860 = vld [vmem:[%s1831 + $0x90] sm:$0xf]
    %v1861 = vsel %vm1834, %v1393, %v1860
    %1862 = vst [vmem:[%s1831 + $0x90] sm:$0xf] %v1861
    %1863 = vst.msk [vmem:[%s1831 + $0x9c] sm:$0xf] %vm1838, %v1402
    %v1864 = vld [vmem:[%s1831 + $0xa8] sm:$0xf]
    %v1865 = vsel %vm1834, %v1409, %v1864
    %1866 = vst [vmem:[%s1831 + $0xa8] sm:$0xf] %v1865
    %1867 = vst.msk [vmem:[%s1831 + $0xb4] sm:$0xf] %vm1838, %v1418
    %v1868 = vld [vmem:[%s1831 + $0xc0] sm:$0xf]
    %v1869 = vsel %vm1834, %v1425, %v1868
    %1870 = vst [vmem:[%s1831 + $0xc0] sm:$0xf] %v1869
    %1871 = vst.msk [vmem:[%s1831 + $0xcc] sm:$0xf] %vm1838, %v1434
    %v1872 = vld [vmem:[%s1831 + $0xd8] sm:$0xf]
    %v1873 = vsel %vm1834, %v1441, %v1872
    %1874 = vst [vmem:[%s1831 + $0xd8] sm:$0xf] %v1873
    %1875 = vst.msk [vmem:[%s1831 + $0xe4] sm:$0xf] %vm1838, %v1450
    %v1876 = vld [vmem:[%s1831 + $0xf0] sm:$0xf]
    %v1877 = vsel %vm1834, %v1457, %v1876
    %1878 = vst [vmem:[%s1831 + $0xf0] sm:$0xf] %v1877
    %1879 = vst.msk [vmem:[%s1831 + $0xfc] sm:$0xf] %vm1838, %v1466
    %v1880 = vld [vmem:[%s1831 + $0x108] sm:$0xf]
    %v1881 = vsel %vm1834, %v1473, %v1880
    %1882 = vst [vmem:[%s1831 + $0x108] sm:$0xf] %v1881
    %1883 = vst.msk [vmem:[%s1831 + $0x114] sm:$0xf] %vm1838, %v1482
    %v1884 = vld [vmem:[%s1831 + $0x120] sm:$0xf]
    %v1885 = vsel %vm1834, %v1489, %v1884
    %1886 = vst [vmem:[%s1831 + $0x120] sm:$0xf] %v1885
    %1887 = vst.msk [vmem:[%s1831 + $0x12c] sm:$0xf] %vm1838, %v1498
    %v1888 = vld [vmem:[%s1831 + $0x138] sm:$0xf]
    %v1889 = vsel %vm1834, %v1505, %v1888
    %1890 = vst [vmem:[%s1831 + $0x138] sm:$0xf] %v1889
    %1891 = vst.msk [vmem:[%s1831 + $0x144] sm:$0xf] %vm1838, %v1514
    %v1892 = vld [vmem:[%s1831 + $0x150] sm:$0xf]
    %v1893 = vsel %vm1834, %v1521, %v1892
    %1894 = vst [vmem:[%s1831 + $0x150] sm:$0xf] %v1893
    %1895 = vst.msk [vmem:[%s1831 + $0x15c] sm:$0xf] %vm1838, %v1530
    %v1896 = vld [vmem:[%s1831 + $0x180] sm:$0xf]
    %v1897 = vsel %vm1834, %v1537, %v1896
    %1898 = vst [vmem:[%s1831 + $0x180] sm:$0xf] %v1897
    %1899 = vst.msk [vmem:[%s1831 + $0x18c] sm:$0xf] %vm1838, %v1546
    %v1900 = vld [vmem:[%s1831 + $0x198] sm:$0xf]
    %v1901 = vsel %vm1834, %v1553, %v1900
    %1902 = vst [vmem:[%s1831 + $0x198] sm:$0xf] %v1901
    %1903 = vst.msk [vmem:[%s1831 + $0x1a4] sm:$0xf] %vm1838, %v1562
    %v1904 = vld [vmem:[%s1831 + $0x1b0] sm:$0xf]
    %v1905 = vsel %vm1834, %v1569, %v1904
    %1906 = vst [vmem:[%s1831 + $0x1b0] sm:$0xf] %v1905
    %1907 = vst.msk [vmem:[%s1831 + $0x1bc] sm:$0xf] %vm1838, %v1578
    %v1908 = vld [vmem:[%s1831 + $0x1c8] sm:$0xf]
    %v1909 = vsel %vm1834, %v1585, %v1908
    %1910 = vst [vmem:[%s1831 + $0x1c8] sm:$0xf] %v1909
    %1911 = vst.msk [vmem:[%s1831 + $0x1d4] sm:$0xf] %vm1838, %v1594
    %v1912 = vld [vmem:[%s1831 + $0x1e0] sm:$0xf]
    %v1913 = vsel %vm1834, %v1601, %v1912
    %1914 = vst [vmem:[%s1831 + $0x1e0] sm:$0xf] %v1913
    %1915 = vst.msk [vmem:[%s1831 + $0x1ec] sm:$0xf] %vm1838, %v1610
    %v1916 = vld [vmem:[%s1831 + $0x1f8] sm:$0xf]
    %v1917 = vsel %vm1834, %v1617, %v1916
    %1918 = vst [vmem:[%s1831 + $0x1f8] sm:$0xf] %v1917
    %1919 = vst.msk [vmem:[%s1831 + $0x204] sm:$0xf] %vm1838, %v1626
    %v1920 = vld [vmem:[%s1831 + $0x210] sm:$0xf]
    %v1921 = vsel %vm1834, %v1633, %v1920
    %1922 = vst [vmem:[%s1831 + $0x210] sm:$0xf] %v1921
    %1923 = vst.msk [vmem:[%s1831 + $0x21c] sm:$0xf] %vm1838, %v1642
    %v1924 = vld [vmem:[%s1831 + $0x228] sm:$0xf]
    %v1925 = vsel %vm1834, %v1649, %v1924
    %1926 = vst [vmem:[%s1831 + $0x228] sm:$0xf] %v1925
    %1927 = vst.msk [vmem:[%s1831 + $0x234] sm:$0xf] %vm1838, %v1658
    %v1928 = vld [vmem:[%s1831 + $0x240] sm:$0xf]
    %v1929 = vsel %vm1834, %v1665, %v1928
    %1930 = vst [vmem:[%s1831 + $0x240] sm:$0xf] %v1929
    %1931 = vst.msk [vmem:[%s1831 + $0x24c] sm:$0xf] %vm1838, %v1674
    %v1932 = vld [vmem:[%s1831 + $0x258] sm:$0xf]
    %v1933 = vsel %vm1834, %v1681, %v1932
    %1934 = vst [vmem:[%s1831 + $0x258] sm:$0xf] %v1933
    %1935 = vst.msk [vmem:[%s1831 + $0x264] sm:$0xf] %vm1838, %v1690
    %v1936 = vld [vmem:[%s1831 + $0x270] sm:$0xf]
    %v1937 = vsel %vm1834, %v1697, %v1936
    %1938 = vst [vmem:[%s1831 + $0x270] sm:$0xf] %v1937
    %1939 = vst.msk [vmem:[%s1831 + $0x27c] sm:$0xf] %vm1838, %v1706
    %v1940 = vld [vmem:[%s1831 + $0x288] sm:$0xf]
    %v1941 = vsel %vm1834, %v1713, %v1940
    %1942 = vst [vmem:[%s1831 + $0x288] sm:$0xf] %v1941
    %1943 = vst.msk [vmem:[%s1831 + $0x294] sm:$0xf] %vm1838, %v1722
    %v1944 = vld [vmem:[%s1831 + $0x2a0] sm:$0xf]
    %v1945 = vsel %vm1834, %v1729, %v1944
    %1946 = vst [vmem:[%s1831 + $0x2a0] sm:$0xf] %v1945
    %1947 = vst.msk [vmem:[%s1831 + $0x2ac] sm:$0xf] %vm1838, %v1738
    %v1948 = vld [vmem:[%s1831 + $0x2b8] sm:$0xf]
    %v1949 = vsel %vm1834, %v1745, %v1948
    %1950 = vst [vmem:[%s1831 + $0x2b8] sm:$0xf] %v1949
    %1951 = vst.msk [vmem:[%s1831 + $0x2c4] sm:$0xf] %vm1838, %v1754
    %v1952 = vld [vmem:[%s1831 + $0x2d0] sm:$0xf]
    %v1953 = vsel %vm1834, %v1761, %v1952
    %1954 = vst [vmem:[%s1831 + $0x2d0] sm:$0xf] %v1953
    %1955 = vst.msk [vmem:[%s1831 + $0x2dc] sm:$0xf] %vm1838, %v1770
    %1956 = vst.msk [vmem:[#allocation2] sm:$0xf] %vm1838, 0
    %1957 = vst.msk [vmem:[#allocation2 + $0xc] sm:$0xf] %vm1838, 0
    %1958 = vst.msk [vmem:[#allocation2 + $0x180] sm:$0xf] %vm1838, 0
    %1959 = vst.msk [vmem:[#allocation2 + $0x18c] sm:$0xf] %vm1838, 0
    %vm1960 = vcmask 253952
    %vm1961 = vmand %vm1960, %vm1288
    %v1962 = vld [vmem:[#allocation2] sm:$0x1]
    %v1963 = vsel %vm1961, 0, %v1962
    %1964 = vst [vmem:[#allocation2] sm:$0x1] %v1963
    %v1965 = vld [vmem:[#allocation2 + $0x18] sm:$0x1]
    %v1966 = vsel %vm1961, 0, %v1965
    %1967 = vst [vmem:[#allocation2 + $0x18] sm:$0x1] %v1966
    %v1968 = vld [vmem:[#allocation2 + $0x30] sm:$0x1]
    %v1969 = vsel %vm1961, 0, %v1968
    %1970 = vst [vmem:[#allocation2 + $0x30] sm:$0x1] %v1969
    %v1971 = vld [vmem:[#allocation2 + $0x48] sm:$0x1]
    %v1972 = vsel %vm1961, 0, %v1971
    %1973 = vst [vmem:[#allocation2 + $0x48] sm:$0x1] %v1972
    %v1974 = vld [vmem:[#allocation2 + $0x60] sm:$0x1]
    %v1975 = vsel %vm1961, 0, %v1974
    %1976 = vst [vmem:[#allocation2 + $0x60] sm:$0x1] %v1975
    %v1977 = vld [vmem:[#allocation2 + $0x78] sm:$0x1]
    %v1978 = vsel %vm1961, 0, %v1977
    %1979 = vst [vmem:[#allocation2 + $0x78] sm:$0x1] %v1978
    %v1980 = vld [vmem:[#allocation2 + $0x90] sm:$0x1]
    %v1981 = vsel %vm1961, 0, %v1980
    %1982 = vst [vmem:[#allocation2 + $0x90] sm:$0x1] %v1981
    %v1983 = vld [vmem:[#allocation2 + $0xa8] sm:$0x1]
    %v1984 = vsel %vm1961, 0, %v1983
    %1985 = vst [vmem:[#allocation2 + $0xa8] sm:$0x1] %v1984
    %v1986 = vld [vmem:[#allocation2 + $0xc0] sm:$0x1]
    %v1987 = vsel %vm1961, 0, %v1986
    %1988 = vst [vmem:[#allocation2 + $0xc0] sm:$0x1] %v1987
    %v1989 = vld [vmem:[#allocation2 + $0xd8] sm:$0x1]
    %v1990 = vsel %vm1961, 0, %v1989
    %1991 = vst [vmem:[#allocation2 + $0xd8] sm:$0x1] %v1990
    %v1992 = vld [vmem:[#allocation2 + $0xf0] sm:$0x1]
    %v1993 = vsel %vm1961, 0, %v1992
    %1994 = vst [vmem:[#allocation2 + $0xf0] sm:$0x1] %v1993
    %v1995 = vld [vmem:[#allocation2 + $0x108] sm:$0x1]
    %v1996 = vsel %vm1961, 0, %v1995
    %1997 = vst [vmem:[#allocation2 + $0x108] sm:$0x1] %v1996
    %v1998 = vld [vmem:[#allocation2 + $0x120] sm:$0x1]
    %v1999 = vsel %vm1961, 0, %v1998
    %2000 = vst [vmem:[#allocation2 + $0x120] sm:$0x1] %v1999
    %v2001 = vld [vmem:[#allocation2 + $0x138] sm:$0x1]
    %v2002 = vsel %vm1961, 0, %v2001
    %2003 = vst [vmem:[#allocation2 + $0x138] sm:$0x1] %v2002
    %v2004 = vld [vmem:[#allocation2 + $0x150] sm:$0x1]
    %v2005 = vsel %vm1961, 0, %v2004
    %2006 = vst [vmem:[#allocation2 + $0x150] sm:$0x1] %v2005
    %v2007 = vld [vmem:[#allocation2 + $0x168] sm:$0x1]
    %v2008 = vsel %vm1961, 0, %v2007
    %2009 = vst [vmem:[#allocation2 + $0x168] sm:$0x1] %v2008
    %v2010 = vld [vmem:[#allocation2 + $0x180] sm:$0x1]
    %v2011 = vsel %vm1961, 0, %v2010
    %2012 = vst [vmem:[#allocation2 + $0x180] sm:$0x1] %v2011
    %v2013 = vld [vmem:[#allocation2 + $0x198] sm:$0x1]
    %v2014 = vsel %vm1961, 0, %v2013
    %2015 = vst [vmem:[#allocation2 + $0x198] sm:$0x1] %v2014
    %v2016 = vld [vmem:[#allocation2 + $0x1b0] sm:$0x1]
    %v2017 = vsel %vm1961, 0, %v2016
    %2018 = vst [vmem:[#allocation2 + $0x1b0] sm:$0x1] %v2017
    %v2019 = vld [vmem:[#allocation2 + $0x1c8] sm:$0x1]
    %v2020 = vsel %vm1961, 0, %v2019
    %2021 = vst [vmem:[#allocation2 + $0x1c8] sm:$0x1] %v2020
    %v2022 = vld [vmem:[#allocation2 + $0x1e0] sm:$0x1]
    %v2023 = vsel %vm1961, 0, %v2022
    %2024 = vst [vmem:[#allocation2 + $0x1e0] sm:$0x1] %v2023
    %v2025 = vld [vmem:[#allocation2 + $0x1f8] sm:$0x1]
    %v2026 = vsel %vm1961, 0, %v2025
    %2027 = vst [vmem:[#allocation2 + $0x1f8] sm:$0x1] %v2026
    %v2028 = vld [vmem:[#allocation2 + $0x210] sm:$0x1]
    %v2029 = vsel %vm1961, 0, %v2028
    %2030 = vst [vmem:[#allocation2 + $0x210] sm:$0x1] %v2029
    %v2031 = vld [vmem:[#allocation2 + $0x228] sm:$0x1]
    %v2032 = vsel %vm1961, 0, %v2031
    %2033 = vst [vmem:[#allocation2 + $0x228] sm:$0x1] %v2032
    %v2034 = vld [vmem:[#allocation2 + $0x240] sm:$0x1]
    %v2035 = vsel %vm1961, 0, %v2034
    %2036 = vst [vmem:[#allocation2 + $0x240] sm:$0x1] %v2035
    %v2037 = vld [vmem:[#allocation2 + $0x258] sm:$0x1]
    %v2038 = vsel %vm1961, 0, %v2037
    %2039 = vst [vmem:[#allocation2 + $0x258] sm:$0x1] %v2038
    %v2040 = vld [vmem:[#allocation2 + $0x270] sm:$0x1]
    %v2041 = vsel %vm1961, 0, %v2040
    %2042 = vst [vmem:[#allocation2 + $0x270] sm:$0x1] %v2041
    %v2043 = vld [vmem:[#allocation2 + $0x288] sm:$0x1]
    %v2044 = vsel %vm1961, 0, %v2043
    %2045 = vst [vmem:[#allocation2 + $0x288] sm:$0x1] %v2044
    %v2046 = vld [vmem:[#allocation2 + $0x2a0] sm:$0x1]
    %v2047 = vsel %vm1961, 0, %v2046
    %2048 = vst [vmem:[#allocation2 + $0x2a0] sm:$0x1] %v2047
    %v2049 = vld [vmem:[#allocation2 + $0x2b8] sm:$0x1]
    %v2050 = vsel %vm1961, 0, %v2049
    %2051 = vst [vmem:[#allocation2 + $0x2b8] sm:$0x1] %v2050
    %v2052 = vld [vmem:[#allocation2 + $0x2d0] sm:$0x1]
    %v2053 = vsel %vm1961, 0, %v2052
    %2054 = vst [vmem:[#allocation2 + $0x2d0] sm:$0x1] %v2053
    %v2055 = vld [vmem:[#allocation2 + $0x2e8] sm:$0x1]
    %v2056 = vsel %vm1961, 0, %v2055
    %2057 = vst [vmem:[#allocation2 + $0x2e8] sm:$0x1] %v2056
    %2058 = vrot.lane.b32.xlu0 %v1228, 32
    %v2059 = vpop.permute.xlu0 %2058
    %2060 = vrot.lane.b32.xlu0 %v1229, 32
    %v2061 = vpop.permute.xlu0 %2060
    %2062 = vrot.lane.b32.xlu0 %v1230, 32
    %v2063 = vpop.permute.xlu0 %2062
    %2064 = vrot.lane.b32.xlu0 %v1231, 32
    %v2065 = vpop.permute.xlu0 %2064
    %2066 = vrot.lane.b32.xlu0 %v1232, 32
    %v2067 = vpop.permute.xlu0 %2066
    %2068 = vrot.lane.b32.xlu0 %v1233, 32
    %v2069 = vpop.permute.xlu0 %2068
    %2070 = vrot.lane.b32.xlu0 %v1234, 32
    %v2071 = vpop.permute.xlu0 %2070
    %2072 = vrot.lane.b32.xlu0 %v1235, 32
    %v2073 = vpop.permute.xlu0 %2072
    %2074 = vrot.lane.b32.xlu0 %v1236, 32
    %v2075 = vpop.permute.xlu0 %2074
    %2076 = vrot.lane.b32.xlu0 %v1237, 32
    %v2077 = vpop.permute.xlu0 %2076
    %2078 = vrot.lane.b32.xlu0 %v1238, 32
    %v2079 = vpop.permute.xlu0 %2078
    %2080 = vrot.lane.b32.xlu0 %v1239, 32
    %v2081 = vpop.permute.xlu0 %2080
    %2082 = vrot.lane.b32.xlu0 %v1240, 32
    %v2083 = vpop.permute.xlu0 %2082
    %2084 = vrot.lane.b32.xlu0 %v1241, 32
    %v2085 = vpop.permute.xlu0 %2084
    %2086 = vrot.lane.b32.xlu0 %v1242, 32
    %v2087 = vpop.permute.xlu0 %2086
    %2088 = vrot.lane.b32.xlu0 %v1243, 32
    %v2089 = vpop.permute.xlu0 %2088
    %2090 = vrot.lane.b32.xlu0 %v1244, 32
    %v2091 = vpop.permute.xlu0 %2090
    %2092 = vrot.lane.b32.xlu0 %v1245, 32
    %v2093 = vpop.permute.xlu0 %2092
    %2094 = vrot.lane.b32.xlu0 %v1246, 32
    %v2095 = vpop.permute.xlu0 %2094
    %2096 = vrot.lane.b32.xlu0 %v1247, 32
    %v2097 = vpop.permute.xlu0 %2096
    %2098 = vrot.lane.b32.xlu0 %v1248, 32
    %v2099 = vpop.permute.xlu0 %2098
    %2100 = vrot.lane.b32.xlu0 %v1249, 32
    %v2101 = vpop.permute.xlu0 %2100
    %2102 = vrot.lane.b32.xlu0 %v1250, 32
    %v2103 = vpop.permute.xlu0 %2102
    %2104 = vrot.lane.b32.xlu0 %v1251, 32
    %v2105 = vpop.permute.xlu0 %2104
    %2106 = vrot.lane.b32.xlu0 %v1252, 32
    %v2107 = vpop.permute.xlu0 %2106
    %2108 = vrot.lane.b32.xlu0 %v1253, 32
    %v2109 = vpop.permute.xlu0 %2108
    %2110 = vrot.lane.b32.xlu0 %v1254, 32
    %v2111 = vpop.permute.xlu0 %2110
    %2112 = vrot.lane.b32.xlu0 %v1255, 32
    %v2113 = vpop.permute.xlu0 %2112
    %2114 = vrot.lane.b32.xlu0 %v1256, 32
    %v2115 = vpop.permute.xlu0 %2114
    %2116 = vrot.lane.b32.xlu0 %v1257, 32
    %v2117 = vpop.permute.xlu0 %2116
    %2118 = vrot.lane.b32.xlu0 %v1258, 32
    %v2119 = vpop.permute.xlu0 %2118
    %2120 = vrot.lane.b32.xlu0 %v1259, 32
    %v2121 = vpop.permute.xlu0 %2120
    %2122 = vrot.lane.b32.xlu0 %v1260, 32
    %v2123 = vpop.permute.xlu0 %2122
    %2124 = vrot.lane.b32.xlu0 %v1261, 32
    %v2125 = vpop.permute.xlu0 %2124
    %2126 = vrot.lane.b32.xlu0 %v1262, 32
    %v2127 = vpop.permute.xlu0 %2126
    %2128 = vrot.lane.b32.xlu0 %v1263, 32
    %v2129 = vpop.permute.xlu0 %2128
    %2130 = vrot.lane.b32.xlu0 %v1264, 32
    %v2131 = vpop.permute.xlu0 %2130
    %2132 = vrot.lane.b32.xlu0 %v1265, 32
    %v2133 = vpop.permute.xlu0 %2132
    %2134 = vrot.lane.b32.xlu0 %v1266, 32
    %v2135 = vpop.permute.xlu0 %2134
    %2136 = vrot.lane.b32.xlu0 %v1267, 32
    %v2137 = vpop.permute.xlu0 %2136
    %2138 = vrot.lane.b32.xlu0 %v1268, 32
    %v2139 = vpop.permute.xlu0 %2138
    %2140 = vrot.lane.b32.xlu0 %v1269, 32
    %v2141 = vpop.permute.xlu0 %2140
    %2142 = vrot.lane.b32.xlu0 %v1270, 32
    %v2143 = vpop.permute.xlu0 %2142
    %2144 = vrot.lane.b32.xlu0 %v1271, 32
    %v2145 = vpop.permute.xlu0 %2144
    %2146 = vrot.lane.b32.xlu0 %v1272, 32
    %v2147 = vpop.permute.xlu0 %2146
    %2148 = vrot.lane.b32.xlu0 %v1273, 32
    %v2149 = vpop.permute.xlu0 %2148
    %2150 = vrot.lane.b32.xlu0 %v1274, 32
    %v2151 = vpop.permute.xlu0 %2150
    %2152 = vrot.lane.b32.xlu0 %v1275, 32
    %v2153 = vpop.permute.xlu0 %2152
    %2154 = vrot.lane.b32.xlu0 %v1276, 32
    %v2155 = vpop.permute.xlu0 %2154
    %2156 = vrot.lane.b32.xlu0 %v1277, 32
    %v2157 = vpop.permute.xlu0 %2156
    %2158 = vrot.lane.b32.xlu0 %v1278, 32
    %v2159 = vpop.permute.xlu0 %2158
    %2160 = vrot.lane.b32.xlu0 %v1279, 32
    %v2161 = vpop.permute.xlu0 %2160
    %2162 = vrot.lane.b32.xlu0 %v1280, 32
    %v2163 = vpop.permute.xlu0 %2162
    %2164 = vrot.lane.b32.xlu0 %v1281, 32
    %v2165 = vpop.permute.xlu0 %2164
    %2166 = vrot.lane.b32.xlu0 %v1282, 32
    %v2167 = vpop.permute.xlu0 %2166
    %2168 = vrot.lane.b32.xlu0 %v1283, 32
    %v2169 = vpop.permute.xlu0 %2168
    %2170 = vrot.lane.b32.xlu0 %v1284, 32
    %v2171 = vpop.permute.xlu0 %2170
    %2172 = vrot.lane.b32.xlu0 %v1285, 32
    %v2173 = vpop.permute.xlu0 %2172
    %2174 = vrot.lane.b32.xlu0 %v1286, 32
    %v2175 = vpop.permute.xlu0 %2174
    %2176 = vrot.lane.b32.xlu0 %v1287, 32
    %v2177 = vpop.permute.xlu0 %2176
    %vm2238 = vcmask 519424
    %2239 = vst.msk [vmem:[%s1831] sm:$0xf] %vm2238, %v2059
    %2240 = vst.msk [vmem:[%s1831 + $0xc] sm:$0xf] %vm2238, %v2061
    %2241 = vst.msk [vmem:[%s1831 + $0x18] sm:$0xf] %vm2238, %v2063
    %2242 = vst.msk [vmem:[%s1831 + $0x24] sm:$0xf] %vm2238, %v2065
    %2243 = vst.msk [vmem:[%s1831 + $0x30] sm:$0xf] %vm2238, %v2067
    %2244 = vst.msk [vmem:[%s1831 + $0x3c] sm:$0xf] %vm2238, %v2069
    %2245 = vst.msk [vmem:[%s1831 + $0x48] sm:$0xf] %vm2238, %v2071
    %2246 = vst.msk [vmem:[%s1831 + $0x54] sm:$0xf] %vm2238, %v2073
    %2247 = vst.msk [vmem:[%s1831 + $0x60] sm:$0xf] %vm2238, %v2075
    %2248 = vst.msk [vmem:[%s1831 + $0x6c] sm:$0xf] %vm2238, %v2077
    %2249 = vst.msk [vmem:[%s1831 + $0x78] sm:$0xf] %vm2238, %v2079
    %2250 = vst.msk [vmem:[%s1831 + $0x84] sm:$0xf] %vm2238, %v2081
    %2251 = vst.msk [vmem:[%s1831 + $0x90] sm:$0xf] %vm2238, %v2083
    %2252 = vst.msk [vmem:[%s1831 + $0x9c] sm:$0xf] %vm2238, %v2085
    %2253 = vst.msk [vmem:[%s1831 + $0xa8] sm:$0xf] %vm2238, %v2087
    %2254 = vst.msk [vmem:[%s1831 + $0xb4] sm:$0xf] %vm2238, %v2089
    %2255 = vst.msk [vmem:[%s1831 + $0xc0] sm:$0xf] %vm2238, %v2091
    %2256 = vst.msk [vmem:[%s1831 + $0xcc] sm:$0xf] %vm2238, %v2093
    %2257 = vst.msk [vmem:[%s1831 + $0xd8] sm:$0xf] %vm2238, %v2095
    %2258 = vst.msk [vmem:[%s1831 + $0xe4] sm:$0xf] %vm2238, %v2097
    %2259 = vst.msk [vmem:[%s1831 + $0xf0] sm:$0xf] %vm2238, %v2099
    %2260 = vst.msk [vmem:[%s1831 + $0xfc] sm:$0xf] %vm2238, %v2101
    %2261 = vst.msk [vmem:[%s1831 + $0x108] sm:$0xf] %vm2238, %v2103
    %2262 = vst.msk [vmem:[%s1831 + $0x114] sm:$0xf] %vm2238, %v2105
    %2263 = vst.msk [vmem:[%s1831 + $0x120] sm:$0xf] %vm2238, %v2107
    %2264 = vst.msk [vmem:[%s1831 + $0x12c] sm:$0xf] %vm2238, %v2109
    %2265 = vst.msk [vmem:[%s1831 + $0x138] sm:$0xf] %vm2238, %v2111
    %2266 = vst.msk [vmem:[%s1831 + $0x144] sm:$0xf] %vm2238, %v2113
    %2267 = vst.msk [vmem:[%s1831 + $0x150] sm:$0xf] %vm2238, %v2115
    %2268 = vst.msk [vmem:[%s1831 + $0x15c] sm:$0xf] %vm2238, %v2117
    %2269 = vst.msk [vmem:[%s1831 + $0x180] sm:$0xf] %vm2238, %v2119
    %2270 = vst.msk [vmem:[%s1831 + $0x18c] sm:$0xf] %vm2238, %v2121
    %2271 = vst.msk [vmem:[%s1831 + $0x198] sm:$0xf] %vm2238, %v2123
    %2272 = vst.msk [vmem:[%s1831 + $0x1a4] sm:$0xf] %vm2238, %v2125
    %2273 = vst.msk [vmem:[%s1831 + $0x1b0] sm:$0xf] %vm2238, %v2127
    %2274 = vst.msk [vmem:[%s1831 + $0x1bc] sm:$0xf] %vm2238, %v2129
    %2275 = vst.msk [vmem:[%s1831 + $0x1c8] sm:$0xf] %vm2238, %v2131
    %2276 = vst.msk [vmem:[%s1831 + $0x1d4] sm:$0xf] %vm2238, %v2133
    %2277 = vst.msk [vmem:[%s1831 + $0x1e0] sm:$0xf] %vm2238, %v2135
    %2278 = vst.msk [vmem:[%s1831 + $0x1ec] sm:$0xf] %vm2238, %v2137
    %2279 = vst.msk [vmem:[%s1831 + $0x1f8] sm:$0xf] %vm2238, %v2139
    %2280 = vst.msk [vmem:[%s1831 + $0x204] sm:$0xf] %vm2238, %v2141
    %2281 = vst.msk [vmem:[%s1831 + $0x210] sm:$0xf] %vm2238, %v2143
    %2282 = vst.msk [vmem:[%s1831 + $0x21c] sm:$0xf] %vm2238, %v2145
    %2283 = vst.msk [vmem:[%s1831 + $0x228] sm:$0xf] %vm2238, %v2147
    %2284 = vst.msk [vmem:[%s1831 + $0x234] sm:$0xf] %vm2238, %v2149
    %2285 = vst.msk [vmem:[%s1831 + $0x240] sm:$0xf] %vm2238, %v2151
    %2286 = vst.msk [vmem:[%s1831 + $0x24c] sm:$0xf] %vm2238, %v2153
    %2287 = vst.msk [vmem:[%s1831 + $0x258] sm:$0xf] %vm2238, %v2155
    %2288 = vst.msk [vmem:[%s1831 + $0x264] sm:$0xf] %vm2238, %v2157
    %2289 = vst.msk [vmem:[%s1831 + $0x270] sm:$0xf] %vm2238, %v2159
    %2290 = vst.msk [vmem:[%s1831 + $0x27c] sm:$0xf] %vm2238, %v2161
    %2291 = vst.msk [vmem:[%s1831 + $0x288] sm:$0xf] %vm2238, %v2163
    %2292 = vst.msk [vmem:[%s1831 + $0x294] sm:$0xf] %vm2238, %v2165
    %2293 = vst.msk [vmem:[%s1831 + $0x2a0] sm:$0xf] %vm2238, %v2167
    %2294 = vst.msk [vmem:[%s1831 + $0x2ac] sm:$0xf] %vm2238, %v2169
    %2295 = vst.msk [vmem:[%s1831 + $0x2b8] sm:$0xf] %vm2238, %v2171
    %2296 = vst.msk [vmem:[%s1831 + $0x2c4] sm:$0xf] %vm2238, %v2173
    %2297 = vst.msk [vmem:[%s1831 + $0x2d0] sm:$0xf] %vm2238, %v2175
    %2298 = vst.msk [vmem:[%s1831 + $0x2dc] sm:$0xf] %vm2238, %v2177
    %2299 = vst.msk [vmem:[#allocation2] sm:$0xf] %vm2238, 0
    %2300 = vst.msk [vmem:[#allocation2 + $0xc] sm:$0xf] %vm2238, 0
    %2301 = vst.msk [vmem:[#allocation2 + $0x180] sm:$0xf] %vm2238, 0
    %2302 = vst.msk [vmem:[#allocation2 + $0x18c] sm:$0xf] %vm2238, 0
    %vm2303 = vsmask.f32 3328
    %vm2304 = vsmask.f32 7440
    %vm2305 = vmor %vm2303, %vm2304
    %v2306 = vrot.slane %v1292, 4
    %v2307 = vrot.slane %v1295, 5
    %v2308 = vor.u32 %v2306, %v2307
    %v2309 = vrot.slane %v2308, 4
    %v2310 = vrot.slane %v1303, 5
    %v2311 = vsel %vm2305, %v2309, %v2310
    %v2312 = vrot.slane %v1300, 4
    %v2313 = vor.u32 %v2312, %v2310
    %v2314 = vrot.slane %v2313, 4
    %v2315 = vrot.slane %v1308, 4
    %v2316 = vrot.slane %v1311, 5
    %v2317 = vor.u32 %v2315, %v2316
    %v2318 = vrot.slane %v2317, 4
    %v2319 = vrot.slane %v1319, 5
    %v2320 = vsel %vm2305, %v2318, %v2319
    %v2321 = vrot.slane %v1316, 4
    %v2322 = vor.u32 %v2321, %v2319
    %v2323 = vrot.slane %v2322, 4
    %v2324 = vrot.slane %v1324, 4
    %v2325 = vrot.slane %v1327, 5
    %v2326 = vor.u32 %v2324, %v2325
    %v2327 = vrot.slane %v2326, 4
    %v2328 = vrot.slane %v1335, 5
    %v2329 = vsel %vm2305, %v2327, %v2328
    %v2330 = vrot.slane %v1332, 4
    %v2331 = vor.u32 %v2330, %v2328
    %v2332 = vrot.slane %v2331, 4
    %v2333 = vrot.slane %v1340, 4
    %v2334 = vrot.slane %v1343, 5
    %v2335 = vor.u32 %v2333, %v2334
    %v2336 = vrot.slane %v2335, 4
    %v2337 = vrot.slane %v1351, 5
    %v2338 = vsel %vm2305, %v2336, %v2337
    %v2339 = vrot.slane %v1348, 4
    %v2340 = vor.u32 %v2339, %v2337
    %v2341 = vrot.slane %v2340, 4
    %v2342 = vrot.slane %v1356, 4
    %v2343 = vrot.slane %v1359, 5
    %v2344 = vor.u32 %v2342, %v2343
    %v2345 = vrot.slane %v2344, 4
    %v2346 = vrot.slane %v1367, 5
    %v2347 = vsel %vm2305, %v2345, %v2346
    %v2348 = vrot.slane %v1364, 4
    %v2349 = vor.u32 %v2348, %v2346
    %v2350 = vrot.slane %v2349, 4
    %v2351 = vrot.slane %v1372, 4
    %v2352 = vrot.slane %v1375, 5
    %v2353 = vor.u32 %v2351, %v2352
    %v2354 = vrot.slane %v2353, 4
    %v2355 = vrot.slane %v1383, 5
    %v2356 = vsel %vm2305, %v2354, %v2355
    %v2357 = vrot.slane %v1380, 4
    %v2358 = vor.u32 %v2357, %v2355
    %v2359 = vrot.slane %v2358, 4
    %v2360 = vrot.slane %v1388, 4
    %v2361 = vrot.slane %v1391, 5
    %v2362 = vor.u32 %v2360, %v2361
    %v2363 = vrot.slane %v2362, 4
    %v2364 = vrot.slane %v1399, 5
    %v2365 = vsel %vm2305, %v2363, %v2364
    %v2366 = vrot.slane %v1396, 4
    %v2367 = vor.u32 %v2366, %v2364
    %v2368 = vrot.slane %v2367, 4
    %v2369 = vrot.slane %v1404, 4
    %v2370 = vrot.slane %v1407, 5
    %v2371 = vor.u32 %v2369, %v2370
    %v2372 = vrot.slane %v2371, 4
    %v2373 = vrot.slane %v1415, 5
    %v2374 = vsel %vm2305, %v2372, %v2373
    %v2375 = vrot.slane %v1412, 4
    %v2376 = vor.u32 %v2375, %v2373
    %v2377 = vrot.slane %v2376, 4
    %v2378 = vrot.slane %v1420, 4
    %v2379 = vrot.slane %v1423, 5
    %v2380 = vor.u32 %v2378, %v2379
    %v2381 = vrot.slane %v2380, 4
    %v2382 = vrot.slane %v1431, 5
    %v2383 = vsel %vm2305, %v2381, %v2382
    %v2384 = vrot.slane %v1428, 4
    %v2385 = vor.u32 %v2384, %v2382
    %v2386 = vrot.slane %v2385, 4
    %v2387 = vrot.slane %v1436, 4
    %v2388 = vrot.slane %v1439, 5
    %v2389 = vor.u32 %v2387, %v2388
    %v2390 = vrot.slane %v2389, 4
    %v2391 = vrot.slane %v1447, 5
    %v2392 = vsel %vm2305, %v2390, %v2391
    %v2393 = vrot.slane %v1444, 4
    %v2394 = vor.u32 %v2393, %v2391
    %v2395 = vrot.slane %v2394, 4
    %v2396 = vrot.slane %v1452, 4
    %v2397 = vrot.slane %v1455, 5
    %v2398 = vor.u32 %v2396, %v2397
    %v2399 = vrot.slane %v2398, 4
    %v2400 = vrot.slane %v1463, 5
    %v2401 = vsel %vm2305, %v2399, %v2400
    %v2402 = vrot.slane %v1460, 4
    %v2403 = vor.u32 %v2402, %v2400
    %v2404 = vrot.slane %v2403, 4
    %v2405 = vrot.slane %v1468, 4
    %v2406 = vrot.slane %v1471, 5
    %v2407 = vor.u32 %v2405, %v2406
    %v2408 = vrot.slane %v2407, 4
    %v2409 = vrot.slane %v1479, 5
    %v2410 = vsel %vm2305, %v2408, %v2409
    %v2411 = vrot.slane %v1476, 4
    %v2412 = vor.u32 %v2411, %v2409
    %v2413 = vrot.slane %v2412, 4
    %v2414 = vrot.slane %v1484, 4
    %v2415 = vrot.slane %v1487, 5
    %v2416 = vor.u32 %v2414, %v2415
    %v2417 = vrot.slane %v2416, 4
    %v2418 = vrot.slane %v1495, 5
    %v2419 = vsel %vm2305, %v2417, %v2418
    %v2420 = vrot.slane %v1492, 4
    %v2421 = vor.u32 %v2420, %v2418
    %v2422 = vrot.slane %v2421, 4
    %v2423 = vrot.slane %v1500, 4
    %v2424 = vrot.slane %v1503, 5
    %v2425 = vor.u32 %v2423, %v2424
    %v2426 = vrot.slane %v2425, 4
    %v2427 = vrot.slane %v1511, 5
    %v2428 = vsel %vm2305, %v2426, %v2427
    %v2429 = vrot.slane %v1508, 4
    %v2430 = vor.u32 %v2429, %v2427
    %v2431 = vrot.slane %v2430, 4
    %v2432 = vrot.slane %v1516, 4
    %v2433 = vrot.slane %v1519, 5
    %v2434 = vor.u32 %v2432, %v2433
    %v2435 = vrot.slane %v2434, 4
    %v2436 = vrot.slane %v1527, 5
    %v2437 = vsel %vm2305, %v2435, %v2436
    %v2438 = vrot.slane %v1524, 4
    %v2439 = vor.u32 %v2438, %v2436
    %v2440 = vrot.slane %v2439, 4
    %v2441 = vrot.slane %v1532, 4
    %v2442 = vrot.slane %v1535, 5
    %v2443 = vor.u32 %v2441, %v2442
    %v2444 = vrot.slane %v2443, 4
    %v2445 = vrot.slane %v1543, 5
    %v2446 = vsel %vm2305, %v2444, %v2445
    %v2447 = vrot.slane %v1540, 4
    %v2448 = vor.u32 %v2447, %v2445
    %v2449 = vrot.slane %v2448, 4
    %v2450 = vrot.slane %v1548, 4
    %v2451 = vrot.slane %v1551, 5
    %v2452 = vor.u32 %v2450, %v2451
    %v2453 = vrot.slane %v2452, 4
    %v2454 = vrot.slane %v1559, 5
    %v2455 = vsel %vm2305, %v2453, %v2454
    %v2456 = vrot.slane %v1556, 4
    %v2457 = vor.u32 %v2456, %v2454
    %v2458 = vrot.slane %v2457, 4
    %v2459 = vrot.slane %v1564, 4
    %v2460 = vrot.slane %v1567, 5
    %v2461 = vor.u32 %v2459, %v2460
    %v2462 = vrot.slane %v2461, 4
    %v2463 = vrot.slane %v1575, 5
    %v2464 = vsel %vm2305, %v2462, %v2463
    %v2465 = vrot.slane %v1572, 4
    %v2466 = vor.u32 %v2465, %v2463
    %v2467 = vrot.slane %v2466, 4
    %v2468 = vrot.slane %v1580, 4
    %v2469 = vrot.slane %v1583, 5
    %v2470 = vor.u32 %v2468, %v2469
    %v2471 = vrot.slane %v2470, 4
    %v2472 = vrot.slane %v1591, 5
    %v2473 = vsel %vm2305, %v2471, %v2472
    %v2474 = vrot.slane %v1588, 4
    %v2475 = vor.u32 %v2474, %v2472
    %v2476 = vrot.slane %v2475, 4
    %v2477 = vrot.slane %v1596, 4
    %v2478 = vrot.slane %v1599, 5
    %v2479 = vor.u32 %v2477, %v2478
    %v2480 = vrot.slane %v2479, 4
    %v2481 = vrot.slane %v1607, 5
    %v2482 = vsel %vm2305, %v2480, %v2481
    %v2483 = vrot.slane %v1604, 4
    %v2484 = vor.u32 %v2483, %v2481
    %v2485 = vrot.slane %v2484, 4
    %v2486 = vrot.slane %v1612, 4
    %v2487 = vrot.slane %v1615, 5
    %v2488 = vor.u32 %v2486, %v2487
    %v2489 = vrot.slane %v2488, 4
    %v2490 = vrot.slane %v1623, 5
    %v2491 = vsel %vm2305, %v2489, %v2490
    %v2492 = vrot.slane %v1620, 4
    %v2493 = vor.u32 %v2492, %v2490
    %v2494 = vrot.slane %v2493, 4
    %v2495 = vrot.slane %v1628, 4
    %v2496 = vrot.slane %v1631, 5
    %v2497 = vor.u32 %v2495, %v2496
    %v2498 = vrot.slane %v2497, 4
    %v2499 = vrot.slane %v1639, 5
    %v2500 = vsel %vm2305, %v2498, %v2499
    %v2501 = vrot.slane %v1636, 4
    %v2502 = vor.u32 %v2501, %v2499
    %v2503 = vrot.slane %v2502, 4
    %v2504 = vrot.slane %v1644, 4
    %v2505 = vrot.slane %v1647, 5
    %v2506 = vor.u32 %v2504, %v2505
    %v2507 = vrot.slane %v2506, 4
    %v2508 = vrot.slane %v1655, 5
    %v2509 = vsel %vm2305, %v2507, %v2508
    %v2510 = vrot.slane %v1652, 4
    %v2511 = vor.u32 %v2510, %v2508
    %v2512 = vrot.slane %v2511, 4
    %v2513 = vrot.slane %v1660, 4
    %v2514 = vrot.slane %v1663, 5
    %v2515 = vor.u32 %v2513, %v2514
    %v2516 = vrot.slane %v2515, 4
    %v2517 = vrot.slane %v1671, 5
    %v2518 = vsel %vm2305, %v2516, %v2517
    %v2519 = vrot.slane %v1668, 4
    %v2520 = vor.u32 %v2519, %v2517
    %v2521 = vrot.slane %v2520, 4
    %v2522 = vrot.slane %v1676, 4
    %v2523 = vrot.slane %v1679, 5
    %v2524 = vor.u32 %v2522, %v2523
    %v2525 = vrot.slane %v2524, 4
    %v2526 = vrot.slane %v1687, 5
    %v2527 = vsel %vm2305, %v2525, %v2526
    %v2528 = vrot.slane %v1684, 4
    %v2529 = vor.u32 %v2528, %v2526
    %v2530 = vrot.slane %v2529, 4
    %v2531 = vrot.slane %v1692, 4
    %v2532 = vrot.slane %v1695, 5
    %v2533 = vor.u32 %v2531, %v2532
    %v2534 = vrot.slane %v2533, 4
    %v2535 = vrot.slane %v1703, 5
    %v2536 = vsel %vm2305, %v2534, %v2535
    %v2537 = vrot.slane %v1700, 4
    %v2538 = vor.u32 %v2537, %v2535
    %v2539 = vrot.slane %v2538, 4
    %v2540 = vrot.slane %v1708, 4
    %v2541 = vrot.slane %v1711, 5
    %v2542 = vor.u32 %v2540, %v2541
    %v2543 = vrot.slane %v2542, 4
    %v2544 = vrot.slane %v1719, 5
    %v2545 = vsel %vm2305, %v2543, %v2544
    %v2546 = vrot.slane %v1716, 4
    %v2547 = vor.u32 %v2546, %v2544
    %v2548 = vrot.slane %v2547, 4
    %v2549 = vrot.slane %v1724, 4
    %v2550 = vrot.slane %v1727, 5
    %v2551 = vor.u32 %v2549, %v2550
    %v2552 = vrot.slane %v2551, 4
    %v2553 = vrot.slane %v1735, 5
    %v2554 = vsel %vm2305, %v2552, %v2553
    %v2555 = vrot.slane %v1732, 4
    %v2556 = vor.u32 %v2555, %v2553
    %v2557 = vrot.slane %v2556, 4
    %v2558 = vrot.slane %v1740, 4
    %v2559 = vrot.slane %v1743, 5
    %v2560 = vor.u32 %v2558, %v2559
    %v2561 = vrot.slane %v2560, 4
    %v2562 = vrot.slane %v1751, 5
    %v2563 = vsel %vm2305, %v2561, %v2562
    %v2564 = vrot.slane %v1748, 4
    %v2565 = vor.u32 %v2564, %v2562
    %v2566 = vrot.slane %v2565, 4
    %v2567 = vrot.slane %v1756, 4
    %v2568 = vrot.slane %v1759, 5
    %v2569 = vor.u32 %v2567, %v2568
    %v2570 = vrot.slane %v2569, 4
    %v2571 = vrot.slane %v1767, 5
    %v2572 = vsel %vm2305, %v2570, %v2571
    %v2573 = vrot.slane %v1764, 4
    %v2574 = vor.u32 %v2573, %v2571
    %v2575 = vrot.slane %v2574, 4
    %2576 = vrot.lane.b32.xlu0 %v2311, 64
    %v2577 = vpop.permute.xlu0 %2576
    %2578 = vrot.lane.b32.xlu0 %v2314, 64
    %v2579 = vpop.permute.xlu0 %2578
    %2580 = vrot.lane.b32.xlu0 %v2320, 64
    %v2581 = vpop.permute.xlu0 %2580
    %2582 = vrot.lane.b32.xlu0 %v2323, 64
    %v2583 = vpop.permute.xlu0 %2582
    %2584 = vrot.lane.b32.xlu0 %v2329, 64
    %v2585 = vpop.permute.xlu0 %2584
    %2586 = vrot.lane.b32.xlu0 %v2332, 64
    %v2587 = vpop.permute.xlu0 %2586
    %2588 = vrot.lane.b32.xlu0 %v2338, 64
    %v2589 = vpop.permute.xlu0 %2588
    %2590 = vrot.lane.b32.xlu0 %v2341, 64
    %v2591 = vpop.permute.xlu0 %2590
    %2592 = vrot.lane.b32.xlu0 %v2347, 64
    %v2593 = vpop.permute.xlu0 %2592
    %2594 = vrot.lane.b32.xlu0 %v2350, 64
    %v2595 = vpop.permute.xlu0 %2594
    %2596 = vrot.lane.b32.xlu0 %v2356, 64
    %v2597 = vpop.permute.xlu0 %2596
    %2598 = vrot.lane.b32.xlu0 %v2359, 64
    %v2599 = vpop.permute.xlu0 %2598
    %2600 = vrot.lane.b32.xlu0 %v2365, 64
    %v2601 = vpop.permute.xlu0 %2600
    %2602 = vrot.lane.b32.xlu0 %v2368, 64
    %v2603 = vpop.permute.xlu0 %2602
    %2604 = vrot.lane.b32.xlu0 %v2374, 64
    %v2605 = vpop.permute.xlu0 %2604
    %2606 = vrot.lane.b32.xlu0 %v2377, 64
    %v2607 = vpop.permute.xlu0 %2606
    %2608 = vrot.lane.b32.xlu0 %v2383, 64
    %v2609 = vpop.permute.xlu0 %2608
    %2610 = vrot.lane.b32.xlu0 %v2386, 64
    %v2611 = vpop.permute.xlu0 %2610
    %2612 = vrot.lane.b32.xlu0 %v2392, 64
    %v2613 = vpop.permute.xlu0 %2612
    %2614 = vrot.lane.b32.xlu0 %v2395, 64
    %v2615 = vpop.permute.xlu0 %2614
    %2616 = vrot.lane.b32.xlu0 %v2401, 64
    %v2617 = vpop.permute.xlu0 %2616
    %2618 = vrot.lane.b32.xlu0 %v2404, 64
    %v2619 = vpop.permute.xlu0 %2618
    %2620 = vrot.lane.b32.xlu0 %v2410, 64
    %v2621 = vpop.permute.xlu0 %2620
    %2622 = vrot.lane.b32.xlu0 %v2413, 64
    %v2623 = vpop.permute.xlu0 %2622
    %2624 = vrot.lane.b32.xlu0 %v2419, 64
    %v2625 = vpop.permute.xlu0 %2624
    %2626 = vrot.lane.b32.xlu0 %v2422, 64
    %v2627 = vpop.permute.xlu0 %2626
    %2628 = vrot.lane.b32.xlu0 %v2428, 64
    %v2629 = vpop.permute.xlu0 %2628
    %2630 = vrot.lane.b32.xlu0 %v2431, 64
    %v2631 = vpop.permute.xlu0 %2630
    %2632 = vrot.lane.b32.xlu0 %v2437, 64
    %v2633 = vpop.permute.xlu0 %2632
    %2634 = vrot.lane.b32.xlu0 %v2440, 64
    %v2635 = vpop.permute.xlu0 %2634
    %2636 = vrot.lane.b32.xlu0 %v2446, 64
    %v2637 = vpop.permute.xlu0 %2636
    %2638 = vrot.lane.b32.xlu0 %v2449, 64
    %v2639 = vpop.permute.xlu0 %2638
    %2640 = vrot.lane.b32.xlu0 %v2455, 64
    %v2641 = vpop.permute.xlu0 %2640
    %2642 = vrot.lane.b32.xlu0 %v2458, 64
    %v2643 = vpop.permute.xlu0 %2642
    %2644 = vrot.lane.b32.xlu0 %v2464, 64
    %v2645 = vpop.permute.xlu0 %2644
    %2646 = vrot.lane.b32.xlu0 %v2467, 64
    %v2647 = vpop.permute.xlu0 %2646
    %2648 = vrot.lane.b32.xlu0 %v2473, 64
    %v2649 = vpop.permute.xlu0 %2648
    %2650 = vrot.lane.b32.xlu0 %v2476, 64
    %v2651 = vpop.permute.xlu0 %2650
    %2652 = vrot.lane.b32.xlu0 %v2482, 64
    %v2653 = vpop.permute.xlu0 %2652
    %2654 = vrot.lane.b32.xlu0 %v2485, 64
    %v2655 = vpop.permute.xlu0 %2654
    %2656 = vrot.lane.b32.xlu0 %v2491, 64
    %v2657 = vpop.permute.xlu0 %2656
    %2658 = vrot.lane.b32.xlu0 %v2494, 64
    %v2659 = vpop.permute.xlu0 %2658
    %2660 = vrot.lane.b32.xlu0 %v2500, 64
    %v2661 = vpop.permute.xlu0 %2660
    %2662 = vrot.lane.b32.xlu0 %v2503, 64
    %v2663 = vpop.permute.xlu0 %2662
    %2664 = vrot.lane.b32.xlu0 %v2509, 64
    %v2665 = vpop.permute.xlu0 %2664
    %2666 = vrot.lane.b32.xlu0 %v2512, 64
    %v2667 = vpop.permute.xlu0 %2666
    %2668 = vrot.lane.b32.xlu0 %v2518, 64
    %v2669 = vpop.permute.xlu0 %2668
    %2670 = vrot.lane.b32.xlu0 %v2521, 64
    %v2671 = vpop.permute.xlu0 %2670
    %2672 = vrot.lane.b32.xlu0 %v2527, 64
    %v2673 = vpop.permute.xlu0 %2672
    %2674 = vrot.lane.b32.xlu0 %v2530, 64
    %v2675 = vpop.permute.xlu0 %2674
    %2676 = vrot.lane.b32.xlu0 %v2536, 64
    %v2677 = vpop.permute.xlu0 %2676
    %2678 = vrot.lane.b32.xlu0 %v2539, 64
    %v2679 = vpop.permute.xlu0 %2678
    %2680 = vrot.lane.b32.xlu0 %v2545, 64
    %v2681 = vpop.permute.xlu0 %2680
    %2682 = vrot.lane.b32.xlu0 %v2548, 64
    %v2683 = vpop.permute.xlu0 %2682
    %2684 = vrot.lane.b32.xlu0 %v2554, 64
    %v2685 = vpop.permute.xlu0 %2684
    %2686 = vrot.lane.b32.xlu0 %v2557, 64
    %v2687 = vpop.permute.xlu0 %2686
    %2688 = vrot.lane.b32.xlu0 %v2563, 64
    %v2689 = vpop.permute.xlu0 %2688
    %2690 = vrot.lane.b32.xlu0 %v2566, 64
    %v2691 = vpop.permute.xlu0 %2690
    %2692 = vrot.lane.b32.xlu0 %v2572, 64
    %v2693 = vpop.permute.xlu0 %2692
    %2694 = vrot.lane.b32.xlu0 %v2575, 64
    %v2695 = vpop.permute.xlu0 %2694
    %vm2756 = vcmask 781824
    %2757 = vst.msk [vmem:[%s1831] sm:$0xf] %vm2756, %v2577
    %vm2758 = vcmask 781824
    %vm2759 = vmand %vm2758, %vm2303
    %v2760 = vld [vmem:[%s1831 + $0xc] sm:$0xf]
    %v2761 = vsel %vm2759, %v2579, %v2760
    %2762 = vst [vmem:[%s1831 + $0xc] sm:$0xf] %v2761
    %2763 = vst.msk [vmem:[%s1831 + $0x18] sm:$0xf] %vm2756, %v2581
    %v2764 = vld [vmem:[%s1831 + $0x24] sm:$0xf]
    %v2765 = vsel %vm2759, %v2583, %v2764
    %2766 = vst [vmem:[%s1831 + $0x24] sm:$0xf] %v2765
    %2767 = vst.msk [vmem:[%s1831 + $0x30] sm:$0xf] %vm2756, %v2585
    %v2768 = vld [vmem:[%s1831 + $0x3c] sm:$0xf]
    %v2769 = vsel %vm2759, %v2587, %v2768
    %2770 = vst [vmem:[%s1831 + $0x3c] sm:$0xf] %v2769
    %2771 = vst.msk [vmem:[%s1831 + $0x48] sm:$0xf] %vm2756, %v2589
    %v2772 = vld [vmem:[%s1831 + $0x54] sm:$0xf]
    %v2773 = vsel %vm2759, %v2591, %v2772
    %2774 = vst [vmem:[%s1831 + $0x54] sm:$0xf] %v2773
    %2775 = vst.msk [vmem:[%s1831 + $0x60] sm:$0xf] %vm2756, %v2593
    %v2776 = vld [vmem:[%s1831 + $0x6c] sm:$0xf]
    %v2777 = vsel %vm2759, %v2595, %v2776
    %2778 = vst [vmem:[%s1831 + $0x6c] sm:$0xf] %v2777
    %2779 = vst.msk [vmem:[%s1831 + $0x78] sm:$0xf] %vm2756, %v2597
    %v2780 = vld [vmem:[%s1831 + $0x84] sm:$0xf]
    %v2781 = vsel %vm2759, %v2599, %v2780
    %2782 = vst [vmem:[%s1831 + $0x84] sm:$0xf] %v2781
    %2783 = vst.msk [vmem:[%s1831 + $0x90] sm:$0xf] %vm2756, %v2601
    %v2784 = vld [vmem:[%s1831 + $0x9c] sm:$0xf]
    %v2785 = vsel %vm2759, %v2603, %v2784
    %2786 = vst [vmem:[%s1831 + $0x9c] sm:$0xf] %v2785
    %2787 = vst.msk [vmem:[%s1831 + $0xa8] sm:$0xf] %vm2756, %v2605
    %v2788 = vld [vmem:[%s1831 + $0xb4] sm:$0xf]
    %v2789 = vsel %vm2759, %v2607, %v2788
    %2790 = vst [vmem:[%s1831 + $0xb4] sm:$0xf] %v2789
    %2791 = vst.msk [vmem:[%s1831 + $0xc0] sm:$0xf] %vm2756, %v2609
    %v2792 = vld [vmem:[%s1831 + $0xcc] sm:$0xf]
    %v2793 = vsel %vm2759, %v2611, %v2792
    %2794 = vst [vmem:[%s1831 + $0xcc] sm:$0xf] %v2793
    %2795 = vst.msk [vmem:[%s1831 + $0xd8] sm:$0xf] %vm2756, %v2613
    %v2796 = vld [vmem:[%s1831 + $0xe4] sm:$0xf]
    %v2797 = vsel %vm2759, %v2615, %v2796
    %2798 = vst [vmem:[%s1831 + $0xe4] sm:$0xf] %v2797
    %2799 = vst.msk [vmem:[%s1831 + $0xf0] sm:$0xf] %vm2756, %v2617
    %v2800 = vld [vmem:[%s1831 + $0xfc] sm:$0xf]
    %v2801 = vsel %vm2759, %v2619, %v2800
    %2802 = vst [vmem:[%s1831 + $0xfc] sm:$0xf] %v2801
    %2803 = vst.msk [vmem:[%s1831 + $0x108] sm:$0xf] %vm2756, %v2621
    %v2804 = vld [vmem:[%s1831 + $0x114] sm:$0xf]
    %v2805 = vsel %vm2759, %v2623, %v2804
    %2806 = vst [vmem:[%s1831 + $0x114] sm:$0xf] %v2805
    %2807 = vst.msk [vmem:[%s1831 + $0x120] sm:$0xf] %vm2756, %v2625
    %v2808 = vld [vmem:[%s1831 + $0x12c] sm:$0xf]
    %v2809 = vsel %vm2759, %v2627, %v2808
    %2810 = vst [vmem:[%s1831 + $0x12c] sm:$0xf] %v2809
    %2811 = vst.msk [vmem:[%s1831 + $0x138] sm:$0xf] %vm2756, %v2629
    %v2812 = vld [vmem:[%s1831 + $0x144] sm:$0xf]
    %v2813 = vsel %vm2759, %v2631, %v2812
    %2814 = vst [vmem:[%s1831 + $0x144] sm:$0xf] %v2813
    %2815 = vst.msk [vmem:[%s1831 + $0x150] sm:$0xf] %vm2756, %v2633
    %v2816 = vld [vmem:[%s1831 + $0x15c] sm:$0xf]
    %v2817 = vsel %vm2759, %v2635, %v2816
    %2818 = vst [vmem:[%s1831 + $0x15c] sm:$0xf] %v2817
    %2819 = vst.msk [vmem:[%s1831 + $0x180] sm:$0xf] %vm2756, %v2637
    %v2820 = vld [vmem:[%s1831 + $0x18c] sm:$0xf]
    %v2821 = vsel %vm2759, %v2639, %v2820
    %2822 = vst [vmem:[%s1831 + $0x18c] sm:$0xf] %v2821
    %2823 = vst.msk [vmem:[%s1831 + $0x198] sm:$0xf] %vm2756, %v2641
    %v2824 = vld [vmem:[%s1831 + $0x1a4] sm:$0xf]
    %v2825 = vsel %vm2759, %v2643, %v2824
    %2826 = vst [vmem:[%s1831 + $0x1a4] sm:$0xf] %v2825
    %2827 = vst.msk [vmem:[%s1831 + $0x1b0] sm:$0xf] %vm2756, %v2645
    %v2828 = vld [vmem:[%s1831 + $0x1bc] sm:$0xf]
    %v2829 = vsel %vm2759, %v2647, %v2828
    %2830 = vst [vmem:[%s1831 + $0x1bc] sm:$0xf] %v2829
    %2831 = vst.msk [vmem:[%s1831 + $0x1c8] sm:$0xf] %vm2756, %v2649
    %v2832 = vld [vmem:[%s1831 + $0x1d4] sm:$0xf]
    %v2833 = vsel %vm2759, %v2651, %v2832
    %2834 = vst [vmem:[%s1831 + $0x1d4] sm:$0xf] %v2833
    %2835 = vst.msk [vmem:[%s1831 + $0x1e0] sm:$0xf] %vm2756, %v2653
    %v2836 = vld [vmem:[%s1831 + $0x1ec] sm:$0xf]
    %v2837 = vsel %vm2759, %v2655, %v2836
    %2838 = vst [vmem:[%s1831 + $0x1ec] sm:$0xf] %v2837
    %2839 = vst.msk [vmem:[%s1831 + $0x1f8] sm:$0xf] %vm2756, %v2657
    %v2840 = vld [vmem:[%s1831 + $0x204] sm:$0xf]
    %v2841 = vsel %vm2759, %v2659, %v2840
    %2842 = vst [vmem:[%s1831 + $0x204] sm:$0xf] %v2841
    %2843 = vst.msk [vmem:[%s1831 + $0x210] sm:$0xf] %vm2756, %v2661
    %v2844 = vld [vmem:[%s1831 + $0x21c] sm:$0xf]
    %v2845 = vsel %vm2759, %v2663, %v2844
    %2846 = vst [vmem:[%s1831 + $0x21c] sm:$0xf] %v2845
    %2847 = vst.msk [vmem:[%s1831 + $0x228] sm:$0xf] %vm2756, %v2665
    %v2848 = vld [vmem:[%s1831 + $0x234] sm:$0xf]
    %v2849 = vsel %vm2759, %v2667, %v2848
    %2850 = vst [vmem:[%s1831 + $0x234] sm:$0xf] %v2849
    %2851 = vst.msk [vmem:[%s1831 + $0x240] sm:$0xf] %vm2756, %v2669
    %v2852 = vld [vmem:[%s1831 + $0x24c] sm:$0xf]
    %v2853 = vsel %vm2759, %v2671, %v2852
    %2854 = vst [vmem:[%s1831 + $0x24c] sm:$0xf] %v2853
    %2855 = vst.msk [vmem:[%s1831 + $0x258] sm:$0xf] %vm2756, %v2673
    %v2856 = vld [vmem:[%s1831 + $0x264] sm:$0xf]
    %v2857 = vsel %vm2759, %v2675, %v2856
    %2858 = vst [vmem:[%s1831 + $0x264] sm:$0xf] %v2857
    %2859 = vst.msk [vmem:[%s1831 + $0x270] sm:$0xf] %vm2756, %v2677
    %v2860 = vld [vmem:[%s1831 + $0x27c] sm:$0xf]
    %v2861 = vsel %vm2759, %v2679, %v2860
    %2862 = vst [vmem:[%s1831 + $0x27c] sm:$0xf] %v2861
    %2863 = vst.msk [vmem:[%s1831 + $0x288] sm:$0xf] %vm2756, %v2681
    %v2864 = vld [vmem:[%s1831 + $0x294] sm:$0xf]
    %v2865 = vsel %vm2759, %v2683, %v2864
    %2866 = vst [vmem:[%s1831 + $0x294] sm:$0xf] %v2865
    %2867 = vst.msk [vmem:[%s1831 + $0x2a0] sm:$0xf] %vm2756, %v2685
    %v2868 = vld [vmem:[%s1831 + $0x2ac] sm:$0xf]
    %v2869 = vsel %vm2759, %v2687, %v2868
    %2870 = vst [vmem:[%s1831 + $0x2ac] sm:$0xf] %v2869
    %2871 = vst.msk [vmem:[%s1831 + $0x2b8] sm:$0xf] %vm2756, %v2689
    %v2872 = vld [vmem:[%s1831 + $0x2c4] sm:$0xf]
    %v2873 = vsel %vm2759, %v2691, %v2872
    %2874 = vst [vmem:[%s1831 + $0x2c4] sm:$0xf] %v2873
    %2875 = vst.msk [vmem:[%s1831 + $0x2d0] sm:$0xf] %vm2756, %v2693
    %v2876 = vld [vmem:[%s1831 + $0x2dc] sm:$0xf]
    %v2877 = vsel %vm2759, %v2695, %v2876
    %2878 = vst [vmem:[%s1831 + $0x2dc] sm:$0xf] %v2877
    %2879 = vst.msk [vmem:[#allocation2] sm:$0xf] %vm2756, 0
    %2880 = vst.msk [vmem:[#allocation2 + $0xc] sm:$0xf] %vm2756, 0
    %2881 = vst.msk [vmem:[#allocation2 + $0x180] sm:$0xf] %vm2756, 0
    %2882 = vst.msk [vmem:[#allocation2 + $0x18c] sm:$0xf] %vm2756, 0
    %vm2883 = vcmask 781827
    %vm2884 = vsmask.f32 7950
    %vm2885 = vmand %vm2883, %vm2884
    %v2886 = vld [vmem:[#allocation2 + $0xc] sm:$0x8]
    %v2887 = vsel %vm2885, 0, %v2886
    %2888 = vst [vmem:[#allocation2 + $0xc] sm:$0x8] %v2887
    %v2889 = vld [vmem:[#allocation2 + $0x24] sm:$0x8]
    %v2890 = vsel %vm2885, 0, %v2889
    %2891 = vst [vmem:[#allocation2 + $0x24] sm:$0x8] %v2890
    %v2892 = vld [vmem:[#allocation2 + $0x3c] sm:$0x8]
    %v2893 = vsel %vm2885, 0, %v2892
    %2894 = vst [vmem:[#allocation2 + $0x3c] sm:$0x8] %v2893
    %v2895 = vld [vmem:[#allocation2 + $0x54] sm:$0x8]
    %v2896 = vsel %vm2885, 0, %v2895
    %2897 = vst [vmem:[#allocation2 + $0x54] sm:$0x8] %v2896
    %v2898 = vld [vmem:[#allocation2 + $0x6c] sm:$0x8]
    %v2899 = vsel %vm2885, 0, %v2898
    %2900 = vst [vmem:[#allocation2 + $0x6c] sm:$0x8] %v2899
    %v2901 = vld [vmem:[#allocation2 + $0x84] sm:$0x8]
    %v2902 = vsel %vm2885, 0, %v2901
    %2903 = vst [vmem:[#allocation2 + $0x84] sm:$0x8] %v2902
    %v2904 = vld [vmem:[#allocation2 + $0x9c] sm:$0x8]
    %v2905 = vsel %vm2885, 0, %v2904
    %2906 = vst [vmem:[#allocation2 + $0x9c] sm:$0x8] %v2905
    %v2907 = vld [vmem:[#allocation2 + $0xb4] sm:$0x8]
    %v2908 = vsel %vm2885, 0, %v2907
    %2909 = vst [vmem:[#allocation2 + $0xb4] sm:$0x8] %v2908
    %v2910 = vld [vmem:[#allocation2 + $0xcc] sm:$0x8]
    %v2911 = vsel %vm2885, 0, %v2910
    %2912 = vst [vmem:[#allocation2 + $0xcc] sm:$0x8] %v2911
    %v2913 = vld [vmem:[#allocation2 + $0xe4] sm:$0x8]
    %v2914 = vsel %vm2885, 0, %v2913
    %2915 = vst [vmem:[#allocation2 + $0xe4] sm:$0x8] %v2914
    %v2916 = vld [vmem:[#allocation2 + $0xfc] sm:$0x8]
    %v2917 = vsel %vm2885, 0, %v2916
    %2918 = vst [vmem:[#allocation2 + $0xfc] sm:$0x8] %v2917
    %v2919 = vld [vmem:[#allocation2 + $0x114] sm:$0x8]
    %v2920 = vsel %vm2885, 0, %v2919
    %2921 = vst [vmem:[#allocation2 + $0x114] sm:$0x8] %v2920
    %v2922 = vld [vmem:[#allocation2 + $0x12c] sm:$0x8]
    %v2923 = vsel %vm2885, 0, %v2922
    %2924 = vst [vmem:[#allocation2 + $0x12c] sm:$0x8] %v2923
    %v2925 = vld [vmem:[#allocation2 + $0x144] sm:$0x8]
    %v2926 = vsel %vm2885, 0, %v2925
    %2927 = vst [vmem:[#allocation2 + $0x144] sm:$0x8] %v2926
    %v2928 = vld [vmem:[#allocation2 + $0x15c] sm:$0x8]
    %v2929 = vsel %vm2885, 0, %v2928
    %2930 = vst [vmem:[#allocation2 + $0x15c] sm:$0x8] %v2929
    %v2931 = vld [vmem:[#allocation2 + $0x174] sm:$0x8]
    %v2932 = vsel %vm2885, 0, %v2931
    %2933 = vst [vmem:[#allocation2 + $0x174] sm:$0x8] %v2932
    %v2934 = vld [vmem:[#allocation2 + $0x18c] sm:$0x8]
    %v2935 = vsel %vm2885, 0, %v2934
    %2936 = vst [vmem:[#allocation2 + $0x18c] sm:$0x8] %v2935
    %v2937 = vld [vmem:[#allocation2 + $0x1a4] sm:$0x8]
    %v2938 = vsel %vm2885, 0, %v2937
    %2939 = vst [vmem:[#allocation2 + $0x1a4] sm:$0x8] %v2938
    %v2940 = vld [vmem:[#allocation2 + $0x1bc] sm:$0x8]
    %v2941 = vsel %vm2885, 0, %v2940
    %2942 = vst [vmem:[#allocation2 + $0x1bc] sm:$0x8] %v2941
    %v2943 = vld [vmem:[#allocation2 + $0x1d4] sm:$0x8]
    %v2944 = vsel %vm2885, 0, %v2943
    %2945 = vst [vmem:[#allocation2 + $0x1d4] sm:$0x8] %v2944
    %v2946 = vld [vmem:[#allocation2 + $0x1ec] sm:$0x8]
    %v2947 = vsel %vm2885, 0, %v2946
    %2948 = vst [vmem:[#allocation2 + $0x1ec] sm:$0x8] %v2947
    %v2949 = vld [vmem:[#allocation2 + $0x204] sm:$0x8]
    %v2950 = vsel %vm2885, 0, %v2949
    %2951 = vst [vmem:[#allocation2 + $0x204] sm:$0x8] %v2950
    %v2952 = vld [vmem:[#allocation2 + $0x21c] sm:$0x8]
    %v2953 = vsel %vm2885, 0, %v2952
    %2954 = vst [vmem:[#allocation2 + $0x21c] sm:$0x8] %v2953
    %v2955 = vld [vmem:[#allocation2 + $0x234] sm:$0x8]
    %v2956 = vsel %vm2885, 0, %v2955
    %2957 = vst [vmem:[#allocation2 + $0x234] sm:$0x8] %v2956
    %v2958 = vld [vmem:[#allocation2 + $0x24c] sm:$0x8]
    %v2959 = vsel %vm2885, 0, %v2958
    %2960 = vst [vmem:[#allocation2 + $0x24c] sm:$0x8] %v2959
    %v2961 = vld [vmem:[#allocation2 + $0x264] sm:$0x8]
    %v2962 = vsel %vm2885, 0, %v2961
    %2963 = vst [vmem:[#allocation2 + $0x264] sm:$0x8] %v2962
    %v2964 = vld [vmem:[#allocation2 + $0x27c] sm:$0x8]
    %v2965 = vsel %vm2885, 0, %v2964
    %2966 = vst [vmem:[#allocation2 + $0x27c] sm:$0x8] %v2965
    %v2967 = vld [vmem:[#allocation2 + $0x294] sm:$0x8]
    %v2968 = vsel %vm2885, 0, %v2967
    %2969 = vst [vmem:[#allocation2 + $0x294] sm:$0x8] %v2968
    %v2970 = vld [vmem:[#allocation2 + $0x2ac] sm:$0x8]
    %v2971 = vsel %vm2885, 0, %v2970
    %2972 = vst [vmem:[#allocation2 + $0x2ac] sm:$0x8] %v2971
    %v2973 = vld [vmem:[#allocation2 + $0x2c4] sm:$0x8]
    %v2974 = vsel %vm2885, 0, %v2973
    %2975 = vst [vmem:[#allocation2 + $0x2c4] sm:$0x8] %v2974
    %v2976 = vld [vmem:[#allocation2 + $0x2dc] sm:$0x8]
    %v2977 = vsel %vm2885, 0, %v2976
    %2978 = vst [vmem:[#allocation2 + $0x2dc] sm:$0x8] %v2977
    %v2979 = vld [vmem:[#allocation2 + $0x2f4] sm:$0x8]
    %v2980 = vsel %vm2885, 0, %v2979
    %2981 = vst [vmem:[#allocation2 + $0x2f4] sm:$0x8] %v2980
    %v2984 = vunpack.c.l.b16 %v1121
    %v2985 = vunpack.c.h.b16 %v1121
    %v2986 = vunpack.c.l.b16 %v1137
    %v2987 = vunpack.c.h.b16 %v1137
    %v2988 = vpack.c.b16 %v2984, %v2984
    %v2989 = vpack.c.b16 %v2985, %v2985
    %v2990 = vpack.c.b16 %v2986, %v2986
    %v2991 = vpack.c.b16 %v2987, %v2987
    %v2993 = vshrl.u32 %v2988, 16
    %v2995 = vrot.slane %v2993, 7
    %v2996 = vshll.u32 %v2988, 16
    %v2998 = vor.u32 %v2995, %v2996
    %v2999 = vrot.slane %v2995, 4
    %v3001 = vshrl.u32 %v2989, 16
    %v3003 = vrot.slane %v3001, 7
    %v3004 = vshll.u32 %v2989, 16
    %v3006 = vor.u32 %v3003, %v3004
    %v3007 = vsel %vm1290, %v2999, %v3006
    %v3009 = vshrl.u32 %v2990, 16
    %v3011 = vrot.slane %v3009, 7
    %v3012 = vshll.u32 %v2990, 16
    %v3014 = vor.u32 %v3011, %v3012
    %v3015 = vrot.slane %v3011, 4
    %v3017 = vshrl.u32 %v2991, 16
    %v3019 = vrot.slane %v3017, 7
    %v3020 = vshll.u32 %v2991, 16
    %v3022 = vor.u32 %v3019, %v3020
    %v3023 = vsel %vm1290, %v3015, %v3022
    %3024 = vrot.lane.b32.xlu0 %v1297, 96
    %v3025 = vpop.permute.xlu0 %3024
    %3026 = vrot.lane.b32.xlu0 %v1306, 96
    %v3027 = vpop.permute.xlu0 %3026
    %3028 = vrot.lane.b32.xlu0 %v1313, 96
    %v3029 = vpop.permute.xlu0 %3028
    %3030 = vrot.lane.b32.xlu0 %v1322, 96
    %v3031 = vpop.permute.xlu0 %3030
    %3032 = vrot.lane.b32.xlu0 %v1329, 96
    %v3033 = vpop.permute.xlu0 %3032
    %3034 = vrot.lane.b32.xlu0 %v1338, 96
    %v3035 = vpop.permute.xlu0 %3034
    %3036 = vrot.lane.b32.xlu0 %v1345, 96
    %v3037 = vpop.permute.xlu0 %3036
    %3038 = vrot.lane.b32.xlu0 %v1354, 96
    %v3039 = vpop.permute.xlu0 %3038
    %3040 = vrot.lane.b32.xlu0 %v1361, 96
    %v3041 = vpop.permute.xlu0 %3040
    %3042 = vrot.lane.b32.xlu0 %v1370, 96
    %v3043 = vpop.permute.xlu0 %3042
    %3044 = vrot.lane.b32.xlu0 %v1377, 96
    %v3045 = vpop.permute.xlu0 %3044
    %3046 = vrot.lane.b32.xlu0 %v1386, 96
    %v3047 = vpop.permute.xlu0 %3046
    %3048 = vrot.lane.b32.xlu0 %v1393, 96
    %v3049 = vpop.permute.xlu0 %3048
    %3050 = vrot.lane.b32.xlu0 %v1402, 96
    %v3051 = vpop.permute.xlu0 %3050
    %3052 = vrot.lane.b32.xlu0 %v1409, 96
    %v3053 = vpop.permute.xlu0 %3052
    %3054 = vrot.lane.b32.xlu0 %v1418, 96
    %v3055 = vpop.permute.xlu0 %3054
    %3056 = vrot.lane.b32.xlu0 %v1425, 96
    %v3057 = vpop.permute.xlu0 %3056
    %3058 = vrot.lane.b32.xlu0 %v1434, 96
    %v3059 = vpop.permute.xlu0 %3058
    %3060 = vrot.lane.b32.xlu0 %v1441, 96
    %v3061 = vpop.permute.xlu0 %3060
    %3062 = vrot.lane.b32.xlu0 %v1450, 96
    %v3063 = vpop.permute.xlu0 %3062
    %3064 = vrot.lane.b32.xlu0 %v1457, 96
    %v3065 = vpop.permute.xlu0 %3064
    %3066 = vrot.lane.b32.xlu0 %v1466, 96
    %v3067 = vpop.permute.xlu0 %3066
    %3068 = vrot.lane.b32.xlu0 %v1473, 96
    %v3069 = vpop.permute.xlu0 %3068
    %3070 = vrot.lane.b32.xlu0 %v1482, 96
    %v3071 = vpop.permute.xlu0 %3070
    %3072 = vrot.lane.b32.xlu0 %v1489, 96
    %v3073 = vpop.permute.xlu0 %3072
    %3074 = vrot.lane.b32.xlu0 %v1498, 96
    %v3075 = vpop.permute.xlu0 %3074
    %3076 = vrot.lane.b32.xlu0 %v1505, 96
    %v3077 = vpop.permute.xlu0 %3076
    %3078 = vrot.lane.b32.xlu0 %v1514, 96
    %v3079 = vpop.permute.xlu0 %3078
    %3080 = vrot.lane.b32.xlu0 %v1521, 96
    %v3081 = vpop.permute.xlu0 %3080
    %3082 = vrot.lane.b32.xlu0 %v1530, 96
    %v3083 = vpop.permute.xlu0 %3082
    %3084 = vrot.lane.b32.xlu0 %v2998, 96
    %v3085 = vpop.permute.xlu0 %3084
    %3086 = vrot.lane.b32.xlu0 %v3007, 96
    %v3087 = vpop.permute.xlu0 %3086
    %3088 = vrot.lane.b32.xlu0 %v1537, 96
    %v3089 = vpop.permute.xlu0 %3088
    %3090 = vrot.lane.b32.xlu0 %v1546, 96
    %v3091 = vpop.permute.xlu0 %3090
    %3092 = vrot.lane.b32.xlu0 %v1553, 96
    %v3093 = vpop.permute.xlu0 %3092
    %3094 = vrot.lane.b32.xlu0 %v1562, 96
    %v3095 = vpop.permute.xlu0 %3094
    %3096 = vrot.lane.b32.xlu0 %v1569, 96
    %v3097 = vpop.permute.xlu0 %3096
    %3098 = vrot.lane.b32.xlu0 %v1578, 96
    %v3099 = vpop.permute.xlu0 %3098
    %3100 = vrot.lane.b32.xlu0 %v1585, 96
    %v3101 = vpop.permute.xlu0 %3100
    %3102 = vrot.lane.b32.xlu0 %v1594, 96
    %v3103 = vpop.permute.xlu0 %3102
    %3104 = vrot.lane.b32.xlu0 %v1601, 96
    %v3105 = vpop.permute.xlu0 %3104
    %3106 = vrot.lane.b32.xlu0 %v1610, 96
    %v3107 = vpop.permute.xlu0 %3106
    %3108 = vrot.lane.b32.xlu0 %v1617, 96
    %v3109 = vpop.permute.xlu0 %3108
    %3110 = vrot.lane.b32.xlu0 %v1626, 96
    %v3111 = vpop.permute.xlu0 %3110
    %3112 = vrot.lane.b32.xlu0 %v1633, 96
    %v3113 = vpop.permute.xlu0 %3112
    %3114 = vrot.lane.b32.xlu0 %v1642, 96
    %v3115 = vpop.permute.xlu0 %3114
    %3116 = vrot.lane.b32.xlu0 %v1649, 96
    %v3117 = vpop.permute.xlu0 %3116
    %3118 = vrot.lane.b32.xlu0 %v1658, 96
    %v3119 = vpop.permute.xlu0 %3118
    %3120 = vrot.lane.b32.xlu0 %v1665, 96
    %v3121 = vpop.permute.xlu0 %3120
    %3122 = vrot.lane.b32.xlu0 %v1674, 96
    %v3123 = vpop.permute.xlu0 %3122
    %3124 = vrot.lane.b32.xlu0 %v1681, 96
    %v3125 = vpop.permute.xlu0 %3124
    %3126 = vrot.lane.b32.xlu0 %v1690, 96
    %v3127 = vpop.permute.xlu0 %3126
    %3128 = vrot.lane.b32.xlu0 %v1697, 96
    %v3129 = vpop.permute.xlu0 %3128
    %3130 = vrot.lane.b32.xlu0 %v1706, 96
    %v3131 = vpop.permute.xlu0 %3130
    %3132 = vrot.lane.b32.xlu0 %v1713, 96
    %v3133 = vpop.permute.xlu0 %3132
    %3134 = vrot.lane.b32.xlu0 %v1722, 96
    %v3135 = vpop.permute.xlu0 %3134
    %3136 = vrot.lane.b32.xlu0 %v1729, 96
    %v3137 = vpop.permute.xlu0 %3136
    %3138 = vrot.lane.b32.xlu0 %v1738, 96
    %v3139 = vpop.permute.xlu0 %3138
    %3140 = vrot.lane.b32.xlu0 %v1745, 96
    %v3141 = vpop.permute.xlu0 %3140
    %3142 = vrot.lane.b32.xlu0 %v1754, 96
    %v3143 = vpop.permute.xlu0 %3142
    %3144 = vrot.lane.b32.xlu0 %v1761, 96
    %v3145 = vpop.permute.xlu0 %3144
    %3146 = vrot.lane.b32.xlu0 %v1770, 96
    %v3147 = vpop.permute.xlu0 %3146
    %3148 = vrot.lane.b32.xlu0 %v3014, 96
    %v3149 = vpop.permute.xlu0 %3148
    %3150 = vrot.lane.b32.xlu0 %v3023, 96
    %v3151 = vpop.permute.xlu0 %3150
    %vm3216 = vcmask 1044224
    %vm3217 = vmand %vm3216, %vm1833
    %v3218 = vld [vmem:[#allocation2] sm:$0xf]
    %v3219 = vsel %vm3217, %v3025, %v3218
    %3220 = vst [vmem:[#allocation2] sm:$0xf] %v3219
    %vm3221 = vcmask 1044224
    %3222 = vst.msk [vmem:[#allocation2 + $0xc] sm:$0xf] %vm3221, %v3027
    %v3223 = vld [vmem:[#allocation2 + $0x18] sm:$0xf]
    %v3224 = vsel %vm3217, %v3029, %v3223
    %3225 = vst [vmem:[#allocation2 + $0x18] sm:$0xf] %v3224
    %3226 = vst.msk [vmem:[#allocation2 + $0x24] sm:$0xf] %vm3221, %v3031
    %v3227 = vld [vmem:[#allocation2 + $0x30] sm:$0xf]
    %v3228 = vsel %vm3217, %v3033, %v3227
    %3229 = vst [vmem:[#allocation2 + $0x30] sm:$0xf] %v3228
    %3230 = vst.msk [vmem:[#allocation2 + $0x3c] sm:$0xf] %vm3221, %v3035
    %v3231 = vld [vmem:[#allocation2 + $0x48] sm:$0xf]
    %v3232 = vsel %vm3217, %v3037, %v3231
    %3233 = vst [vmem:[#allocation2 + $0x48] sm:$0xf] %v3232
    %3234 = vst.msk [vmem:[#allocation2 + $0x54] sm:$0xf] %vm3221, %v3039
    %v3235 = vld [vmem:[#allocation2 + $0x60] sm:$0xf]
    %v3236 = vsel %vm3217, %v3041, %v3235
    %3237 = vst [vmem:[#allocation2 + $0x60] sm:$0xf] %v3236
    %3238 = vst.msk [vmem:[#allocation2 + $0x6c] sm:$0xf] %vm3221, %v3043
    %v3239 = vld [vmem:[#allocation2 + $0x78] sm:$0xf]
    %v3240 = vsel %vm3217, %v3045, %v3239
    %3241 = vst [vmem:[#allocation2 + $0x78] sm:$0xf] %v3240
    %3242 = vst.msk [vmem:[#allocation2 + $0x84] sm:$0xf] %vm3221, %v3047
    %v3243 = vld [vmem:[#allocation2 + $0x90] sm:$0xf]
    %v3244 = vsel %vm3217, %v3049, %v3243
    %3245 = vst [vmem:[#allocation2 + $0x90] sm:$0xf] %v3244
    %3246 = vst.msk [vmem:[#allocation2 + $0x9c] sm:$0xf] %vm3221, %v3051
    %v3247 = vld [vmem:[#allocation2 + $0xa8] sm:$0xf]
    %v3248 = vsel %vm3217, %v3053, %v3247
    %3249 = vst [vmem:[#allocation2 + $0xa8] sm:$0xf] %v3248
    %3250 = vst.msk [vmem:[#allocation2 + $0xb4] sm:$0xf] %vm3221, %v3055
    %v3251 = vld [vmem:[#allocation2 + $0xc0] sm:$0xf]
    %v3252 = vsel %vm3217, %v3057, %v3251
    %3253 = vst [vmem:[#allocation2 + $0xc0] sm:$0xf] %v3252
    %3254 = vst.msk [vmem:[#allocation2 + $0xcc] sm:$0xf] %vm3221, %v3059
    %v3255 = vld [vmem:[#allocation2 + $0xd8] sm:$0xf]
    %v3256 = vsel %vm3217, %v3061, %v3255
    %3257 = vst [vmem:[#allocation2 + $0xd8] sm:$0xf] %v3256
    %3258 = vst.msk [vmem:[#allocation2 + $0xe4] sm:$0xf] %vm3221, %v3063
    %v3259 = vld [vmem:[#allocation2 + $0xf0] sm:$0xf]
    %v3260 = vsel %vm3217, %v3065, %v3259
    %3261 = vst [vmem:[#allocation2 + $0xf0] sm:$0xf] %v3260
    %3262 = vst.msk [vmem:[#allocation2 + $0xfc] sm:$0xf] %vm3221, %v3067
    %v3263 = vld [vmem:[#allocation2 + $0x108] sm:$0xf]
    %v3264 = vsel %vm3217, %v3069, %v3263
    %3265 = vst [vmem:[#allocation2 + $0x108] sm:$0xf] %v3264
    %3266 = vst.msk [vmem:[#allocation2 + $0x114] sm:$0xf] %vm3221, %v3071
    %v3267 = vld [vmem:[#allocation2 + $0x120] sm:$0xf]
    %v3268 = vsel %vm3217, %v3073, %v3267
    %3269 = vst [vmem:[#allocation2 + $0x120] sm:$0xf] %v3268
    %3270 = vst.msk [vmem:[#allocation2 + $0x12c] sm:$0xf] %vm3221, %v3075
    %v3271 = vld [vmem:[#allocation2 + $0x138] sm:$0xf]
    %v3272 = vsel %vm3217, %v3077, %v3271
    %3273 = vst [vmem:[#allocation2 + $0x138] sm:$0xf] %v3272
    %3274 = vst.msk [vmem:[#allocation2 + $0x144] sm:$0xf] %vm3221, %v3079
    %v3275 = vld [vmem:[#allocation2 + $0x150] sm:$0xf]
    %v3276 = vsel %vm3217, %v3081, %v3275
    %3277 = vst [vmem:[#allocation2 + $0x150] sm:$0xf] %v3276
    %3278 = vst.msk [vmem:[#allocation2 + $0x15c] sm:$0xf] %vm3221, %v3083
    %v3279 = vld [vmem:[#allocation2 + $0x168] sm:$0xf]
    %v3280 = vsel %vm3217, %v3085, %v3279
    %3281 = vst [vmem:[#allocation2 + $0x168] sm:$0xf] %v3280
    %3282 = vst.msk [vmem:[#allocation2 + $0x174] sm:$0xf] %vm3221, %v3087
    %v3283 = vld [vmem:[#allocation2 + $0x180] sm:$0xf]
    %v3284 = vsel %vm3217, %v3089, %v3283
    %3285 = vst [vmem:[#allocation2 + $0x180] sm:$0xf] %v3284
    %3286 = vst.msk [vmem:[#allocation2 + $0x18c] sm:$0xf] %vm3221, %v3091
    %v3287 = vld [vmem:[#allocation2 + $0x198] sm:$0xf]
    %v3288 = vsel %vm3217, %v3093, %v3287
    %3289 = vst [vmem:[#allocation2 + $0x198] sm:$0xf] %v3288
    %3290 = vst.msk [vmem:[#allocation2 + $0x1a4] sm:$0xf] %vm3221, %v3095
    %v3291 = vld [vmem:[#allocation2 + $0x1b0] sm:$0xf]
    %v3292 = vsel %vm3217, %v3097, %v3291
    %3293 = vst [vmem:[#allocation2 + $0x1b0] sm:$0xf] %v3292
    %3294 = vst.msk [vmem:[#allocation2 + $0x1bc] sm:$0xf] %vm3221, %v3099
    %v3295 = vld [vmem:[#allocation2 + $0x1c8] sm:$0xf]
    %v3296 = vsel %vm3217, %v3101, %v3295
    %3297 = vst [vmem:[#allocation2 + $0x1c8] sm:$0xf] %v3296
    %3298 = vst.msk [vmem:[#allocation2 + $0x1d4] sm:$0xf] %vm3221, %v3103
    %v3299 = vld [vmem:[#allocation2 + $0x1e0] sm:$0xf]
    %v3300 = vsel %vm3217, %v3105, %v3299
    %3301 = vst [vmem:[#allocation2 + $0x1e0] sm:$0xf] %v3300
    %3302 = vst.msk [vmem:[#allocation2 + $0x1ec] sm:$0xf] %vm3221, %v3107
    %v3303 = vld [vmem:[#allocation2 + $0x1f8] sm:$0xf]
    %v3304 = vsel %vm3217, %v3109, %v3303
    %3305 = vst [vmem:[#allocation2 + $0x1f8] sm:$0xf] %v3304
    %3306 = vst.msk [vmem:[#allocation2 + $0x204] sm:$0xf] %vm3221, %v3111
    %v3307 = vld [vmem:[#allocation2 + $0x210] sm:$0xf]
    %v3308 = vsel %vm3217, %v3113, %v3307
    %3309 = vst [vmem:[#allocation2 + $0x210] sm:$0xf] %v3308
    %3310 = vst.msk [vmem:[#allocation2 + $0x21c] sm:$0xf] %vm3221, %v3115
    %v3311 = vld [vmem:[#allocation2 + $0x228] sm:$0xf]
    %v3312 = vsel %vm3217, %v3117, %v3311
    %3313 = vst [vmem:[#allocation2 + $0x228] sm:$0xf] %v3312
    %3314 = vst.msk [vmem:[#allocation2 + $0x234] sm:$0xf] %vm3221, %v3119
    %v3315 = vld [vmem:[#allocation2 + $0x240] sm:$0xf]
    %v3316 = vsel %vm3217, %v3121, %v3315
    %3317 = vst [vmem:[#allocation2 + $0x240] sm:$0xf] %v3316
    %3318 = vst.msk [vmem:[#allocation2 + $0x24c] sm:$0xf] %vm3221, %v3123
    %v3319 = vld [vmem:[#allocation2 + $0x258] sm:$0xf]
    %v3320 = vsel %vm3217, %v3125, %v3319
    %3321 = vst [vmem:[#allocation2 + $0x258] sm:$0xf] %v3320
    %3322 = vst.msk [vmem:[#allocation2 + $0x264] sm:$0xf] %vm3221, %v3127
    %v3323 = vld [vmem:[#allocation2 + $0x270] sm:$0xf]
    %v3324 = vsel %vm3217, %v3129, %v3323
    %3325 = vst [vmem:[#allocation2 + $0x270] sm:$0xf] %v3324
    %3326 = vst.msk [vmem:[#allocation2 + $0x27c] sm:$0xf] %vm3221, %v3131
    %v3327 = vld [vmem:[#allocation2 + $0x288] sm:$0xf]
    %v3328 = vsel %vm3217, %v3133, %v3327
    %3329 = vst [vmem:[#allocation2 + $0x288] sm:$0xf] %v3328
    %3330 = vst.msk [vmem:[#allocation2 + $0x294] sm:$0xf] %vm3221, %v3135
    %v3331 = vld [vmem:[#allocation2 + $0x2a0] sm:$0xf]
    %v3332 = vsel %vm3217, %v3137, %v3331
    %3333 = vst [vmem:[#allocation2 + $0x2a0] sm:$0xf] %v3332
    %3334 = vst.msk [vmem:[#allocation2 + $0x2ac] sm:$0xf] %vm3221, %v3139
    %v3335 = vld [vmem:[#allocation2 + $0x2b8] sm:$0xf]
    %v3336 = vsel %vm3217, %v3141, %v3335
    %3337 = vst [vmem:[#allocation2 + $0x2b8] sm:$0xf] %v3336
    %3338 = vst.msk [vmem:[#allocation2 + $0x2c4] sm:$0xf] %vm3221, %v3143
    %v3339 = vld [vmem:[#allocation2 + $0x2d0] sm:$0xf]
    %v3340 = vsel %vm3217, %v3145, %v3339
    %3341 = vst [vmem:[#allocation2 + $0x2d0] sm:$0xf] %v3340
    %3342 = vst.msk [vmem:[#allocation2 + $0x2dc] sm:$0xf] %vm3221, %v3147
    %v3343 = vld [vmem:[#allocation2 + $0x2e8] sm:$0xf]
    %v3344 = vsel %vm3217, %v3149, %v3343
    %3345 = vst [vmem:[#allocation2 + $0x2e8] sm:$0xf] %v3344
    %3346 = vst.msk [vmem:[#allocation2 + $0x2f4] sm:$0xf] %vm3221, %v3151
    %vm3347 = vcmask 1041152
    %vm3348 = vmand %vm3347, %vm1288
    %v3349 = vld [vmem:[#allocation2] sm:$0x1]
    %v3350 = vsel %vm3348, 0, %v3349
    %3351 = vst [vmem:[#allocation2] sm:$0x1] %v3350
    %v3352 = vld [vmem:[#allocation2 + $0x18] sm:$0x1]
    %v3353 = vsel %vm3348, 0, %v3352
    %3354 = vst [vmem:[#allocation2 + $0x18] sm:$0x1] %v3353
    %v3355 = vld [vmem:[#allocation2 + $0x30] sm:$0x1]
    %v3356 = vsel %vm3348, 0, %v3355
    %3357 = vst [vmem:[#allocation2 + $0x30] sm:$0x1] %v3356
    %v3358 = vld [vmem:[#allocation2 + $0x48] sm:$0x1]
    %v3359 = vsel %vm3348, 0, %v3358
    %3360 = vst [vmem:[#allocation2 + $0x48] sm:$0x1] %v3359
    %v3361 = vld [vmem:[#allocation2 + $0x60] sm:$0x1]
    %v3362 = vsel %vm3348, 0, %v3361
    %3363 = vst [vmem:[#allocation2 + $0x60] sm:$0x1] %v3362
    %v3364 = vld [vmem:[#allocation2 + $0x78] sm:$0x1]
    %v3365 = vsel %vm3348, 0, %v3364
    %3366 = vst [vmem:[#allocation2 + $0x78] sm:$0x1] %v3365
    %v3367 = vld [vmem:[#allocation2 + $0x90] sm:$0x1]
    %v3368 = vsel %vm3348, 0, %v3367
    %3369 = vst [vmem:[#allocation2 + $0x90] sm:$0x1] %v3368
    %v3370 = vld [vmem:[#allocation2 + $0xa8] sm:$0x1]
    %v3371 = vsel %vm3348, 0, %v3370
    %3372 = vst [vmem:[#allocation2 + $0xa8] sm:$0x1] %v3371
    %v3373 = vld [vmem:[#allocation2 + $0xc0] sm:$0x1]
    %v3374 = vsel %vm3348, 0, %v3373
    %3375 = vst [vmem:[#allocation2 + $0xc0] sm:$0x1] %v3374
    %v3376 = vld [vmem:[#allocation2 + $0xd8] sm:$0x1]
    %v3377 = vsel %vm3348, 0, %v3376
    %3378 = vst [vmem:[#allocation2 + $0xd8] sm:$0x1] %v3377
    %v3379 = vld [vmem:[#allocation2 + $0xf0] sm:$0x1]
    %v3380 = vsel %vm3348, 0, %v3379
    %3381 = vst [vmem:[#allocation2 + $0xf0] sm:$0x1] %v3380
    %v3382 = vld [vmem:[#allocation2 + $0x108] sm:$0x1]
    %v3383 = vsel %vm3348, 0, %v3382
    %3384 = vst [vmem:[#allocation2 + $0x108] sm:$0x1] %v3383
    %v3385 = vld [vmem:[#allocation2 + $0x120] sm:$0x1]
    %v3386 = vsel %vm3348, 0, %v3385
    %3387 = vst [vmem:[#allocation2 + $0x120] sm:$0x1] %v3386
    %v3388 = vld [vmem:[#allocation2 + $0x138] sm:$0x1]
    %v3389 = vsel %vm3348, 0, %v3388
    %3390 = vst [vmem:[#allocation2 + $0x138] sm:$0x1] %v3389
    %v3391 = vld [vmem:[#allocation2 + $0x150] sm:$0x1]
    %v3392 = vsel %vm3348, 0, %v3391
    %3393 = vst [vmem:[#allocation2 + $0x150] sm:$0x1] %v3392
    %v3394 = vld [vmem:[#allocation2 + $0x168] sm:$0x1]
    %v3395 = vsel %vm3348, 0, %v3394
    %3396 = vst [vmem:[#allocation2 + $0x168] sm:$0x1] %v3395
    %v3397 = vld [vmem:[#allocation2 + $0x180] sm:$0x1]
    %v3398 = vsel %vm3348, 0, %v3397
    %3399 = vst [vmem:[#allocation2 + $0x180] sm:$0x1] %v3398
    %v3400 = vld [vmem:[#allocation2 + $0x198] sm:$0x1]
    %v3401 = vsel %vm3348, 0, %v3400
    %3402 = vst [vmem:[#allocation2 + $0x198] sm:$0x1] %v3401
    %v3403 = vld [vmem:[#allocation2 + $0x1b0] sm:$0x1]
    %v3404 = vsel %vm3348, 0, %v3403
    %3405 = vst [vmem:[#allocation2 + $0x1b0] sm:$0x1] %v3404
    %v3406 = vld [vmem:[#allocation2 + $0x1c8] sm:$0x1]
    %v3407 = vsel %vm3348, 0, %v3406
    %3408 = vst [vmem:[#allocation2 + $0x1c8] sm:$0x1] %v3407
    %v3409 = vld [vmem:[#allocation2 + $0x1e0] sm:$0x1]
    %v3410 = vsel %vm3348, 0, %v3409
    %3411 = vst [vmem:[#allocation2 + $0x1e0] sm:$0x1] %v3410
    %v3412 = vld [vmem:[#allocation2 + $0x1f8] sm:$0x1]
    %v3413 = vsel %vm3348, 0, %v3412
    %3414 = vst [vmem:[#allocation2 + $0x1f8] sm:$0x1] %v3413
    %v3415 = vld [vmem:[#allocation2 + $0x210] sm:$0x1]
    %v3416 = vsel %vm3348, 0, %v3415
    %3417 = vst [vmem:[#allocation2 + $0x210] sm:$0x1] %v3416
    %v3418 = vld [vmem:[#allocation2 + $0x228] sm:$0x1]
    %v3419 = vsel %vm3348, 0, %v3418
    %3420 = vst [vmem:[#allocation2 + $0x228] sm:$0x1] %v3419
    %v3421 = vld [vmem:[#allocation2 + $0x240] sm:$0x1]
    %v3422 = vsel %vm3348, 0, %v3421
    %3423 = vst [vmem:[#allocation2 + $0x240] sm:$0x1] %v3422
    %v3424 = vld [vmem:[#allocation2 + $0x258] sm:$0x1]
    %v3425 = vsel %vm3348, 0, %v3424
    %3426 = vst [vmem:[#allocation2 + $0x258] sm:$0x1] %v3425
    %v3427 = vld [vmem:[#allocation2 + $0x270] sm:$0x1]
    %v3428 = vsel %vm3348, 0, %v3427
    %3429 = vst [vmem:[#allocation2 + $0x270] sm:$0x1] %v3428
    %v3430 = vld [vmem:[#allocation2 + $0x288] sm:$0x1]
    %v3431 = vsel %vm3348, 0, %v3430
    %3432 = vst [vmem:[#allocation2 + $0x288] sm:$0x1] %v3431
    %v3433 = vld [vmem:[#allocation2 + $0x2a0] sm:$0x1]
    %v3434 = vsel %vm3348, 0, %v3433
    %3435 = vst [vmem:[#allocation2 + $0x2a0] sm:$0x1] %v3434
    %v3436 = vld [vmem:[#allocation2 + $0x2b8] sm:$0x1]
    %v3437 = vsel %vm3348, 0, %v3436
    %3438 = vst [vmem:[#allocation2 + $0x2b8] sm:$0x1] %v3437
    %v3439 = vld [vmem:[#allocation2 + $0x2d0] sm:$0x1]
    %v3440 = vsel %vm3348, 0, %v3439
    %3441 = vst [vmem:[#allocation2 + $0x2d0] sm:$0x1] %v3440
    %v3442 = vld [vmem:[#allocation2 + $0x2e8] sm:$0x1]
    %v3443 = vsel %vm3348, 0, %v3442
    %3444 = vst [vmem:[#allocation2 + $0x2e8] sm:$0x1] %v3443
    %3509 = vst.msk [vmem:[#allocation2 + $0x4] sm:$0xf] %vm1838, %v1228
    %3510 = vst.msk [vmem:[#allocation2 + $0x10] sm:$0xf] %vm1838, %v1229
    %3511 = vst.msk [vmem:[#allocation2 + $0x1c] sm:$0xf] %vm1838, %v1230
    %3512 = vst.msk [vmem:[#allocation2 + $0x28] sm:$0xf] %vm1838, %v1231
    %3513 = vst.msk [vmem:[#allocation2 + $0x34] sm:$0xf] %vm1838, %v1232
    %3514 = vst.msk [vmem:[#allocation2 + $0x40] sm:$0xf] %vm1838, %v1233
    %3515 = vst.msk [vmem:[#allocation2 + $0x4c] sm:$0xf] %vm1838, %v1234
    %3516 = vst.msk [vmem:[#allocation2 + $0x58] sm:$0xf] %vm1838, %v1235
    %3517 = vst.msk [vmem:[#allocation2 + $0x64] sm:$0xf] %vm1838, %v1236
    %3518 = vst.msk [vmem:[#allocation2 + $0x70] sm:$0xf] %vm1838, %v1237
    %3519 = vst.msk [vmem:[#allocation2 + $0x7c] sm:$0xf] %vm1838, %v1238
    %3520 = vst.msk [vmem:[#allocation2 + $0x88] sm:$0xf] %vm1838, %v1239
    %3521 = vst.msk [vmem:[#allocation2 + $0x94] sm:$0xf] %vm1838, %v1240
    %3522 = vst.msk [vmem:[#allocation2 + $0xa0] sm:$0xf] %vm1838, %v1241
    %3523 = vst.msk [vmem:[#allocation2 + $0xac] sm:$0xf] %vm1838, %v1242
    %3524 = vst.msk [vmem:[#allocation2 + $0xb8] sm:$0xf] %vm1838, %v1243
    %3525 = vst.msk [vmem:[#allocation2 + $0xc4] sm:$0xf] %vm1838, %v1244
    %3526 = vst.msk [vmem:[#allocation2 + $0xd0] sm:$0xf] %vm1838, %v1245
    %3527 = vst.msk [vmem:[#allocation2 + $0xdc] sm:$0xf] %vm1838, %v1246
    %3528 = vst.msk [vmem:[#allocation2 + $0xe8] sm:$0xf] %vm1838, %v1247
    %3529 = vst.msk [vmem:[#allocation2 + $0xf4] sm:$0xf] %vm1838, %v1248
    %3530 = vst.msk [vmem:[#allocation2 + $0x100] sm:$0xf] %vm1838, %v1249
    %3531 = vst.msk [vmem:[#allocation2 + $0x10c] sm:$0xf] %vm1838, %v1250
    %3532 = vst.msk [vmem:[#allocation2 + $0x118] sm:$0xf] %vm1838, %v1251
    %3533 = vst.msk [vmem:[#allocation2 + $0x124] sm:$0xf] %vm1838, %v1252
    %3534 = vst.msk [vmem:[#allocation2 + $0x130] sm:$0xf] %vm1838, %v1253
    %3535 = vst.msk [vmem:[#allocation2 + $0x13c] sm:$0xf] %vm1838, %v1254
    %3536 = vst.msk [vmem:[#allocation2 + $0x148] sm:$0xf] %vm1838, %v1255
    %3537 = vst.msk [vmem:[#allocation2 + $0x154] sm:$0xf] %vm1838, %v1256
    %3538 = vst.msk [vmem:[#allocation2 + $0x160] sm:$0xf] %vm1838, %v1257
    %3539 = vst.msk [vmem:[#allocation2 + $0x16c] sm:$0xf] %vm1838, %v2988
    %3540 = vst.msk [vmem:[#allocation2 + $0x178] sm:$0xf] %vm1838, %v2989
    %3541 = vst.msk [vmem:[#allocation2 + $0x184] sm:$0xf] %vm1838, %v1258
    %3542 = vst.msk [vmem:[#allocation2 + $0x190] sm:$0xf] %vm1838, %v1259
    %3543 = vst.msk [vmem:[#allocation2 + $0x19c] sm:$0xf] %vm1838, %v1260
    %3544 = vst.msk [vmem:[#allocation2 + $0x1a8] sm:$0xf] %vm1838, %v1261
    %3545 = vst.msk [vmem:[#allocation2 + $0x1b4] sm:$0xf] %vm1838, %v1262
    %3546 = vst.msk [vmem:[#allocation2 + $0x1c0] sm:$0xf] %vm1838, %v1263
    %3547 = vst.msk [vmem:[#allocation2 + $0x1cc] sm:$0xf] %vm1838, %v1264
    %3548 = vst.msk [vmem:[#allocation2 + $0x1d8] sm:$0xf] %vm1838, %v1265
    %3549 = vst.msk [vmem:[#allocation2 + $0x1e4] sm:$0xf] %vm1838, %v1266
    %3550 = vst.msk [vmem:[#allocation2 + $0x1f0] sm:$0xf] %vm1838, %v1267
    %3551 = vst.msk [vmem:[#allocation2 + $0x1fc] sm:$0xf] %vm1838, %v1268
    %3552 = vst.msk [vmem:[#allocation2 + $0x208] sm:$0xf] %vm1838, %v1269
    %3553 = vst.msk [vmem:[#allocation2 + $0x214] sm:$0xf] %vm1838, %v1270
    %3554 = vst.msk [vmem:[#allocation2 + $0x220] sm:$0xf] %vm1838, %v1271
    %3555 = vst.msk [vmem:[#allocation2 + $0x22c] sm:$0xf] %vm1838, %v1272
    %3556 = vst.msk [vmem:[#allocation2 + $0x238] sm:$0xf] %vm1838, %v1273
    %3557 = vst.msk [vmem:[#allocation2 + $0x244] sm:$0xf] %vm1838, %v1274
    %3558 = vst.msk [vmem:[#allocation2 + $0x250] sm:$0xf] %vm1838, %v1275
    %3559 = vst.msk [vmem:[#allocation2 + $0x25c] sm:$0xf] %vm1838, %v1276
    %3560 = vst.msk [vmem:[#allocation2 + $0x268] sm:$0xf] %vm1838, %v1277
    %3561 = vst.msk [vmem:[#allocation2 + $0x274] sm:$0xf] %vm1838, %v1278
    %3562 = vst.msk [vmem:[#allocation2 + $0x280] sm:$0xf] %vm1838, %v1279
    %3563 = vst.msk [vmem:[#allocation2 + $0x28c] sm:$0xf] %vm1838, %v1280
    %3564 = vst.msk [vmem:[#allocation2 + $0x298] sm:$0xf] %vm1838, %v1281
    %3565 = vst.msk [vmem:[#allocation2 + $0x2a4] sm:$0xf] %vm1838, %v1282
    %3566 = vst.msk [vmem:[#allocation2 + $0x2b0] sm:$0xf] %vm1838, %v1283
    %3567 = vst.msk [vmem:[#allocation2 + $0x2bc] sm:$0xf] %vm1838, %v1284
    %3568 = vst.msk [vmem:[#allocation2 + $0x2c8] sm:$0xf] %vm1838, %v1285
    %3569 = vst.msk [vmem:[#allocation2 + $0x2d4] sm:$0xf] %vm1838, %v1286
    %3570 = vst.msk [vmem:[#allocation2 + $0x2e0] sm:$0xf] %vm1838, %v1287
    %3571 = vst.msk [vmem:[#allocation2 + $0x2ec] sm:$0xf] %vm1838, %v2990
    %3572 = vst.msk [vmem:[#allocation2 + $0x2f8] sm:$0xf] %vm1838, %v2991
    %v3573 = vrot.slane %v2993, 4
    %v3574 = vrot.slane %v2996, 5
    %v3575 = vor.u32 %v3573, %v3574
    %v3576 = vrot.slane %v3575, 4
    %v3577 = vrot.slane %v3004, 5
    %v3578 = vsel %vm2305, %v3576, %v3577
    %v3579 = vrot.slane %v3001, 4
    %v3580 = vor.u32 %v3579, %v3577
    %v3581 = vrot.slane %v3580, 4
    %v3582 = vrot.slane %v3009, 4
    %v3583 = vrot.slane %v3012, 5
    %v3584 = vor.u32 %v3582, %v3583
    %v3585 = vrot.slane %v3584, 4
    %v3586 = vrot.slane %v3020, 5
    %v3587 = vsel %vm2305, %v3585, %v3586
    %v3588 = vrot.slane %v3017, 4
    %v3589 = vor.u32 %v3588, %v3586
    %v3590 = vrot.slane %v3589, 4
    %3591 = vrot.lane.b32.xlu0 %v2311, 32
    %v3592 = vpop.permute.xlu0 %3591
    %3593 = vrot.lane.b32.xlu0 %v2314, 32
    %v3594 = vpop.permute.xlu0 %3593
    %3595 = vrot.lane.b32.xlu0 %v2320, 32
    %v3596 = vpop.permute.xlu0 %3595
    %3597 = vrot.lane.b32.xlu0 %v2323, 32
    %v3598 = vpop.permute.xlu0 %3597
    %3599 = vrot.lane.b32.xlu0 %v2329, 32
    %v3600 = vpop.permute.xlu0 %3599
    %3601 = vrot.lane.b32.xlu0 %v2332, 32
    %v3602 = vpop.permute.xlu0 %3601
    %3603 = vrot.lane.b32.xlu0 %v2338, 32
    %v3604 = vpop.permute.xlu0 %3603
    %3605 = vrot.lane.b32.xlu0 %v2341, 32
    %v3606 = vpop.permute.xlu0 %3605
    %3607 = vrot.lane.b32.xlu0 %v2347, 32
    %v3608 = vpop.permute.xlu0 %3607
    %3609 = vrot.lane.b32.xlu0 %v2350, 32
    %v3610 = vpop.permute.xlu0 %3609
    %3611 = vrot.lane.b32.xlu0 %v2356, 32
    %v3612 = vpop.permute.xlu0 %3611
    %3613 = vrot.lane.b32.xlu0 %v2359, 32
    %v3614 = vpop.permute.xlu0 %3613
    %3615 = vrot.lane.b32.xlu0 %v2365, 32
    %v3616 = vpop.permute.xlu0 %3615
    %3617 = vrot.lane.b32.xlu0 %v2368, 32
    %v3618 = vpop.permute.xlu0 %3617
    %3619 = vrot.lane.b32.xlu0 %v2374, 32
    %v3620 = vpop.permute.xlu0 %3619
    %3621 = vrot.lane.b32.xlu0 %v2377, 32
    %v3622 = vpop.permute.xlu0 %3621
    %3623 = vrot.lane.b32.xlu0 %v2383, 32
    %v3624 = vpop.permute.xlu0 %3623
    %3625 = vrot.lane.b32.xlu0 %v2386, 32
    %v3626 = vpop.permute.xlu0 %3625
    %3627 = vrot.lane.b32.xlu0 %v2392, 32
    %v3628 = vpop.permute.xlu0 %3627
    %3629 = vrot.lane.b32.xlu0 %v2395, 32
    %v3630 = vpop.permute.xlu0 %3629
    %3631 = vrot.lane.b32.xlu0 %v2401, 32
    %v3632 = vpop.permute.xlu0 %3631
    %3633 = vrot.lane.b32.xlu0 %v2404, 32
    %v3634 = vpop.permute.xlu0 %3633
    %3635 = vrot.lane.b32.xlu0 %v2410, 32
    %v3636 = vpop.permute.xlu0 %3635
    %3637 = vrot.lane.b32.xlu0 %v2413, 32
    %v3638 = vpop.permute.xlu0 %3637
    %3639 = vrot.lane.b32.xlu0 %v2419, 32
    %v3640 = vpop.permute.xlu0 %3639
    %3641 = vrot.lane.b32.xlu0 %v2422, 32
    %v3642 = vpop.permute.xlu0 %3641
    %3643 = vrot.lane.b32.xlu0 %v2428, 32
    %v3644 = vpop.permute.xlu0 %3643
    %3645 = vrot.lane.b32.xlu0 %v2431, 32
    %v3646 = vpop.permute.xlu0 %3645
    %3647 = vrot.lane.b32.xlu0 %v2437, 32
    %v3648 = vpop.permute.xlu0 %3647
    %3649 = vrot.lane.b32.xlu0 %v2440, 32
    %v3650 = vpop.permute.xlu0 %3649
    %3651 = vrot.lane.b32.xlu0 %v3578, 32
    %v3652 = vpop.permute.xlu0 %3651
    %3653 = vrot.lane.b32.xlu0 %v3581, 32
    %v3654 = vpop.permute.xlu0 %3653
    %3655 = vrot.lane.b32.xlu0 %v2446, 32
    %v3656 = vpop.permute.xlu0 %3655
    %3657 = vrot.lane.b32.xlu0 %v2449, 32
    %v3658 = vpop.permute.xlu0 %3657
    %3659 = vrot.lane.b32.xlu0 %v2455, 32
    %v3660 = vpop.permute.xlu0 %3659
    %3661 = vrot.lane.b32.xlu0 %v2458, 32
    %v3662 = vpop.permute.xlu0 %3661
    %3663 = vrot.lane.b32.xlu0 %v2464, 32
    %v3664 = vpop.permute.xlu0 %3663
    %3665 = vrot.lane.b32.xlu0 %v2467, 32
    %v3666 = vpop.permute.xlu0 %3665
    %3667 = vrot.lane.b32.xlu0 %v2473, 32
    %v3668 = vpop.permute.xlu0 %3667
    %3669 = vrot.lane.b32.xlu0 %v2476, 32
    %v3670 = vpop.permute.xlu0 %3669
    %3671 = vrot.lane.b32.xlu0 %v2482, 32
    %v3672 = vpop.permute.xlu0 %3671
    %3673 = vrot.lane.b32.xlu0 %v2485, 32
    %v3674 = vpop.permute.xlu0 %3673
    %3675 = vrot.lane.b32.xlu0 %v2491, 32
    %v3676 = vpop.permute.xlu0 %3675
    %3677 = vrot.lane.b32.xlu0 %v2494, 32
    %v3678 = vpop.permute.xlu0 %3677
    %3679 = vrot.lane.b32.xlu0 %v2500, 32
    %v3680 = vpop.permute.xlu0 %3679
    %3681 = vrot.lane.b32.xlu0 %v2503, 32
    %v3682 = vpop.permute.xlu0 %3681
    %3683 = vrot.lane.b32.xlu0 %v2509, 32
    %v3684 = vpop.permute.xlu0 %3683
    %3685 = vrot.lane.b32.xlu0 %v2512, 32
    %v3686 = vpop.permute.xlu0 %3685
    %3687 = vrot.lane.b32.xlu0 %v2518, 32
    %v3688 = vpop.permute.xlu0 %3687
    %3689 = vrot.lane.b32.xlu0 %v2521, 32
    %v3690 = vpop.permute.xlu0 %3689
    %3691 = vrot.lane.b32.xlu0 %v2527, 32
    %v3692 = vpop.permute.xlu0 %3691
    %3693 = vrot.lane.b32.xlu0 %v2530, 32
    %v3694 = vpop.permute.xlu0 %3693
    %3695 = vrot.lane.b32.xlu0 %v2536, 32
    %v3696 = vpop.permute.xlu0 %3695
    %3697 = vrot.lane.b32.xlu0 %v2539, 32
    %v3698 = vpop.permute.xlu0 %3697
    %3699 = vrot.lane.b32.xlu0 %v2545, 32
    %v3700 = vpop.permute.xlu0 %3699
    %3701 = vrot.lane.b32.xlu0 %v2548, 32
    %v3702 = vpop.permute.xlu0 %3701
    %3703 = vrot.lane.b32.xlu0 %v2554, 32
    %v3704 = vpop.permute.xlu0 %3703
    %3705 = vrot.lane.b32.xlu0 %v2557, 32
    %v3706 = vpop.permute.xlu0 %3705
    %3707 = vrot.lane.b32.xlu0 %v2563, 32
    %v3708 = vpop.permute.xlu0 %3707
    %3709 = vrot.lane.b32.xlu0 %v2566, 32
    %v3710 = vpop.permute.xlu0 %3709
    %3711 = vrot.lane.b32.xlu0 %v2572, 32
    %v3712 = vpop.permute.xlu0 %3711
    %3713 = vrot.lane.b32.xlu0 %v2575, 32
    %v3714 = vpop.permute.xlu0 %3713
    %3715 = vrot.lane.b32.xlu0 %v3587, 32
    %v3716 = vpop.permute.xlu0 %3715
    %3717 = vrot.lane.b32.xlu0 %v3590, 32
    %v3718 = vpop.permute.xlu0 %3717
    %3783 = vst.msk [vmem:[#allocation2 + $0x4] sm:$0xf] %vm2238, %v3592
    %vm3784 = vcmask 519424
    %vm3785 = vmand %vm3784, %vm2303
    %v3786 = vld [vmem:[#allocation2 + $0x10] sm:$0xf]
    %v3787 = vsel %vm3785, %v3594, %v3786
    %3788 = vst [vmem:[#allocation2 + $0x10] sm:$0xf] %v3787
    %3789 = vst.msk [vmem:[#allocation2 + $0x1c] sm:$0xf] %vm2238, %v3596
    %v3790 = vld [vmem:[#allocation2 + $0x28] sm:$0xf]
    %v3791 = vsel %vm3785, %v3598, %v3790
    %3792 = vst [vmem:[#allocation2 + $0x28] sm:$0xf] %v3791
    %3793 = vst.msk [vmem:[#allocation2 + $0x34] sm:$0xf] %vm2238, %v3600
    %v3794 = vld [vmem:[#allocation2 + $0x40] sm:$0xf]
    %v3795 = vsel %vm3785, %v3602, %v3794
    %3796 = vst [vmem:[#allocation2 + $0x40] sm:$0xf] %v3795
    %3797 = vst.msk [vmem:[#allocation2 + $0x4c] sm:$0xf] %vm2238, %v3604
    %v3798 = vld [vmem:[#allocation2 + $0x58] sm:$0xf]
    %v3799 = vsel %vm3785, %v3606, %v3798
    %3800 = vst [vmem:[#allocation2 + $0x58] sm:$0xf] %v3799
    %3801 = vst.msk [vmem:[#allocation2 + $0x64] sm:$0xf] %vm2238, %v3608
    %v3802 = vld [vmem:[#allocation2 + $0x70] sm:$0xf]
    %v3803 = vsel %vm3785, %v3610, %v3802
    %3804 = vst [vmem:[#allocation2 + $0x70] sm:$0xf] %v3803
    %3805 = vst.msk [vmem:[#allocation2 + $0x7c] sm:$0xf] %vm2238, %v3612
    %v3806 = vld [vmem:[#allocation2 + $0x88] sm:$0xf]
    %v3807 = vsel %vm3785, %v3614, %v3806
    %3808 = vst [vmem:[#allocation2 + $0x88] sm:$0xf] %v3807
    %3809 = vst.msk [vmem:[#allocation2 + $0x94] sm:$0xf] %vm2238, %v3616
    %v3810 = vld [vmem:[#allocation2 + $0xa0] sm:$0xf]
    %v3811 = vsel %vm3785, %v3618, %v3810
    %3812 = vst [vmem:[#allocation2 + $0xa0] sm:$0xf] %v3811
    %3813 = vst.msk [vmem:[#allocation2 + $0xac] sm:$0xf] %vm2238, %v3620
    %v3814 = vld [vmem:[#allocation2 + $0xb8] sm:$0xf]
    %v3815 = vsel %vm3785, %v3622, %v3814
    %3816 = vst [vmem:[#allocation2 + $0xb8] sm:$0xf] %v3815
    %3817 = vst.msk [vmem:[#allocation2 + $0xc4] sm:$0xf] %vm2238, %v3624
    %v3818 = vld [vmem:[#allocation2 + $0xd0] sm:$0xf]
    %v3819 = vsel %vm3785, %v3626, %v3818
    %3820 = vst [vmem:[#allocation2 + $0xd0] sm:$0xf] %v3819
    %3821 = vst.msk [vmem:[#allocation2 + $0xdc] sm:$0xf] %vm2238, %v3628
    %v3822 = vld [vmem:[#allocation2 + $0xe8] sm:$0xf]
    %v3823 = vsel %vm3785, %v3630, %v3822
    %3824 = vst [vmem:[#allocation2 + $0xe8] sm:$0xf] %v3823
    %3825 = vst.msk [vmem:[#allocation2 + $0xf4] sm:$0xf] %vm2238, %v3632
    %v3826 = vld [vmem:[#allocation2 + $0x100] sm:$0xf]
    %v3827 = vsel %vm3785, %v3634, %v3826
    %3828 = vst [vmem:[#allocation2 + $0x100] sm:$0xf] %v3827
    %3829 = vst.msk [vmem:[#allocation2 + $0x10c] sm:$0xf] %vm2238, %v3636
    %v3830 = vld [vmem:[#allocation2 + $0x118] sm:$0xf]
    %v3831 = vsel %vm3785, %v3638, %v3830
    %3832 = vst [vmem:[#allocation2 + $0x118] sm:$0xf] %v3831
    %3833 = vst.msk [vmem:[#allocation2 + $0x124] sm:$0xf] %vm2238, %v3640
    %v3834 = vld [vmem:[#allocation2 + $0x130] sm:$0xf]
    %v3835 = vsel %vm3785, %v3642, %v3834
    %3836 = vst [vmem:[#allocation2 + $0x130] sm:$0xf] %v3835
    %3837 = vst.msk [vmem:[#allocation2 + $0x13c] sm:$0xf] %vm2238, %v3644
    %v3838 = vld [vmem:[#allocation2 + $0x148] sm:$0xf]
    %v3839 = vsel %vm3785, %v3646, %v3838
    %3840 = vst [vmem:[#allocation2 + $0x148] sm:$0xf] %v3839
    %3841 = vst.msk [vmem:[#allocation2 + $0x154] sm:$0xf] %vm2238, %v3648
    %v3842 = vld [vmem:[#allocation2 + $0x160] sm:$0xf]
    %v3843 = vsel %vm3785, %v3650, %v3842
    %3844 = vst [vmem:[#allocation2 + $0x160] sm:$0xf] %v3843
    %3845 = vst.msk [vmem:[#allocation2 + $0x16c] sm:$0xf] %vm2238, %v3652
    %v3846 = vld [vmem:[#allocation2 + $0x178] sm:$0xf]
    %v3847 = vsel %vm3785, %v3654, %v3846
    %3848 = vst [vmem:[#allocation2 + $0x178] sm:$0xf] %v3847
    %3849 = vst.msk [vmem:[#allocation2 + $0x184] sm:$0xf] %vm2238, %v3656
    %v3850 = vld [vmem:[#allocation2 + $0x190] sm:$0xf]
    %v3851 = vsel %vm3785, %v3658, %v3850
    %3852 = vst [vmem:[#allocation2 + $0x190] sm:$0xf] %v3851
    %3853 = vst.msk [vmem:[#allocation2 + $0x19c] sm:$0xf] %vm2238, %v3660
    %v3854 = vld [vmem:[#allocation2 + $0x1a8] sm:$0xf]
    %v3855 = vsel %vm3785, %v3662, %v3854
    %3856 = vst [vmem:[#allocation2 + $0x1a8] sm:$0xf] %v3855
    %3857 = vst.msk [vmem:[#allocation2 + $0x1b4] sm:$0xf] %vm2238, %v3664
    %v3858 = vld [vmem:[#allocation2 + $0x1c0] sm:$0xf]
    %v3859 = vsel %vm3785, %v3666, %v3858
    %3860 = vst [vmem:[#allocation2 + $0x1c0] sm:$0xf] %v3859
    %3861 = vst.msk [vmem:[#allocation2 + $0x1cc] sm:$0xf] %vm2238, %v3668
    %v3862 = vld [vmem:[#allocation2 + $0x1d8] sm:$0xf]
    %v3863 = vsel %vm3785, %v3670, %v3862
    %3864 = vst [vmem:[#allocation2 + $0x1d8] sm:$0xf] %v3863
    %3865 = vst.msk [vmem:[#allocation2 + $0x1e4] sm:$0xf] %vm2238, %v3672
    %v3866 = vld [vmem:[#allocation2 + $0x1f0] sm:$0xf]
    %v3867 = vsel %vm3785, %v3674, %v3866
    %3868 = vst [vmem:[#allocation2 + $0x1f0] sm:$0xf] %v3867
    %3869 = vst.msk [vmem:[#allocation2 + $0x1fc] sm:$0xf] %vm2238, %v3676
    %v3870 = vld [vmem:[#allocation2 + $0x208] sm:$0xf]
    %v3871 = vsel %vm3785, %v3678, %v3870
    %3872 = vst [vmem:[#allocation2 + $0x208] sm:$0xf] %v3871
    %3873 = vst.msk [vmem:[#allocation2 + $0x214] sm:$0xf] %vm2238, %v3680
    %v3874 = vld [vmem:[#allocation2 + $0x220] sm:$0xf]
    %v3875 = vsel %vm3785, %v3682, %v3874
    %3876 = vst [vmem:[#allocation2 + $0x220] sm:$0xf] %v3875
    %3877 = vst.msk [vmem:[#allocation2 + $0x22c] sm:$0xf] %vm2238, %v3684
    %v3878 = vld [vmem:[#allocation2 + $0x238] sm:$0xf]
    %v3879 = vsel %vm3785, %v3686, %v3878
    %3880 = vst [vmem:[#allocation2 + $0x238] sm:$0xf] %v3879
    %3881 = vst.msk [vmem:[#allocation2 + $0x244] sm:$0xf] %vm2238, %v3688
    %v3882 = vld [vmem:[#allocation2 + $0x250] sm:$0xf]
    %v3883 = vsel %vm3785, %v3690, %v3882
    %3884 = vst [vmem:[#allocation2 + $0x250] sm:$0xf] %v3883
    %3885 = vst.msk [vmem:[#allocation2 + $0x25c] sm:$0xf] %vm2238, %v3692
    %v3886 = vld [vmem:[#allocation2 + $0x268] sm:$0xf]
    %v3887 = vsel %vm3785, %v3694, %v3886
    %3888 = vst [vmem:[#allocation2 + $0x268] sm:$0xf] %v3887
    %3889 = vst.msk [vmem:[#allocation2 + $0x274] sm:$0xf] %vm2238, %v3696
    %v3890 = vld [vmem:[#allocation2 + $0x280] sm:$0xf]
    %v3891 = vsel %vm3785, %v3698, %v3890
    %3892 = vst [vmem:[#allocation2 + $0x280] sm:$0xf] %v3891
    %3893 = vst.msk [vmem:[#allocation2 + $0x28c] sm:$0xf] %vm2238, %v3700
    %v3894 = vld [vmem:[#allocation2 + $0x298] sm:$0xf]
    %v3895 = vsel %vm3785, %v3702, %v3894
    %3896 = vst [vmem:[#allocation2 + $0x298] sm:$0xf] %v3895
    %3897 = vst.msk [vmem:[#allocation2 + $0x2a4] sm:$0xf] %vm2238, %v3704
    %v3898 = vld [vmem:[#allocation2 + $0x2b0] sm:$0xf]
    %v3899 = vsel %vm3785, %v3706, %v3898
    %3900 = vst [vmem:[#allocation2 + $0x2b0] sm:$0xf] %v3899
    %3901 = vst.msk [vmem:[#allocation2 + $0x2bc] sm:$0xf] %vm2238, %v3708
    %v3902 = vld [vmem:[#allocation2 + $0x2c8] sm:$0xf]
    %v3903 = vsel %vm3785, %v3710, %v3902
    %3904 = vst [vmem:[#allocation2 + $0x2c8] sm:$0xf] %v3903
    %3905 = vst.msk [vmem:[#allocation2 + $0x2d4] sm:$0xf] %vm2238, %v3712
    %v3906 = vld [vmem:[#allocation2 + $0x2e0] sm:$0xf]
    %v3907 = vsel %vm3785, %v3714, %v3906
    %3908 = vst [vmem:[#allocation2 + $0x2e0] sm:$0xf] %v3907
    %3909 = vst.msk [vmem:[#allocation2 + $0x2ec] sm:$0xf] %vm2238, %v3716
    %v3910 = vld [vmem:[#allocation2 + $0x2f8] sm:$0xf]
    %v3911 = vsel %vm3785, %v3718, %v3910
    %3912 = vst [vmem:[#allocation2 + $0x2f8] sm:$0xf] %v3911
    %vm3913 = vcmask 519427
    %vm3914 = vmand %vm3913, %vm2884
    %v3915 = vld [vmem:[#allocation2 + $0x10] sm:$0x8]
    %v3916 = vsel %vm3914, 0, %v3915
    %3917 = vst [vmem:[#allocation2 + $0x10] sm:$0x8] %v3916
    %v3918 = vld [vmem:[#allocation2 + $0x28] sm:$0x8]
    %v3919 = vsel %vm3914, 0, %v3918
    %3920 = vst [vmem:[#allocation2 + $0x28] sm:$0x8] %v3919
    %v3921 = vld [vmem:[#allocation2 + $0x40] sm:$0x8]
    %v3922 = vsel %vm3914, 0, %v3921
    %3923 = vst [vmem:[#allocation2 + $0x40] sm:$0x8] %v3922
    %v3924 = vld [vmem:[#allocation2 + $0x58] sm:$0x8]
    %v3925 = vsel %vm3914, 0, %v3924
    %3926 = vst [vmem:[#allocation2 + $0x58] sm:$0x8] %v3925
    %v3927 = vld [vmem:[#allocation2 + $0x70] sm:$0x8]
    %v3928 = vsel %vm3914, 0, %v3927
    %3929 = vst [vmem:[#allocation2 + $0x70] sm:$0x8] %v3928
    %v3930 = vld [vmem:[#allocation2 + $0x88] sm:$0x8]
    %v3931 = vsel %vm3914, 0, %v3930
    %3932 = vst [vmem:[#allocation2 + $0x88] sm:$0x8] %v3931
    %v3933 = vld [vmem:[#allocation2 + $0xa0] sm:$0x8]
    %v3934 = vsel %vm3914, 0, %v3933
    %3935 = vst [vmem:[#allocation2 + $0xa0] sm:$0x8] %v3934
    %v3936 = vld [vmem:[#allocation2 + $0xb8] sm:$0x8]
    %v3937 = vsel %vm3914, 0, %v3936
    %3938 = vst [vmem:[#allocation2 + $0xb8] sm:$0x8] %v3937
    %v3939 = vld [vmem:[#allocation2 + $0xd0] sm:$0x8]
    %v3940 = vsel %vm3914, 0, %v3939
    %3941 = vst [vmem:[#allocation2 + $0xd0] sm:$0x8] %v3940
    %v3942 = vld [vmem:[#allocation2 + $0xe8] sm:$0x8]
    %v3943 = vsel %vm3914, 0, %v3942
    %3944 = vst [vmem:[#allocation2 + $0xe8] sm:$0x8] %v3943
    %v3945 = vld [vmem:[#allocation2 + $0x100] sm:$0x8]
    %v3946 = vsel %vm3914, 0, %v3945
    %3947 = vst [vmem:[#allocation2 + $0x100] sm:$0x8] %v3946
    %v3948 = vld [vmem:[#allocation2 + $0x118] sm:$0x8]
    %v3949 = vsel %vm3914, 0, %v3948
    %3950 = vst [vmem:[#allocation2 + $0x118] sm:$0x8] %v3949
    %v3951 = vld [vmem:[#allocation2 + $0x130] sm:$0x8]
    %v3952 = vsel %vm3914, 0, %v3951
    %3953 = vst [vmem:[#allocation2 + $0x130] sm:$0x8] %v3952
    %v3954 = vld [vmem:[#allocation2 + $0x148] sm:$0x8]
    %v3955 = vsel %vm3914, 0, %v3954
    %3956 = vst [vmem:[#allocation2 + $0x148] sm:$0x8] %v3955
    %v3957 = vld [vmem:[#allocation2 + $0x160] sm:$0x8]
    %v3958 = vsel %vm3914, 0, %v3957
    %3959 = vst [vmem:[#allocation2 + $0x160] sm:$0x8] %v3958
    %v3960 = vld [vmem:[#allocation2 + $0x178] sm:$0x8]
    %v3961 = vsel %vm3914, 0, %v3960
    %3962 = vst [vmem:[#allocation2 + $0x178] sm:$0x8] %v3961
    %v3963 = vld [vmem:[#allocation2 + $0x190] sm:$0x8]
    %v3964 = vsel %vm3914, 0, %v3963
    %3965 = vst [vmem:[#allocation2 + $0x190] sm:$0x8] %v3964
    %v3966 = vld [vmem:[#allocation2 + $0x1a8] sm:$0x8]
    %v3967 = vsel %vm3914, 0, %v3966
    %3968 = vst [vmem:[#allocation2 + $0x1a8] sm:$0x8] %v3967
    %v3969 = vld [vmem:[#allocation2 + $0x1c0] sm:$0x8]
    %v3970 = vsel %vm3914, 0, %v3969
    %3971 = vst [vmem:[#allocation2 + $0x1c0] sm:$0x8] %v3970
    %v3972 = vld [vmem:[#allocation2 + $0x1d8] sm:$0x8]
    %v3973 = vsel %vm3914, 0, %v3972
    %3974 = vst [vmem:[#allocation2 + $0x1d8] sm:$0x8] %v3973
    %v3975 = vld [vmem:[#allocation2 + $0x1f0] sm:$0x8]
    %v3976 = vsel %vm3914, 0, %v3975
    %3977 = vst [vmem:[#allocation2 + $0x1f0] sm:$0x8] %v3976
    %v3978 = vld [vmem:[#allocation2 + $0x208] sm:$0x8]
    %v3979 = vsel %vm3914, 0, %v3978
    %3980 = vst [vmem:[#allocation2 + $0x208] sm:$0x8] %v3979
    %v3981 = vld [vmem:[#allocation2 + $0x220] sm:$0x8]
    %v3982 = vsel %vm3914, 0, %v3981
    %3983 = vst [vmem:[#allocation2 + $0x220] sm:$0x8] %v3982
    %v3984 = vld [vmem:[#allocation2 + $0x238] sm:$0x8]
    %v3985 = vsel %vm3914, 0, %v3984
    %3986 = vst [vmem:[#allocation2 + $0x238] sm:$0x8] %v3985
    %v3987 = vld [vmem:[#allocation2 + $0x250] sm:$0x8]
    %v3988 = vsel %vm3914, 0, %v3987
    %3989 = vst [vmem:[#allocation2 + $0x250] sm:$0x8] %v3988
    %v3990 = vld [vmem:[#allocation2 + $0x268] sm:$0x8]
    %v3991 = vsel %vm3914, 0, %v3990
    %3992 = vst [vmem:[#allocation2 + $0x268] sm:$0x8] %v3991
    %v3993 = vld [vmem:[#allocation2 + $0x280] sm:$0x8]
    %v3994 = vsel %vm3914, 0, %v3993
    %3995 = vst [vmem:[#allocation2 + $0x280] sm:$0x8] %v3994
    %v3996 = vld [vmem:[#allocation2 + $0x298] sm:$0x8]
    %v3997 = vsel %vm3914, 0, %v3996
    %3998 = vst [vmem:[#allocation2 + $0x298] sm:$0x8] %v3997
    %v3999 = vld [vmem:[#allocation2 + $0x2b0] sm:$0x8]
    %v4000 = vsel %vm3914, 0, %v3999
    %4001 = vst [vmem:[#allocation2 + $0x2b0] sm:$0x8] %v4000
    %v4002 = vld [vmem:[#allocation2 + $0x2c8] sm:$0x8]
    %v4003 = vsel %vm3914, 0, %v4002
    %4004 = vst [vmem:[#allocation2 + $0x2c8] sm:$0x8] %v4003
    %v4005 = vld [vmem:[#allocation2 + $0x2e0] sm:$0x8]
    %v4006 = vsel %vm3914, 0, %v4005
    %4007 = vst [vmem:[#allocation2 + $0x2e0] sm:$0x8] %v4006
    %v4008 = vld [vmem:[#allocation2 + $0x2f8] sm:$0x8]
    %v4009 = vsel %vm3914, 0, %v4008
    %4010 = vst [vmem:[#allocation2 + $0x2f8] sm:$0x8] %v4009
    %4011 = vrot.lane.b32.xlu0 %v1313, 64
    %v4012 = vpop.permute.xlu0 %4011
    %4013 = vrot.lane.b32.xlu0 %v1322, 64
    %v4014 = vpop.permute.xlu0 %4013
    %4015 = vrot.lane.b32.xlu0 %v1329, 64
    %v4016 = vpop.permute.xlu0 %4015
    %4017 = vrot.lane.b32.xlu0 %v1338, 64
    %v4018 = vpop.permute.xlu0 %4017
    %4019 = vrot.lane.b32.xlu0 %v1345, 64
    %v4020 = vpop.permute.xlu0 %4019
    %4021 = vrot.lane.b32.xlu0 %v1354, 64
    %v4022 = vpop.permute.xlu0 %4021
    %4023 = vrot.lane.b32.xlu0 %v1361, 64
    %v4024 = vpop.permute.xlu0 %4023
    %4025 = vrot.lane.b32.xlu0 %v1370, 64
    %v4026 = vpop.permute.xlu0 %4025
    %4027 = vrot.lane.b32.xlu0 %v1377, 64
    %v4028 = vpop.permute.xlu0 %4027
    %4029 = vrot.lane.b32.xlu0 %v1386, 64
    %v4030 = vpop.permute.xlu0 %4029
    %4031 = vrot.lane.b32.xlu0 %v1393, 64
    %v4032 = vpop.permute.xlu0 %4031
    %4033 = vrot.lane.b32.xlu0 %v1402, 64
    %v4034 = vpop.permute.xlu0 %4033
    %4035 = vrot.lane.b32.xlu0 %v1409, 64
    %v4036 = vpop.permute.xlu0 %4035
    %4037 = vrot.lane.b32.xlu0 %v1418, 64
    %v4038 = vpop.permute.xlu0 %4037
    %4039 = vrot.lane.b32.xlu0 %v1425, 64
    %v4040 = vpop.permute.xlu0 %4039
    %4041 = vrot.lane.b32.xlu0 %v1434, 64
    %v4042 = vpop.permute.xlu0 %4041
    %4043 = vrot.lane.b32.xlu0 %v1441, 64
    %v4044 = vpop.permute.xlu0 %4043
    %4045 = vrot.lane.b32.xlu0 %v1450, 64
    %v4046 = vpop.permute.xlu0 %4045
    %4047 = vrot.lane.b32.xlu0 %v1457, 64
    %v4048 = vpop.permute.xlu0 %4047
    %4049 = vrot.lane.b32.xlu0 %v1466, 64
    %v4050 = vpop.permute.xlu0 %4049
    %4051 = vrot.lane.b32.xlu0 %v1473, 64
    %v4052 = vpop.permute.xlu0 %4051
    %4053 = vrot.lane.b32.xlu0 %v1482, 64
    %v4054 = vpop.permute.xlu0 %4053
    %4055 = vrot.lane.b32.xlu0 %v1489, 64
    %v4056 = vpop.permute.xlu0 %4055
    %4057 = vrot.lane.b32.xlu0 %v1498, 64
    %v4058 = vpop.permute.xlu0 %4057
    %4059 = vrot.lane.b32.xlu0 %v1505, 64
    %v4060 = vpop.permute.xlu0 %4059
    %4061 = vrot.lane.b32.xlu0 %v1514, 64
    %v4062 = vpop.permute.xlu0 %4061
    %4063 = vrot.lane.b32.xlu0 %v1521, 64
    %v4064 = vpop.permute.xlu0 %4063
    %4065 = vrot.lane.b32.xlu0 %v1530, 64
    %v4066 = vpop.permute.xlu0 %4065
    %4067 = vrot.lane.b32.xlu0 %v2998, 64
    %v4068 = vpop.permute.xlu0 %4067
    %4069 = vrot.lane.b32.xlu0 %v3007, 64
    %v4070 = vpop.permute.xlu0 %4069
    %4071 = vrot.lane.b32.xlu0 %v1553, 64
    %v4072 = vpop.permute.xlu0 %4071
    %4073 = vrot.lane.b32.xlu0 %v1562, 64
    %v4074 = vpop.permute.xlu0 %4073
    %4075 = vrot.lane.b32.xlu0 %v1569, 64
    %v4076 = vpop.permute.xlu0 %4075
    %4077 = vrot.lane.b32.xlu0 %v1578, 64
    %v4078 = vpop.permute.xlu0 %4077
    %4079 = vrot.lane.b32.xlu0 %v1585, 64
    %v4080 = vpop.permute.xlu0 %4079
    %4081 = vrot.lane.b32.xlu0 %v1594, 64
    %v4082 = vpop.permute.xlu0 %4081
    %4083 = vrot.lane.b32.xlu0 %v1601, 64
    %v4084 = vpop.permute.xlu0 %4083
    %4085 = vrot.lane.b32.xlu0 %v1610, 64
    %v4086 = vpop.permute.xlu0 %4085
    %4087 = vrot.lane.b32.xlu0 %v1617, 64
    %v4088 = vpop.permute.xlu0 %4087
    %4089 = vrot.lane.b32.xlu0 %v1626, 64
    %v4090 = vpop.permute.xlu0 %4089
    %4091 = vrot.lane.b32.xlu0 %v1633, 64
    %v4092 = vpop.permute.xlu0 %4091
    %4093 = vrot.lane.b32.xlu0 %v1642, 64
    %v4094 = vpop.permute.xlu0 %4093
    %4095 = vrot.lane.b32.xlu0 %v1649, 64
    %v4096 = vpop.permute.xlu0 %4095
    %4097 = vrot.lane.b32.xlu0 %v1658, 64
    %v4098 = vpop.permute.xlu0 %4097
    %4099 = vrot.lane.b32.xlu0 %v1665, 64
    %v4100 = vpop.permute.xlu0 %4099
    %4101 = vrot.lane.b32.xlu0 %v1674, 64
    %v4102 = vpop.permute.xlu0 %4101
    %4103 = vrot.lane.b32.xlu0 %v1681, 64
    %v4104 = vpop.permute.xlu0 %4103
    %4105 = vrot.lane.b32.xlu0 %v1690, 64
    %v4106 = vpop.permute.xlu0 %4105
    %4107 = vrot.lane.b32.xlu0 %v1697, 64
    %v4108 = vpop.permute.xlu0 %4107
    %4109 = vrot.lane.b32.xlu0 %v1706, 64
    %v4110 = vpop.permute.xlu0 %4109
    %4111 = vrot.lane.b32.xlu0 %v1713, 64
    %v4112 = vpop.permute.xlu0 %4111
    %4113 = vrot.lane.b32.xlu0 %v1722, 64
    %v4114 = vpop.permute.xlu0 %4113
    %4115 = vrot.lane.b32.xlu0 %v1729, 64
    %v4116 = vpop.permute.xlu0 %4115
    %4117 = vrot.lane.b32.xlu0 %v1738, 64
    %v4118 = vpop.permute.xlu0 %4117
    %4119 = vrot.lane.b32.xlu0 %v1745, 64
    %v4120 = vpop.permute.xlu0 %4119
    %4121 = vrot.lane.b32.xlu0 %v1754, 64
    %v4122 = vpop.permute.xlu0 %4121
    %4123 = vrot.lane.b32.xlu0 %v1761, 64
    %v4124 = vpop.permute.xlu0 %4123
    %4125 = vrot.lane.b32.xlu0 %v1770, 64
    %v4126 = vpop.permute.xlu0 %4125
    %4127 = vrot.lane.b32.xlu0 %v3014, 64
    %v4128 = vpop.permute.xlu0 %4127
    %4129 = vrot.lane.b32.xlu0 %v3023, 64
    %v4130 = vpop.permute.xlu0 %4129
    %vm4191 = vmand %vm2758, %vm1833
    %v4192 = vld [vmem:[#allocation2 + $0x4] sm:$0xf]
    %v4193 = vsel %vm4191, %v4012, %v4192
    %4194 = vst [vmem:[#allocation2 + $0x4] sm:$0xf] %v4193
    %4195 = vst.msk [vmem:[#allocation2 + $0x10] sm:$0xf] %vm2756, %v4014
    %v4196 = vld [vmem:[#allocation2 + $0x1c] sm:$0xf]
    %v4197 = vsel %vm4191, %v4016, %v4196
    %4198 = vst [vmem:[#allocation2 + $0x1c] sm:$0xf] %v4197
    %4199 = vst.msk [vmem:[#allocation2 + $0x28] sm:$0xf] %vm2756, %v4018
    %v4200 = vld [vmem:[#allocation2 + $0x34] sm:$0xf]
    %v4201 = vsel %vm4191, %v4020, %v4200
    %4202 = vst [vmem:[#allocation2 + $0x34] sm:$0xf] %v4201
    %4203 = vst.msk [vmem:[#allocation2 + $0x40] sm:$0xf] %vm2756, %v4022
    %v4204 = vld [vmem:[#allocation2 + $0x4c] sm:$0xf]
    %v4205 = vsel %vm4191, %v4024, %v4204
    %4206 = vst [vmem:[#allocation2 + $0x4c] sm:$0xf] %v4205
    %4207 = vst.msk [vmem:[#allocation2 + $0x58] sm:$0xf] %vm2756, %v4026
    %v4208 = vld [vmem:[#allocation2 + $0x64] sm:$0xf]
    %v4209 = vsel %vm4191, %v4028, %v4208
    %4210 = vst [vmem:[#allocation2 + $0x64] sm:$0xf] %v4209
    %4211 = vst.msk [vmem:[#allocation2 + $0x70] sm:$0xf] %vm2756, %v4030
    %v4212 = vld [vmem:[#allocation2 + $0x7c] sm:$0xf]
    %v4213 = vsel %vm4191, %v4032, %v4212
    %4214 = vst [vmem:[#allocation2 + $0x7c] sm:$0xf] %v4213
    %4215 = vst.msk [vmem:[#allocation2 + $0x88] sm:$0xf] %vm2756, %v4034
    %v4216 = vld [vmem:[#allocation2 + $0x94] sm:$0xf]
    %v4217 = vsel %vm4191, %v4036, %v4216
    %4218 = vst [vmem:[#allocation2 + $0x94] sm:$0xf] %v4217
    %4219 = vst.msk [vmem:[#allocation2 + $0xa0] sm:$0xf] %vm2756, %v4038
    %v4220 = vld [vmem:[#allocation2 + $0xac] sm:$0xf]
    %v4221 = vsel %vm4191, %v4040, %v4220
    %4222 = vst [vmem:[#allocation2 + $0xac] sm:$0xf] %v4221
    %4223 = vst.msk [vmem:[#allocation2 + $0xb8] sm:$0xf] %vm2756, %v4042
    %v4224 = vld [vmem:[#allocation2 + $0xc4] sm:$0xf]
    %v4225 = vsel %vm4191, %v4044, %v4224
    %4226 = vst [vmem:[#allocation2 + $0xc4] sm:$0xf] %v4225
    %4227 = vst.msk [vmem:[#allocation2 + $0xd0] sm:$0xf] %vm2756, %v4046
    %v4228 = vld [vmem:[#allocation2 + $0xdc] sm:$0xf]
    %v4229 = vsel %vm4191, %v4048, %v4228
    %4230 = vst [vmem:[#allocation2 + $0xdc] sm:$0xf] %v4229
    %4231 = vst.msk [vmem:[#allocation2 + $0xe8] sm:$0xf] %vm2756, %v4050
    %v4232 = vld [vmem:[#allocation2 + $0xf4] sm:$0xf]
    %v4233 = vsel %vm4191, %v4052, %v4232
    %4234 = vst [vmem:[#allocation2 + $0xf4] sm:$0xf] %v4233
    %4235 = vst.msk [vmem:[#allocation2 + $0x100] sm:$0xf] %vm2756, %v4054
    %v4236 = vld [vmem:[#allocation2 + $0x10c] sm:$0xf]
    %v4237 = vsel %vm4191, %v4056, %v4236
    %4238 = vst [vmem:[#allocation2 + $0x10c] sm:$0xf] %v4237
    %4239 = vst.msk [vmem:[#allocation2 + $0x118] sm:$0xf] %vm2756, %v4058
    %v4240 = vld [vmem:[#allocation2 + $0x124] sm:$0xf]
    %v4241 = vsel %vm4191, %v4060, %v4240
    %4242 = vst [vmem:[#allocation2 + $0x124] sm:$0xf] %v4241
    %4243 = vst.msk [vmem:[#allocation2 + $0x130] sm:$0xf] %vm2756, %v4062
    %v4244 = vld [vmem:[#allocation2 + $0x13c] sm:$0xf]
    %v4245 = vsel %vm4191, %v4064, %v4244
    %4246 = vst [vmem:[#allocation2 + $0x13c] sm:$0xf] %v4245
    %4247 = vst.msk [vmem:[#allocation2 + $0x148] sm:$0xf] %vm2756, %v4066
    %v4248 = vld [vmem:[#allocation2 + $0x154] sm:$0xf]
    %v4249 = vsel %vm4191, %v4068, %v4248
    %4250 = vst [vmem:[#allocation2 + $0x154] sm:$0xf] %v4249
    %4251 = vst.msk [vmem:[#allocation2 + $0x160] sm:$0xf] %vm2756, %v4070
    %v4252 = vld [vmem:[#allocation2 + $0x184] sm:$0xf]
    %v4253 = vsel %vm4191, %v4072, %v4252
    %4254 = vst [vmem:[#allocation2 + $0x184] sm:$0xf] %v4253
    %4255 = vst.msk [vmem:[#allocation2 + $0x190] sm:$0xf] %vm2756, %v4074
    %v4256 = vld [vmem:[#allocation2 + $0x19c] sm:$0xf]
    %v4257 = vsel %vm4191, %v4076, %v4256
    %4258 = vst [vmem:[#allocation2 + $0x19c] sm:$0xf] %v4257
    %4259 = vst.msk [vmem:[#allocation2 + $0x1a8] sm:$0xf] %vm2756, %v4078
    %v4260 = vld [vmem:[#allocation2 + $0x1b4] sm:$0xf]
    %v4261 = vsel %vm4191, %v4080, %v4260
    %4262 = vst [vmem:[#allocation2 + $0x1b4] sm:$0xf] %v4261
    %4263 = vst.msk [vmem:[#allocation2 + $0x1c0] sm:$0xf] %vm2756, %v4082
    %v4264 = vld [vmem:[#allocation2 + $0x1cc] sm:$0xf]
    %v4265 = vsel %vm4191, %v4084, %v4264
    %4266 = vst [vmem:[#allocation2 + $0x1cc] sm:$0xf] %v4265
    %4267 = vst.msk [vmem:[#allocation2 + $0x1d8] sm:$0xf] %vm2756, %v4086
    %v4268 = vld [vmem:[#allocation2 + $0x1e4] sm:$0xf]
    %v4269 = vsel %vm4191, %v4088, %v4268
    %4270 = vst [vmem:[#allocation2 + $0x1e4] sm:$0xf] %v4269
    %4271 = vst.msk [vmem:[#allocation2 + $0x1f0] sm:$0xf] %vm2756, %v4090
    %v4272 = vld [vmem:[#allocation2 + $0x1fc] sm:$0xf]
    %v4273 = vsel %vm4191, %v4092, %v4272
    %4274 = vst [vmem:[#allocation2 + $0x1fc] sm:$0xf] %v4273
    %4275 = vst.msk [vmem:[#allocation2 + $0x208] sm:$0xf] %vm2756, %v4094
    %v4276 = vld [vmem:[#allocation2 + $0x214] sm:$0xf]
    %v4277 = vsel %vm4191, %v4096, %v4276
    %4278 = vst [vmem:[#allocation2 + $0x214] sm:$0xf] %v4277
    %4279 = vst.msk [vmem:[#allocation2 + $0x220] sm:$0xf] %vm2756, %v4098
    %v4280 = vld [vmem:[#allocation2 + $0x22c] sm:$0xf]
    %v4281 = vsel %vm4191, %v4100, %v4280
    %4282 = vst [vmem:[#allocation2 + $0x22c] sm:$0xf] %v4281
    %4283 = vst.msk [vmem:[#allocation2 + $0x238] sm:$0xf] %vm2756, %v4102
    %v4284 = vld [vmem:[#allocation2 + $0x244] sm:$0xf]
    %v4285 = vsel %vm4191, %v4104, %v4284
    %4286 = vst [vmem:[#allocation2 + $0x244] sm:$0xf] %v4285
    %4287 = vst.msk [vmem:[#allocation2 + $0x250] sm:$0xf] %vm2756, %v4106
    %v4288 = vld [vmem:[#allocation2 + $0x25c] sm:$0xf]
    %v4289 = vsel %vm4191, %v4108, %v4288
    %4290 = vst [vmem:[#allocation2 + $0x25c] sm:$0xf] %v4289
    %4291 = vst.msk [vmem:[#allocation2 + $0x268] sm:$0xf] %vm2756, %v4110
    %v4292 = vld [vmem:[#allocation2 + $0x274] sm:$0xf]
    %v4293 = vsel %vm4191, %v4112, %v4292
    %4294 = vst [vmem:[#allocation2 + $0x274] sm:$0xf] %v4293
    %4295 = vst.msk [vmem:[#allocation2 + $0x280] sm:$0xf] %vm2756, %v4114
    %v4296 = vld [vmem:[#allocation2 + $0x28c] sm:$0xf]
    %v4297 = vsel %vm4191, %v4116, %v4296
    %4298 = vst [vmem:[#allocation2 + $0x28c] sm:$0xf] %v4297
    %4299 = vst.msk [vmem:[#allocation2 + $0x298] sm:$0xf] %vm2756, %v4118
    %v4300 = vld [vmem:[#allocation2 + $0x2a4] sm:$0xf]
    %v4301 = vsel %vm4191, %v4120, %v4300
    %4302 = vst [vmem:[#allocation2 + $0x2a4] sm:$0xf] %v4301
    %4303 = vst.msk [vmem:[#allocation2 + $0x2b0] sm:$0xf] %vm2756, %v4122
    %v4304 = vld [vmem:[#allocation2 + $0x2bc] sm:$0xf]
    %v4305 = vsel %vm4191, %v4124, %v4304
    %4306 = vst [vmem:[#allocation2 + $0x2bc] sm:$0xf] %v4305
    %4307 = vst.msk [vmem:[#allocation2 + $0x2c8] sm:$0xf] %vm2756, %v4126
    %v4308 = vld [vmem:[#allocation2 + $0x2d4] sm:$0xf]
    %v4309 = vsel %vm4191, %v4128, %v4308
    %4310 = vst [vmem:[#allocation2 + $0x2d4] sm:$0xf] %v4309
    %4311 = vst.msk [vmem:[#allocation2 + $0x2e0] sm:$0xf] %vm2756, %v4130
    %s4312 = scalar_lea.vmem [#allocation2], 360
    %4313 = vst.msk [vmem:[%s4312 + $0x4] sm:$0xf] %vm2756, 0
    %4314 = vst.msk [vmem:[%s4312 + $0x10] sm:$0xf] %vm2756, 0
    %4315 = vst.msk [vmem:[%s4312 + $0x184] sm:$0xf] %vm2756, 0
    %4316 = vst.msk [vmem:[%s4312 + $0x190] sm:$0xf] %vm2756, 0
    %vm4317 = vcmask 778752
    %vm4318 = vmand %vm4317, %vm1288
    %v4319 = vld [vmem:[#allocation2 + $0x4] sm:$0x1]
    %v4320 = vsel %vm4318, 0, %v4319
    %4321 = vst [vmem:[#allocation2 + $0x4] sm:$0x1] %v4320
    %v4322 = vld [vmem:[#allocation2 + $0x1c] sm:$0x1]
    %v4323 = vsel %vm4318, 0, %v4322
    %4324 = vst [vmem:[#allocation2 + $0x1c] sm:$0x1] %v4323
    %v4325 = vld [vmem:[#allocation2 + $0x34] sm:$0x1]
    %v4326 = vsel %vm4318, 0, %v4325
    %4327 = vst [vmem:[#allocation2 + $0x34] sm:$0x1] %v4326
    %v4328 = vld [vmem:[#allocation2 + $0x4c] sm:$0x1]
    %v4329 = vsel %vm4318, 0, %v4328
    %4330 = vst [vmem:[#allocation2 + $0x4c] sm:$0x1] %v4329
    %v4331 = vld [vmem:[#allocation2 + $0x64] sm:$0x1]
    %v4332 = vsel %vm4318, 0, %v4331
    %4333 = vst [vmem:[#allocation2 + $0x64] sm:$0x1] %v4332
    %v4334 = vld [vmem:[#allocation2 + $0x7c] sm:$0x1]
    %v4335 = vsel %vm4318, 0, %v4334
    %4336 = vst [vmem:[#allocation2 + $0x7c] sm:$0x1] %v4335
    %v4337 = vld [vmem:[#allocation2 + $0x94] sm:$0x1]
    %v4338 = vsel %vm4318, 0, %v4337
    %4339 = vst [vmem:[#allocation2 + $0x94] sm:$0x1] %v4338
    %v4340 = vld [vmem:[#allocation2 + $0xac] sm:$0x1]
    %v4341 = vsel %vm4318, 0, %v4340
    %4342 = vst [vmem:[#allocation2 + $0xac] sm:$0x1] %v4341
    %v4343 = vld [vmem:[#allocation2 + $0xc4] sm:$0x1]
    %v4344 = vsel %vm4318, 0, %v4343
    %4345 = vst [vmem:[#allocation2 + $0xc4] sm:$0x1] %v4344
    %v4346 = vld [vmem:[#allocation2 + $0xdc] sm:$0x1]
    %v4347 = vsel %vm4318, 0, %v4346
    %4348 = vst [vmem:[#allocation2 + $0xdc] sm:$0x1] %v4347
    %v4349 = vld [vmem:[#allocation2 + $0xf4] sm:$0x1]
    %v4350 = vsel %vm4318, 0, %v4349
    %4351 = vst [vmem:[#allocation2 + $0xf4] sm:$0x1] %v4350
    %v4352 = vld [vmem:[#allocation2 + $0x10c] sm:$0x1]
    %v4353 = vsel %vm4318, 0, %v4352
    %4354 = vst [vmem:[#allocation2 + $0x10c] sm:$0x1] %v4353
    %v4355 = vld [vmem:[#allocation2 + $0x124] sm:$0x1]
    %v4356 = vsel %vm4318, 0, %v4355
    %4357 = vst [vmem:[#allocation2 + $0x124] sm:$0x1] %v4356
    %v4358 = vld [vmem:[#allocation2 + $0x13c] sm:$0x1]
    %v4359 = vsel %vm4318, 0, %v4358
    %4360 = vst [vmem:[#allocation2 + $0x13c] sm:$0x1] %v4359
    %v4361 = vld [vmem:[#allocation2 + $0x154] sm:$0x1]
    %v4362 = vsel %vm4318, 0, %v4361
    %4363 = vst [vmem:[#allocation2 + $0x154] sm:$0x1] %v4362
    %v4364 = vld [vmem:[#allocation2 + $0x16c] sm:$0x1]
    %v4365 = vsel %vm4318, 0, %v4364
    %4366 = vst [vmem:[#allocation2 + $0x16c] sm:$0x1] %v4365
    %v4367 = vld [vmem:[#allocation2 + $0x184] sm:$0x1]
    %v4368 = vsel %vm4318, 0, %v4367
    %4369 = vst [vmem:[#allocation2 + $0x184] sm:$0x1] %v4368
    %v4370 = vld [vmem:[#allocation2 + $0x19c] sm:$0x1]
    %v4371 = vsel %vm4318, 0, %v4370
    %4372 = vst [vmem:[#allocation2 + $0x19c] sm:$0x1] %v4371
    %v4373 = vld [vmem:[#allocation2 + $0x1b4] sm:$0x1]
    %v4374 = vsel %vm4318, 0, %v4373
    %4375 = vst [vmem:[#allocation2 + $0x1b4] sm:$0x1] %v4374
    %v4376 = vld [vmem:[#allocation2 + $0x1cc] sm:$0x1]
    %v4377 = vsel %vm4318, 0, %v4376
    %4378 = vst [vmem:[#allocation2 + $0x1cc] sm:$0x1] %v4377
    %v4379 = vld [vmem:[#allocation2 + $0x1e4] sm:$0x1]
    %v4380 = vsel %vm4318, 0, %v4379
    %4381 = vst [vmem:[#allocation2 + $0x1e4] sm:$0x1] %v4380
    %v4382 = vld [vmem:[#allocation2 + $0x1fc] sm:$0x1]
    %v4383 = vsel %vm4318, 0, %v4382
    %4384 = vst [vmem:[#allocation2 + $0x1fc] sm:$0x1] %v4383
    %v4385 = vld [vmem:[#allocation2 + $0x214] sm:$0x1]
    %v4386 = vsel %vm4318, 0, %v4385
    %4387 = vst [vmem:[#allocation2 + $0x214] sm:$0x1] %v4386
    %v4388 = vld [vmem:[#allocation2 + $0x22c] sm:$0x1]
    %v4389 = vsel %vm4318, 0, %v4388
    %4390 = vst [vmem:[#allocation2 + $0x22c] sm:$0x1] %v4389
    %v4391 = vld [vmem:[#allocation2 + $0x244] sm:$0x1]
    %v4392 = vsel %vm4318, 0, %v4391
    %4393 = vst [vmem:[#allocation2 + $0x244] sm:$0x1] %v4392
    %v4394 = vld [vmem:[#allocation2 + $0x25c] sm:$0x1]
    %v4395 = vsel %vm4318, 0, %v4394
    %4396 = vst [vmem:[#allocation2 + $0x25c] sm:$0x1] %v4395
    %v4397 = vld [vmem:[#allocation2 + $0x274] sm:$0x1]
    %v4398 = vsel %vm4318, 0, %v4397
    %4399 = vst [vmem:[#allocation2 + $0x274] sm:$0x1] %v4398
    %v4400 = vld [vmem:[#allocation2 + $0x28c] sm:$0x1]
    %v4401 = vsel %vm4318, 0, %v4400
    %4402 = vst [vmem:[#allocation2 + $0x28c] sm:$0x1] %v4401
    %v4403 = vld [vmem:[#allocation2 + $0x2a4] sm:$0x1]
    %v4404 = vsel %vm4318, 0, %v4403
    %4405 = vst [vmem:[#allocation2 + $0x2a4] sm:$0x1] %v4404
    %v4406 = vld [vmem:[#allocation2 + $0x2bc] sm:$0x1]
    %v4407 = vsel %vm4318, 0, %v4406
    %4408 = vst [vmem:[#allocation2 + $0x2bc] sm:$0x1] %v4407
    %v4409 = vld [vmem:[#allocation2 + $0x2d4] sm:$0x1]
    %v4410 = vsel %vm4318, 0, %v4409
    %4411 = vst [vmem:[#allocation2 + $0x2d4] sm:$0x1] %v4410
    %v4412 = vld [vmem:[#allocation2 + $0x2ec] sm:$0x1]
    %v4413 = vsel %vm4318, 0, %v4412
    %4414 = vst [vmem:[#allocation2 + $0x2ec] sm:$0x1] %v4413
    %4415 = vrot.lane.b32.xlu0 %v1230, 96
    %v4416 = vpop.permute.xlu0 %4415
    %4417 = vrot.lane.b32.xlu0 %v1231, 96
    %v4418 = vpop.permute.xlu0 %4417
    %4419 = vrot.lane.b32.xlu0 %v1232, 96
    %v4420 = vpop.permute.xlu0 %4419
    %4421 = vrot.lane.b32.xlu0 %v1233, 96
    %v4422 = vpop.permute.xlu0 %4421
    %4423 = vrot.lane.b32.xlu0 %v1234, 96
    %v4424 = vpop.permute.xlu0 %4423
    %4425 = vrot.lane.b32.xlu0 %v1235, 96
    %v4426 = vpop.permute.xlu0 %4425
    %4427 = vrot.lane.b32.xlu0 %v1236, 96
    %v4428 = vpop.permute.xlu0 %4427
    %4429 = vrot.lane.b32.xlu0 %v1237, 96
    %v4430 = vpop.permute.xlu0 %4429
    %4431 = vrot.lane.b32.xlu0 %v1238, 96
    %v4432 = vpop.permute.xlu0 %4431
    %4433 = vrot.lane.b32.xlu0 %v1239, 96
    %v4434 = vpop.permute.xlu0 %4433
    %4435 = vrot.lane.b32.xlu0 %v1240, 96
    %v4436 = vpop.permute.xlu0 %4435
    %4437 = vrot.lane.b32.xlu0 %v1241, 96
    %v4438 = vpop.permute.xlu0 %4437
    %4439 = vrot.lane.b32.xlu0 %v1242, 96
    %v4440 = vpop.permute.xlu0 %4439
    %4441 = vrot.lane.b32.xlu0 %v1243, 96
    %v4442 = vpop.permute.xlu0 %4441
    %4443 = vrot.lane.b32.xlu0 %v1244, 96
    %v4444 = vpop.permute.xlu0 %4443
    %4445 = vrot.lane.b32.xlu0 %v1245, 96
    %v4446 = vpop.permute.xlu0 %4445
    %4447 = vrot.lane.b32.xlu0 %v1246, 96
    %v4448 = vpop.permute.xlu0 %4447
    %4449 = vrot.lane.b32.xlu0 %v1247, 96
    %v4450 = vpop.permute.xlu0 %4449
    %4451 = vrot.lane.b32.xlu0 %v1248, 96
    %v4452 = vpop.permute.xlu0 %4451
    %4453 = vrot.lane.b32.xlu0 %v1249, 96
    %v4454 = vpop.permute.xlu0 %4453
    %4455 = vrot.lane.b32.xlu0 %v1250, 96
    %v4456 = vpop.permute.xlu0 %4455
    %4457 = vrot.lane.b32.xlu0 %v1251, 96
    %v4458 = vpop.permute.xlu0 %4457
    %4459 = vrot.lane.b32.xlu0 %v1252, 96
    %v4460 = vpop.permute.xlu0 %4459
    %4461 = vrot.lane.b32.xlu0 %v1253, 96
    %v4462 = vpop.permute.xlu0 %4461
    %4463 = vrot.lane.b32.xlu0 %v1254, 96
    %v4464 = vpop.permute.xlu0 %4463
    %4465 = vrot.lane.b32.xlu0 %v1255, 96
    %v4466 = vpop.permute.xlu0 %4465
    %4467 = vrot.lane.b32.xlu0 %v1256, 96
    %v4468 = vpop.permute.xlu0 %4467
    %4469 = vrot.lane.b32.xlu0 %v1257, 96
    %v4470 = vpop.permute.xlu0 %4469
    %4471 = vrot.lane.b32.xlu0 %v2988, 96
    %v4472 = vpop.permute.xlu0 %4471
    %4473 = vrot.lane.b32.xlu0 %v2989, 96
    %v4474 = vpop.permute.xlu0 %4473
    %4475 = vrot.lane.b32.xlu0 %v1260, 96
    %v4476 = vpop.permute.xlu0 %4475
    %4477 = vrot.lane.b32.xlu0 %v1261, 96
    %v4478 = vpop.permute.xlu0 %4477
    %4479 = vrot.lane.b32.xlu0 %v1262, 96
    %v4480 = vpop.permute.xlu0 %4479
    %4481 = vrot.lane.b32.xlu0 %v1263, 96
    %v4482 = vpop.permute.xlu0 %4481
    %4483 = vrot.lane.b32.xlu0 %v1264, 96
    %v4484 = vpop.permute.xlu0 %4483
    %4485 = vrot.lane.b32.xlu0 %v1265, 96
    %v4486 = vpop.permute.xlu0 %4485
    %4487 = vrot.lane.b32.xlu0 %v1266, 96
    %v4488 = vpop.permute.xlu0 %4487
    %4489 = vrot.lane.b32.xlu0 %v1267, 96
    %v4490 = vpop.permute.xlu0 %4489
    %4491 = vrot.lane.b32.xlu0 %v1268, 96
    %v4492 = vpop.permute.xlu0 %4491
    %4493 = vrot.lane.b32.xlu0 %v1269, 96
    %v4494 = vpop.permute.xlu0 %4493
    %4495 = vrot.lane.b32.xlu0 %v1270, 96
    %v4496 = vpop.permute.xlu0 %4495
    %4497 = vrot.lane.b32.xlu0 %v1271, 96
    %v4498 = vpop.permute.xlu0 %4497
    %4499 = vrot.lane.b32.xlu0 %v1272, 96
    %v4500 = vpop.permute.xlu0 %4499
    %4501 = vrot.lane.b32.xlu0 %v1273, 96
    %v4502 = vpop.permute.xlu0 %4501
    %4503 = vrot.lane.b32.xlu0 %v1274, 96
    %v4504 = vpop.permute.xlu0 %4503
    %4505 = vrot.lane.b32.xlu0 %v1275, 96
    %v4506 = vpop.permute.xlu0 %4505
    %4507 = vrot.lane.b32.xlu0 %v1276, 96
    %v4508 = vpop.permute.xlu0 %4507
    %4509 = vrot.lane.b32.xlu0 %v1277, 96
    %v4510 = vpop.permute.xlu0 %4509
    %4511 = vrot.lane.b32.xlu0 %v1278, 96
    %v4512 = vpop.permute.xlu0 %4511
    %4513 = vrot.lane.b32.xlu0 %v1279, 96
    %v4514 = vpop.permute.xlu0 %4513
    %4515 = vrot.lane.b32.xlu0 %v1280, 96
    %v4516 = vpop.permute.xlu0 %4515
    %4517 = vrot.lane.b32.xlu0 %v1281, 96
    %v4518 = vpop.permute.xlu0 %4517
    %4519 = vrot.lane.b32.xlu0 %v1282, 96
    %v4520 = vpop.permute.xlu0 %4519
    %4521 = vrot.lane.b32.xlu0 %v1283, 96
    %v4522 = vpop.permute.xlu0 %4521
    %4523 = vrot.lane.b32.xlu0 %v1284, 96
    %v4524 = vpop.permute.xlu0 %4523
    %4525 = vrot.lane.b32.xlu0 %v1285, 96
    %v4526 = vpop.permute.xlu0 %4525
    %4527 = vrot.lane.b32.xlu0 %v1286, 96
    %v4528 = vpop.permute.xlu0 %4527
    %4529 = vrot.lane.b32.xlu0 %v1287, 96
    %v4530 = vpop.permute.xlu0 %4529
    %4531 = vrot.lane.b32.xlu0 %v2990, 96
    %v4532 = vpop.permute.xlu0 %4531
    %4533 = vrot.lane.b32.xlu0 %v2991, 96
    %v4534 = vpop.permute.xlu0 %4533
    %4595 = vst.msk [vmem:[#allocation2 + $0x4] sm:$0xf] %vm3221, %v4416
    %4596 = vst.msk [vmem:[#allocation2 + $0x10] sm:$0xf] %vm3221, %v4418
    %4597 = vst.msk [vmem:[#allocation2 + $0x1c] sm:$0xf] %vm3221, %v4420
    %4598 = vst.msk [vmem:[#allocation2 + $0x28] sm:$0xf] %vm3221, %v4422
    %4599 = vst.msk [vmem:[#allocation2 + $0x34] sm:$0xf] %vm3221, %v4424
    %4600 = vst.msk [vmem:[#allocation2 + $0x40] sm:$0xf] %vm3221, %v4426
    %4601 = vst.msk [vmem:[#allocation2 + $0x4c] sm:$0xf] %vm3221, %v4428
    %4602 = vst.msk [vmem:[#allocation2 + $0x58] sm:$0xf] %vm3221, %v4430
    %4603 = vst.msk [vmem:[#allocation2 + $0x64] sm:$0xf] %vm3221, %v4432
    %4604 = vst.msk [vmem:[#allocation2 + $0x70] sm:$0xf] %vm3221, %v4434
    %4605 = vst.msk [vmem:[#allocation2 + $0x7c] sm:$0xf] %vm3221, %v4436
    %4606 = vst.msk [vmem:[#allocation2 + $0x88] sm:$0xf] %vm3221, %v4438
    %4607 = vst.msk [vmem:[#allocation2 + $0x94] sm:$0xf] %vm3221, %v4440
    %4608 = vst.msk [vmem:[#allocation2 + $0xa0] sm:$0xf] %vm3221, %v4442
    %4609 = vst.msk [vmem:[#allocation2 + $0xac] sm:$0xf] %vm3221, %v4444
    %4610 = vst.msk [vmem:[#allocation2 + $0xb8] sm:$0xf] %vm3221, %v4446
    %4611 = vst.msk [vmem:[#allocation2 + $0xc4] sm:$0xf] %vm3221, %v4448
    %4612 = vst.msk [vmem:[#allocation2 + $0xd0] sm:$0xf] %vm3221, %v4450
    %4613 = vst.msk [vmem:[#allocation2 + $0xdc] sm:$0xf] %vm3221, %v4452
    %4614 = vst.msk [vmem:[#allocation2 + $0xe8] sm:$0xf] %vm3221, %v4454
    %4615 = vst.msk [vmem:[#allocation2 + $0xf4] sm:$0xf] %vm3221, %v4456
    %4616 = vst.msk [vmem:[#allocation2 + $0x100] sm:$0xf] %vm3221, %v4458
    %4617 = vst.msk [vmem:[#allocation2 + $0x10c] sm:$0xf] %vm3221, %v4460
    %4618 = vst.msk [vmem:[#allocation2 + $0x118] sm:$0xf] %vm3221, %v4462
    %4619 = vst.msk [vmem:[#allocation2 + $0x124] sm:$0xf] %vm3221, %v4464
    %4620 = vst.msk [vmem:[#allocation2 + $0x130] sm:$0xf] %vm3221, %v4466
    %4621 = vst.msk [vmem:[#allocation2 + $0x13c] sm:$0xf] %vm3221, %v4468
    %4622 = vst.msk [vmem:[#allocation2 + $0x148] sm:$0xf] %vm3221, %v4470
    %4623 = vst.msk [vmem:[#allocation2 + $0x154] sm:$0xf] %vm3221, %v4472
    %4624 = vst.msk [vmem:[#allocation2 + $0x160] sm:$0xf] %vm3221, %v4474
    %4625 = vst.msk [vmem:[#allocation2 + $0x184] sm:$0xf] %vm3221, %v4476
    %4626 = vst.msk [vmem:[#allocation2 + $0x190] sm:$0xf] %vm3221, %v4478
    %4627 = vst.msk [vmem:[#allocation2 + $0x19c] sm:$0xf] %vm3221, %v4480
    %4628 = vst.msk [vmem:[#allocation2 + $0x1a8] sm:$0xf] %vm3221, %v4482
    %4629 = vst.msk [vmem:[#allocation2 + $0x1b4] sm:$0xf] %vm3221, %v4484
    %4630 = vst.msk [vmem:[#allocation2 + $0x1c0] sm:$0xf] %vm3221, %v4486
    %4631 = vst.msk [vmem:[#allocation2 + $0x1cc] sm:$0xf] %vm3221, %v4488
    %4632 = vst.msk [vmem:[#allocation2 + $0x1d8] sm:$0xf] %vm3221, %v4490
    %4633 = vst.msk [vmem:[#allocation2 + $0x1e4] sm:$0xf] %vm3221, %v4492
    %4634 = vst.msk [vmem:[#allocation2 + $0x1f0] sm:$0xf] %vm3221, %v4494
    %4635 = vst.msk [vmem:[#allocation2 + $0x1fc] sm:$0xf] %vm3221, %v4496
    %4636 = vst.msk [vmem:[#allocation2 + $0x208] sm:$0xf] %vm3221, %v4498
    %4637 = vst.msk [vmem:[#allocation2 + $0x214] sm:$0xf] %vm3221, %v4500
    %4638 = vst.msk [vmem:[#allocation2 + $0x220] sm:$0xf] %vm3221, %v4502
    %4639 = vst.msk [vmem:[#allocation2 + $0x22c] sm:$0xf] %vm3221, %v4504
    %4640 = vst.msk [vmem:[#allocation2 + $0x238] sm:$0xf] %vm3221, %v4506
    %4641 = vst.msk [vmem:[#allocation2 + $0x244] sm:$0xf] %vm3221, %v4508
    %4642 = vst.msk [vmem:[#allocation2 + $0x250] sm:$0xf] %vm3221, %v4510
    %4643 = vst.msk [vmem:[#allocation2 + $0x25c] sm:$0xf] %vm3221, %v4512
    %4644 = vst.msk [vmem:[#allocation2 + $0x268] sm:$0xf] %vm3221, %v4514
    %4645 = vst.msk [vmem:[#allocation2 + $0x274] sm:$0xf] %vm3221, %v4516
    %4646 = vst.msk [vmem:[#allocation2 + $0x280] sm:$0xf] %vm3221, %v4518
    %4647 = vst.msk [vmem:[#allocation2 + $0x28c] sm:$0xf] %vm3221, %v4520
    %4648 = vst.msk [vmem:[#allocation2 + $0x298] sm:$0xf] %vm3221, %v4522
    %4649 = vst.msk [vmem:[#allocation2 + $0x2a4] sm:$0xf] %vm3221, %v4524
    %4650 = vst.msk [vmem:[#allocation2 + $0x2b0] sm:$0xf] %vm3221, %v4526
    %4651 = vst.msk [vmem:[#allocation2 + $0x2bc] sm:$0xf] %vm3221, %v4528
    %4652 = vst.msk [vmem:[#allocation2 + $0x2c8] sm:$0xf] %vm3221, %v4530
    %4653 = vst.msk [vmem:[#allocation2 + $0x2d4] sm:$0xf] %vm3221, %v4532
    %4654 = vst.msk [vmem:[#allocation2 + $0x2e0] sm:$0xf] %vm3221, %v4534
    %4655 = vst.msk [vmem:[%s4312 + $0x4] sm:$0xf] %vm3221, 0
    %4656 = vst.msk [vmem:[%s4312 + $0x10] sm:$0xf] %vm3221, 0
    %4657 = vst.msk [vmem:[%s4312 + $0x184] sm:$0xf] %vm3221, 0
    %4658 = vst.msk [vmem:[%s4312 + $0x190] sm:$0xf] %vm3221, 0
    %4719 = vst.msk [vmem:[#allocation2 + $0x8] sm:$0xf] %vm1838, %v2320
    %vm4720 = vmand %vm1832, %vm2303
    %v4721 = vld [vmem:[#allocation2 + $0x14] sm:$0xf]
    %v4722 = vsel %vm4720, %v2323, %v4721
    %4723 = vst [vmem:[#allocation2 + $0x14] sm:$0xf] %v4722
    %4724 = vst.msk [vmem:[#allocation2 + $0x20] sm:$0xf] %vm1838, %v2329
    %v4725 = vld [vmem:[#allocation2 + $0x2c] sm:$0xf]
    %v4726 = vsel %vm4720, %v2332, %v4725
    %4727 = vst [vmem:[#allocation2 + $0x2c] sm:$0xf] %v4726
    %4728 = vst.msk [vmem:[#allocation2 + $0x38] sm:$0xf] %vm1838, %v2338
    %v4729 = vld [vmem:[#allocation2 + $0x44] sm:$0xf]
    %v4730 = vsel %vm4720, %v2341, %v4729
    %4731 = vst [vmem:[#allocation2 + $0x44] sm:$0xf] %v4730
    %4732 = vst.msk [vmem:[#allocation2 + $0x50] sm:$0xf] %vm1838, %v2347
    %v4733 = vld [vmem:[#allocation2 + $0x5c] sm:$0xf]
    %v4734 = vsel %vm4720, %v2350, %v4733
    %4735 = vst [vmem:[#allocation2 + $0x5c] sm:$0xf] %v4734
    %4736 = vst.msk [vmem:[#allocation2 + $0x68] sm:$0xf] %vm1838, %v2356
    %v4737 = vld [vmem:[#allocation2 + $0x74] sm:$0xf]
    %v4738 = vsel %vm4720, %v2359, %v4737
    %4739 = vst [vmem:[#allocation2 + $0x74] sm:$0xf] %v4738
    %4740 = vst.msk [vmem:[#allocation2 + $0x80] sm:$0xf] %vm1838, %v2365
    %v4741 = vld [vmem:[#allocation2 + $0x8c] sm:$0xf]
    %v4742 = vsel %vm4720, %v2368, %v4741
    %4743 = vst [vmem:[#allocation2 + $0x8c] sm:$0xf] %v4742
    %4744 = vst.msk [vmem:[#allocation2 + $0x98] sm:$0xf] %vm1838, %v2374
    %v4745 = vld [vmem:[#allocation2 + $0xa4] sm:$0xf]
    %v4746 = vsel %vm4720, %v2377, %v4745
    %4747 = vst [vmem:[#allocation2 + $0xa4] sm:$0xf] %v4746
    %4748 = vst.msk [vmem:[#allocation2 + $0xb0] sm:$0xf] %vm1838, %v2383
    %v4749 = vld [vmem:[#allocation2 + $0xbc] sm:$0xf]
    %v4750 = vsel %vm4720, %v2386, %v4749
    %4751 = vst [vmem:[#allocation2 + $0xbc] sm:$0xf] %v4750
    %4752 = vst.msk [vmem:[#allocation2 + $0xc8] sm:$0xf] %vm1838, %v2392
    %v4753 = vld [vmem:[#allocation2 + $0xd4] sm:$0xf]
    %v4754 = vsel %vm4720, %v2395, %v4753
    %4755 = vst [vmem:[#allocation2 + $0xd4] sm:$0xf] %v4754
    %4756 = vst.msk [vmem:[#allocation2 + $0xe0] sm:$0xf] %vm1838, %v2401
    %v4757 = vld [vmem:[#allocation2 + $0xec] sm:$0xf]
    %v4758 = vsel %vm4720, %v2404, %v4757
    %4759 = vst [vmem:[#allocation2 + $0xec] sm:$0xf] %v4758
    %4760 = vst.msk [vmem:[#allocation2 + $0xf8] sm:$0xf] %vm1838, %v2410
    %v4761 = vld [vmem:[#allocation2 + $0x104] sm:$0xf]
    %v4762 = vsel %vm4720, %v2413, %v4761
    %4763 = vst [vmem:[#allocation2 + $0x104] sm:$0xf] %v4762
    %4764 = vst.msk [vmem:[#allocation2 + $0x110] sm:$0xf] %vm1838, %v2419
    %v4765 = vld [vmem:[#allocation2 + $0x11c] sm:$0xf]
    %v4766 = vsel %vm4720, %v2422, %v4765
    %4767 = vst [vmem:[#allocation2 + $0x11c] sm:$0xf] %v4766
    %4768 = vst.msk [vmem:[#allocation2 + $0x128] sm:$0xf] %vm1838, %v2428
    %v4769 = vld [vmem:[#allocation2 + $0x134] sm:$0xf]
    %v4770 = vsel %vm4720, %v2431, %v4769
    %4771 = vst [vmem:[#allocation2 + $0x134] sm:$0xf] %v4770
    %4772 = vst.msk [vmem:[#allocation2 + $0x140] sm:$0xf] %vm1838, %v2437
    %v4773 = vld [vmem:[#allocation2 + $0x14c] sm:$0xf]
    %v4774 = vsel %vm4720, %v2440, %v4773
    %4775 = vst [vmem:[#allocation2 + $0x14c] sm:$0xf] %v4774
    %4776 = vst.msk [vmem:[#allocation2 + $0x158] sm:$0xf] %vm1838, %v3578
    %v4777 = vld [vmem:[#allocation2 + $0x164] sm:$0xf]
    %v4778 = vsel %vm4720, %v3581, %v4777
    %4779 = vst [vmem:[#allocation2 + $0x164] sm:$0xf] %v4778
    %4780 = vst.msk [vmem:[#allocation2 + $0x188] sm:$0xf] %vm1838, %v2455
    %v4781 = vld [vmem:[#allocation2 + $0x194] sm:$0xf]
    %v4782 = vsel %vm4720, %v2458, %v4781
    %4783 = vst [vmem:[#allocation2 + $0x194] sm:$0xf] %v4782
    %4784 = vst.msk [vmem:[#allocation2 + $0x1a0] sm:$0xf] %vm1838, %v2464
    %v4785 = vld [vmem:[#allocation2 + $0x1ac] sm:$0xf]
    %v4786 = vsel %vm4720, %v2467, %v4785
    %4787 = vst [vmem:[#allocation2 + $0x1ac] sm:$0xf] %v4786
    %4788 = vst.msk [vmem:[#allocation2 + $0x1b8] sm:$0xf] %vm1838, %v2473
    %v4789 = vld [vmem:[#allocation2 + $0x1c4] sm:$0xf]
    %v4790 = vsel %vm4720, %v2476, %v4789
    %4791 = vst [vmem:[#allocation2 + $0x1c4] sm:$0xf] %v4790
    %4792 = vst.msk [vmem:[#allocation2 + $0x1d0] sm:$0xf] %vm1838, %v2482
    %v4793 = vld [vmem:[#allocation2 + $0x1dc] sm:$0xf]
    %v4794 = vsel %vm4720, %v2485, %v4793
    %4795 = vst [vmem:[#allocation2 + $0x1dc] sm:$0xf] %v4794
    %4796 = vst.msk [vmem:[#allocation2 + $0x1e8] sm:$0xf] %vm1838, %v2491
    %v4797 = vld [vmem:[#allocation2 + $0x1f4] sm:$0xf]
    %v4798 = vsel %vm4720, %v2494, %v4797
    %4799 = vst [vmem:[#allocation2 + $0x1f4] sm:$0xf] %v4798
    %4800 = vst.msk [vmem:[#allocation2 + $0x200] sm:$0xf] %vm1838, %v2500
    %v4801 = vld [vmem:[#allocation2 + $0x20c] sm:$0xf]
    %v4802 = vsel %vm4720, %v2503, %v4801
    %4803 = vst [vmem:[#allocation2 + $0x20c] sm:$0xf] %v4802
    %4804 = vst.msk [vmem:[#allocation2 + $0x218] sm:$0xf] %vm1838, %v2509
    %v4805 = vld [vmem:[#allocation2 + $0x224] sm:$0xf]
    %v4806 = vsel %vm4720, %v2512, %v4805
    %4807 = vst [vmem:[#allocation2 + $0x224] sm:$0xf] %v4806
    %4808 = vst.msk [vmem:[#allocation2 + $0x230] sm:$0xf] %vm1838, %v2518
    %v4809 = vld [vmem:[#allocation2 + $0x23c] sm:$0xf]
    %v4810 = vsel %vm4720, %v2521, %v4809
    %4811 = vst [vmem:[#allocation2 + $0x23c] sm:$0xf] %v4810
    %4812 = vst.msk [vmem:[#allocation2 + $0x248] sm:$0xf] %vm1838, %v2527
    %v4813 = vld [vmem:[#allocation2 + $0x254] sm:$0xf]
    %v4814 = vsel %vm4720, %v2530, %v4813
    %4815 = vst [vmem:[#allocation2 + $0x254] sm:$0xf] %v4814
    %4816 = vst.msk [vmem:[#allocation2 + $0x260] sm:$0xf] %vm1838, %v2536
    %v4817 = vld [vmem:[#allocation2 + $0x26c] sm:$0xf]
    %v4818 = vsel %vm4720, %v2539, %v4817
    %4819 = vst [vmem:[#allocation2 + $0x26c] sm:$0xf] %v4818
    %4820 = vst.msk [vmem:[#allocation2 + $0x278] sm:$0xf] %vm1838, %v2545
    %v4821 = vld [vmem:[#allocation2 + $0x284] sm:$0xf]
    %v4822 = vsel %vm4720, %v2548, %v4821
    %4823 = vst [vmem:[#allocation2 + $0x284] sm:$0xf] %v4822
    %4824 = vst.msk [vmem:[#allocation2 + $0x290] sm:$0xf] %vm1838, %v2554
    %v4825 = vld [vmem:[#allocation2 + $0x29c] sm:$0xf]
    %v4826 = vsel %vm4720, %v2557, %v4825
    %4827 = vst [vmem:[#allocation2 + $0x29c] sm:$0xf] %v4826
    %4828 = vst.msk [vmem:[#allocation2 + $0x2a8] sm:$0xf] %vm1838, %v2563
    %v4829 = vld [vmem:[#allocation2 + $0x2b4] sm:$0xf]
    %v4830 = vsel %vm4720, %v2566, %v4829
    %4831 = vst [vmem:[#allocation2 + $0x2b4] sm:$0xf] %v4830
    %4832 = vst.msk [vmem:[#allocation2 + $0x2c0] sm:$0xf] %vm1838, %v2572
    %v4833 = vld [vmem:[#allocation2 + $0x2cc] sm:$0xf]
    %v4834 = vsel %vm4720, %v2575, %v4833
    %4835 = vst [vmem:[#allocation2 + $0x2cc] sm:$0xf] %v4834
    %4836 = vst.msk [vmem:[#allocation2 + $0x2d8] sm:$0xf] %vm1838, %v3587
    %v4837 = vld [vmem:[#allocation2 + $0x2e4] sm:$0xf]
    %v4838 = vsel %vm4720, %v3590, %v4837
    %4839 = vst [vmem:[#allocation2 + $0x2e4] sm:$0xf] %v4838
    %4840 = vst.msk [vmem:[%s4312 + $0x8] sm:$0xf] %vm1838, 0
    %4841 = vst.msk [vmem:[%s4312 + $0x14] sm:$0xf] %vm1838, 0
    %4842 = vst.msk [vmem:[%s4312 + $0x188] sm:$0xf] %vm1838, 0
    %4843 = vst.msk [vmem:[%s4312 + $0x194] sm:$0xf] %vm1838, 0
    %vm4844 = vcmask 257027
    %vm4845 = vmand %vm4844, %vm2884
    %v4846 = vld [vmem:[#allocation2 + $0x14] sm:$0x8]
    %v4847 = vsel %vm4845, 0, %v4846
    %4848 = vst [vmem:[#allocation2 + $0x14] sm:$0x8] %v4847
    %v4849 = vld [vmem:[#allocation2 + $0x2c] sm:$0x8]
    %v4850 = vsel %vm4845, 0, %v4849
    %4851 = vst [vmem:[#allocation2 + $0x2c] sm:$0x8] %v4850
    %v4852 = vld [vmem:[#allocation2 + $0x44] sm:$0x8]
    %v4853 = vsel %vm4845, 0, %v4852
    %4854 = vst [vmem:[#allocation2 + $0x44] sm:$0x8] %v4853
    %v4855 = vld [vmem:[#allocation2 + $0x5c] sm:$0x8]
    %v4856 = vsel %vm4845, 0, %v4855
    %4857 = vst [vmem:[#allocation2 + $0x5c] sm:$0x8] %v4856
    %v4858 = vld [vmem:[#allocation2 + $0x74] sm:$0x8]
    %v4859 = vsel %vm4845, 0, %v4858
    %4860 = vst [vmem:[#allocation2 + $0x74] sm:$0x8] %v4859
    %v4861 = vld [vmem:[#allocation2 + $0x8c] sm:$0x8]
    %v4862 = vsel %vm4845, 0, %v4861
    %4863 = vst [vmem:[#allocation2 + $0x8c] sm:$0x8] %v4862
    %v4864 = vld [vmem:[#allocation2 + $0xa4] sm:$0x8]
    %v4865 = vsel %vm4845, 0, %v4864
    %4866 = vst [vmem:[#allocation2 + $0xa4] sm:$0x8] %v4865
    %v4867 = vld [vmem:[#allocation2 + $0xbc] sm:$0x8]
    %v4868 = vsel %vm4845, 0, %v4867
    %4869 = vst [vmem:[#allocation2 + $0xbc] sm:$0x8] %v4868
    %v4870 = vld [vmem:[#allocation2 + $0xd4] sm:$0x8]
    %v4871 = vsel %vm4845, 0, %v4870
    %4872 = vst [vmem:[#allocation2 + $0xd4] sm:$0x8] %v4871
    %v4873 = vld [vmem:[#allocation2 + $0xec] sm:$0x8]
    %v4874 = vsel %vm4845, 0, %v4873
    %4875 = vst [vmem:[#allocation2 + $0xec] sm:$0x8] %v4874
    %v4876 = vld [vmem:[#allocation2 + $0x104] sm:$0x8]
    %v4877 = vsel %vm4845, 0, %v4876
    %4878 = vst [vmem:[#allocation2 + $0x104] sm:$0x8] %v4877
    %v4879 = vld [vmem:[#allocation2 + $0x11c] sm:$0x8]
    %v4880 = vsel %vm4845, 0, %v4879
    %4881 = vst [vmem:[#allocation2 + $0x11c] sm:$0x8] %v4880
    %v4882 = vld [vmem:[#allocation2 + $0x134] sm:$0x8]
    %v4883 = vsel %vm4845, 0, %v4882
    %4884 = vst [vmem:[#allocation2 + $0x134] sm:$0x8] %v4883
    %v4885 = vld [vmem:[#allocation2 + $0x14c] sm:$0x8]
    %v4886 = vsel %vm4845, 0, %v4885
    %4887 = vst [vmem:[#allocation2 + $0x14c] sm:$0x8] %v4886
    %v4888 = vld [vmem:[#allocation2 + $0x164] sm:$0x8]
    %v4889 = vsel %vm4845, 0, %v4888
    %4890 = vst [vmem:[#allocation2 + $0x164] sm:$0x8] %v4889
    %v4891 = vld [vmem:[#allocation2 + $0x17c] sm:$0x8]
    %v4892 = vsel %vm4845, 0, %v4891
    %4893 = vst [vmem:[#allocation2 + $0x17c] sm:$0x8] %v4892
    %v4894 = vld [vmem:[#allocation2 + $0x194] sm:$0x8]
    %v4895 = vsel %vm4845, 0, %v4894
    %4896 = vst [vmem:[#allocation2 + $0x194] sm:$0x8] %v4895
    %v4897 = vld [vmem:[#allocation2 + $0x1ac] sm:$0x8]
    %v4898 = vsel %vm4845, 0, %v4897
    %4899 = vst [vmem:[#allocation2 + $0x1ac] sm:$0x8] %v4898
    %v4900 = vld [vmem:[#allocation2 + $0x1c4] sm:$0x8]
    %v4901 = vsel %vm4845, 0, %v4900
    %4902 = vst [vmem:[#allocation2 + $0x1c4] sm:$0x8] %v4901
    %v4903 = vld [vmem:[#allocation2 + $0x1dc] sm:$0x8]
    %v4904 = vsel %vm4845, 0, %v4903
    %4905 = vst [vmem:[#allocation2 + $0x1dc] sm:$0x8] %v4904
    %v4906 = vld [vmem:[#allocation2 + $0x1f4] sm:$0x8]
    %v4907 = vsel %vm4845, 0, %v4906
    %4908 = vst [vmem:[#allocation2 + $0x1f4] sm:$0x8] %v4907
    %v4909 = vld [vmem:[#allocation2 + $0x20c] sm:$0x8]
    %v4910 = vsel %vm4845, 0, %v4909
    %4911 = vst [vmem:[#allocation2 + $0x20c] sm:$0x8] %v4910
    %v4912 = vld [vmem:[#allocation2 + $0x224] sm:$0x8]
    %v4913 = vsel %vm4845, 0, %v4912
    %4914 = vst [vmem:[#allocation2 + $0x224] sm:$0x8] %v4913
    %v4915 = vld [vmem:[#allocation2 + $0x23c] sm:$0x8]
    %v4916 = vsel %vm4845, 0, %v4915
    %4917 = vst [vmem:[#allocation2 + $0x23c] sm:$0x8] %v4916
    %v4918 = vld [vmem:[#allocation2 + $0x254] sm:$0x8]
    %v4919 = vsel %vm4845, 0, %v4918
    %4920 = vst [vmem:[#allocation2 + $0x254] sm:$0x8] %v4919
    %v4921 = vld [vmem:[#allocation2 + $0x26c] sm:$0x8]
    %v4922 = vsel %vm4845, 0, %v4921
    %4923 = vst [vmem:[#allocation2 + $0x26c] sm:$0x8] %v4922
    %v4924 = vld [vmem:[#allocation2 + $0x284] sm:$0x8]
    %v4925 = vsel %vm4845, 0, %v4924
    %4926 = vst [vmem:[#allocation2 + $0x284] sm:$0x8] %v4925
    %v4927 = vld [vmem:[#allocation2 + $0x29c] sm:$0x8]
    %v4928 = vsel %vm4845, 0, %v4927
    %4929 = vst [vmem:[#allocation2 + $0x29c] sm:$0x8] %v4928
    %v4930 = vld [vmem:[#allocation2 + $0x2b4] sm:$0x8]
    %v4931 = vsel %vm4845, 0, %v4930
    %4932 = vst [vmem:[#allocation2 + $0x2b4] sm:$0x8] %v4931
    %v4933 = vld [vmem:[#allocation2 + $0x2cc] sm:$0x8]
    %v4934 = vsel %vm4845, 0, %v4933
    %4935 = vst [vmem:[#allocation2 + $0x2cc] sm:$0x8] %v4934
    %v4936 = vld [vmem:[#allocation2 + $0x2e4] sm:$0x8]
    %v4937 = vsel %vm4845, 0, %v4936
    %4938 = vst [vmem:[#allocation2 + $0x2e4] sm:$0x8] %v4937
    %v4939 = vld [vmem:[#allocation2 + $0x2fc] sm:$0x8]
    %v4940 = vsel %vm4845, 0, %v4939
    %4941 = vst [vmem:[#allocation2 + $0x2fc] sm:$0x8] %v4940
    %v4942 = vld [vmem:[#allocation2] sm:$0xff]
    %v4943 = vld [vmem:[#allocation2 + $0x8] sm:$0xf]
    %v4944 = vld [vmem:[#allocation2 + $0xc] sm:$0xff]
    %v4945 = vld [vmem:[#allocation2 + $0x14] sm:$0xf]
    %v4946 = vld [vmem:[#allocation2 + $0x18] sm:$0xff]
    %v4947 = vld [vmem:[#allocation2 + $0x20] sm:$0xf]
    %v4948 = vld [vmem:[#allocation2 + $0x24] sm:$0xff]
    %v4949 = vld [vmem:[#allocation2 + $0x2c] sm:$0xf]
    %v4950 = vld [vmem:[#allocation2 + $0x30] sm:$0xff]
    %v4951 = vld [vmem:[#allocation2 + $0x38] sm:$0xf]
    %v4952 = vld [vmem:[#allocation2 + $0x3c] sm:$0xff]
    %v4953 = vld [vmem:[#allocation2 + $0x44] sm:$0xf]
    %v4954 = vld [vmem:[#allocation2 + $0x48] sm:$0xff]
    %v4955 = vld [vmem:[#allocation2 + $0x50] sm:$0xf]
    %v4956 = vld [vmem:[#allocation2 + $0x54] sm:$0xff]
    %v4957 = vld [vmem:[#allocation2 + $0x5c] sm:$0xf]
    %v4958 = vld [vmem:[#allocation2 + $0x60] sm:$0xff]
    %v4959 = vld [vmem:[#allocation2 + $0x68] sm:$0xf]
    %v4960 = vld [vmem:[#allocation2 + $0x6c] sm:$0xff]
    %v4961 = vld [vmem:[#allocation2 + $0x74] sm:$0xf]
    %v4962 = vld [vmem:[#allocation2 + $0x78] sm:$0xff]
    %v4963 = vld [vmem:[#allocation2 + $0x80] sm:$0xf]
    %v4964 = vld [vmem:[#allocation2 + $0x84] sm:$0xff]
    %v4965 = vld [vmem:[#allocation2 + $0x8c] sm:$0xf]
    %v4966 = vld [vmem:[#allocation2 + $0x90] sm:$0xff]
    %v4967 = vld [vmem:[#allocation2 + $0x98] sm:$0xf]
    %v4968 = vld [vmem:[#allocation2 + $0x9c] sm:$0xff]
    %v4969 = vld [vmem:[#allocation2 + $0xa4] sm:$0xf]
    %v4970 = vld [vmem:[#allocation2 + $0xa8] sm:$0xff]
    %v4971 = vld [vmem:[#allocation2 + $0xb0] sm:$0xf]
    %v4972 = vld [vmem:[#allocation2 + $0xb4] sm:$0xff]
    %v4973 = vld [vmem:[#allocation2 + $0xbc] sm:$0xf]
    %v4974 = vld [vmem:[#allocation2 + $0xc0] sm:$0xff]
    %v4975 = vld [vmem:[#allocation2 + $0xc8] sm:$0xf]
    %v4976 = vld [vmem:[#allocation2 + $0xcc] sm:$0xff]
    %v4977 = vld [vmem:[#allocation2 + $0xd4] sm:$0xf]
    %v4978 = vld [vmem:[#allocation2 + $0xd8] sm:$0xff]
    %v4979 = vld [vmem:[#allocation2 + $0xe0] sm:$0xf]
    %v4980 = vld [vmem:[#allocation2 + $0xe4] sm:$0xff]
    %v4981 = vld [vmem:[#allocation2 + $0xec] sm:$0xf]
    %v4982 = vld [vmem:[#allocation2 + $0xf0] sm:$0xff]
    %v4983 = vld [vmem:[#allocation2 + $0xf8] sm:$0xf]
    %v4984 = vld [vmem:[#allocation2 + $0xfc] sm:$0xff]
    %v4985 = vld [vmem:[#allocation2 + $0x104] sm:$0xf]
    %v4986 = vld [vmem:[#allocation2 + $0x108] sm:$0xff]
    %v4987 = vld [vmem:[#allocation2 + $0x110] sm:$0xf]
    %v4988 = vld [vmem:[#allocation2 + $0x114] sm:$0xff]
    %v4989 = vld [vmem:[#allocation2 + $0x11c] sm:$0xf]
    %v4990 = vld [vmem:[#allocation2 + $0x120] sm:$0xff]
    %v4991 = vld [vmem:[#allocation2 + $0x128] sm:$0xf]
    %v4992 = vld [vmem:[#allocation2 + $0x12c] sm:$0xff]
    %v4993 = vld [vmem:[#allocation2 + $0x134] sm:$0xf]
    %v4994 = vld [vmem:[#allocation2 + $0x138] sm:$0xff]
    %v4995 = vld [vmem:[#allocation2 + $0x140] sm:$0xf]
    %v4996 = vld [vmem:[#allocation2 + $0x144] sm:$0xff]
    %v4997 = vld [vmem:[#allocation2 + $0x14c] sm:$0xf]
    %v4998 = vld [vmem:[#allocation2 + $0x150] sm:$0xff]
    %v4999 = vld [vmem:[#allocation2 + $0x158] sm:$0xf]
    %v5000 = vld [vmem:[#allocation2 + $0x15c] sm:$0xff]
    %v5001 = vld [vmem:[#allocation2 + $0x164] sm:$0xf]
    %v5002 = vld [vmem:[#allocation2 + $0x168] sm:$0xff]
    %v5003 = vld [vmem:[#allocation2 + $0x170] sm:$0xf]
    %v5004 = vld [vmem:[#allocation2 + $0x174] sm:$0xff]
    %v5005 = vld [vmem:[#allocation2 + $0x17c] sm:$0xf]
    %v5006 = vld [vmem:[#allocation2 + $0x180] sm:$0xff]
    %v5007 = vld [vmem:[#allocation2 + $0x188] sm:$0xf]
    %v5008 = vld [vmem:[#allocation2 + $0x18c] sm:$0xff]
    %v5009 = vld [vmem:[#allocation2 + $0x194] sm:$0xf]
    %v5010 = vld [vmem:[#allocation2 + $0x198] sm:$0xff]
    %v5011 = vld [vmem:[#allocation2 + $0x1a0] sm:$0xf]
    %v5012 = vld [vmem:[#allocation2 + $0x1a4] sm:$0xff]
    %v5013 = vld [vmem:[#allocation2 + $0x1ac] sm:$0xf]
    %v5014 = vld [vmem:[#allocation2 + $0x1b0] sm:$0xff]
    %v5015 = vld [vmem:[#allocation2 + $0x1b8] sm:$0xf]
    %v5016 = vld [vmem:[#allocation2 + $0x1bc] sm:$0xff]
    %v5017 = vld [vmem:[#allocation2 + $0x1c4] sm:$0xf]
    %v5018 = vld [vmem:[#allocation2 + $0x1c8] sm:$0xff]
    %v5019 = vld [vmem:[#allocation2 + $0x1d0] sm:$0xf]
    %v5020 = vld [vmem:[#allocation2 + $0x1d4] sm:$0xff]
    %v5021 = vld [vmem:[#allocation2 + $0x1dc] sm:$0xf]
    %v5022 = vld [vmem:[#allocation2 + $0x1e0] sm:$0xff]
    %v5023 = vld [vmem:[#allocation2 + $0x1e8] sm:$0xf]
    %v5024 = vld [vmem:[#allocation2 + $0x1ec] sm:$0xff]
    %v5025 = vld [vmem:[#allocation2 + $0x1f4] sm:$0xf]
    %v5026 = vld [vmem:[#allocation2 + $0x1f8] sm:$0xff]
    %v5027 = vld [vmem:[#allocation2 + $0x200] sm:$0xf]
    %v5028 = vld [vmem:[#allocation2 + $0x204] sm:$0xff]
    %v5029 = vld [vmem:[#allocation2 + $0x20c] sm:$0xf]
    %v5030 = vld [vmem:[#allocation2 + $0x210] sm:$0xff]
    %v5031 = vld [vmem:[#allocation2 + $0x218] sm:$0xf]
    %v5032 = vld [vmem:[#allocation2 + $0x21c] sm:$0xff]
    %v5033 = vld [vmem:[#allocation2 + $0x224] sm:$0xf]
    %v5034 = vld [vmem:[#allocation2 + $0x228] sm:$0xff]
    %v5035 = vld [vmem:[#allocation2 + $0x230] sm:$0xf]
    %v5036 = vld [vmem:[#allocation2 + $0x234] sm:$0xff]
    %v5037 = vld [vmem:[#allocation2 + $0x23c] sm:$0xf]
    %v5038 = vld [vmem:[#allocation2 + $0x240] sm:$0xff]
    %v5039 = vld [vmem:[#allocation2 + $0x248] sm:$0xf]
    %v5040 = vld [vmem:[#allocation2 + $0x24c] sm:$0xff]
    %v5041 = vld [vmem:[#allocation2 + $0x254] sm:$0xf]
    %v5042 = vld [vmem:[#allocation2 + $0x258] sm:$0xff]
    %v5043 = vld [vmem:[#allocation2 + $0x260] sm:$0xf]
    %v5044 = vld [vmem:[#allocation2 + $0x264] sm:$0xff]
    %v5045 = vld [vmem:[#allocation2 + $0x26c] sm:$0xf]
    %v5046 = vld [vmem:[#allocation2 + $0x270] sm:$0xff]
    %v5047 = vld [vmem:[#allocation2 + $0x278] sm:$0xf]
    %v5048 = vld [vmem:[#allocation2 + $0x27c] sm:$0xff]
    %v5049 = vld [vmem:[#allocation2 + $0x284] sm:$0xf]
    %v5050 = vld [vmem:[#allocation2 + $0x288] sm:$0xff]
    %v5051 = vld [vmem:[#allocation2 + $0x290] sm:$0xf]
    %v5052 = vld [vmem:[#allocation2 + $0x294] sm:$0xff]
    %v5053 = vld [vmem:[#allocation2 + $0x29c] sm:$0xf]
    %v5054 = vld [vmem:[#allocation2 + $0x2a0] sm:$0xff]
    %v5055 = vld [vmem:[#allocation2 + $0x2a8] sm:$0xf]
    %v5056 = vld [vmem:[#allocation2 + $0x2ac] sm:$0xff]
    %v5057 = vld [vmem:[#allocation2 + $0x2b4] sm:$0xf]
    %v5058 = vld [vmem:[#allocation2 + $0x2b8] sm:$0xff]
    %v5059 = vld [vmem:[#allocation2 + $0x2c0] sm:$0xf]
    %v5060 = vld [vmem:[#allocation2 + $0x2c4] sm:$0xff]
    %v5061 = vld [vmem:[#allocation2 + $0x2cc] sm:$0xf]
    %v5062 = vld [vmem:[#allocation2 + $0x2d0] sm:$0xff]
    %v5063 = vld [vmem:[#allocation2 + $0x2d8] sm:$0xf]
    %v5064 = vld [vmem:[#allocation2 + $0x2dc] sm:$0xff]
    %v5065 = vld [vmem:[#allocation2 + $0x2e4] sm:$0xf]
    %v5066 = vld [vmem:[#allocation2 + $0x2e8] sm:$0xff]
    %v5067 = vld [vmem:[#allocation2 + $0x2f0] sm:$0xf]
    %v5068 = vld [vmem:[#allocation2 + $0x2f4] sm:$0xff]
    %v5069 = vld [vmem:[#allocation2 + $0x2fc] sm:$0xf]
    %v5070 = vld [vmem:[%s4] sm:$0xf]
    %v5071 = vld [vmem:[%s4 + $0x4] sm:$0xf]
    %v5072 = vld [vmem:[%s4 + $0x8] sm:$0xf]
    %v5073 = vld [vmem:[%s4 + $0xc] sm:$0xf]
    %v5074 = vld [vmem:[%s4 + $0x10] sm:$0xf]
    %v5075 = vld [vmem:[%s4 + $0x14] sm:$0xf]
    %v5076 = vld [vmem:[%s4 + $0x18] sm:$0xf]
    %v5077 = vld [vmem:[%s4 + $0x1c] sm:$0xf]
    %v5078 = vld [vmem:[%s4 + $0x20] sm:$0xf]
    %v5079 = vld [vmem:[%s4 + $0x24] sm:$0xf]
    %v5080 = vld [vmem:[%s4 + $0x28] sm:$0xf]
    %v5081 = vld [vmem:[%s4 + $0x2c] sm:$0xf]
    %v5082 = vld [vmem:[%s4 + $0x30] sm:$0xf]
    %v5083 = vld [vmem:[%s4 + $0x34] sm:$0xf]
    %v5084 = vld [vmem:[%s4 + $0x38] sm:$0xf]
    %v5085 = vld [vmem:[%s4 + $0x3c] sm:$0xf]
    %v5086 = vld [vmem:[%s4 + $0x40] sm:$0xf]
    %v5087 = vld [vmem:[%s4 + $0x44] sm:$0xf]
    %v5088 = vld [vmem:[%s4 + $0x48] sm:$0xf]
    %v5089 = vld [vmem:[%s4 + $0x4c] sm:$0xf]
    %v5090 = vld [vmem:[%s4 + $0x50] sm:$0xf]
    %v5091 = vld [vmem:[%s4 + $0x54] sm:$0xf]
    %v5092 = vld [vmem:[%s4 + $0x58] sm:$0xf]
    %v5093 = vld [vmem:[%s4 + $0x5c] sm:$0xf]
    %v5094 = vld [vmem:[%s4 + $0x60] sm:$0xf]
    %v5095 = vld [vmem:[%s4 + $0x64] sm:$0xf]
    %v5096 = vld [vmem:[%s4 + $0x68] sm:$0xf]
    %v5097 = vld [vmem:[%s4 + $0x6c] sm:$0xf]
    %v5098 = vld [vmem:[%s4 + $0x70] sm:$0xf]
    %v5099 = vld [vmem:[%s4 + $0x74] sm:$0xf]
    %v5100 = vld [vmem:[%s4 + $0x78] sm:$0xf]
    %v5101 = vld [vmem:[%s4 + $0x7c] sm:$0xf]
    %v5102 = vld [vmem:[%s4 + $0x80] sm:$0xf]
    %v5103 = vld [vmem:[%s4 + $0x84] sm:$0xf]
    %v5104 = vld [vmem:[%s4 + $0x88] sm:$0xf]
    %v5105 = vld [vmem:[%s4 + $0x8c] sm:$0xf]
    %v5234 = vunpack.c.l.b16 %v4942
    %v5235 = vunpack.c.h.b16 %v4942
    %v5236 = vunpack.c.l.b16 %v4943
    %v5237 = vunpack.c.l.b16 %v4944
    %v5238 = vunpack.c.h.b16 %v4944
    %v5239 = vunpack.c.l.b16 %v4945
    %v5240 = vunpack.c.l.b16 %v4946
    %v5241 = vunpack.c.h.b16 %v4946
    %v5242 = vunpack.c.l.b16 %v4947
    %v5243 = vunpack.c.l.b16 %v4948
    %v5244 = vunpack.c.h.b16 %v4948
    %v5245 = vunpack.c.l.b16 %v4949
    %v5246 = vunpack.c.l.b16 %v4950
    %v5247 = vunpack.c.h.b16 %v4950
    %v5248 = vunpack.c.l.b16 %v4951
    %v5249 = vunpack.c.l.b16 %v4952
    %v5250 = vunpack.c.h.b16 %v4952
    %v5251 = vunpack.c.l.b16 %v4953
    %v5252 = vunpack.c.l.b16 %v4954
    %v5253 = vunpack.c.h.b16 %v4954
    %v5254 = vunpack.c.l.b16 %v4955
    %v5255 = vunpack.c.l.b16 %v4956
    %v5256 = vunpack.c.h.b16 %v4956
    %v5257 = vunpack.c.l.b16 %v4957
    %v5258 = vunpack.c.l.b16 %v4958
    %v5259 = vunpack.c.h.b16 %v4958
    %v5260 = vunpack.c.l.b16 %v4959
    %v5261 = vunpack.c.l.b16 %v4960
    %v5262 = vunpack.c.h.b16 %v4960
    %v5263 = vunpack.c.l.b16 %v4961
    %v5264 = vunpack.c.l.b16 %v4962
    %v5265 = vunpack.c.h.b16 %v4962
    %v5266 = vunpack.c.l.b16 %v4963
    %v5267 = vunpack.c.l.b16 %v4964
    %v5268 = vunpack.c.h.b16 %v4964
    %v5269 = vunpack.c.l.b16 %v4965
    %v5270 = vunpack.c.l.b16 %v4966
    %v5271 = vunpack.c.h.b16 %v4966
    %v5272 = vunpack.c.l.b16 %v4967
    %v5273 = vunpack.c.l.b16 %v4968
    %v5274 = vunpack.c.h.b16 %v4968
    %v5275 = vunpack.c.l.b16 %v4969
    %v5276 = vunpack.c.l.b16 %v4970
    %v5277 = vunpack.c.h.b16 %v4970
    %v5278 = vunpack.c.l.b16 %v4971
    %v5279 = vunpack.c.l.b16 %v4972
    %v5280 = vunpack.c.h.b16 %v4972
    %v5281 = vunpack.c.l.b16 %v4973
    %v5282 = vunpack.c.l.b16 %v4974
    %v5283 = vunpack.c.h.b16 %v4974
    %v5284 = vunpack.c.l.b16 %v4975
    %v5285 = vunpack.c.l.b16 %v4976
    %v5286 = vunpack.c.h.b16 %v4976
    %v5287 = vunpack.c.l.b16 %v4977
    %v5288 = vunpack.c.l.b16 %v4978
    %v5289 = vunpack.c.h.b16 %v4978
    %v5290 = vunpack.c.l.b16 %v4979
    %v5291 = vunpack.c.l.b16 %v4980
    %v5292 = vunpack.c.h.b16 %v4980
    %v5293 = vunpack.c.l.b16 %v4981
    %v5294 = vunpack.c.l.b16 %v4982
    %v5295 = vunpack.c.h.b16 %v4982
    %v5296 = vunpack.c.l.b16 %v4983
    %v5297 = vunpack.c.l.b16 %v4984
    %v5298 = vunpack.c.h.b16 %v4984
    %v5299 = vunpack.c.l.b16 %v4985
    %v5300 = vunpack.c.l.b16 %v4986
    %v5301 = vunpack.c.h.b16 %v4986
    %v5302 = vunpack.c.l.b16 %v4987
    %v5303 = vunpack.c.l.b16 %v4988
    %v5304 = vunpack.c.h.b16 %v4988
    %v5305 = vunpack.c.l.b16 %v4989
    %v5306 = vunpack.c.l.b16 %v4990
    %v5307 = vunpack.c.h.b16 %v4990
    %v5308 = vunpack.c.l.b16 %v4991
    %v5309 = vunpack.c.l.b16 %v4992
    %v5310 = vunpack.c.h.b16 %v4992
    %v5311 = vunpack.c.l.b16 %v4993
    %v5312 = vunpack.c.l.b16 %v4994
    %v5313 = vunpack.c.h.b16 %v4994
    %v5314 = vunpack.c.l.b16 %v4995
    %v5315 = vunpack.c.l.b16 %v4996
    %v5316 = vunpack.c.h.b16 %v4996
    %v5317 = vunpack.c.l.b16 %v4997
    %v5318 = vunpack.c.l.b16 %v4998
    %v5319 = vunpack.c.h.b16 %v4998
    %v5320 = vunpack.c.l.b16 %v4999
    %v5321 = vunpack.c.l.b16 %v5000
    %v5322 = vunpack.c.h.b16 %v5000
    %v5323 = vunpack.c.l.b16 %v5001
    %v5324 = vunpack.c.l.b16 %v5002
    %v5325 = vunpack.c.h.b16 %v5002
    %v5326 = vunpack.c.l.b16 %v5003
    %v5327 = vunpack.c.l.b16 %v5004
    %v5328 = vunpack.c.h.b16 %v5004
    %v5329 = vunpack.c.l.b16 %v5005
    %v5330 = vunpack.c.l.b16 %v5006
    %v5331 = vunpack.c.h.b16 %v5006
    %v5332 = vunpack.c.l.b16 %v5007
    %v5333 = vunpack.c.l.b16 %v5008
    %v5334 = vunpack.c.h.b16 %v5008
    %v5335 = vunpack.c.l.b16 %v5009
    %v5336 = vunpack.c.l.b16 %v5010
    %v5337 = vunpack.c.h.b16 %v5010
    %v5338 = vunpack.c.l.b16 %v5011
    %v5339 = vunpack.c.l.b16 %v5012
    %v5340 = vunpack.c.h.b16 %v5012
    %v5341 = vunpack.c.l.b16 %v5013
    %v5342 = vunpack.c.l.b16 %v5014
    %v5343 = vunpack.c.h.b16 %v5014
    %v5344 = vunpack.c.l.b16 %v5015
    %v5345 = vunpack.c.l.b16 %v5016
    %v5346 = vunpack.c.h.b16 %v5016
    %v5347 = vunpack.c.l.b16 %v5017
    %v5348 = vunpack.c.l.b16 %v5018
    %v5349 = vunpack.c.h.b16 %v5018
    %v5350 = vunpack.c.l.b16 %v5019
    %v5351 = vunpack.c.l.b16 %v5020
    %v5352 = vunpack.c.h.b16 %v5020
    %v5353 = vunpack.c.l.b16 %v5021
    %v5354 = vunpack.c.l.b16 %v5022
    %v5355 = vunpack.c.h.b16 %v5022
    %v5356 = vunpack.c.l.b16 %v5023
    %v5357 = vunpack.c.l.b16 %v5024
    %v5358 = vunpack.c.h.b16 %v5024
    %v5359 = vunpack.c.l.b16 %v5025
    %v5360 = vunpack.c.l.b16 %v5026
    %v5361 = vunpack.c.h.b16 %v5026
    %v5362 = vunpack.c.l.b16 %v5027
    %v5363 = vunpack.c.l.b16 %v5028
    %v5364 = vunpack.c.h.b16 %v5028
    %v5365 = vunpack.c.l.b16 %v5029
    %v5366 = vunpack.c.l.b16 %v5030
    %v5367 = vunpack.c.h.b16 %v5030
    %v5368 = vunpack.c.l.b16 %v5031
    %v5369 = vunpack.c.l.b16 %v5032
    %v5370 = vunpack.c.h.b16 %v5032
    %v5371 = vunpack.c.l.b16 %v5033
    %v5372 = vunpack.c.l.b16 %v5034
    %v5373 = vunpack.c.h.b16 %v5034
    %v5374 = vunpack.c.l.b16 %v5035
    %v5375 = vunpack.c.l.b16 %v5036
    %v5376 = vunpack.c.h.b16 %v5036
    %v5377 = vunpack.c.l.b16 %v5037
    %v5378 = vunpack.c.l.b16 %v5038
    %v5379 = vunpack.c.h.b16 %v5038
    %v5380 = vunpack.c.l.b16 %v5039
    %v5381 = vunpack.c.l.b16 %v5040
    %v5382 = vunpack.c.h.b16 %v5040
    %v5383 = vunpack.c.l.b16 %v5041
    %v5384 = vunpack.c.l.b16 %v5042
    %v5385 = vunpack.c.h.b16 %v5042
    %v5386 = vunpack.c.l.b16 %v5043
    %v5387 = vunpack.c.l.b16 %v5044
    %v5388 = vunpack.c.h.b16 %v5044
    %v5389 = vunpack.c.l.b16 %v5045
    %v5390 = vunpack.c.l.b16 %v5046
    %v5391 = vunpack.c.h.b16 %v5046
    %v5392 = vunpack.c.l.b16 %v5047
    %v5393 = vunpack.c.l.b16 %v5048
    %v5394 = vunpack.c.h.b16 %v5048
    %v5395 = vunpack.c.l.b16 %v5049
    %v5396 = vunpack.c.l.b16 %v5050
    %v5397 = vunpack.c.h.b16 %v5050
    %v5398 = vunpack.c.l.b16 %v5051
    %v5399 = vunpack.c.l.b16 %v5052
    %v5400 = vunpack.c.h.b16 %v5052
    %v5401 = vunpack.c.l.b16 %v5053
    %v5402 = vunpack.c.l.b16 %v5054
    %v5403 = vunpack.c.h.b16 %v5054
    %v5404 = vunpack.c.l.b16 %v5055
    %v5405 = vunpack.c.l.b16 %v5056
    %v5406 = vunpack.c.h.b16 %v5056
    %v5407 = vunpack.c.l.b16 %v5057
    %v5408 = vunpack.c.l.b16 %v5058
    %v5409 = vunpack.c.h.b16 %v5058
    %v5410 = vunpack.c.l.b16 %v5059
    %v5411 = vunpack.c.l.b16 %v5060
    %v5412 = vunpack.c.h.b16 %v5060
    %v5413 = vunpack.c.l.b16 %v5061
    %v5414 = vunpack.c.l.b16 %v5062
    %v5415 = vunpack.c.h.b16 %v5062
    %v5416 = vunpack.c.l.b16 %v5063
    %v5417 = vunpack.c.l.b16 %v5064
    %v5418 = vunpack.c.h.b16 %v5064
    %v5419 = vunpack.c.l.b16 %v5065
    %v5420 = vunpack.c.l.b16 %v5066
    %v5421 = vunpack.c.h.b16 %v5066
    %v5422 = vunpack.c.l.b16 %v5067
    %v5423 = vunpack.c.l.b16 %v5068
    %v5424 = vunpack.c.h.b16 %v5068
    %v5425 = vunpack.c.l.b16 %v5069
    %v5426 = vpack.c.b16 %v5237, %v5234
    %v5427 = vpack.c.b16 %v5238, %v5235
    %v5428 = vpack.c.b16 %v5239, %v5236
    %v5429 = vpack.c.b16 %v5243, %v5240
    %v5430 = vpack.c.b16 %v5244, %v5241
    %v5431 = vpack.c.b16 %v5245, %v5242
    %v5432 = vpack.c.b16 %v5249, %v5246
    %v5433 = vpack.c.b16 %v5250, %v5247
    %v5434 = vpack.c.b16 %v5251, %v5248
    %v5435 = vpack.c.b16 %v5255, %v5252
    %v5436 = vpack.c.b16 %v5256, %v5253
    %v5437 = vpack.c.b16 %v5257, %v5254
    %v5438 = vpack.c.b16 %v5261, %v5258
    %v5439 = vpack.c.b16 %v5262, %v5259
    %v5440 = vpack.c.b16 %v5263, %v5260
    %v5441 = vpack.c.b16 %v5267, %v5264
    %v5442 = vpack.c.b16 %v5268, %v5265
    %v5443 = vpack.c.b16 %v5269, %v5266
    %v5444 = vpack.c.b16 %v5273, %v5270
    %v5445 = vpack.c.b16 %v5274, %v5271
    %v5446 = vpack.c.b16 %v5275, %v5272
    %v5447 = vpack.c.b16 %v5279, %v5276
    %v5448 = vpack.c.b16 %v5280, %v5277
    %v5449 = vpack.c.b16 %v5281, %v5278
    %v5450 = vpack.c.b16 %v5285, %v5282
    %v5451 = vpack.c.b16 %v5286, %v5283
    %v5452 = vpack.c.b16 %v5287, %v5284
    %v5453 = vpack.c.b16 %v5291, %v5288
    %v5454 = vpack.c.b16 %v5292, %v5289
    %v5455 = vpack.c.b16 %v5293, %v5290
    %v5456 = vpack.c.b16 %v5297, %v5294
    %v5457 = vpack.c.b16 %v5298, %v5295
    %v5458 = vpack.c.b16 %v5299, %v5296
    %v5459 = vpack.c.b16 %v5303, %v5300
    %v5460 = vpack.c.b16 %v5304, %v5301
    %v5461 = vpack.c.b16 %v5305, %v5302
    %v5462 = vpack.c.b16 %v5309, %v5306
    %v5463 = vpack.c.b16 %v5310, %v5307
    %v5464 = vpack.c.b16 %v5311, %v5308
    %v5465 = vpack.c.b16 %v5315, %v5312
    %v5466 = vpack.c.b16 %v5316, %v5313
    %v5467 = vpack.c.b16 %v5317, %v5314
    %v5468 = vpack.c.b16 %v5321, %v5318
    %v5469 = vpack.c.b16 %v5322, %v5319
    %v5470 = vpack.c.b16 %v5323, %v5320
    %v5471 = vpack.c.b16 %v5327, %v5324
    %v5472 = vpack.c.b16 %v5328, %v5325
    %v5473 = vpack.c.b16 %v5329, %v5326
    %v5474 = vpack.c.b16 %v5333, %v5330
    %v5475 = vpack.c.b16 %v5334, %v5331
    %v5476 = vpack.c.b16 %v5335, %v5332
    %v5477 = vpack.c.b16 %v5339, %v5336
    %v5478 = vpack.c.b16 %v5340, %v5337
    %v5479 = vpack.c.b16 %v5341, %v5338
    %v5480 = vpack.c.b16 %v5345, %v5342
    %v5481 = vpack.c.b16 %v5346, %v5343
    %v5482 = vpack.c.b16 %v5347, %v5344
    %v5483 = vpack.c.b16 %v5351, %v5348
    %v5484 = vpack.c.b16 %v5352, %v5349
    %v5485 = vpack.c.b16 %v5353, %v5350
    %v5486 = vpack.c.b16 %v5357, %v5354
    %v5487 = vpack.c.b16 %v5358, %v5355
    %v5488 = vpack.c.b16 %v5359, %v5356
    %v5489 = vpack.c.b16 %v5363, %v5360
    %v5490 = vpack.c.b16 %v5364, %v5361
    %v5491 = vpack.c.b16 %v5365, %v5362
    %v5492 = vpack.c.b16 %v5369, %v5366
    %v5493 = vpack.c.b16 %v5370, %v5367
    %v5494 = vpack.c.b16 %v5371, %v5368
    %v5495 = vpack.c.b16 %v5375, %v5372
    %v5496 = vpack.c.b16 %v5376, %v5373
    %v5497 = vpack.c.b16 %v5377, %v5374
    %v5498 = vpack.c.b16 %v5381, %v5378
    %v5499 = vpack.c.b16 %v5382, %v5379
    %v5500 = vpack.c.b16 %v5383, %v5380
    %v5501 = vpack.c.b16 %v5387, %v5384
    %v5502 = vpack.c.b16 %v5388, %v5385
    %v5503 = vpack.c.b16 %v5389, %v5386
    %v5504 = vpack.c.b16 %v5393, %v5390
    %v5505 = vpack.c.b16 %v5394, %v5391
    %v5506 = vpack.c.b16 %v5395, %v5392
    %v5507 = vpack.c.b16 %v5399, %v5396
    %v5508 = vpack.c.b16 %v5400, %v5397
    %v5509 = vpack.c.b16 %v5401, %v5398
    %v5510 = vpack.c.b16 %v5405, %v5402
    %v5511 = vpack.c.b16 %v5406, %v5403
    %v5512 = vpack.c.b16 %v5407, %v5404
    %v5513 = vpack.c.b16 %v5411, %v5408
    %v5514 = vpack.c.b16 %v5412, %v5409
    %v5515 = vpack.c.b16 %v5413, %v5410
    %v5516 = vpack.c.b16 %v5417, %v5414
    %v5517 = vpack.c.b16 %v5418, %v5415
    %v5518 = vpack.c.b16 %v5419, %v5416
    %v5519 = vpack.c.b16 %v5423, %v5420
    %v5520 = vpack.c.b16 %v5424, %v5421
    %v5521 = vpack.c.b16 %v5425, %v5422
    %v5622 = vunpack.c.l.b16 %v5070
    %v5623 = vunpack.c.l.b16 %v5071
    %v5624 = vunpack.c.l.b16 %v5072
    %v5625 = vunpack.c.l.b16 %v5073
    %v5626 = vunpack.c.l.b16 %v5074
    %v5627 = vunpack.c.l.b16 %v5075
    %v5628 = vunpack.c.l.b16 %v5076
    %v5629 = vunpack.c.l.b16 %v5077
    %v5630 = vunpack.c.l.b16 %v5078
    %v5631 = vunpack.c.l.b16 %v5079
    %v5632 = vunpack.c.l.b16 %v5080
    %v5633 = vunpack.c.l.b16 %v5081
    %v5634 = vunpack.c.l.b16 %v5082
    %v5635 = vunpack.c.l.b16 %v5083
    %v5636 = vunpack.c.l.b16 %v5084
    %v5637 = vunpack.c.l.b16 %v5085
    %v5638 = vunpack.c.l.b16 %v5086
    %v5639 = vunpack.c.l.b16 %v5087
    %v5640 = vunpack.c.l.b16 %v5088
    %v5641 = vunpack.c.l.b16 %v5089
    %v5642 = vunpack.c.l.b16 %v5090
    %v5643 = vunpack.c.l.b16 %v5091
    %v5644 = vunpack.c.l.b16 %v5092
    %v5645 = vunpack.c.l.b16 %v5093
    %v5646 = vunpack.c.l.b16 %v5094
    %v5647 = vunpack.c.l.b16 %v5095
    %v5648 = vunpack.c.l.b16 %v5096
    %v5649 = vunpack.c.l.b16 %v5097
    %v5650 = vunpack.c.l.b16 %v5098
    %v5651 = vunpack.c.l.b16 %v5099
    %v5652 = vunpack.c.l.b16 %v5100
    %v5653 = vunpack.c.l.b16 %v5101
    %v5654 = vunpack.c.l.b16 %v5102
    %v5655 = vunpack.c.l.b16 %v5103
    %v5656 = vunpack.c.l.b16 %v5104
    %v5657 = vunpack.c.l.b16 %v5105
    %v5658 = vpack.c.b16 %v5623, %v5622
    %v5659 = vpack.c.b16 %v5625, %v5624
    %v5660 = vpack.c.b16 %v5627, %v5626
    %v5661 = vpack.c.b16 %v5629, %v5628
    %v5662 = vpack.c.b16 %v5631, %v5630
    %v5663 = vpack.c.b16 %v5633, %v5632
    %v5664 = vpack.c.b16 %v5635, %v5634
    %v5665 = vpack.c.b16 %v5637, %v5636
    %v5666 = vpack.c.b16 %v5639, %v5638
    %v5667 = vpack.c.b16 %v5641, %v5640
    %v5668 = vpack.c.b16 %v5643, %v5642
    %v5669 = vpack.c.b16 %v5645, %v5644
    %v5670 = vpack.c.b16 %v5647, %v5646
    %v5671 = vpack.c.b16 %v5649, %v5648
    %v5672 = vpack.c.b16 %v5651, %v5650
    %v5673 = vpack.c.b16 %v5653, %v5652
    %v5674 = vpack.c.b16 %v5655, %v5654
    %v5675 = vpack.c.b16 %v5657, %v5656
    %v5695 = vsel %vm502, %v5428, 0
    %v5698 = vsel %vm502, %v5431, 0
    %v5701 = vsel %vm502, %v5434, 0
    %v5704 = vsel %vm502, %v5437, 0
    %v5707 = vsel %vm502, %v5440, 0
    %v5710 = vsel %vm502, %v5443, 0
    %v5713 = vsel %vm502, %v5446, 0
    %v5716 = vsel %vm502, %v5449, 0
    %v5719 = vsel %vm502, %v5452, 0
    %v5722 = vsel %vm502, %v5455, 0
    %v5725 = vsel %vm502, %v5458, 0
    %v5728 = vsel %vm502, %v5461, 0
    %v5731 = vsel %vm502, %v5464, 0
    %v5734 = vsel %vm502, %v5467, 0
    %v5737 = vsel %vm502, %v5470, 0
    %v5740 = vsel %vm502, %v5473, 0
    %v5743 = vsel %vm502, %v5476, 0
    %v5746 = vsel %vm502, %v5479, 0
    %v5749 = vsel %vm502, %v5482, 0
    %v5752 = vsel %vm502, %v5485, 0
    %v5755 = vsel %vm502, %v5488, 0
    %v5758 = vsel %vm502, %v5491, 0
    %v5761 = vsel %vm502, %v5494, 0
    %v5764 = vsel %vm502, %v5497, 0
    %v5767 = vsel %vm502, %v5500, 0
    %v5770 = vsel %vm502, %v5503, 0
    %v5773 = vsel %vm502, %v5506, 0
    %v5776 = vsel %vm502, %v5509, 0
    %v5779 = vsel %vm502, %v5512, 0
    %v5782 = vsel %vm502, %v5515, 0
    %v5785 = vsel %vm502, %v5518, 0
    %v5788 = vsel %vm502, %v5521, 0
    %5790 = vmatprep.subr.bf16.mxu0 0
    %5791 = vmatpush1.bf16.msra.mxu0 %v5665
    %5792 = vmatprep.subr.bf16.mxu0 0
    %5793 = vmatpush1.bf16.msra.mxu0 %v5664
    %5794 = vmatprep.subr.bf16.mxu0 0
    %5795 = vmatpush1.bf16.msra.mxu0 %v5663
    %5796 = vmatprep.subr.bf16.mxu0 0
    %5797 = vmatpush1.bf16.msra.mxu0 %v5662
    %5798 = vmatprep.subr.bf16.mxu0 0
    %5799 = vmatpush1.bf16.msra.mxu0 %v5661
    %5800 = vmatprep.subr.bf16.mxu0 0
    %5801 = vmatpush1.bf16.msra.mxu0 %v5660
    %5802 = vmatprep.subr.bf16.mxu0 0
    %5803 = vmatpush1.bf16.msra.mxu0 %v5659
    %5804 = vmatprep.subr.bf16.mxu0 0
    %5805 = vmatpush1.bf16.msra.mxu0 %v5658
    %5806 = vmatprep.subr.bf16.mxu0 0
    %5807 = vmatpush2.bf16.msra.mxu0 %v5673
    %5808 = vmatprep.subr.bf16.mxu0 0
    %5809 = vmatpush2.bf16.msra.mxu0 %v5672
    %5810 = vmatprep.subr.bf16.mxu0 0
    %5811 = vmatpush2.bf16.msra.mxu0 %v5671
    %5812 = vmatprep.subr.bf16.mxu0 0
    %5813 = vmatpush2.bf16.msra.mxu0 %v5670
    %5814 = vmatprep.subr.bf16.mxu0 0
    %5815 = vmatpush2.bf16.msra.mxu0 %v5669
    %5816 = vmatprep.subr.bf16.mxu0 0
    %5817 = vmatpush2.bf16.msra.mxu0 %v5668
    %5818 = vmatprep.subr.bf16.mxu0 0
    %5819 = vmatpush2.bf16.msra.mxu0 %v5667
    %5820 = vmatprep.subr.bf16.mxu0 0
    %5821 = vmatpush2.bf16.msra.mxu0 %v5666
    %5822 = vmatprep.mubr.bf16.mxu0 %v5427
    %5823 = vmatmul.mubr.bf16.gmra.mxu0 %v5426
    %v5824 = vpop.f32.mrf.mxu0
    %v5825 = vadd.f32 0.0, %v5824
    %v5826 = vpop.f32.mrf.mxu0
    %v5827 = vpop.f32.mrf.mxu0
    %v5828 = vadd.f32 0.0, %v5827
    %v5829 = vpop.f32.mrf.mxu0
    %5830 = vmatprep.mubr.bf16.mxu0 %v5430
    %5831 = vmatmul.mubr.bf16.gmra.mxu0 %v5429
    %v5832 = vpop.f32.mrf.mxu0
    %v5833 = vadd.f32 0.0, %v5832
    %v5834 = vpop.f32.mrf.mxu0
    %v5835 = vpop.f32.mrf.mxu0
    %v5836 = vadd.f32 0.0, %v5835
    %v5837 = vpop.f32.mrf.mxu0
    %5838 = vmatprep.mubr.bf16.mxu0 %v5433
    %5839 = vmatmul.mubr.bf16.gmra.mxu0 %v5432
    %v5840 = vpop.f32.mrf.mxu0
    %v5841 = vadd.f32 0.0, %v5840
    %v5842 = vpop.f32.mrf.mxu0
    %v5843 = vpop.f32.mrf.mxu0
    %v5844 = vadd.f32 0.0, %v5843
    %v5845 = vpop.f32.mrf.mxu0
    %5846 = vmatprep.mubr.bf16.mxu0 %v5436
    %5847 = vmatmul.mubr.bf16.gmra.mxu0 %v5435
    %v5848 = vpop.f32.mrf.mxu0
    %v5849 = vadd.f32 0.0, %v5848
    %v5850 = vpop.f32.mrf.mxu0
    %v5851 = vpop.f32.mrf.mxu0
    %v5852 = vadd.f32 0.0, %v5851
    %v5853 = vpop.f32.mrf.mxu0
    %5854 = vmatprep.mubr.bf16.mxu0 %v5439
    %5855 = vmatmul.mubr.bf16.gmra.mxu0 %v5438
    %v5856 = vpop.f32.mrf.mxu0
    %v5857 = vadd.f32 0.0, %v5856
    %v5858 = vpop.f32.mrf.mxu0
    %v5859 = vpop.f32.mrf.mxu0
    %v5860 = vadd.f32 0.0, %v5859
    %v5861 = vpop.f32.mrf.mxu0
    %5862 = vmatprep.mubr.bf16.mxu0 %v5442
    %5863 = vmatmul.mubr.bf16.gmra.mxu0 %v5441
    %v5864 = vpop.f32.mrf.mxu0
    %v5865 = vadd.f32 0.0, %v5864
    %v5866 = vpop.f32.mrf.mxu0
    %v5867 = vpop.f32.mrf.mxu0
    %v5868 = vadd.f32 0.0, %v5867
    %v5869 = vpop.f32.mrf.mxu0
    %5870 = vmatprep.mubr.bf16.mxu0 %v5445
    %5871 = vmatmul.mubr.bf16.gmra.mxu0 %v5444
    %v5872 = vpop.f32.mrf.mxu0
    %v5873 = vadd.f32 0.0, %v5872
    %v5874 = vpop.f32.mrf.mxu0
    %v5875 = vpop.f32.mrf.mxu0
    %v5876 = vadd.f32 0.0, %v5875
    %v5877 = vpop.f32.mrf.mxu0
    %5878 = vmatprep.mubr.bf16.mxu0 %v5448
    %5879 = vmatmul.mubr.bf16.gmra.mxu0 %v5447
    %v5880 = vpop.f32.mrf.mxu0
    %v5881 = vadd.f32 0.0, %v5880
    %v5882 = vpop.f32.mrf.mxu0
    %v5883 = vpop.f32.mrf.mxu0
    %v5884 = vadd.f32 0.0, %v5883
    %v5885 = vpop.f32.mrf.mxu0
    %5886 = vmatprep.mubr.bf16.mxu0 %v5451
    %5887 = vmatmul.mubr.bf16.gmra.mxu0 %v5450
    %v5888 = vpop.f32.mrf.mxu0
    %v5889 = vadd.f32 0.0, %v5888
    %v5890 = vpop.f32.mrf.mxu0
    %v5891 = vpop.f32.mrf.mxu0
    %v5892 = vadd.f32 0.0, %v5891
    %v5893 = vpop.f32.mrf.mxu0
    %5894 = vmatprep.mubr.bf16.mxu0 %v5454
    %5895 = vmatmul.mubr.bf16.gmra.mxu0 %v5453
    %v5896 = vpop.f32.mrf.mxu0
    %v5897 = vadd.f32 0.0, %v5896
    %v5898 = vpop.f32.mrf.mxu0
    %v5899 = vpop.f32.mrf.mxu0
    %v5900 = vadd.f32 0.0, %v5899
    %v5901 = vpop.f32.mrf.mxu0
    %5902 = vmatprep.mubr.bf16.mxu0 %v5457
    %5903 = vmatmul.mubr.bf16.gmra.mxu0 %v5456
    %v5904 = vpop.f32.mrf.mxu0
    %v5905 = vadd.f32 0.0, %v5904
    %v5906 = vpop.f32.mrf.mxu0
    %v5907 = vpop.f32.mrf.mxu0
    %v5908 = vadd.f32 0.0, %v5907
    %v5909 = vpop.f32.mrf.mxu0
    %5910 = vmatprep.mubr.bf16.mxu0 %v5460
    %5911 = vmatmul.mubr.bf16.gmra.mxu0 %v5459
    %v5912 = vpop.f32.mrf.mxu0
    %v5913 = vadd.f32 0.0, %v5912
    %v5914 = vpop.f32.mrf.mxu0
    %v5915 = vpop.f32.mrf.mxu0
    %v5916 = vadd.f32 0.0, %v5915
    %v5917 = vpop.f32.mrf.mxu0
    %5918 = vmatprep.mubr.bf16.mxu0 %v5463
    %5919 = vmatmul.mubr.bf16.gmra.mxu0 %v5462
    %v5920 = vpop.f32.mrf.mxu0
    %v5921 = vadd.f32 0.0, %v5920
    %v5922 = vpop.f32.mrf.mxu0
    %v5923 = vpop.f32.mrf.mxu0
    %v5924 = vadd.f32 0.0, %v5923
    %v5925 = vpop.f32.mrf.mxu0
    %5926 = vmatprep.mubr.bf16.mxu0 %v5466
    %5927 = vmatmul.mubr.bf16.gmra.mxu0 %v5465
    %v5928 = vpop.f32.mrf.mxu0
    %v5929 = vadd.f32 0.0, %v5928
    %v5930 = vpop.f32.mrf.mxu0
    %v5931 = vpop.f32.mrf.mxu0
    %v5932 = vadd.f32 0.0, %v5931
    %v5933 = vpop.f32.mrf.mxu0
    %5934 = vmatprep.mubr.bf16.mxu0 %v5469
    %5935 = vmatmul.mubr.bf16.gmra.mxu0 %v5468
    %v5936 = vpop.f32.mrf.mxu0
    %v5937 = vadd.f32 0.0, %v5936
    %v5938 = vpop.f32.mrf.mxu0
    %v5939 = vpop.f32.mrf.mxu0
    %v5940 = vadd.f32 0.0, %v5939
    %v5941 = vpop.f32.mrf.mxu0
    %5942 = vmatprep.mubr.bf16.mxu0 %v5472
    %5943 = vmatmul.mubr.bf16.gmra.mxu0 %v5471
    %v5944 = vpop.f32.mrf.mxu0
    %v5945 = vadd.f32 0.0, %v5944
    %v5946 = vpop.f32.mrf.mxu0
    %v5947 = vpop.f32.mrf.mxu0
    %v5948 = vadd.f32 0.0, %v5947
    %v5949 = vpop.f32.mrf.mxu0
    %5950 = vmatprep.mubr.bf16.mxu0 %v5475
    %5951 = vmatmul.mubr.bf16.gmra.mxu0 %v5474
    %v5952 = vpop.f32.mrf.mxu0
    %v5953 = vadd.f32 0.0, %v5952
    %v5954 = vpop.f32.mrf.mxu0
    %v5955 = vpop.f32.mrf.mxu0
    %v5956 = vadd.f32 0.0, %v5955
    %v5957 = vpop.f32.mrf.mxu0
    %5958 = vmatprep.mubr.bf16.mxu0 %v5478
    %5959 = vmatmul.mubr.bf16.gmra.mxu0 %v5477
    %v5960 = vpop.f32.mrf.mxu0
    %v5961 = vadd.f32 0.0, %v5960
    %v5962 = vpop.f32.mrf.mxu0
    %v5963 = vpop.f32.mrf.mxu0
    %v5964 = vadd.f32 0.0, %v5963
    %v5965 = vpop.f32.mrf.mxu0
    %5966 = vmatprep.mubr.bf16.mxu0 %v5481
    %5967 = vmatmul.mubr.bf16.gmra.mxu0 %v5480
    %v5968 = vpop.f32.mrf.mxu0
    %v5969 = vadd.f32 0.0, %v5968
    %v5970 = vpop.f32.mrf.mxu0
    %v5971 = vpop.f32.mrf.mxu0
    %v5972 = vadd.f32 0.0, %v5971
    %v5973 = vpop.f32.mrf.mxu0
    %5974 = vmatprep.mubr.bf16.mxu0 %v5484
    %5975 = vmatmul.mubr.bf16.gmra.mxu0 %v5483
    %v5976 = vpop.f32.mrf.mxu0
    %v5977 = vadd.f32 0.0, %v5976
    %v5978 = vpop.f32.mrf.mxu0
    %v5979 = vpop.f32.mrf.mxu0
    %v5980 = vadd.f32 0.0, %v5979
    %v5981 = vpop.f32.mrf.mxu0
    %5982 = vmatprep.mubr.bf16.mxu0 %v5487
    %5983 = vmatmul.mubr.bf16.gmra.mxu0 %v5486
    %v5984 = vpop.f32.mrf.mxu0
    %v5985 = vadd.f32 0.0, %v5984
    %v5986 = vpop.f32.mrf.mxu0
    %v5987 = vpop.f32.mrf.mxu0
    %v5988 = vadd.f32 0.0, %v5987
    %v5989 = vpop.f32.mrf.mxu0
    %5990 = vmatprep.mubr.bf16.mxu0 %v5490
    %5991 = vmatmul.mubr.bf16.gmra.mxu0 %v5489
    %v5992 = vpop.f32.mrf.mxu0
    %v5993 = vadd.f32 0.0, %v5992
    %v5994 = vpop.f32.mrf.mxu0
    %v5995 = vpop.f32.mrf.mxu0
    %v5996 = vadd.f32 0.0, %v5995
    %v5997 = vpop.f32.mrf.mxu0
    %5998 = vmatprep.mubr.bf16.mxu0 %v5493
    %5999 = vmatmul.mubr.bf16.gmra.mxu0 %v5492
    %v6000 = vpop.f32.mrf.mxu0
    %v6001 = vadd.f32 0.0, %v6000
    %v6002 = vpop.f32.mrf.mxu0
    %v6003 = vpop.f32.mrf.mxu0
    %v6004 = vadd.f32 0.0, %v6003
    %v6005 = vpop.f32.mrf.mxu0
    %6006 = vmatprep.mubr.bf16.mxu0 %v5496
    %6007 = vmatmul.mubr.bf16.gmra.mxu0 %v5495
    %v6008 = vpop.f32.mrf.mxu0
    %v6009 = vadd.f32 0.0, %v6008
    %v6010 = vpop.f32.mrf.mxu0
    %v6011 = vpop.f32.mrf.mxu0
    %v6012 = vadd.f32 0.0, %v6011
    %v6013 = vpop.f32.mrf.mxu0
    %6014 = vmatprep.mubr.bf16.mxu0 %v5499
    %6015 = vmatmul.mubr.bf16.gmra.mxu0 %v5498
    %v6016 = vpop.f32.mrf.mxu0
    %v6017 = vadd.f32 0.0, %v6016
    %v6018 = vpop.f32.mrf.mxu0
    %v6019 = vpop.f32.mrf.mxu0
    %v6020 = vadd.f32 0.0, %v6019
    %v6021 = vpop.f32.mrf.mxu0
    %6022 = vmatprep.mubr.bf16.mxu0 %v5502
    %6023 = vmatmul.mubr.bf16.gmra.mxu0 %v5501
    %v6024 = vpop.f32.mrf.mxu0
    %v6025 = vadd.f32 0.0, %v6024
    %v6026 = vpop.f32.mrf.mxu0
    %v6027 = vpop.f32.mrf.mxu0
    %v6028 = vadd.f32 0.0, %v6027
    %v6029 = vpop.f32.mrf.mxu0
    %6030 = vmatprep.mubr.bf16.mxu0 %v5505
    %6031 = vmatmul.mubr.bf16.gmra.mxu0 %v5504
    %v6032 = vpop.f32.mrf.mxu0
    %v6033 = vadd.f32 0.0, %v6032
    %v6034 = vpop.f32.mrf.mxu0
    %v6035 = vpop.f32.mrf.mxu0
    %v6036 = vadd.f32 0.0, %v6035
    %v6037 = vpop.f32.mrf.mxu0
    %6038 = vmatprep.mubr.bf16.mxu0 %v5508
    %6039 = vmatmul.mubr.bf16.gmra.mxu0 %v5507
    %v6040 = vpop.f32.mrf.mxu0
    %v6041 = vadd.f32 0.0, %v6040
    %v6042 = vpop.f32.mrf.mxu0
    %v6043 = vpop.f32.mrf.mxu0
    %v6044 = vadd.f32 0.0, %v6043
    %v6045 = vpop.f32.mrf.mxu0
    %6046 = vmatprep.mubr.bf16.mxu0 %v5511
    %6047 = vmatmul.mubr.bf16.gmra.mxu0 %v5510
    %v6048 = vpop.f32.mrf.mxu0
    %v6049 = vadd.f32 0.0, %v6048
    %v6050 = vpop.f32.mrf.mxu0
    %v6051 = vpop.f32.mrf.mxu0
    %v6052 = vadd.f32 0.0, %v6051
    %v6053 = vpop.f32.mrf.mxu0
    %6054 = vmatprep.mubr.bf16.mxu0 %v5514
    %6055 = vmatmul.mubr.bf16.gmra.mxu0 %v5513
    %v6056 = vpop.f32.mrf.mxu0
    %v6057 = vadd.f32 0.0, %v6056
    %v6058 = vpop.f32.mrf.mxu0
    %v6059 = vpop.f32.mrf.mxu0
    %v6060 = vadd.f32 0.0, %v6059
    %v6061 = vpop.f32.mrf.mxu0
    %6062 = vmatprep.mubr.bf16.mxu0 %v5517
    %6063 = vmatmul.mubr.bf16.gmra.mxu0 %v5516
    %v6064 = vpop.f32.mrf.mxu0
    %v6065 = vadd.f32 0.0, %v6064
    %v6066 = vpop.f32.mrf.mxu0
    %v6067 = vpop.f32.mrf.mxu0
    %v6068 = vadd.f32 0.0, %v6067
    %v6069 = vpop.f32.mrf.mxu0
    %6070 = vmatprep.mubr.bf16.mxu0 %v5520
    %6071 = vmatmul.mubr.bf16.gmra.mxu0 %v5519
    %v6072 = vpop.f32.mrf.mxu0
    %v6073 = vadd.f32 0.0, %v6072
    %v6074 = vpop.f32.mrf.mxu0
    %v6075 = vpop.f32.mrf.mxu0
    %v6076 = vadd.f32 0.0, %v6075
    %v6077 = vpop.f32.mrf.mxu0
    %6078 = vdwg.mxu0
    %6079 = vmatprep.subr.bf16.mxu0 0
    %6080 = vmatpush1.bf16.msra.mxu0 0
    %6081 = vmatprep.subr.bf16.mxu0 0
    %6082 = vmatpush1.bf16.msra.mxu0 0
    %6083 = vmatprep.subr.bf16.mxu0 0
    %6084 = vmatpush1.bf16.msra.mxu0 0
    %6085 = vmatprep.subr.bf16.mxu0 0
    %6086 = vmatpush1.bf16.msra.mxu0 0
    %6087 = vmatprep.subr.bf16.mxu0 0
    %6088 = vmatpush1.bf16.msra.mxu0 0
    %6089 = vmatprep.subr.bf16.mxu0 0
    %6090 = vmatpush1.bf16.msra.mxu0 0
    %6091 = vmatprep.subr.bf16.mxu0 0
    %6092 = vmatpush1.bf16.msra.mxu0 %v5675
    %6093 = vmatprep.subr.bf16.mxu0 0
    %6094 = vmatpush1.bf16.msra.mxu0 %v5674
    %6095 = vmatprep.subr.bf16.mxu0 0
    %6096 = vmatpush2.bf16.msra.mxu0 0
    %6097 = vmatprep.subr.bf16.mxu0 0
    %6098 = vmatpush2.bf16.msra.mxu0 0
    %6099 = vmatprep.subr.bf16.mxu0 0
    %6100 = vmatpush2.bf16.msra.mxu0 0
    %6101 = vmatprep.subr.bf16.mxu0 0
    %6102 = vmatpush2.bf16.msra.mxu0 0
    %6103 = vmatprep.subr.bf16.mxu0 0
    %6104 = vmatpush2.bf16.msra.mxu0 0
    %6105 = vmatprep.subr.bf16.mxu0 0
    %6106 = vmatpush2.bf16.msra.mxu0 0
    %6107 = vmatprep.subr.bf16.mxu0 0
    %6108 = vmatpush2.bf16.msra.mxu0 0
    %6109 = vmatprep.subr.bf16.mxu0 0
    %6110 = vmatpush2.bf16.msra.mxu0 0
    %6111 = vmatprep.mubr.bf16.mxu0 0
    %6112 = vmatmul.mubr.bf16.gmra.mxu0 %v5695
    %v6113 = vpop.f32.mrf.mxu0
    %v6114 = vadd.f32 %v5825, %v6113
    %v6115 = vpop.f32.mrf.mxu0
    %v6116 = vpop.f32.mrf.mxu0
    %v6117 = vadd.f32 %v5828, %v6116
    %v6118 = vpop.f32.mrf.mxu0
    %6119 = vmatprep.mubr.bf16.mxu0 0
    %6120 = vmatmul.mubr.bf16.gmra.mxu0 %v5698
    %v6121 = vpop.f32.mrf.mxu0
    %v6122 = vadd.f32 %v5833, %v6121
    %v6123 = vpop.f32.mrf.mxu0
    %v6124 = vpop.f32.mrf.mxu0
    %v6125 = vadd.f32 %v5836, %v6124
    %v6126 = vpop.f32.mrf.mxu0
    %6127 = vmatprep.mubr.bf16.mxu0 0
    %6128 = vmatmul.mubr.bf16.gmra.mxu0 %v5701
    %v6129 = vpop.f32.mrf.mxu0
    %v6130 = vadd.f32 %v5841, %v6129
    %v6131 = vpop.f32.mrf.mxu0
    %v6132 = vpop.f32.mrf.mxu0
    %v6133 = vadd.f32 %v5844, %v6132
    %v6134 = vpop.f32.mrf.mxu0
    %6135 = vmatprep.mubr.bf16.mxu0 0
    %6136 = vmatmul.mubr.bf16.gmra.mxu0 %v5704
    %v6137 = vpop.f32.mrf.mxu0
    %v6138 = vadd.f32 %v5849, %v6137
    %v6139 = vpop.f32.mrf.mxu0
    %v6140 = vpop.f32.mrf.mxu0
    %v6141 = vadd.f32 %v5852, %v6140
    %v6142 = vpop.f32.mrf.mxu0
    %6143 = vmatprep.mubr.bf16.mxu0 0
    %6144 = vmatmul.mubr.bf16.gmra.mxu0 %v5707
    %v6145 = vpop.f32.mrf.mxu0
    %v6146 = vadd.f32 %v5857, %v6145
    %v6147 = vpop.f32.mrf.mxu0
    %v6148 = vpop.f32.mrf.mxu0
    %v6149 = vadd.f32 %v5860, %v6148
    %v6150 = vpop.f32.mrf.mxu0
    %6151 = vmatprep.mubr.bf16.mxu0 0
    %6152 = vmatmul.mubr.bf16.gmra.mxu0 %v5710
    %v6153 = vpop.f32.mrf.mxu0
    %v6154 = vadd.f32 %v5865, %v6153
    %v6155 = vpop.f32.mrf.mxu0
    %v6156 = vpop.f32.mrf.mxu0
    %v6157 = vadd.f32 %v5868, %v6156
    %v6158 = vpop.f32.mrf.mxu0
    %6159 = vmatprep.mubr.bf16.mxu0 0
    %6160 = vmatmul.mubr.bf16.gmra.mxu0 %v5713
    %v6161 = vpop.f32.mrf.mxu0
    %v6162 = vadd.f32 %v5873, %v6161
    %v6163 = vpop.f32.mrf.mxu0
    %v6164 = vpop.f32.mrf.mxu0
    %v6165 = vadd.f32 %v5876, %v6164
    %v6166 = vpop.f32.mrf.mxu0
    %6167 = vmatprep.mubr.bf16.mxu0 0
    %6168 = vmatmul.mubr.bf16.gmra.mxu0 %v5716
    %v6169 = vpop.f32.mrf.mxu0
    %v6170 = vadd.f32 %v5881, %v6169
    %v6171 = vpop.f32.mrf.mxu0
    %v6172 = vpop.f32.mrf.mxu0
    %v6173 = vadd.f32 %v5884, %v6172
    %v6174 = vpop.f32.mrf.mxu0
    %6175 = vmatprep.mubr.bf16.mxu0 0
    %6176 = vmatmul.mubr.bf16.gmra.mxu0 %v5719
    %v6177 = vpop.f32.mrf.mxu0
    %v6178 = vadd.f32 %v5889, %v6177
    %v6179 = vpop.f32.mrf.mxu0
    %v6180 = vpop.f32.mrf.mxu0
    %v6181 = vadd.f32 %v5892, %v6180
    %v6182 = vpop.f32.mrf.mxu0
    %6183 = vmatprep.mubr.bf16.mxu0 0
    %6184 = vmatmul.mubr.bf16.gmra.mxu0 %v5722
    %v6185 = vpop.f32.mrf.mxu0
    %v6186 = vadd.f32 %v5897, %v6185
    %v6187 = vpop.f32.mrf.mxu0
    %v6188 = vpop.f32.mrf.mxu0
    %v6189 = vadd.f32 %v5900, %v6188
    %v6190 = vpop.f32.mrf.mxu0
    %6191 = vmatprep.mubr.bf16.mxu0 0
    %6192 = vmatmul.mubr.bf16.gmra.mxu0 %v5725
    %v6193 = vpop.f32.mrf.mxu0
    %v6194 = vadd.f32 %v5905, %v6193
    %v6195 = vpop.f32.mrf.mxu0
    %v6196 = vpop.f32.mrf.mxu0
    %v6197 = vadd.f32 %v5908, %v6196
    %v6198 = vpop.f32.mrf.mxu0
    %6199 = vmatprep.mubr.bf16.mxu0 0
    %6200 = vmatmul.mubr.bf16.gmra.mxu0 %v5728
    %v6201 = vpop.f32.mrf.mxu0
    %v6202 = vadd.f32 %v5913, %v6201
    %v6203 = vpop.f32.mrf.mxu0
    %v6204 = vpop.f32.mrf.mxu0
    %v6205 = vadd.f32 %v5916, %v6204
    %v6206 = vpop.f32.mrf.mxu0
    %6207 = vmatprep.mubr.bf16.mxu0 0
    %6208 = vmatmul.mubr.bf16.gmra.mxu0 %v5731
    %v6209 = vpop.f32.mrf.mxu0
    %v6210 = vadd.f32 %v5921, %v6209
    %v6211 = vpop.f32.mrf.mxu0
    %v6212 = vpop.f32.mrf.mxu0
    %v6213 = vadd.f32 %v5924, %v6212
    %v6214 = vpop.f32.mrf.mxu0
    %6215 = vmatprep.mubr.bf16.mxu0 0
    %6216 = vmatmul.mubr.bf16.gmra.mxu0 %v5734
    %v6217 = vpop.f32.mrf.mxu0
    %v6218 = vadd.f32 %v5929, %v6217
    %v6219 = vpop.f32.mrf.mxu0
    %v6220 = vpop.f32.mrf.mxu0
    %v6221 = vadd.f32 %v5932, %v6220
    %v6222 = vpop.f32.mrf.mxu0
    %6223 = vmatprep.mubr.bf16.mxu0 0
    %6224 = vmatmul.mubr.bf16.gmra.mxu0 %v5737
    %v6225 = vpop.f32.mrf.mxu0
    %v6226 = vadd.f32 %v5937, %v6225
    %v6227 = vpop.f32.mrf.mxu0
    %v6228 = vpop.f32.mrf.mxu0
    %v6229 = vadd.f32 %v5940, %v6228
    %v6230 = vpop.f32.mrf.mxu0
    %6231 = vmatprep.mubr.bf16.mxu0 0
    %6232 = vmatmul.mubr.bf16.gmra.mxu0 %v5740
    %v6233 = vpop.f32.mrf.mxu0
    %v6234 = vadd.f32 %v5945, %v6233
    %v6235 = vpop.f32.mrf.mxu0
    %v6236 = vpop.f32.mrf.mxu0
    %v6237 = vadd.f32 %v5948, %v6236
    %v6238 = vpop.f32.mrf.mxu0
    %6239 = vmatprep.mubr.bf16.mxu0 0
    %6240 = vmatmul.mubr.bf16.gmra.mxu0 %v5743
    %v6241 = vpop.f32.mrf.mxu0
    %v6242 = vadd.f32 %v5953, %v6241
    %v6243 = vpop.f32.mrf.mxu0
    %v6244 = vpop.f32.mrf.mxu0
    %v6245 = vadd.f32 %v5956, %v6244
    %v6246 = vpop.f32.mrf.mxu0
    %6247 = vmatprep.mubr.bf16.mxu0 0
    %6248 = vmatmul.mubr.bf16.gmra.mxu0 %v5746
    %v6249 = vpop.f32.mrf.mxu0
    %v6250 = vadd.f32 %v5961, %v6249
    %v6251 = vpop.f32.mrf.mxu0
    %v6252 = vpop.f32.mrf.mxu0
    %v6253 = vadd.f32 %v5964, %v6252
    %v6254 = vpop.f32.mrf.mxu0
    %6255 = vmatprep.mubr.bf16.mxu0 0
    %6256 = vmatmul.mubr.bf16.gmra.mxu0 %v5749
    %v6257 = vpop.f32.mrf.mxu0
    %v6258 = vadd.f32 %v5969, %v6257
    %v6259 = vpop.f32.mrf.mxu0
    %v6260 = vpop.f32.mrf.mxu0
    %v6261 = vadd.f32 %v5972, %v6260
    %v6262 = vpop.f32.mrf.mxu0
    %6263 = vmatprep.mubr.bf16.mxu0 0
    %6264 = vmatmul.mubr.bf16.gmra.mxu0 %v5752
    %v6265 = vpop.f32.mrf.mxu0
    %v6266 = vadd.f32 %v5977, %v6265
    %v6267 = vpop.f32.mrf.mxu0
    %v6268 = vpop.f32.mrf.mxu0
    %v6269 = vadd.f32 %v5980, %v6268
    %v6270 = vpop.f32.mrf.mxu0
    %6271 = vmatprep.mubr.bf16.mxu0 0
    %6272 = vmatmul.mubr.bf16.gmra.mxu0 %v5755
    %v6273 = vpop.f32.mrf.mxu0
    %v6274 = vadd.f32 %v5985, %v6273
    %v6275 = vpop.f32.mrf.mxu0
    %v6276 = vpop.f32.mrf.mxu0
    %v6277 = vadd.f32 %v5988, %v6276
    %v6278 = vpop.f32.mrf.mxu0
    %6279 = vmatprep.mubr.bf16.mxu0 0
    %6280 = vmatmul.mubr.bf16.gmra.mxu0 %v5758
    %v6281 = vpop.f32.mrf.mxu0
    %v6282 = vadd.f32 %v5993, %v6281
    %v6283 = vpop.f32.mrf.mxu0
    %v6284 = vpop.f32.mrf.mxu0
    %v6285 = vadd.f32 %v5996, %v6284
    %v6286 = vpop.f32.mrf.mxu0
    %6287 = vmatprep.mubr.bf16.mxu0 0
    %6288 = vmatmul.mubr.bf16.gmra.mxu0 %v5761
    %v6289 = vpop.f32.mrf.mxu0
    %v6290 = vadd.f32 %v6001, %v6289
    %v6291 = vpop.f32.mrf.mxu0
    %v6292 = vpop.f32.mrf.mxu0
    %v6293 = vadd.f32 %v6004, %v6292
    %v6294 = vpop.f32.mrf.mxu0
    %6295 = vmatprep.mubr.bf16.mxu0 0
    %6296 = vmatmul.mubr.bf16.gmra.mxu0 %v5764
    %v6297 = vpop.f32.mrf.mxu0
    %v6298 = vadd.f32 %v6009, %v6297
    %v6299 = vpop.f32.mrf.mxu0
    %v6300 = vpop.f32.mrf.mxu0
    %v6301 = vadd.f32 %v6012, %v6300
    %v6302 = vpop.f32.mrf.mxu0
    %6303 = vmatprep.mubr.bf16.mxu0 0
    %6304 = vmatmul.mubr.bf16.gmra.mxu0 %v5767
    %v6305 = vpop.f32.mrf.mxu0
    %v6306 = vadd.f32 %v6017, %v6305
    %v6307 = vpop.f32.mrf.mxu0
    %v6308 = vpop.f32.mrf.mxu0
    %v6309 = vadd.f32 %v6020, %v6308
    %v6310 = vpop.f32.mrf.mxu0
    %6311 = vmatprep.mubr.bf16.mxu0 0
    %6312 = vmatmul.mubr.bf16.gmra.mxu0 %v5770
    %v6313 = vpop.f32.mrf.mxu0
    %v6314 = vadd.f32 %v6025, %v6313
    %v6315 = vpop.f32.mrf.mxu0
    %v6316 = vpop.f32.mrf.mxu0
    %v6317 = vadd.f32 %v6028, %v6316
    %v6318 = vpop.f32.mrf.mxu0
    %6319 = vmatprep.mubr.bf16.mxu0 0
    %6320 = vmatmul.mubr.bf16.gmra.mxu0 %v5773
    %v6321 = vpop.f32.mrf.mxu0
    %v6322 = vadd.f32 %v6033, %v6321
    %v6323 = vpop.f32.mrf.mxu0
    %v6324 = vpop.f32.mrf.mxu0
    %v6325 = vadd.f32 %v6036, %v6324
    %v6326 = vpop.f32.mrf.mxu0
    %6327 = vmatprep.mubr.bf16.mxu0 0
    %6328 = vmatmul.mubr.bf16.gmra.mxu0 %v5776
    %v6329 = vpop.f32.mrf.mxu0
    %v6330 = vadd.f32 %v6041, %v6329
    %v6331 = vpop.f32.mrf.mxu0
    %v6332 = vpop.f32.mrf.mxu0
    %v6333 = vadd.f32 %v6044, %v6332
    %v6334 = vpop.f32.mrf.mxu0
    %6335 = vmatprep.mubr.bf16.mxu0 0
    %6336 = vmatmul.mubr.bf16.gmra.mxu0 %v5779
    %v6337 = vpop.f32.mrf.mxu0
    %v6338 = vadd.f32 %v6049, %v6337
    %v6339 = vpop.f32.mrf.mxu0
    %v6340 = vpop.f32.mrf.mxu0
    %v6341 = vadd.f32 %v6052, %v6340
    %v6342 = vpop.f32.mrf.mxu0
    %6343 = vmatprep.mubr.bf16.mxu0 0
    %6344 = vmatmul.mubr.bf16.gmra.mxu0 %v5782
    %v6345 = vpop.f32.mrf.mxu0
    %v6346 = vadd.f32 %v6057, %v6345
    %v6347 = vpop.f32.mrf.mxu0
    %v6348 = vpop.f32.mrf.mxu0
    %v6349 = vadd.f32 %v6060, %v6348
    %v6350 = vpop.f32.mrf.mxu0
    %6351 = vmatprep.mubr.bf16.mxu0 0
    %6352 = vmatmul.mubr.bf16.gmra.mxu0 %v5785
    %v6353 = vpop.f32.mrf.mxu0
    %v6354 = vadd.f32 %v6065, %v6353
    %v6355 = vpop.f32.mrf.mxu0
    %v6356 = vpop.f32.mrf.mxu0
    %v6357 = vadd.f32 %v6068, %v6356
    %v6358 = vpop.f32.mrf.mxu0
    %6359 = vmatprep.mubr.bf16.mxu0 0
    %6360 = vmatmul.mubr.bf16.gmra.mxu0 %v5788
    %v6361 = vpop.f32.mrf.mxu0
    %v6362 = vadd.f32 %v6073, %v6361
    %v6363 = vpop.f32.mrf.mxu0
    %v6364 = vpop.f32.mrf.mxu0
    %v6365 = vadd.f32 %v6076, %v6364
    %v6366 = vpop.f32.mrf.mxu0
    %6367 = vdwg.mxu0
    %v6368 = vld [vmem:[%s5] sm:$0x1]
    %v6369 = vld [vmem:[%s6] sm:$0x1]
    %v6370 = vsel %vm502, %v6114, 0.0
    %v6371 = vsel %vm502, %v6117, 0.0
    %v6372 = vadd.f32 %v6370, %v6371
    %v6373 = vsel %vm502, %v6122, 0.0
    %v6374 = vadd.f32 %v6372, %v6373
    %v6375 = vsel %vm502, %v6125, 0.0
    %v6376 = vadd.f32 %v6374, %v6375
    %v6377 = vsel %vm502, %v6130, 0.0
    %v6378 = vadd.f32 %v6376, %v6377
    %v6379 = vsel %vm502, %v6133, 0.0
    %v6380 = vadd.f32 %v6378, %v6379
    %v6381 = vsel %vm502, %v6138, 0.0
    %v6382 = vadd.f32 %v6380, %v6381
    %v6383 = vsel %vm502, %v6141, 0.0
    %v6384 = vadd.f32 %v6382, %v6383
    %v6385 = vsel %vm502, %v6146, 0.0
    %v6386 = vadd.f32 %v6384, %v6385
    %v6387 = vsel %vm502, %v6149, 0.0
    %v6388 = vadd.f32 %v6386, %v6387
    %v6389 = vsel %vm502, %v6154, 0.0
    %v6390 = vadd.f32 %v6388, %v6389
    %v6391 = vsel %vm502, %v6157, 0.0
    %v6392 = vadd.f32 %v6390, %v6391
    %v6393 = vsel %vm502, %v6162, 0.0
    %v6394 = vadd.f32 %v6392, %v6393
    %v6395 = vsel %vm502, %v6165, 0.0
    %v6396 = vadd.f32 %v6394, %v6395
    %v6397 = vsel %vm502, %v6170, 0.0
    %v6398 = vadd.f32 %v6396, %v6397
    %v6399 = vsel %vm502, %v6173, 0.0
    %v6400 = vadd.f32 %v6398, %v6399
    %v6401 = vsel %vm502, %v6178, 0.0
    %v6402 = vadd.f32 %v6400, %v6401
    %v6403 = vsel %vm502, %v6181, 0.0
    %v6404 = vadd.f32 %v6402, %v6403
    %v6405 = vsel %vm502, %v6186, 0.0
    %v6406 = vadd.f32 %v6404, %v6405
    %v6407 = vsel %vm502, %v6189, 0.0
    %v6408 = vadd.f32 %v6406, %v6407
    %v6409 = vsel %vm502, %v6194, 0.0
    %v6410 = vadd.f32 %v6408, %v6409
    %v6411 = vsel %vm502, %v6197, 0.0
    %v6412 = vadd.f32 %v6410, %v6411
    %v6413 = vsel %vm502, %v6202, 0.0
    %v6414 = vadd.f32 %v6412, %v6413
    %v6415 = vsel %vm502, %v6205, 0.0
    %v6416 = vadd.f32 %v6414, %v6415
    %v6417 = vsel %vm502, %v6210, 0.0
    %v6418 = vadd.f32 %v6416, %v6417
    %v6419 = vsel %vm502, %v6213, 0.0
    %v6420 = vadd.f32 %v6418, %v6419
    %v6421 = vsel %vm502, %v6218, 0.0
    %v6422 = vadd.f32 %v6420, %v6421
    %v6423 = vsel %vm502, %v6221, 0.0
    %v6424 = vadd.f32 %v6422, %v6423
    %v6425 = vsel %vm502, %v6226, 0.0
    %v6426 = vadd.f32 %v6424, %v6425
    %v6427 = vsel %vm502, %v6229, 0.0
    %v6428 = vadd.f32 %v6426, %v6427
    %v6429 = vsel %vm502, %v6234, 0.0
    %v6430 = vadd.f32 %v6428, %v6429
    %v6431 = vsel %vm502, %v6237, 0.0
    %v6432 = vadd.f32 %v6430, %v6431
    %v6433 = vsel %vm502, %v6242, 0.0
    %v6434 = vadd.f32 %v6432, %v6433
    %v6435 = vsel %vm502, %v6245, 0.0
    %v6436 = vadd.f32 %v6434, %v6435
    %v6437 = vsel %vm502, %v6250, 0.0
    %v6438 = vadd.f32 %v6436, %v6437
    %v6439 = vsel %vm502, %v6253, 0.0
    %v6440 = vadd.f32 %v6438, %v6439
    %v6441 = vsel %vm502, %v6258, 0.0
    %v6442 = vadd.f32 %v6440, %v6441
    %v6443 = vsel %vm502, %v6261, 0.0
    %v6444 = vadd.f32 %v6442, %v6443
    %v6445 = vsel %vm502, %v6266, 0.0
    %v6446 = vadd.f32 %v6444, %v6445
    %v6447 = vsel %vm502, %v6269, 0.0
    %v6448 = vadd.f32 %v6446, %v6447
    %v6449 = vsel %vm502, %v6274, 0.0
    %v6450 = vadd.f32 %v6448, %v6449
    %v6451 = vsel %vm502, %v6277, 0.0
    %v6452 = vadd.f32 %v6450, %v6451
    %v6453 = vsel %vm502, %v6282, 0.0
    %v6454 = vadd.f32 %v6452, %v6453
    %v6455 = vsel %vm502, %v6285, 0.0
    %v6456 = vadd.f32 %v6454, %v6455
    %v6457 = vsel %vm502, %v6290, 0.0
    %v6458 = vadd.f32 %v6456, %v6457
    %v6459 = vsel %vm502, %v6293, 0.0
    %v6460 = vadd.f32 %v6458, %v6459
    %v6461 = vsel %vm502, %v6298, 0.0
    %v6462 = vadd.f32 %v6460, %v6461
    %v6463 = vsel %vm502, %v6301, 0.0
    %v6464 = vadd.f32 %v6462, %v6463
    %v6465 = vsel %vm502, %v6306, 0.0
    %v6466 = vadd.f32 %v6464, %v6465
    %v6467 = vsel %vm502, %v6309, 0.0
    %v6468 = vadd.f32 %v6466, %v6467
    %v6469 = vsel %vm502, %v6314, 0.0
    %v6470 = vadd.f32 %v6468, %v6469
    %v6471 = vsel %vm502, %v6317, 0.0
    %v6472 = vadd.f32 %v6470, %v6471
    %v6473 = vsel %vm502, %v6322, 0.0
    %v6474 = vadd.f32 %v6472, %v6473
    %v6475 = vsel %vm502, %v6325, 0.0
    %v6476 = vadd.f32 %v6474, %v6475
    %v6477 = vsel %vm502, %v6330, 0.0
    %v6478 = vadd.f32 %v6476, %v6477
    %v6479 = vsel %vm502, %v6333, 0.0
    %v6480 = vadd.f32 %v6478, %v6479
    %v6481 = vsel %vm502, %v6338, 0.0
    %v6482 = vadd.f32 %v6480, %v6481
    %v6483 = vsel %vm502, %v6341, 0.0
    %v6484 = vadd.f32 %v6482, %v6483
    %v6485 = vsel %vm502, %v6346, 0.0
    %v6486 = vadd.f32 %v6484, %v6485
    %v6487 = vsel %vm502, %v6349, 0.0
    %v6488 = vadd.f32 %v6486, %v6487
    %v6489 = vsel %vm502, %v6354, 0.0
    %v6490 = vadd.f32 %v6488, %v6489
    %v6491 = vsel %vm502, %v6357, 0.0
    %v6492 = vadd.f32 %v6490, %v6491
    %v6493 = vsel %vm502, %v6362, 0.0
    %v6494 = vadd.f32 %v6492, %v6493
    %v6495 = vsel %vm502, %v6365, 0.0
    %v6496 = vadd.f32 %v6494, %v6495
    %v6497 = vrot.slane %v6496, 4
    %v6498 = vadd.f32 %v6496, %v6497
    %v6499 = vrot.slane %v6498, 2
    %v6500 = vadd.f32 %v6498, %v6499
    %v6501 = vrot.slane %v6500, 1
    %v6502 = vadd.f32 %v6500, %v6501
    %v6503 = vmul.f32 %v6502, 0.001953125
    %v6504 = vsub.f32 %v6114, %v6503
    %v6505 = vsub.f32 %v6117, %v6503
    %v6506 = vsub.f32 %v6122, %v6503
    %v6507 = vsub.f32 %v6125, %v6503
    %v6508 = vsub.f32 %v6130, %v6503
    %v6509 = vsub.f32 %v6133, %v6503
    %v6510 = vsub.f32 %v6138, %v6503
    %v6511 = vsub.f32 %v6141, %v6503
    %v6512 = vsub.f32 %v6146, %v6503
    %v6513 = vsub.f32 %v6149, %v6503
    %v6514 = vsub.f32 %v6154, %v6503
    %v6515 = vsub.f32 %v6157, %v6503
    %v6516 = vsub.f32 %v6162, %v6503
    %v6517 = vsub.f32 %v6165, %v6503
    %v6518 = vsub.f32 %v6170, %v6503
    %v6519 = vsub.f32 %v6173, %v6503
    %v6520 = vsub.f32 %v6178, %v6503
    %v6521 = vsub.f32 %v6181, %v6503
    %v6522 = vsub.f32 %v6186, %v6503
    %v6523 = vsub.f32 %v6189, %v6503
    %v6524 = vsub.f32 %v6194, %v6503
    %v6525 = vsub.f32 %v6197, %v6503
    %v6526 = vsub.f32 %v6202, %v6503
    %v6527 = vsub.f32 %v6205, %v6503
    %v6528 = vsub.f32 %v6210, %v6503
    %v6529 = vsub.f32 %v6213, %v6503
    %v6530 = vsub.f32 %v6218, %v6503
    %v6531 = vsub.f32 %v6221, %v6503
    %v6532 = vsub.f32 %v6226, %v6503
    %v6533 = vsub.f32 %v6229, %v6503
    %v6534 = vsub.f32 %v6234, %v6503
    %v6535 = vsub.f32 %v6237, %v6503
    %v6536 = vsub.f32 %v6242, %v6503
    %v6537 = vsub.f32 %v6245, %v6503
    %v6538 = vsub.f32 %v6250, %v6503
    %v6539 = vsub.f32 %v6253, %v6503
    %v6540 = vsub.f32 %v6258, %v6503
    %v6541 = vsub.f32 %v6261, %v6503
    %v6542 = vsub.f32 %v6266, %v6503
    %v6543 = vsub.f32 %v6269, %v6503
    %v6544 = vsub.f32 %v6274, %v6503
    %v6545 = vsub.f32 %v6277, %v6503
    %v6546 = vsub.f32 %v6282, %v6503
    %v6547 = vsub.f32 %v6285, %v6503
    %v6548 = vsub.f32 %v6290, %v6503
    %v6549 = vsub.f32 %v6293, %v6503
    %v6550 = vsub.f32 %v6298, %v6503
    %v6551 = vsub.f32 %v6301, %v6503
    %v6552 = vsub.f32 %v6306, %v6503
    %v6553 = vsub.f32 %v6309, %v6503
    %v6554 = vsub.f32 %v6314, %v6503
    %v6555 = vsub.f32 %v6317, %v6503
    %v6556 = vsub.f32 %v6322, %v6503
    %v6557 = vsub.f32 %v6325, %v6503
    %v6558 = vsub.f32 %v6330, %v6503
    %v6559 = vsub.f32 %v6333, %v6503
    %v6560 = vsub.f32 %v6338, %v6503
    %v6561 = vsub.f32 %v6341, %v6503
    %v6562 = vsub.f32 %v6346, %v6503
    %v6563 = vsub.f32 %v6349, %v6503
    %v6564 = vsub.f32 %v6354, %v6503
    %v6565 = vsub.f32 %v6357, %v6503
    %v6566 = vsub.f32 %v6362, %v6503
    %v6567 = vsub.f32 %v6365, %v6503
    %v6568 = vmul.f32 %v6504, %v6504
    %v6569 = vmul.f32 %v6505, %v6505
    %v6570 = vmul.f32 %v6506, %v6506
    %v6571 = vmul.f32 %v6507, %v6507
    %v6572 = vmul.f32 %v6508, %v6508
    %v6573 = vmul.f32 %v6509, %v6509
    %v6574 = vmul.f32 %v6510, %v6510
    %v6575 = vmul.f32 %v6511, %v6511
    %v6576 = vmul.f32 %v6512, %v6512
    %v6577 = vmul.f32 %v6513, %v6513
    %v6578 = vmul.f32 %v6514, %v6514
    %v6579 = vmul.f32 %v6515, %v6515
    %v6580 = vmul.f32 %v6516, %v6516
    %v6581 = vmul.f32 %v6517, %v6517
    %v6582 = vmul.f32 %v6518, %v6518
    %v6583 = vmul.f32 %v6519, %v6519
    %v6584 = vmul.f32 %v6520, %v6520
    %v6585 = vmul.f32 %v6521, %v6521
    %v6586 = vmul.f32 %v6522, %v6522
    %v6587 = vmul.f32 %v6523, %v6523
    %v6588 = vmul.f32 %v6524, %v6524
    %v6589 = vmul.f32 %v6525, %v6525
    %v6590 = vmul.f32 %v6526, %v6526
    %v6591 = vmul.f32 %v6527, %v6527
    %v6592 = vmul.f32 %v6528, %v6528
    %v6593 = vmul.f32 %v6529, %v6529
    %v6594 = vmul.f32 %v6530, %v6530
    %v6595 = vmul.f32 %v6531, %v6531
    %v6596 = vmul.f32 %v6532, %v6532
    %v6597 = vmul.f32 %v6533, %v6533
    %v6598 = vmul.f32 %v6534, %v6534
    %v6599 = vmul.f32 %v6535, %v6535
    %v6600 = vmul.f32 %v6536, %v6536
    %v6601 = vmul.f32 %v6537, %v6537
    %v6602 = vmul.f32 %v6538, %v6538
    %v6603 = vmul.f32 %v6539, %v6539
    %v6604 = vmul.f32 %v6540, %v6540
    %v6605 = vmul.f32 %v6541, %v6541
    %v6606 = vmul.f32 %v6542, %v6542
    %v6607 = vmul.f32 %v6543, %v6543
    %v6608 = vmul.f32 %v6544, %v6544
    %v6609 = vmul.f32 %v6545, %v6545
    %v6610 = vmul.f32 %v6546, %v6546
    %v6611 = vmul.f32 %v6547, %v6547
    %v6612 = vmul.f32 %v6548, %v6548
    %v6613 = vmul.f32 %v6549, %v6549
    %v6614 = vmul.f32 %v6550, %v6550
    %v6615 = vmul.f32 %v6551, %v6551
    %v6616 = vmul.f32 %v6552, %v6552
    %v6617 = vmul.f32 %v6553, %v6553
    %v6618 = vmul.f32 %v6554, %v6554
    %v6619 = vmul.f32 %v6555, %v6555
    %v6620 = vmul.f32 %v6556, %v6556
    %v6621 = vmul.f32 %v6557, %v6557
    %v6622 = vmul.f32 %v6558, %v6558
    %v6623 = vmul.f32 %v6559, %v6559
    %v6624 = vmul.f32 %v6560, %v6560
    %v6625 = vmul.f32 %v6561, %v6561
    %v6626 = vmul.f32 %v6562, %v6562
    %v6627 = vmul.f32 %v6563, %v6563
    %v6628 = vmul.f32 %v6564, %v6564
    %v6629 = vmul.f32 %v6565, %v6565
    %v6630 = vmul.f32 %v6566, %v6566
    %v6631 = vmul.f32 %v6567, %v6567
    %v6632 = vsel %vm502, %v6568, 0.0
    %v6633 = vsel %vm502, %v6569, 0.0
    %v6634 = vadd.f32 %v6632, %v6633
    %v6635 = vsel %vm502, %v6570, 0.0
    %v6636 = vadd.f32 %v6634, %v6635
    %v6637 = vsel %vm502, %v6571, 0.0
    %v6638 = vadd.f32 %v6636, %v6637
    %v6639 = vsel %vm502, %v6572, 0.0
    %v6640 = vadd.f32 %v6638, %v6639
    %v6641 = vsel %vm502, %v6573, 0.0
    %v6642 = vadd.f32 %v6640, %v6641
    %v6643 = vsel %vm502, %v6574, 0.0
    %v6644 = vadd.f32 %v6642, %v6643
    %v6645 = vsel %vm502, %v6575, 0.0
    %v6646 = vadd.f32 %v6644, %v6645
    %v6647 = vsel %vm502, %v6576, 0.0
    %v6648 = vadd.f32 %v6646, %v6647
    %v6649 = vsel %vm502, %v6577, 0.0
    %v6650 = vadd.f32 %v6648, %v6649
    %v6651 = vsel %vm502, %v6578, 0.0
    %v6652 = vadd.f32 %v6650, %v6651
    %v6653 = vsel %vm502, %v6579, 0.0
    %v6654 = vadd.f32 %v6652, %v6653
    %v6655 = vsel %vm502, %v6580, 0.0
    %v6656 = vadd.f32 %v6654, %v6655
    %v6657 = vsel %vm502, %v6581, 0.0
    %v6658 = vadd.f32 %v6656, %v6657
    %v6659 = vsel %vm502, %v6582, 0.0
    %v6660 = vadd.f32 %v6658, %v6659
    %v6661 = vsel %vm502, %v6583, 0.0
    %v6662 = vadd.f32 %v6660, %v6661
    %v6663 = vsel %vm502, %v6584, 0.0
    %v6664 = vadd.f32 %v6662, %v6663
    %v6665 = vsel %vm502, %v6585, 0.0
    %v6666 = vadd.f32 %v6664, %v6665
    %v6667 = vsel %vm502, %v6586, 0.0
    %v6668 = vadd.f32 %v6666, %v6667
    %v6669 = vsel %vm502, %v6587, 0.0
    %v6670 = vadd.f32 %v6668, %v6669
    %v6671 = vsel %vm502, %v6588, 0.0
    %v6672 = vadd.f32 %v6670, %v6671
    %v6673 = vsel %vm502, %v6589, 0.0
    %v6674 = vadd.f32 %v6672, %v6673
    %v6675 = vsel %vm502, %v6590, 0.0
    %v6676 = vadd.f32 %v6674, %v6675
    %v6677 = vsel %vm502, %v6591, 0.0
    %v6678 = vadd.f32 %v6676, %v6677
    %v6679 = vsel %vm502, %v6592, 0.0
    %v6680 = vadd.f32 %v6678, %v6679
    %v6681 = vsel %vm502, %v6593, 0.0
    %v6682 = vadd.f32 %v6680, %v6681
    %v6683 = vsel %vm502, %v6594, 0.0
    %v6684 = vadd.f32 %v6682, %v6683
    %v6685 = vsel %vm502, %v6595, 0.0
    %v6686 = vadd.f32 %v6684, %v6685
    %v6687 = vsel %vm502, %v6596, 0.0
    %v6688 = vadd.f32 %v6686, %v6687
    %v6689 = vsel %vm502, %v6597, 0.0
    %v6690 = vadd.f32 %v6688, %v6689
    %v6691 = vsel %vm502, %v6598, 0.0
    %v6692 = vadd.f32 %v6690, %v6691
    %v6693 = vsel %vm502, %v6599, 0.0
    %v6694 = vadd.f32 %v6692, %v6693
    %v6695 = vsel %vm502, %v6600, 0.0
    %v6696 = vadd.f32 %v6694, %v6695
    %v6697 = vsel %vm502, %v6601, 0.0
    %v6698 = vadd.f32 %v6696, %v6697
    %v6699 = vsel %vm502, %v6602, 0.0
    %v6700 = vadd.f32 %v6698, %v6699
    %v6701 = vsel %vm502, %v6603, 0.0
    %v6702 = vadd.f32 %v6700, %v6701
    %v6703 = vsel %vm502, %v6604, 0.0
    %v6704 = vadd.f32 %v6702, %v6703
    %v6705 = vsel %vm502, %v6605, 0.0
    %v6706 = vadd.f32 %v6704, %v6705
    %v6707 = vsel %vm502, %v6606, 0.0
    %v6708 = vadd.f32 %v6706, %v6707
    %v6709 = vsel %vm502, %v6607, 0.0
    %v6710 = vadd.f32 %v6708, %v6709
    %v6711 = vsel %vm502, %v6608, 0.0
    %v6712 = vadd.f32 %v6710, %v6711
    %v6713 = vsel %vm502, %v6609, 0.0
    %v6714 = vadd.f32 %v6712, %v6713
    %v6715 = vsel %vm502, %v6610, 0.0
    %v6716 = vadd.f32 %v6714, %v6715
    %v6717 = vsel %vm502, %v6611, 0.0
    %v6718 = vadd.f32 %v6716, %v6717
    %v6719 = vsel %vm502, %v6612, 0.0
    %v6720 = vadd.f32 %v6718, %v6719
    %v6721 = vsel %vm502, %v6613, 0.0
    %v6722 = vadd.f32 %v6720, %v6721
    %v6723 = vsel %vm502, %v6614, 0.0
    %v6724 = vadd.f32 %v6722, %v6723
    %v6725 = vsel %vm502, %v6615, 0.0
    %v6726 = vadd.f32 %v6724, %v6725
    %v6727 = vsel %vm502, %v6616, 0.0
    %v6728 = vadd.f32 %v6726, %v6727
    %v6729 = vsel %vm502, %v6617, 0.0
    %v6730 = vadd.f32 %v6728, %v6729
    %v6731 = vsel %vm502, %v6618, 0.0
    %v6732 = vadd.f32 %v6730, %v6731
    %v6733 = vsel %vm502, %v6619, 0.0
    %v6734 = vadd.f32 %v6732, %v6733
    %v6735 = vsel %vm502, %v6620, 0.0
    %v6736 = vadd.f32 %v6734, %v6735
    %v6737 = vsel %vm502, %v6621, 0.0
    %v6738 = vadd.f32 %v6736, %v6737
    %v6739 = vsel %vm502, %v6622, 0.0
    %v6740 = vadd.f32 %v6738, %v6739
    %v6741 = vsel %vm502, %v6623, 0.0
    %v6742 = vadd.f32 %v6740, %v6741
    %v6743 = vsel %vm502, %v6624, 0.0
    %v6744 = vadd.f32 %v6742, %v6743
    %v6745 = vsel %vm502, %v6625, 0.0
    %v6746 = vadd.f32 %v6744, %v6745
    %v6747 = vsel %vm502, %v6626, 0.0
    %v6748 = vadd.f32 %v6746, %v6747
    %v6749 = vsel %vm502, %v6627, 0.0
    %v6750 = vadd.f32 %v6748, %v6749
    %v6751 = vsel %vm502, %v6628, 0.0
    %v6752 = vadd.f32 %v6750, %v6751
    %v6753 = vsel %vm502, %v6629, 0.0
    %v6754 = vadd.f32 %v6752, %v6753
    %v6755 = vsel %vm502, %v6630, 0.0
    %v6756 = vadd.f32 %v6754, %v6755
    %v6757 = vsel %vm502, %v6631, 0.0
    %v6758 = vadd.f32 %v6756, %v6757
    %v6759 = vrot.slane %v6758, 4
    %v6760 = vadd.f32 %v6758, %v6759
    %v6761 = vrot.slane %v6760, 2
    %v6762 = vadd.f32 %v6760, %v6761
    %v6763 = vrot.slane %v6762, 1
    %v6764 = vadd.f32 %v6762, %v6763
    %v6765 = vmul.f32 %v6764, 0.001953125
    %v6766 = vadd.f32 %v6765, 1e-05
    %v6767 = vrsqrt.pop %v6766
    %v6768 = vmul.f32 %v6368, %v6767
    %v6770 = vlaneseq
    %v6771 = vshrl.u32 %v6770, 7
    %v6772 = vsub.s32 0, %v6771
    %v6773 = vrot.slane %v6768, %v6772
    %v6775 = vmul.f32 %v6504, %v6773
    %v6776 = vmul.f32 %v6505, %v6773
    %v6777 = vmul.f32 %v6506, %v6773
    %v6778 = vmul.f32 %v6507, %v6773
    %v6779 = vmul.f32 %v6508, %v6773
    %v6780 = vmul.f32 %v6509, %v6773
    %v6781 = vmul.f32 %v6510, %v6773
    %v6782 = vmul.f32 %v6511, %v6773
    %v6783 = vmul.f32 %v6512, %v6773
    %v6784 = vmul.f32 %v6513, %v6773
    %v6785 = vmul.f32 %v6514, %v6773
    %v6786 = vmul.f32 %v6515, %v6773
    %v6787 = vmul.f32 %v6516, %v6773
    %v6788 = vmul.f32 %v6517, %v6773
    %v6789 = vmul.f32 %v6518, %v6773
    %v6790 = vmul.f32 %v6519, %v6773
    %v6791 = vmul.f32 %v6520, %v6773
    %v6792 = vmul.f32 %v6521, %v6773
    %v6793 = vmul.f32 %v6522, %v6773
    %v6794 = vmul.f32 %v6523, %v6773
    %v6795 = vmul.f32 %v6524, %v6773
    %v6796 = vmul.f32 %v6525, %v6773
    %v6797 = vmul.f32 %v6526, %v6773
    %v6798 = vmul.f32 %v6527, %v6773
    %v6799 = vmul.f32 %v6528, %v6773
    %v6800 = vmul.f32 %v6529, %v6773
    %v6801 = vmul.f32 %v6530, %v6773
    %v6802 = vmul.f32 %v6531, %v6773
    %v6803 = vmul.f32 %v6532, %v6773
    %v6804 = vmul.f32 %v6533, %v6773
    %v6805 = vmul.f32 %v6534, %v6773
    %v6806 = vmul.f32 %v6535, %v6773
    %v6807 = vmul.f32 %v6536, %v6773
    %v6808 = vmul.f32 %v6537, %v6773
    %v6809 = vmul.f32 %v6538, %v6773
    %v6810 = vmul.f32 %v6539, %v6773
    %v6811 = vmul.f32 %v6540, %v6773
    %v6812 = vmul.f32 %v6541, %v6773
    %v6813 = vmul.f32 %v6542, %v6773
    %v6814 = vmul.f32 %v6543, %v6773
    %v6815 = vmul.f32 %v6544, %v6773
    %v6816 = vmul.f32 %v6545, %v6773
    %v6817 = vmul.f32 %v6546, %v6773
    %v6818 = vmul.f32 %v6547, %v6773
    %v6819 = vmul.f32 %v6548, %v6773
    %v6820 = vmul.f32 %v6549, %v6773
    %v6821 = vmul.f32 %v6550, %v6773
    %v6822 = vmul.f32 %v6551, %v6773
    %v6823 = vmul.f32 %v6552, %v6773
    %v6824 = vmul.f32 %v6553, %v6773
    %v6825 = vmul.f32 %v6554, %v6773
    %v6826 = vmul.f32 %v6555, %v6773
    %v6827 = vmul.f32 %v6556, %v6773
    %v6828 = vmul.f32 %v6557, %v6773
    %v6829 = vmul.f32 %v6558, %v6773
    %v6830 = vmul.f32 %v6559, %v6773
    %v6831 = vmul.f32 %v6560, %v6773
    %v6832 = vmul.f32 %v6561, %v6773
    %v6833 = vmul.f32 %v6562, %v6773
    %v6834 = vmul.f32 %v6563, %v6773
    %v6835 = vmul.f32 %v6564, %v6773
    %v6836 = vmul.f32 %v6565, %v6773
    %v6837 = vmul.f32 %v6566, %v6773
    %v6838 = vmul.f32 %v6567, %v6773
    %v6840 = vlaneseq
    %v6841 = vshrl.u32 %v6840, 7
    %v6842 = vsub.s32 0, %v6841
    %v6843 = vrot.slane %v6369, %v6842
    %v6845 = vadd.f32 %v6775, %v6843
    %v6846 = vadd.f32 %v6776, %v6843
    %v6847 = vadd.f32 %v6777, %v6843
    %v6848 = vadd.f32 %v6778, %v6843
    %v6849 = vadd.f32 %v6779, %v6843
    %v6850 = vadd.f32 %v6780, %v6843
    %v6851 = vadd.f32 %v6781, %v6843
    %v6852 = vadd.f32 %v6782, %v6843
    %v6853 = vadd.f32 %v6783, %v6843
    %v6854 = vadd.f32 %v6784, %v6843
    %v6855 = vadd.f32 %v6785, %v6843
    %v6856 = vadd.f32 %v6786, %v6843
    %v6857 = vadd.f32 %v6787, %v6843
    %v6858 = vadd.f32 %v6788, %v6843
    %v6859 = vadd.f32 %v6789, %v6843
    %v6860 = vadd.f32 %v6790, %v6843
    %v6861 = vadd.f32 %v6791, %v6843
    %v6862 = vadd.f32 %v6792, %v6843
    %v6863 = vadd.f32 %v6793, %v6843
    %v6864 = vadd.f32 %v6794, %v6843
    %v6865 = vadd.f32 %v6795, %v6843
    %v6866 = vadd.f32 %v6796, %v6843
    %v6867 = vadd.f32 %v6797, %v6843
    %v6868 = vadd.f32 %v6798, %v6843
    %v6869 = vadd.f32 %v6799, %v6843
    %v6870 = vadd.f32 %v6800, %v6843
    %v6871 = vadd.f32 %v6801, %v6843
    %v6872 = vadd.f32 %v6802, %v6843
    %v6873 = vadd.f32 %v6803, %v6843
    %v6874 = vadd.f32 %v6804, %v6843
    %v6875 = vadd.f32 %v6805, %v6843
    %v6876 = vadd.f32 %v6806, %v6843
    %v6877 = vadd.f32 %v6807, %v6843
    %v6878 = vadd.f32 %v6808, %v6843
    %v6879 = vadd.f32 %v6809, %v6843
    %v6880 = vadd.f32 %v6810, %v6843
    %v6881 = vadd.f32 %v6811, %v6843
    %v6882 = vadd.f32 %v6812, %v6843
    %v6883 = vadd.f32 %v6813, %v6843
    %v6884 = vadd.f32 %v6814, %v6843
    %v6885 = vadd.f32 %v6815, %v6843
    %v6886 = vadd.f32 %v6816, %v6843
    %v6887 = vadd.f32 %v6817, %v6843
    %v6888 = vadd.f32 %v6818, %v6843
    %v6889 = vadd.f32 %v6819, %v6843
    %v6890 = vadd.f32 %v6820, %v6843
    %v6891 = vadd.f32 %v6821, %v6843
    %v6892 = vadd.f32 %v6822, %v6843
    %v6893 = vadd.f32 %v6823, %v6843
    %v6894 = vadd.f32 %v6824, %v6843
    %v6895 = vadd.f32 %v6825, %v6843
    %v6896 = vadd.f32 %v6826, %v6843
    %v6897 = vadd.f32 %v6827, %v6843
    %v6898 = vadd.f32 %v6828, %v6843
    %v6899 = vadd.f32 %v6829, %v6843
    %v6900 = vadd.f32 %v6830, %v6843
    %v6901 = vadd.f32 %v6831, %v6843
    %v6902 = vadd.f32 %v6832, %v6843
    %v6903 = vadd.f32 %v6833, %v6843
    %v6904 = vadd.f32 %v6834, %v6843
    %v6905 = vadd.f32 %v6835, %v6843
    %v6906 = vadd.f32 %v6836, %v6843
    %v6907 = vadd.f32 %v6837, %v6843
    %v6908 = vadd.f32 %v6838, %v6843
    %v6909 = vmax.f32 %v6845, 0.0
    %v6910 = vmax.f32 %v6846, 0.0
    %v6911 = vmax.f32 %v6847, 0.0
    %v6912 = vmax.f32 %v6848, 0.0
    %v6913 = vmax.f32 %v6849, 0.0
    %v6914 = vmax.f32 %v6850, 0.0
    %v6915 = vmax.f32 %v6851, 0.0
    %v6916 = vmax.f32 %v6852, 0.0
    %v6917 = vmax.f32 %v6853, 0.0
    %v6918 = vmax.f32 %v6854, 0.0
    %v6919 = vmax.f32 %v6855, 0.0
    %v6920 = vmax.f32 %v6856, 0.0
    %v6921 = vmax.f32 %v6857, 0.0
    %v6922 = vmax.f32 %v6858, 0.0
    %v6923 = vmax.f32 %v6859, 0.0
    %v6924 = vmax.f32 %v6860, 0.0
    %v6925 = vmax.f32 %v6861, 0.0
    %v6926 = vmax.f32 %v6862, 0.0
    %v6927 = vmax.f32 %v6863, 0.0
    %v6928 = vmax.f32 %v6864, 0.0
    %v6929 = vmax.f32 %v6865, 0.0
    %v6930 = vmax.f32 %v6866, 0.0
    %v6931 = vmax.f32 %v6867, 0.0
    %v6932 = vmax.f32 %v6868, 0.0
    %v6933 = vmax.f32 %v6869, 0.0
    %v6934 = vmax.f32 %v6870, 0.0
    %v6935 = vmax.f32 %v6871, 0.0
    %v6936 = vmax.f32 %v6872, 0.0
    %v6937 = vmax.f32 %v6873, 0.0
    %v6938 = vmax.f32 %v6874, 0.0
    %v6939 = vmax.f32 %v6875, 0.0
    %v6940 = vmax.f32 %v6876, 0.0
    %v6941 = vmax.f32 %v6877, 0.0
    %v6942 = vmax.f32 %v6878, 0.0
    %v6943 = vmax.f32 %v6879, 0.0
    %v6944 = vmax.f32 %v6880, 0.0
    %v6945 = vmax.f32 %v6881, 0.0
    %v6946 = vmax.f32 %v6882, 0.0
    %v6947 = vmax.f32 %v6883, 0.0
    %v6948 = vmax.f32 %v6884, 0.0
    %v6949 = vmax.f32 %v6885, 0.0
    %v6950 = vmax.f32 %v6886, 0.0
    %v6951 = vmax.f32 %v6887, 0.0
    %v6952 = vmax.f32 %v6888, 0.0
    %v6953 = vmax.f32 %v6889, 0.0
    %v6954 = vmax.f32 %v6890, 0.0
    %v6955 = vmax.f32 %v6891, 0.0
    %v6956 = vmax.f32 %v6892, 0.0
    %v6957 = vmax.f32 %v6893, 0.0
    %v6958 = vmax.f32 %v6894, 0.0
    %v6959 = vmax.f32 %v6895, 0.0
    %v6960 = vmax.f32 %v6896, 0.0
    %v6961 = vmax.f32 %v6897, 0.0
    %v6962 = vmax.f32 %v6898, 0.0
    %v6963 = vmax.f32 %v6899, 0.0
    %v6964 = vmax.f32 %v6900, 0.0
    %v6965 = vmax.f32 %v6901, 0.0
    %v6966 = vmax.f32 %v6902, 0.0
    %v6967 = vmax.f32 %v6903, 0.0
    %v6968 = vmax.f32 %v6904, 0.0
    %v6969 = vmax.f32 %v6905, 0.0
    %v6970 = vmax.f32 %v6906, 0.0
    %v6971 = vmax.f32 %v6907, 0.0
    %v6972 = vmax.f32 %v6908, 0.0
    %v6973 = vpack.c.bf16 %v6910, %v6909
    %v6974 = vpack.c.bf16 %v6912, %v6911
    %v6975 = vpack.c.bf16 %v6914, %v6913
    %v6976 = vpack.c.bf16 %v6916, %v6915
    %v6977 = vpack.c.bf16 %v6918, %v6917
    %v6978 = vpack.c.bf16 %v6920, %v6919
    %v6979 = vpack.c.bf16 %v6922, %v6921
    %v6980 = vpack.c.bf16 %v6924, %v6923
    %v6981 = vpack.c.bf16 %v6926, %v6925
    %v6982 = vpack.c.bf16 %v6928, %v6927
    %v6983 = vpack.c.bf16 %v6930, %v6929
    %v6984 = vpack.c.bf16 %v6932, %v6931
    %v6985 = vpack.c.bf16 %v6934, %v6933
    %v6986 = vpack.c.bf16 %v6936, %v6935
    %v6987 = vpack.c.bf16 %v6938, %v6937
    %v6988 = vpack.c.bf16 %v6940, %v6939
    %v6989 = vpack.c.bf16 %v6942, %v6941
    %v6990 = vpack.c.bf16 %v6944, %v6943
    %v6991 = vpack.c.bf16 %v6946, %v6945
    %v6992 = vpack.c.bf16 %v6948, %v6947
    %v6993 = vpack.c.bf16 %v6950, %v6949
    %v6994 = vpack.c.bf16 %v6952, %v6951
    %v6995 = vpack.c.bf16 %v6954, %v6953
    %v6996 = vpack.c.bf16 %v6956, %v6955
    %v6997 = vpack.c.bf16 %v6958, %v6957
    %v6998 = vpack.c.bf16 %v6960, %v6959
    %v6999 = vpack.c.bf16 %v6962, %v6961
    %v7000 = vpack.c.bf16 %v6964, %v6963
    %v7001 = vpack.c.bf16 %v6966, %v6965
    %v7002 = vpack.c.bf16 %v6968, %v6967
    %v7003 = vpack.c.bf16 %v6970, %v6969
    %v7004 = vpack.c.bf16 %v6972, %v6971
    %v7005 = vld [vmem:[%s7] sm:$0xf]
    %v7006 = vld [vmem:[%s7 + $0x4] sm:$0xf]
    %v7007 = vld [vmem:[%s7 + $0x8] sm:$0xf]
    %v7008 = vld [vmem:[%s7 + $0xc] sm:$0xf]
    %v7013 = vunpack.c.l.b16 %v7005
    %v7014 = vunpack.c.l.b16 %v7006
    %v7015 = vunpack.c.l.b16 %v7007
    %v7016 = vunpack.c.l.b16 %v7008
    %v7017 = vpack.c.b16 %v7014, %v7013
    %v7018 = vpack.c.b16 %v7016, %v7015
    %v7022 = vsel %vm502, %v6973, 0
    %v7025 = vsel %vm502, %v6974, 0
    %v7028 = vsel %vm502, %v6975, 0
    %v7031 = vsel %vm502, %v6976, 0
    %v7034 = vsel %vm502, %v6977, 0
    %v7037 = vsel %vm502, %v6978, 0
    %v7040 = vsel %vm502, %v6979, 0
    %v7043 = vsel %vm502, %v6980, 0
    %v7046 = vsel %vm502, %v6981, 0
    %v7049 = vsel %vm502, %v6982, 0
    %v7052 = vsel %vm502, %v6983, 0
    %v7055 = vsel %vm502, %v6984, 0
    %v7058 = vsel %vm502, %v6985, 0
    %v7061 = vsel %vm502, %v6986, 0
    %v7064 = vsel %vm502, %v6987, 0
    %v7067 = vsel %vm502, %v6988, 0
    %v7070 = vsel %vm502, %v6989, 0
    %v7073 = vsel %vm502, %v6990, 0
    %v7076 = vsel %vm502, %v6991, 0
    %v7079 = vsel %vm502, %v6992, 0
    %v7082 = vsel %vm502, %v6993, 0
    %v7085 = vsel %vm502, %v6994, 0
    %v7088 = vsel %vm502, %v6995, 0
    %v7091 = vsel %vm502, %v6996, 0
    %v7094 = vsel %vm502, %v6997, 0
    %v7097 = vsel %vm502, %v6998, 0
    %v7100 = vsel %vm502, %v6999, 0
    %v7103 = vsel %vm502, %v7000, 0
    %v7106 = vsel %vm502, %v7001, 0
    %v7109 = vsel %vm502, %v7002, 0
    %v7112 = vsel %vm502, %v7003, 0
    %v7115 = vsel %vm502, %v7004, 0
    %7117 = vmatprep.subr.bf16.mxu0 0
    %7118 = vmatpush1.bf16.msra.mxu0 0
    %7119 = vmatprep.subr.bf16.mxu0 0
    %7120 = vmatpush1.bf16.msra.mxu0 0
    %7121 = vmatprep.subr.bf16.mxu0 0
    %7122 = vmatpush1.bf16.msra.mxu0 0
    %7123 = vmatprep.subr.bf16.mxu0 0
    %7124 = vmatpush1.bf16.msra.mxu0 0
    %7125 = vmatprep.subr.bf16.mxu0 0
    %7126 = vmatpush1.bf16.msra.mxu0 0
    %7127 = vmatprep.subr.bf16.mxu0 0
    %7128 = vmatpush1.bf16.msra.mxu0 0
    %7129 = vmatprep.subr.bf16.mxu0 0
    %7130 = vmatpush1.bf16.msra.mxu0 %v7018
    %7131 = vmatprep.subr.bf16.mxu0 0
    %7132 = vmatpush1.bf16.msra.mxu0 %v7017
    %7133 = vmatprep.subr.bf16.mxu0 0
    %7134 = vmatpush2.bf16.msra.mxu0 0
    %7135 = vmatprep.subr.bf16.mxu0 0
    %7136 = vmatpush2.bf16.msra.mxu0 0
    %7137 = vmatprep.subr.bf16.mxu0 0
    %7138 = vmatpush2.bf16.msra.mxu0 0
    %7139 = vmatprep.subr.bf16.mxu0 0
    %7140 = vmatpush2.bf16.msra.mxu0 0
    %7141 = vmatprep.subr.bf16.mxu0 0
    %7142 = vmatpush2.bf16.msra.mxu0 0
    %7143 = vmatprep.subr.bf16.mxu0 0
    %7144 = vmatpush2.bf16.msra.mxu0 0
    %7145 = vmatprep.subr.bf16.mxu0 0
    %7146 = vmatpush2.bf16.msra.mxu0 0
    %7147 = vmatprep.subr.bf16.mxu0 0
    %7148 = vmatpush2.bf16.msra.mxu0 0
    %7149 = vmatprep.mubr.bf16.mxu0 0
    %7150 = vmatmul.mubr.bf16.gmra.mxu0 %v7022
    %v7151 = vpop.f32.mrf.mxu0
    %v7152 = vadd.f32 0.0, %v7151
    %v7153 = vpop.f32.mrf.mxu0
    %v7154 = vpop.f32.mrf.mxu0
    %v7155 = vadd.f32 0.0, %v7154
    %v7156 = vpop.f32.mrf.mxu0
    %7157 = vmatprep.mubr.bf16.mxu0 0
    %7158 = vmatmul.mubr.bf16.gmra.mxu0 %v7025
    %v7159 = vpop.f32.mrf.mxu0
    %v7160 = vadd.f32 0.0, %v7159
    %v7161 = vpop.f32.mrf.mxu0
    %v7162 = vpop.f32.mrf.mxu0
    %v7163 = vadd.f32 0.0, %v7162
    %v7164 = vpop.f32.mrf.mxu0
    %7165 = vmatprep.mubr.bf16.mxu0 0
    %7166 = vmatmul.mubr.bf16.gmra.mxu0 %v7028
    %v7167 = vpop.f32.mrf.mxu0
    %v7168 = vadd.f32 0.0, %v7167
    %v7169 = vpop.f32.mrf.mxu0
    %v7170 = vpop.f32.mrf.mxu0
    %v7171 = vadd.f32 0.0, %v7170
    %v7172 = vpop.f32.mrf.mxu0
    %7173 = vmatprep.mubr.bf16.mxu0 0
    %7174 = vmatmul.mubr.bf16.gmra.mxu0 %v7031
    %v7175 = vpop.f32.mrf.mxu0
    %v7176 = vadd.f32 0.0, %v7175
    %v7177 = vpop.f32.mrf.mxu0
    %v7178 = vpop.f32.mrf.mxu0
    %v7179 = vadd.f32 0.0, %v7178
    %v7180 = vpop.f32.mrf.mxu0
    %7181 = vmatprep.mubr.bf16.mxu0 0
    %7182 = vmatmul.mubr.bf16.gmra.mxu0 %v7034
    %v7183 = vpop.f32.mrf.mxu0
    %v7184 = vadd.f32 0.0, %v7183
    %v7185 = vpop.f32.mrf.mxu0
    %v7186 = vpop.f32.mrf.mxu0
    %v7187 = vadd.f32 0.0, %v7186
    %v7188 = vpop.f32.mrf.mxu0
    %7189 = vmatprep.mubr.bf16.mxu0 0
    %7190 = vmatmul.mubr.bf16.gmra.mxu0 %v7037
    %v7191 = vpop.f32.mrf.mxu0
    %v7192 = vadd.f32 0.0, %v7191
    %v7193 = vpop.f32.mrf.mxu0
    %v7194 = vpop.f32.mrf.mxu0
    %v7195 = vadd.f32 0.0, %v7194
    %v7196 = vpop.f32.mrf.mxu0
    %7197 = vmatprep.mubr.bf16.mxu0 0
    %7198 = vmatmul.mubr.bf16.gmra.mxu0 %v7040
    %v7199 = vpop.f32.mrf.mxu0
    %v7200 = vadd.f32 0.0, %v7199
    %v7201 = vpop.f32.mrf.mxu0
    %v7202 = vpop.f32.mrf.mxu0
    %v7203 = vadd.f32 0.0, %v7202
    %v7204 = vpop.f32.mrf.mxu0
    %7205 = vmatprep.mubr.bf16.mxu0 0
    %7206 = vmatmul.mubr.bf16.gmra.mxu0 %v7043
    %v7207 = vpop.f32.mrf.mxu0
    %v7208 = vadd.f32 0.0, %v7207
    %v7209 = vpop.f32.mrf.mxu0
    %v7210 = vpop.f32.mrf.mxu0
    %v7211 = vadd.f32 0.0, %v7210
    %v7212 = vpop.f32.mrf.mxu0
    %7213 = vmatprep.mubr.bf16.mxu0 0
    %7214 = vmatmul.mubr.bf16.gmra.mxu0 %v7046
    %v7215 = vpop.f32.mrf.mxu0
    %v7216 = vadd.f32 0.0, %v7215
    %v7217 = vpop.f32.mrf.mxu0
    %v7218 = vpop.f32.mrf.mxu0
    %v7219 = vadd.f32 0.0, %v7218
    %v7220 = vpop.f32.mrf.mxu0
    %7221 = vmatprep.mubr.bf16.mxu0 0
    %7222 = vmatmul.mubr.bf16.gmra.mxu0 %v7049
    %v7223 = vpop.f32.mrf.mxu0
    %v7224 = vadd.f32 0.0, %v7223
    %v7225 = vpop.f32.mrf.mxu0
    %v7226 = vpop.f32.mrf.mxu0
    %v7227 = vadd.f32 0.0, %v7226
    %v7228 = vpop.f32.mrf.mxu0
    %7229 = vmatprep.mubr.bf16.mxu0 0
    %7230 = vmatmul.mubr.bf16.gmra.mxu0 %v7052
    %v7231 = vpop.f32.mrf.mxu0
    %v7232 = vadd.f32 0.0, %v7231
    %v7233 = vpop.f32.mrf.mxu0
    %v7234 = vpop.f32.mrf.mxu0
    %v7235 = vadd.f32 0.0, %v7234
    %v7236 = vpop.f32.mrf.mxu0
    %7237 = vmatprep.mubr.bf16.mxu0 0
    %7238 = vmatmul.mubr.bf16.gmra.mxu0 %v7055
    %v7239 = vpop.f32.mrf.mxu0
    %v7240 = vadd.f32 0.0, %v7239
    %v7241 = vpop.f32.mrf.mxu0
    %v7242 = vpop.f32.mrf.mxu0
    %v7243 = vadd.f32 0.0, %v7242
    %v7244 = vpop.f32.mrf.mxu0
    %7245 = vmatprep.mubr.bf16.mxu0 0
    %7246 = vmatmul.mubr.bf16.gmra.mxu0 %v7058
    %v7247 = vpop.f32.mrf.mxu0
    %v7248 = vadd.f32 0.0, %v7247
    %v7249 = vpop.f32.mrf.mxu0
    %v7250 = vpop.f32.mrf.mxu0
    %v7251 = vadd.f32 0.0, %v7250
    %v7252 = vpop.f32.mrf.mxu0
    %7253 = vmatprep.mubr.bf16.mxu0 0
    %7254 = vmatmul.mubr.bf16.gmra.mxu0 %v7061
    %v7255 = vpop.f32.mrf.mxu0
    %v7256 = vadd.f32 0.0, %v7255
    %v7257 = vpop.f32.mrf.mxu0
    %v7258 = vpop.f32.mrf.mxu0
    %v7259 = vadd.f32 0.0, %v7258
    %v7260 = vpop.f32.mrf.mxu0
    %7261 = vmatprep.mubr.bf16.mxu0 0
    %7262 = vmatmul.mubr.bf16.gmra.mxu0 %v7064
    %v7263 = vpop.f32.mrf.mxu0
    %v7264 = vadd.f32 0.0, %v7263
    %v7265 = vpop.f32.mrf.mxu0
    %v7266 = vpop.f32.mrf.mxu0
    %v7267 = vadd.f32 0.0, %v7266
    %v7268 = vpop.f32.mrf.mxu0
    %7269 = vmatprep.mubr.bf16.mxu0 0
    %7270 = vmatmul.mubr.bf16.gmra.mxu0 %v7067
    %v7271 = vpop.f32.mrf.mxu0
    %v7272 = vadd.f32 0.0, %v7271
    %v7273 = vpop.f32.mrf.mxu0
    %v7274 = vpop.f32.mrf.mxu0
    %v7275 = vadd.f32 0.0, %v7274
    %v7276 = vpop.f32.mrf.mxu0
    %7277 = vmatprep.mubr.bf16.mxu0 0
    %7278 = vmatmul.mubr.bf16.gmra.mxu0 %v7070
    %v7279 = vpop.f32.mrf.mxu0
    %v7280 = vadd.f32 0.0, %v7279
    %v7281 = vpop.f32.mrf.mxu0
    %v7282 = vpop.f32.mrf.mxu0
    %v7283 = vadd.f32 0.0, %v7282
    %v7284 = vpop.f32.mrf.mxu0
    %7285 = vmatprep.mubr.bf16.mxu0 0
    %7286 = vmatmul.mubr.bf16.gmra.mxu0 %v7073
    %v7287 = vpop.f32.mrf.mxu0
    %v7288 = vadd.f32 0.0, %v7287
    %v7289 = vpop.f32.mrf.mxu0
    %v7290 = vpop.f32.mrf.mxu0
    %v7291 = vadd.f32 0.0, %v7290
    %v7292 = vpop.f32.mrf.mxu0
    %7293 = vmatprep.mubr.bf16.mxu0 0
    %7294 = vmatmul.mubr.bf16.gmra.mxu0 %v7076
    %v7295 = vpop.f32.mrf.mxu0
    %v7296 = vadd.f32 0.0, %v7295
    %v7297 = vpop.f32.mrf.mxu0
    %v7298 = vpop.f32.mrf.mxu0
    %v7299 = vadd.f32 0.0, %v7298
    %v7300 = vpop.f32.mrf.mxu0
    %7301 = vmatprep.mubr.bf16.mxu0 0
    %7302 = vmatmul.mubr.bf16.gmra.mxu0 %v7079
    %v7303 = vpop.f32.mrf.mxu0
    %v7304 = vadd.f32 0.0, %v7303
    %v7305 = vpop.f32.mrf.mxu0
    %v7306 = vpop.f32.mrf.mxu0
    %v7307 = vadd.f32 0.0, %v7306
    %v7308 = vpop.f32.mrf.mxu0
    %7309 = vmatprep.mubr.bf16.mxu0 0
    %7310 = vmatmul.mubr.bf16.gmra.mxu0 %v7082
    %v7311 = vpop.f32.mrf.mxu0
    %v7312 = vadd.f32 0.0, %v7311
    %v7313 = vpop.f32.mrf.mxu0
    %v7314 = vpop.f32.mrf.mxu0
    %v7315 = vadd.f32 0.0, %v7314
    %v7316 = vpop.f32.mrf.mxu0
    %7317 = vmatprep.mubr.bf16.mxu0 0
    %7318 = vmatmul.mubr.bf16.gmra.mxu0 %v7085
    %v7319 = vpop.f32.mrf.mxu0
    %v7320 = vadd.f32 0.0, %v7319
    %v7321 = vpop.f32.mrf.mxu0
    %v7322 = vpop.f32.mrf.mxu0
    %v7323 = vadd.f32 0.0, %v7322
    %v7324 = vpop.f32.mrf.mxu0
    %7325 = vmatprep.mubr.bf16.mxu0 0
    %7326 = vmatmul.mubr.bf16.gmra.mxu0 %v7088
    %v7327 = vpop.f32.mrf.mxu0
    %v7328 = vadd.f32 0.0, %v7327
    %v7329 = vpop.f32.mrf.mxu0
    %v7330 = vpop.f32.mrf.mxu0
    %v7331 = vadd.f32 0.0, %v7330
    %v7332 = vpop.f32.mrf.mxu0
    %7333 = vmatprep.mubr.bf16.mxu0 0
    %7334 = vmatmul.mubr.bf16.gmra.mxu0 %v7091
    %v7335 = vpop.f32.mrf.mxu0
    %v7336 = vadd.f32 0.0, %v7335
    %v7337 = vpop.f32.mrf.mxu0
    %v7338 = vpop.f32.mrf.mxu0
    %v7339 = vadd.f32 0.0, %v7338
    %v7340 = vpop.f32.mrf.mxu0
    %7341 = vmatprep.mubr.bf16.mxu0 0
    %7342 = vmatmul.mubr.bf16.gmra.mxu0 %v7094
    %v7343 = vpop.f32.mrf.mxu0
    %v7344 = vadd.f32 0.0, %v7343
    %v7345 = vpop.f32.mrf.mxu0
    %v7346 = vpop.f32.mrf.mxu0
    %v7347 = vadd.f32 0.0, %v7346
    %v7348 = vpop.f32.mrf.mxu0
    %7349 = vmatprep.mubr.bf16.mxu0 0
    %7350 = vmatmul.mubr.bf16.gmra.mxu0 %v7097
    %v7351 = vpop.f32.mrf.mxu0
    %v7352 = vadd.f32 0.0, %v7351
    %v7353 = vpop.f32.mrf.mxu0
    %v7354 = vpop.f32.mrf.mxu0
    %v7355 = vadd.f32 0.0, %v7354
    %v7356 = vpop.f32.mrf.mxu0
    %7357 = vmatprep.mubr.bf16.mxu0 0
    %7358 = vmatmul.mubr.bf16.gmra.mxu0 %v7100
    %v7359 = vpop.f32.mrf.mxu0
    %v7360 = vadd.f32 0.0, %v7359
    %v7361 = vpop.f32.mrf.mxu0
    %v7362 = vpop.f32.mrf.mxu0
    %v7363 = vadd.f32 0.0, %v7362
    %v7364 = vpop.f32.mrf.mxu0
    %7365 = vmatprep.mubr.bf16.mxu0 0
    %7366 = vmatmul.mubr.bf16.gmra.mxu0 %v7103
    %v7367 = vpop.f32.mrf.mxu0
    %v7368 = vadd.f32 0.0, %v7367
    %v7369 = vpop.f32.mrf.mxu0
    %v7370 = vpop.f32.mrf.mxu0
    %v7371 = vadd.f32 0.0, %v7370
    %v7372 = vpop.f32.mrf.mxu0
    %7373 = vmatprep.mubr.bf16.mxu0 0
    %7374 = vmatmul.mubr.bf16.gmra.mxu0 %v7106
    %v7375 = vpop.f32.mrf.mxu0
    %v7376 = vadd.f32 0.0, %v7375
    %v7377 = vpop.f32.mrf.mxu0
    %v7378 = vpop.f32.mrf.mxu0
    %v7379 = vadd.f32 0.0, %v7378
    %v7380 = vpop.f32.mrf.mxu0
    %7381 = vmatprep.mubr.bf16.mxu0 0
    %7382 = vmatmul.mubr.bf16.gmra.mxu0 %v7109
    %v7383 = vpop.f32.mrf.mxu0
    %v7384 = vadd.f32 0.0, %v7383
    %v7385 = vpop.f32.mrf.mxu0
    %v7386 = vpop.f32.mrf.mxu0
    %v7387 = vadd.f32 0.0, %v7386
    %v7388 = vpop.f32.mrf.mxu0
    %7389 = vmatprep.mubr.bf16.mxu0 0
    %7390 = vmatmul.mubr.bf16.gmra.mxu0 %v7112
    %v7391 = vpop.f32.mrf.mxu0
    %v7392 = vadd.f32 0.0, %v7391
    %v7393 = vpop.f32.mrf.mxu0
    %v7394 = vpop.f32.mrf.mxu0
    %v7395 = vadd.f32 0.0, %v7394
    %v7396 = vpop.f32.mrf.mxu0
    %7397 = vmatprep.mubr.bf16.mxu0 0
    %7398 = vmatmul.mubr.bf16.gmra.mxu0 %v7115
    %v7399 = vpop.f32.mrf.mxu0
    %v7400 = vadd.f32 0.0, %v7399
    %v7401 = vpop.f32.mrf.mxu0
    %v7402 = vpop.f32.mrf.mxu0
    %v7403 = vadd.f32 0.0, %v7402
    %v7404 = vpop.f32.mrf.mxu0
    %7405 = vdwg.mxu0
    %v7406 = vld [vmem:[%s8] sm:$0x1]
    %v7407 = vld [vmem:[%s9] sm:$0x1]
    %v7408 = vadd.f32 %v7152, %v7155
    %v7409 = vadd.f32 %v7408, %v7160
    %v7410 = vadd.f32 %v7409, %v7163
    %v7411 = vadd.f32 %v7410, %v7168
    %v7412 = vadd.f32 %v7411, %v7171
    %v7413 = vadd.f32 %v7412, %v7176
    %v7414 = vadd.f32 %v7413, %v7179
    %v7415 = vadd.f32 %v7414, %v7184
    %v7416 = vadd.f32 %v7415, %v7187
    %v7417 = vadd.f32 %v7416, %v7192
    %v7418 = vadd.f32 %v7417, %v7195
    %v7419 = vadd.f32 %v7418, %v7200
    %v7420 = vadd.f32 %v7419, %v7203
    %v7421 = vadd.f32 %v7420, %v7208
    %v7422 = vadd.f32 %v7421, %v7211
    %v7423 = vadd.f32 %v7422, %v7216
    %v7424 = vadd.f32 %v7423, %v7219
    %v7425 = vadd.f32 %v7424, %v7224
    %v7426 = vadd.f32 %v7425, %v7227
    %v7427 = vadd.f32 %v7426, %v7232
    %v7428 = vadd.f32 %v7427, %v7235
    %v7429 = vadd.f32 %v7428, %v7240
    %v7430 = vadd.f32 %v7429, %v7243
    %v7431 = vadd.f32 %v7430, %v7248
    %v7432 = vadd.f32 %v7431, %v7251
    %v7433 = vadd.f32 %v7432, %v7256
    %v7434 = vadd.f32 %v7433, %v7259
    %v7435 = vadd.f32 %v7434, %v7264
    %v7436 = vadd.f32 %v7435, %v7267
    %v7437 = vadd.f32 %v7436, %v7272
    %v7438 = vadd.f32 %v7437, %v7275
    %v7439 = vadd.f32 %v7438, %v7280
    %v7440 = vadd.f32 %v7439, %v7283
    %v7441 = vadd.f32 %v7440, %v7288
    %v7442 = vadd.f32 %v7441, %v7291
    %v7443 = vadd.f32 %v7442, %v7296
    %v7444 = vadd.f32 %v7443, %v7299
    %v7445 = vadd.f32 %v7444, %v7304
    %v7446 = vadd.f32 %v7445, %v7307
    %v7447 = vadd.f32 %v7446, %v7312
    %v7448 = vadd.f32 %v7447, %v7315
    %v7449 = vadd.f32 %v7448, %v7320
    %v7450 = vadd.f32 %v7449, %v7323
    %v7451 = vadd.f32 %v7450, %v7328
    %v7452 = vadd.f32 %v7451, %v7331
    %v7453 = vadd.f32 %v7452, %v7336
    %v7454 = vadd.f32 %v7453, %v7339
    %v7455 = vadd.f32 %v7454, %v7344
    %v7456 = vadd.f32 %v7455, %v7347
    %v7457 = vadd.f32 %v7456, %v7352
    %v7458 = vadd.f32 %v7457, %v7355
    %v7459 = vadd.f32 %v7458, %v7360
    %v7460 = vadd.f32 %v7459, %v7363
    %v7461 = vadd.f32 %v7460, %v7368
    %v7462 = vadd.f32 %v7461, %v7371
    %v7463 = vadd.f32 %v7462, %v7376
    %v7464 = vadd.f32 %v7463, %v7379
    %v7465 = vadd.f32 %v7464, %v7384
    %v7466 = vadd.f32 %v7465, %v7387
    %v7467 = vadd.f32 %v7466, %v7392
    %v7468 = vadd.f32 %v7467, %v7395
    %v7469 = vadd.f32 %v7468, %v7400
    %v7470 = vadd.f32 %v7469, %v7403
    %v7471 = vrot.slane %v7470, 4
    %v7472 = vadd.f32 %v7470, %v7471
    %v7473 = vrot.slane %v7472, 2
    %v7474 = vadd.f32 %v7472, %v7473
    %v7475 = vrot.slane %v7474, 1
    %v7476 = vadd.f32 %v7474, %v7475
    %v7477 = vmul.f32 %v7476, 0.001953125
    %v7478 = vsub.f32 %v7152, %v7477
    %v7479 = vsub.f32 %v7155, %v7477
    %v7480 = vsub.f32 %v7160, %v7477
    %v7481 = vsub.f32 %v7163, %v7477
    %v7482 = vsub.f32 %v7168, %v7477
    %v7483 = vsub.f32 %v7171, %v7477
    %v7484 = vsub.f32 %v7176, %v7477
    %v7485 = vsub.f32 %v7179, %v7477
    %v7486 = vsub.f32 %v7184, %v7477
    %v7487 = vsub.f32 %v7187, %v7477
    %v7488 = vsub.f32 %v7192, %v7477
    %v7489 = vsub.f32 %v7195, %v7477
    %v7490 = vsub.f32 %v7200, %v7477
    %v7491 = vsub.f32 %v7203, %v7477
    %v7492 = vsub.f32 %v7208, %v7477
    %v7493 = vsub.f32 %v7211, %v7477
    %v7494 = vsub.f32 %v7216, %v7477
    %v7495 = vsub.f32 %v7219, %v7477
    %v7496 = vsub.f32 %v7224, %v7477
    %v7497 = vsub.f32 %v7227, %v7477
    %v7498 = vsub.f32 %v7232, %v7477
    %v7499 = vsub.f32 %v7235, %v7477
    %v7500 = vsub.f32 %v7240, %v7477
    %v7501 = vsub.f32 %v7243, %v7477
    %v7502 = vsub.f32 %v7248, %v7477
    %v7503 = vsub.f32 %v7251, %v7477
    %v7504 = vsub.f32 %v7256, %v7477
    %v7505 = vsub.f32 %v7259, %v7477
    %v7506 = vsub.f32 %v7264, %v7477
    %v7507 = vsub.f32 %v7267, %v7477
    %v7508 = vsub.f32 %v7272, %v7477
    %v7509 = vsub.f32 %v7275, %v7477
    %v7510 = vsub.f32 %v7280, %v7477
    %v7511 = vsub.f32 %v7283, %v7477
    %v7512 = vsub.f32 %v7288, %v7477
    %v7513 = vsub.f32 %v7291, %v7477
    %v7514 = vsub.f32 %v7296, %v7477
    %v7515 = vsub.f32 %v7299, %v7477
    %v7516 = vsub.f32 %v7304, %v7477
    %v7517 = vsub.f32 %v7307, %v7477
    %v7518 = vsub.f32 %v7312, %v7477
    %v7519 = vsub.f32 %v7315, %v7477
    %v7520 = vsub.f32 %v7320, %v7477
    %v7521 = vsub.f32 %v7323, %v7477
    %v7522 = vsub.f32 %v7328, %v7477
    %v7523 = vsub.f32 %v7331, %v7477
    %v7524 = vsub.f32 %v7336, %v7477
    %v7525 = vsub.f32 %v7339, %v7477
    %v7526 = vsub.f32 %v7344, %v7477
    %v7527 = vsub.f32 %v7347, %v7477
    %v7528 = vsub.f32 %v7352, %v7477
    %v7529 = vsub.f32 %v7355, %v7477
    %v7530 = vsub.f32 %v7360, %v7477
    %v7531 = vsub.f32 %v7363, %v7477
    %v7532 = vsub.f32 %v7368, %v7477
    %v7533 = vsub.f32 %v7371, %v7477
    %v7534 = vsub.f32 %v7376, %v7477
    %v7535 = vsub.f32 %v7379, %v7477
    %v7536 = vsub.f32 %v7384, %v7477
    %v7537 = vsub.f32 %v7387, %v7477
    %v7538 = vsub.f32 %v7392, %v7477
    %v7539 = vsub.f32 %v7395, %v7477
    %v7540 = vsub.f32 %v7400, %v7477
    %v7541 = vsub.f32 %v7403, %v7477
    %v7542 = vmul.f32 %v7478, %v7478
    %v7543 = vmul.f32 %v7479, %v7479
    %v7544 = vmul.f32 %v7480, %v7480
    %v7545 = vmul.f32 %v7481, %v7481
    %v7546 = vmul.f32 %v7482, %v7482
    %v7547 = vmul.f32 %v7483, %v7483
    %v7548 = vmul.f32 %v7484, %v7484
    %v7549 = vmul.f32 %v7485, %v7485
    %v7550 = vmul.f32 %v7486, %v7486
    %v7551 = vmul.f32 %v7487, %v7487
    %v7552 = vmul.f32 %v7488, %v7488
    %v7553 = vmul.f32 %v7489, %v7489
    %v7554 = vmul.f32 %v7490, %v7490
    %v7555 = vmul.f32 %v7491, %v7491
    %v7556 = vmul.f32 %v7492, %v7492
    %v7557 = vmul.f32 %v7493, %v7493
    %v7558 = vmul.f32 %v7494, %v7494
    %v7559 = vmul.f32 %v7495, %v7495
    %v7560 = vmul.f32 %v7496, %v7496
    %v7561 = vmul.f32 %v7497, %v7497
    %v7562 = vmul.f32 %v7498, %v7498
    %v7563 = vmul.f32 %v7499, %v7499
    %v7564 = vmul.f32 %v7500, %v7500
    %v7565 = vmul.f32 %v7501, %v7501
    %v7566 = vmul.f32 %v7502, %v7502
    %v7567 = vmul.f32 %v7503, %v7503
    %v7568 = vmul.f32 %v7504, %v7504
    %v7569 = vmul.f32 %v7505, %v7505
    %v7570 = vmul.f32 %v7506, %v7506
    %v7571 = vmul.f32 %v7507, %v7507
    %v7572 = vmul.f32 %v7508, %v7508
    %v7573 = vmul.f32 %v7509, %v7509
    %v7574 = vmul.f32 %v7510, %v7510
    %v7575 = vmul.f32 %v7511, %v7511
    %v7576 = vmul.f32 %v7512, %v7512
    %v7577 = vmul.f32 %v7513, %v7513
    %v7578 = vmul.f32 %v7514, %v7514
    %v7579 = vmul.f32 %v7515, %v7515
    %v7580 = vmul.f32 %v7516, %v7516
    %v7581 = vmul.f32 %v7517, %v7517
    %v7582 = vmul.f32 %v7518, %v7518
    %v7583 = vmul.f32 %v7519, %v7519
    %v7584 = vmul.f32 %v7520, %v7520
    %v7585 = vmul.f32 %v7521, %v7521
    %v7586 = vmul.f32 %v7522, %v7522
    %v7587 = vmul.f32 %v7523, %v7523
    %v7588 = vmul.f32 %v7524, %v7524
    %v7589 = vmul.f32 %v7525, %v7525
    %v7590 = vmul.f32 %v7526, %v7526
    %v7591 = vmul.f32 %v7527, %v7527
    %v7592 = vmul.f32 %v7528, %v7528
    %v7593 = vmul.f32 %v7529, %v7529
    %v7594 = vmul.f32 %v7530, %v7530
    %v7595 = vmul.f32 %v7531, %v7531
    %v7596 = vmul.f32 %v7532, %v7532
    %v7597 = vmul.f32 %v7533, %v7533
    %v7598 = vmul.f32 %v7534, %v7534
    %v7599 = vmul.f32 %v7535, %v7535
    %v7600 = vmul.f32 %v7536, %v7536
    %v7601 = vmul.f32 %v7537, %v7537
    %v7602 = vmul.f32 %v7538, %v7538
    %v7603 = vmul.f32 %v7539, %v7539
    %v7604 = vmul.f32 %v7540, %v7540
    %v7605 = vmul.f32 %v7541, %v7541
    %v7606 = vadd.f32 %v7542, %v7543
    %v7607 = vadd.f32 %v7606, %v7544
    %v7608 = vadd.f32 %v7607, %v7545
    %v7609 = vadd.f32 %v7608, %v7546
    %v7610 = vadd.f32 %v7609, %v7547
    %v7611 = vadd.f32 %v7610, %v7548
    %v7612 = vadd.f32 %v7611, %v7549
    %v7613 = vadd.f32 %v7612, %v7550
    %v7614 = vadd.f32 %v7613, %v7551
    %v7615 = vadd.f32 %v7614, %v7552
    %v7616 = vadd.f32 %v7615, %v7553
    %v7617 = vadd.f32 %v7616, %v7554
    %v7618 = vadd.f32 %v7617, %v7555
    %v7619 = vadd.f32 %v7618, %v7556
    %v7620 = vadd.f32 %v7619, %v7557
    %v7621 = vadd.f32 %v7620, %v7558
    %v7622 = vadd.f32 %v7621, %v7559
    %v7623 = vadd.f32 %v7622, %v7560
    %v7624 = vadd.f32 %v7623, %v7561
    %v7625 = vadd.f32 %v7624, %v7562
    %v7626 = vadd.f32 %v7625, %v7563
    %v7627 = vadd.f32 %v7626, %v7564
    %v7628 = vadd.f32 %v7627, %v7565
    %v7629 = vadd.f32 %v7628, %v7566
    %v7630 = vadd.f32 %v7629, %v7567
    %v7631 = vadd.f32 %v7630, %v7568
    %v7632 = vadd.f32 %v7631, %v7569
    %v7633 = vadd.f32 %v7632, %v7570
    %v7634 = vadd.f32 %v7633, %v7571
    %v7635 = vadd.f32 %v7634, %v7572
    %v7636 = vadd.f32 %v7635, %v7573
    %v7637 = vadd.f32 %v7636, %v7574
    %v7638 = vadd.f32 %v7637, %v7575
    %v7639 = vadd.f32 %v7638, %v7576
    %v7640 = vadd.f32 %v7639, %v7577
    %v7641 = vadd.f32 %v7640, %v7578
    %v7642 = vadd.f32 %v7641, %v7579
    %v7643 = vadd.f32 %v7642, %v7580
    %v7644 = vadd.f32 %v7643, %v7581
    %v7645 = vadd.f32 %v7644, %v7582
    %v7646 = vadd.f32 %v7645, %v7583
    %v7647 = vadd.f32 %v7646, %v7584
    %v7648 = vadd.f32 %v7647, %v7585
    %v7649 = vadd.f32 %v7648, %v7586
    %v7650 = vadd.f32 %v7649, %v7587
    %v7651 = vadd.f32 %v7650, %v7588
    %v7652 = vadd.f32 %v7651, %v7589
    %v7653 = vadd.f32 %v7652, %v7590
    %v7654 = vadd.f32 %v7653, %v7591
    %v7655 = vadd.f32 %v7654, %v7592
    %v7656 = vadd.f32 %v7655, %v7593
    %v7657 = vadd.f32 %v7656, %v7594
    %v7658 = vadd.f32 %v7657, %v7595
    %v7659 = vadd.f32 %v7658, %v7596
    %v7660 = vadd.f32 %v7659, %v7597
    %v7661 = vadd.f32 %v7660, %v7598
    %v7662 = vadd.f32 %v7661, %v7599
    %v7663 = vadd.f32 %v7662, %v7600
    %v7664 = vadd.f32 %v7663, %v7601
    %v7665 = vadd.f32 %v7664, %v7602
    %v7666 = vadd.f32 %v7665, %v7603
    %v7667 = vadd.f32 %v7666, %v7604
    %v7668 = vadd.f32 %v7667, %v7605
    %v7669 = vrot.slane %v7668, 4
    %v7670 = vadd.f32 %v7668, %v7669
    %v7671 = vrot.slane %v7670, 2
    %v7672 = vadd.f32 %v7670, %v7671
    %v7673 = vrot.slane %v7672, 1
    %v7674 = vadd.f32 %v7672, %v7673
    %v7675 = vmul.f32 %v7674, 0.001953125
    %v7676 = vadd.f32 %v7675, 1e-05
    %v7677 = vrsqrt.pop %v7676
    %v7678 = vmul.f32 %v7406, %v7677
    %v7680 = vlaneseq
    %v7681 = vshrl.u32 %v7680, 7
    %v7682 = vsub.s32 0, %v7681
    %v7683 = vrot.slane %v7678, %v7682
    %v7685 = vmul.f32 %v7478, %v7683
    %v7686 = vmul.f32 %v7479, %v7683
    %v7687 = vmul.f32 %v7480, %v7683
    %v7688 = vmul.f32 %v7481, %v7683
    %v7689 = vmul.f32 %v7482, %v7683
    %v7690 = vmul.f32 %v7483, %v7683
    %v7691 = vmul.f32 %v7484, %v7683
    %v7692 = vmul.f32 %v7485, %v7683
    %v7693 = vmul.f32 %v7486, %v7683
    %v7694 = vmul.f32 %v7487, %v7683
    %v7695 = vmul.f32 %v7488, %v7683
    %v7696 = vmul.f32 %v7489, %v7683
    %v7697 = vmul.f32 %v7490, %v7683
    %v7698 = vmul.f32 %v7491, %v7683
    %v7699 = vmul.f32 %v7492, %v7683
    %v7700 = vmul.f32 %v7493, %v7683
    %v7701 = vmul.f32 %v7494, %v7683
    %v7702 = vmul.f32 %v7495, %v7683
    %v7703 = vmul.f32 %v7496, %v7683
    %v7704 = vmul.f32 %v7497, %v7683
    %v7705 = vmul.f32 %v7498, %v7683
    %v7706 = vmul.f32 %v7499, %v7683
    %v7707 = vmul.f32 %v7500, %v7683
    %v7708 = vmul.f32 %v7501, %v7683
    %v7709 = vmul.f32 %v7502, %v7683
    %v7710 = vmul.f32 %v7503, %v7683
    %v7711 = vmul.f32 %v7504, %v7683
    %v7712 = vmul.f32 %v7505, %v7683
    %v7713 = vmul.f32 %v7506, %v7683
    %v7714 = vmul.f32 %v7507, %v7683
    %v7715 = vmul.f32 %v7508, %v7683
    %v7716 = vmul.f32 %v7509, %v7683
    %v7717 = vmul.f32 %v7510, %v7683
    %v7718 = vmul.f32 %v7511, %v7683
    %v7719 = vmul.f32 %v7512, %v7683
    %v7720 = vmul.f32 %v7513, %v7683
    %v7721 = vmul.f32 %v7514, %v7683
    %v7722 = vmul.f32 %v7515, %v7683
    %v7723 = vmul.f32 %v7516, %v7683
    %v7724 = vmul.f32 %v7517, %v7683
    %v7725 = vmul.f32 %v7518, %v7683
    %v7726 = vmul.f32 %v7519, %v7683
    %v7727 = vmul.f32 %v7520, %v7683
    %v7728 = vmul.f32 %v7521, %v7683
    %v7729 = vmul.f32 %v7522, %v7683
    %v7730 = vmul.f32 %v7523, %v7683
    %v7731 = vmul.f32 %v7524, %v7683
    %v7732 = vmul.f32 %v7525, %v7683
    %v7733 = vmul.f32 %v7526, %v7683
    %v7734 = vmul.f32 %v7527, %v7683
    %v7735 = vmul.f32 %v7528, %v7683
    %v7736 = vmul.f32 %v7529, %v7683
    %v7737 = vmul.f32 %v7530, %v7683
    %v7738 = vmul.f32 %v7531, %v7683
    %v7739 = vmul.f32 %v7532, %v7683
    %v7740 = vmul.f32 %v7533, %v7683
    %v7741 = vmul.f32 %v7534, %v7683
    %v7742 = vmul.f32 %v7535, %v7683
    %v7743 = vmul.f32 %v7536, %v7683
    %v7744 = vmul.f32 %v7537, %v7683
    %v7745 = vmul.f32 %v7538, %v7683
    %v7746 = vmul.f32 %v7539, %v7683
    %v7747 = vmul.f32 %v7540, %v7683
    %v7748 = vmul.f32 %v7541, %v7683
    %v7750 = vlaneseq
    %v7751 = vshrl.u32 %v7750, 7
    %v7752 = vsub.s32 0, %v7751
    %v7753 = vrot.slane %v7407, %v7752
    %v7755 = vadd.f32 %v7685, %v7753
    %v7756 = vadd.f32 %v7686, %v7753
    %v7757 = vadd.f32 %v7687, %v7753
    %v7758 = vadd.f32 %v7688, %v7753
    %v7759 = vadd.f32 %v7689, %v7753
    %v7760 = vadd.f32 %v7690, %v7753
    %v7761 = vadd.f32 %v7691, %v7753
    %v7762 = vadd.f32 %v7692, %v7753
    %v7763 = vadd.f32 %v7693, %v7753
    %v7764 = vadd.f32 %v7694, %v7753
    %v7765 = vadd.f32 %v7695, %v7753
    %v7766 = vadd.f32 %v7696, %v7753
    %v7767 = vadd.f32 %v7697, %v7753
    %v7768 = vadd.f32 %v7698, %v7753
    %v7769 = vadd.f32 %v7699, %v7753
    %v7770 = vadd.f32 %v7700, %v7753
    %v7771 = vadd.f32 %v7701, %v7753
    %v7772 = vadd.f32 %v7702, %v7753
    %v7773 = vadd.f32 %v7703, %v7753
    %v7774 = vadd.f32 %v7704, %v7753
    %v7775 = vadd.f32 %v7705, %v7753
    %v7776 = vadd.f32 %v7706, %v7753
    %v7777 = vadd.f32 %v7707, %v7753
    %v7778 = vadd.f32 %v7708, %v7753
    %v7779 = vadd.f32 %v7709, %v7753
    %v7780 = vadd.f32 %v7710, %v7753
    %v7781 = vadd.f32 %v7711, %v7753
    %v7782 = vadd.f32 %v7712, %v7753
    %v7783 = vadd.f32 %v7713, %v7753
    %v7784 = vadd.f32 %v7714, %v7753
    %v7785 = vadd.f32 %v7715, %v7753
    %v7786 = vadd.f32 %v7716, %v7753
    %v7787 = vadd.f32 %v7717, %v7753
    %v7788 = vadd.f32 %v7718, %v7753
    %v7789 = vadd.f32 %v7719, %v7753
    %v7790 = vadd.f32 %v7720, %v7753
    %v7791 = vadd.f32 %v7721, %v7753
    %v7792 = vadd.f32 %v7722, %v7753
    %v7793 = vadd.f32 %v7723, %v7753
    %v7794 = vadd.f32 %v7724, %v7753
    %v7795 = vadd.f32 %v7725, %v7753
    %v7796 = vadd.f32 %v7726, %v7753
    %v7797 = vadd.f32 %v7727, %v7753
    %v7798 = vadd.f32 %v7728, %v7753
    %v7799 = vadd.f32 %v7729, %v7753
    %v7800 = vadd.f32 %v7730, %v7753
    %v7801 = vadd.f32 %v7731, %v7753
    %v7802 = vadd.f32 %v7732, %v7753
    %v7803 = vadd.f32 %v7733, %v7753
    %v7804 = vadd.f32 %v7734, %v7753
    %v7805 = vadd.f32 %v7735, %v7753
    %v7806 = vadd.f32 %v7736, %v7753
    %v7807 = vadd.f32 %v7737, %v7753
    %v7808 = vadd.f32 %v7738, %v7753
    %v7809 = vadd.f32 %v7739, %v7753
    %v7810 = vadd.f32 %v7740, %v7753
    %v7811 = vadd.f32 %v7741, %v7753
    %v7812 = vadd.f32 %v7742, %v7753
    %v7813 = vadd.f32 %v7743, %v7753
    %v7814 = vadd.f32 %v7744, %v7753
    %v7815 = vadd.f32 %v7745, %v7753
    %v7816 = vadd.f32 %v7746, %v7753
    %v7817 = vadd.f32 %v7747, %v7753
    %v7818 = vadd.f32 %v7748, %v7753
    %v7819 = vld [vmem:[#allocation3] sm:$0xff]
    %v7820 = vld [vmem:[#allocation3 + $0x8] sm:$0xff]
    %v7821 = vld [vmem:[#allocation3 + $0x10] sm:$0xff]
    %v7822 = vld [vmem:[#allocation3 + $0x18] sm:$0xff]
    %v7823 = vld [vmem:[#allocation3 + $0x20] sm:$0xff]
    %v7824 = vld [vmem:[#allocation3 + $0x28] sm:$0xff]
    %v7825 = vld [vmem:[#allocation3 + $0x30] sm:$0xff]
    %v7826 = vld [vmem:[#allocation3 + $0x38] sm:$0xff]
    %v7827 = vld [vmem:[#allocation3 + $0x40] sm:$0xff]
    %v7828 = vld [vmem:[#allocation3 + $0x48] sm:$0xff]
    %v7829 = vld [vmem:[#allocation3 + $0x50] sm:$0xff]
    %v7830 = vld [vmem:[#allocation3 + $0x58] sm:$0xff]
    %v7831 = vld [vmem:[#allocation3 + $0x60] sm:$0xff]
    %v7832 = vld [vmem:[#allocation3 + $0x68] sm:$0xff]
    %v7833 = vld [vmem:[#allocation3 + $0x70] sm:$0xff]
    %v7834 = vld [vmem:[#allocation3 + $0x78] sm:$0xff]
    %v7835 = vld [vmem:[#allocation3 + $0x80] sm:$0xff]
    %v7836 = vld [vmem:[#allocation3 + $0x88] sm:$0xff]
    %v7837 = vld [vmem:[#allocation3 + $0x90] sm:$0xff]
    %v7838 = vld [vmem:[#allocation3 + $0x98] sm:$0xff]
    %v7839 = vld [vmem:[#allocation3 + $0xa0] sm:$0xff]
    %v7840 = vld [vmem:[#allocation3 + $0xa8] sm:$0xff]
    %v7841 = vld [vmem:[#allocation3 + $0xb0] sm:$0xff]
    %v7842 = vld [vmem:[#allocation3 + $0xb8] sm:$0xff]
    %v7843 = vld [vmem:[#allocation3 + $0xc0] sm:$0xff]
    %v7844 = vld [vmem:[#allocation3 + $0xc8] sm:$0xff]
    %v7845 = vld [vmem:[#allocation3 + $0xd0] sm:$0xff]
    %v7846 = vld [vmem:[#allocation3 + $0xd8] sm:$0xff]
    %v7847 = vld [vmem:[#allocation3 + $0xe0] sm:$0xff]
    %v7848 = vld [vmem:[#allocation3 + $0xe8] sm:$0xff]
    %v7849 = vld [vmem:[#allocation3 + $0xf0] sm:$0xff]
    %v7850 = vld [vmem:[#allocation3 + $0xf8] sm:$0xff]
    %v7851 = vld [vmem:[#allocation3 + $0x100] sm:$0xff]
    %v7852 = vld [vmem:[#allocation3 + $0x108] sm:$0xff]
    %v7853 = vld [vmem:[#allocation3 + $0x110] sm:$0xff]
    %v7854 = vld [vmem:[#allocation3 + $0x118] sm:$0xff]
    %v7855 = vld [vmem:[#allocation3 + $0x120] sm:$0xff]
    %v7856 = vld [vmem:[#allocation3 + $0x128] sm:$0xff]
    %v7857 = vld [vmem:[#allocation3 + $0x130] sm:$0xff]
    %v7858 = vld [vmem:[#allocation3 + $0x138] sm:$0xff]
    %v7859 = vld [vmem:[#allocation3 + $0x140] sm:$0xff]
    %v7860 = vld [vmem:[#allocation3 + $0x148] sm:$0xff]
    %v7861 = vld [vmem:[#allocation3 + $0x150] sm:$0xff]
    %v7862 = vld [vmem:[#allocation3 + $0x158] sm:$0xff]
    %v7863 = vld [vmem:[#allocation3 + $0x160] sm:$0xff]
    %v7864 = vld [vmem:[#allocation3 + $0x168] sm:$0xff]
    %v7865 = vld [vmem:[#allocation3 + $0x170] sm:$0xff]
    %v7866 = vld [vmem:[#allocation3 + $0x178] sm:$0xff]
    %v7867 = vld [vmem:[#allocation3 + $0x180] sm:$0xff]
    %v7868 = vld [vmem:[#allocation3 + $0x188] sm:$0xff]
    %v7869 = vld [vmem:[#allocation3 + $0x190] sm:$0xff]
    %v7870 = vld [vmem:[#allocation3 + $0x198] sm:$0xff]
    %v7871 = vld [vmem:[#allocation3 + $0x1a0] sm:$0xff]
    %v7872 = vld [vmem:[#allocation3 + $0x1a8] sm:$0xff]
    %v7873 = vld [vmem:[#allocation3 + $0x1b0] sm:$0xff]
    %v7874 = vld [vmem:[#allocation3 + $0x1b8] sm:$0xff]
    %v7875 = vld [vmem:[#allocation3 + $0x1c0] sm:$0xff]
    %v7876 = vld [vmem:[#allocation3 + $0x1c8] sm:$0xff]
    %v7877 = vld [vmem:[#allocation3 + $0x1d0] sm:$0xff]
    %v7878 = vld [vmem:[#allocation3 + $0x1d8] sm:$0xff]
    %v7879 = vld [vmem:[#allocation3 + $0x1e0] sm:$0xff]
    %v7880 = vld [vmem:[#allocation3 + $0x1e8] sm:$0xff]
    %v7881 = vld [vmem:[#allocation3 + $0x1f0] sm:$0xff]
    %v7882 = vld [vmem:[#allocation3 + $0x1f8] sm:$0xff]
    %v7883 = vadd.f32 %v7755, %v7819
    %v7884 = vadd.f32 %v7756, %v7820
    %v7885 = vadd.f32 %v7757, %v7821
    %v7886 = vadd.f32 %v7758, %v7822
    %v7887 = vadd.f32 %v7759, %v7823
    %v7888 = vadd.f32 %v7760, %v7824
    %v7889 = vadd.f32 %v7761, %v7825
    %v7890 = vadd.f32 %v7762, %v7826
    %v7891 = vadd.f32 %v7763, %v7827
    %v7892 = vadd.f32 %v7764, %v7828
    %v7893 = vadd.f32 %v7765, %v7829
    %v7894 = vadd.f32 %v7766, %v7830
    %v7895 = vadd.f32 %v7767, %v7831
    %v7896 = vadd.f32 %v7768, %v7832
    %v7897 = vadd.f32 %v7769, %v7833
    %v7898 = vadd.f32 %v7770, %v7834
    %v7899 = vadd.f32 %v7771, %v7835
    %v7900 = vadd.f32 %v7772, %v7836
    %v7901 = vadd.f32 %v7773, %v7837
    %v7902 = vadd.f32 %v7774, %v7838
    %v7903 = vadd.f32 %v7775, %v7839
    %v7904 = vadd.f32 %v7776, %v7840
    %v7905 = vadd.f32 %v7777, %v7841
    %v7906 = vadd.f32 %v7778, %v7842
    %v7907 = vadd.f32 %v7779, %v7843
    %v7908 = vadd.f32 %v7780, %v7844
    %v7909 = vadd.f32 %v7781, %v7845
    %v7910 = vadd.f32 %v7782, %v7846
    %v7911 = vadd.f32 %v7783, %v7847
    %v7912 = vadd.f32 %v7784, %v7848
    %v7913 = vadd.f32 %v7785, %v7849
    %v7914 = vadd.f32 %v7786, %v7850
    %v7915 = vadd.f32 %v7787, %v7851
    %v7916 = vadd.f32 %v7788, %v7852
    %v7917 = vadd.f32 %v7789, %v7853
    %v7918 = vadd.f32 %v7790, %v7854
    %v7919 = vadd.f32 %v7791, %v7855
    %v7920 = vadd.f32 %v7792, %v7856
    %v7921 = vadd.f32 %v7793, %v7857
    %v7922 = vadd.f32 %v7794, %v7858
    %v7923 = vadd.f32 %v7795, %v7859
    %v7924 = vadd.f32 %v7796, %v7860
    %v7925 = vadd.f32 %v7797, %v7861
    %v7926 = vadd.f32 %v7798, %v7862
    %v7927 = vadd.f32 %v7799, %v7863
    %v7928 = vadd.f32 %v7800, %v7864
    %v7929 = vadd.f32 %v7801, %v7865
    %v7930 = vadd.f32 %v7802, %v7866
    %v7931 = vadd.f32 %v7803, %v7867
    %v7932 = vadd.f32 %v7804, %v7868
    %v7933 = vadd.f32 %v7805, %v7869
    %v7934 = vadd.f32 %v7806, %v7870
    %v7935 = vadd.f32 %v7807, %v7871
    %v7936 = vadd.f32 %v7808, %v7872
    %v7937 = vadd.f32 %v7809, %v7873
    %v7938 = vadd.f32 %v7810, %v7874
    %v7939 = vadd.f32 %v7811, %v7875
    %v7940 = vadd.f32 %v7812, %v7876
    %v7941 = vadd.f32 %v7813, %v7877
    %v7942 = vadd.f32 %v7814, %v7878
    %v7943 = vadd.f32 %v7815, %v7879
    %v7944 = vadd.f32 %v7816, %v7880
    %v7945 = vadd.f32 %v7817, %v7881
    %v7946 = vadd.f32 %v7818, %v7882
    %v7947 = vmax.f32 %v7883, 0.0
    %v7948 = vmax.f32 %v7884, 0.0
    %v7949 = vmax.f32 %v7885, 0.0
    %v7950 = vmax.f32 %v7886, 0.0
    %v7951 = vmax.f32 %v7887, 0.0
    %v7952 = vmax.f32 %v7888, 0.0
    %v7953 = vmax.f32 %v7889, 0.0
    %v7954 = vmax.f32 %v7890, 0.0
    %v7955 = vmax.f32 %v7891, 0.0
    %v7956 = vmax.f32 %v7892, 0.0
    %v7957 = vmax.f32 %v7893, 0.0
    %v7958 = vmax.f32 %v7894, 0.0
    %v7959 = vmax.f32 %v7895, 0.0
    %v7960 = vmax.f32 %v7896, 0.0
    %v7961 = vmax.f32 %v7897, 0.0
    %v7962 = vmax.f32 %v7898, 0.0
    %v7963 = vmax.f32 %v7899, 0.0
    %v7964 = vmax.f32 %v7900, 0.0
    %v7965 = vmax.f32 %v7901, 0.0
    %v7966 = vmax.f32 %v7902, 0.0
    %v7967 = vmax.f32 %v7903, 0.0
    %v7968 = vmax.f32 %v7904, 0.0
    %v7969 = vmax.f32 %v7905, 0.0
    %v7970 = vmax.f32 %v7906, 0.0
    %v7971 = vmax.f32 %v7907, 0.0
    %v7972 = vmax.f32 %v7908, 0.0
    %v7973 = vmax.f32 %v7909, 0.0
    %v7974 = vmax.f32 %v7910, 0.0
    %v7975 = vmax.f32 %v7911, 0.0
    %v7976 = vmax.f32 %v7912, 0.0
    %v7977 = vmax.f32 %v7913, 0.0
    %v7978 = vmax.f32 %v7914, 0.0
    %v7979 = vmax.f32 %v7915, 0.0
    %v7980 = vmax.f32 %v7916, 0.0
    %v7981 = vmax.f32 %v7917, 0.0
    %v7982 = vmax.f32 %v7918, 0.0
    %v7983 = vmax.f32 %v7919, 0.0
    %v7984 = vmax.f32 %v7920, 0.0
    %v7985 = vmax.f32 %v7921, 0.0
    %v7986 = vmax.f32 %v7922, 0.0
    %v7987 = vmax.f32 %v7923, 0.0
    %v7988 = vmax.f32 %v7924, 0.0
    %v7989 = vmax.f32 %v7925, 0.0
    %v7990 = vmax.f32 %v7926, 0.0
    %v7991 = vmax.f32 %v7927, 0.0
    %v7992 = vmax.f32 %v7928, 0.0
    %v7993 = vmax.f32 %v7929, 0.0
    %v7994 = vmax.f32 %v7930, 0.0
    %v7995 = vmax.f32 %v7931, 0.0
    %v7996 = vmax.f32 %v7932, 0.0
    %v7997 = vmax.f32 %v7933, 0.0
    %v7998 = vmax.f32 %v7934, 0.0
    %v7999 = vmax.f32 %v7935, 0.0
    %v8000 = vmax.f32 %v7936, 0.0
    %v8001 = vmax.f32 %v7937, 0.0
    %v8002 = vmax.f32 %v7938, 0.0
    %v8003 = vmax.f32 %v7939, 0.0
    %v8004 = vmax.f32 %v7940, 0.0
    %v8005 = vmax.f32 %v7941, 0.0
    %v8006 = vmax.f32 %v7942, 0.0
    %v8007 = vmax.f32 %v7943, 0.0
    %v8008 = vmax.f32 %v7944, 0.0
    %v8009 = vmax.f32 %v7945, 0.0
    %v8010 = vmax.f32 %v7946, 0.0
    %8011 = vst [vmem:[#allocation6] sm:$0xff] %v7947
    %8012 = vst [vmem:[#allocation6 + $0x8] sm:$0xff] %v7948
    %8013 = vst [vmem:[#allocation6 + $0x10] sm:$0xff] %v7949
    %8014 = vst [vmem:[#allocation6 + $0x18] sm:$0xff] %v7950
    %8015 = vst [vmem:[#allocation6 + $0x20] sm:$0xff] %v7951
    %8016 = vst [vmem:[#allocation6 + $0x28] sm:$0xff] %v7952
    %8017 = vst [vmem:[#allocation6 + $0x30] sm:$0xff] %v7953
    %8018 = vst [vmem:[#allocation6 + $0x38] sm:$0xff] %v7954
    %8019 = vst [vmem:[#allocation6 + $0x40] sm:$0xff] %v7955
    %8020 = vst [vmem:[#allocation6 + $0x48] sm:$0xff] %v7956
    %8021 = vst [vmem:[#allocation6 + $0x50] sm:$0xff] %v7957
    %8022 = vst [vmem:[#allocation6 + $0x58] sm:$0xff] %v7958
    %8023 = vst [vmem:[#allocation6 + $0x60] sm:$0xff] %v7959
    %8024 = vst [vmem:[#allocation6 + $0x68] sm:$0xff] %v7960
    %8025 = vst [vmem:[#allocation6 + $0x70] sm:$0xff] %v7961
    %8026 = vst [vmem:[#allocation6 + $0x78] sm:$0xff] %v7962
    %8027 = vst [vmem:[#allocation6 + $0x80] sm:$0xff] %v7963
    %8028 = vst [vmem:[#allocation6 + $0x88] sm:$0xff] %v7964
    %8029 = vst [vmem:[#allocation6 + $0x90] sm:$0xff] %v7965
    %8030 = vst [vmem:[#allocation6 + $0x98] sm:$0xff] %v7966
    %8031 = vst [vmem:[#allocation6 + $0xa0] sm:$0xff] %v7967
    %8032 = vst [vmem:[#allocation6 + $0xa8] sm:$0xff] %v7968
    %8033 = vst [vmem:[#allocation6 + $0xb0] sm:$0xff] %v7969
    %8034 = vst [vmem:[#allocation6 + $0xb8] sm:$0xff] %v7970
    %8035 = vst [vmem:[#allocation6 + $0xc0] sm:$0xff] %v7971
    %8036 = vst [vmem:[#allocation6 + $0xc8] sm:$0xff] %v7972
    %8037 = vst [vmem:[#allocation6 + $0xd0] sm:$0xff] %v7973
    %8038 = vst [vmem:[#allocation6 + $0xd8] sm:$0xff] %v7974
    %8039 = vst [vmem:[#allocation6 + $0xe0] sm:$0xff] %v7975
    %8040 = vst [vmem:[#allocation6 + $0xe8] sm:$0xff] %v7976
    %8041 = vst [vmem:[#allocation6 + $0xf0] sm:$0xff] %v7977
    %8042 = vst [vmem:[#allocation6 + $0xf8] sm:$0xff] %v7978
    %8043 = vst [vmem:[#allocation6 + $0x100] sm:$0xff] %v7979
    %8044 = vst [vmem:[#allocation6 + $0x108] sm:$0xff] %v7980
    %8045 = vst [vmem:[#allocation6 + $0x110] sm:$0xff] %v7981
    %8046 = vst [vmem:[#allocation6 + $0x118] sm:$0xff] %v7982
    %8047 = vst [vmem:[#allocation6 + $0x120] sm:$0xff] %v7983
    %8048 = vst [vmem:[#allocation6 + $0x128] sm:$0xff] %v7984
    %8049 = vst [vmem:[#allocation6 + $0x130] sm:$0xff] %v7985
    %8050 = vst [vmem:[#allocation6 + $0x138] sm:$0xff] %v7986
    %8051 = vst [vmem:[#allocation6 + $0x140] sm:$0xff] %v7987
    %8052 = vst [vmem:[#allocation6 + $0x148] sm:$0xff] %v7988
    %8053 = vst [vmem:[#allocation6 + $0x150] sm:$0xff] %v7989
    %8054 = vst [vmem:[#allocation6 + $0x158] sm:$0xff] %v7990
    %8055 = vst [vmem:[#allocation6 + $0x160] sm:$0xff] %v7991
    %8056 = vst [vmem:[#allocation6 + $0x168] sm:$0xff] %v7992
    %8057 = vst [vmem:[#allocation6 + $0x170] sm:$0xff] %v7993
    %8058 = vst [vmem:[#allocation6 + $0x178] sm:$0xff] %v7994
    %8059 = vst [vmem:[#allocation6 + $0x180] sm:$0xff] %v7995
    %8060 = vst [vmem:[#allocation6 + $0x188] sm:$0xff] %v7996
    %8061 = vst [vmem:[#allocation6 + $0x190] sm:$0xff] %v7997
    %8062 = vst [vmem:[#allocation6 + $0x198] sm:$0xff] %v7998
    %8063 = vst [vmem:[#allocation6 + $0x1a0] sm:$0xff] %v7999
    %8064 = vst [vmem:[#allocation6 + $0x1a8] sm:$0xff] %v8000
    %8065 = vst [vmem:[#allocation6 + $0x1b0] sm:$0xff] %v8001
    %8066 = vst [vmem:[#allocation6 + $0x1b8] sm:$0xff] %v8002
    %8067 = vst [vmem:[#allocation6 + $0x1c0] sm:$0xff] %v8003
    %8068 = vst [vmem:[#allocation6 + $0x1c8] sm:$0xff] %v8004
    %8069 = vst [vmem:[#allocation6 + $0x1d0] sm:$0xff] %v8005
    %8070 = vst [vmem:[#allocation6 + $0x1d8] sm:$0xff] %v8006
    %8071 = vst [vmem:[#allocation6 + $0x1e0] sm:$0xff] %v8007
    %8072 = vst [vmem:[#allocation6 + $0x1e8] sm:$0xff] %v8008
    %8073 = vst [vmem:[#allocation6 + $0x1f0] sm:$0xff] %v8009
    %8074 = vst [vmem:[#allocation6 + $0x1f8] sm:$0xff] %v8010
    // Predicated region
    $region46: #{tpu_custom_call.1} parent=1 // pred_check
      _
    $region47: #{tpu_custom_call.1} parent=1 // pred_check_branch
      %8076 = sbr.rel (0) target = $region49
    $region48: #{tpu_custom_call.1} parent=1 // pred_region
      %s8078 = ssub.s32 8192, 8192
      %8079 = vsyncadd [#allocation5], %s8078
      %s8080 = sshll.u32 [#allocation6], 4
      %s8081 = int_to_ptr.vmem [resolvable:$true] %s8080
      %8086 = dma.vmem_to_hbm [thread:$0]  %s8081, 8192, %s10, [#allocation5], 128, 128, 8
    $region49: #{tpu_custom_call.1} parent=1 // pred_fallthru
      _
    // Predicated region
    $region50: #{tpu_custom_call.1} parent=1 // pred_check
      _
    $region51: #{tpu_custom_call.1} parent=1 // pred_check_branch
      %8088 = sbr.rel (0) target = $region53
    $region52: #{tpu_custom_call.1} parent=1 // pred_region
      %8089 = dma.done [#allocation5], 8192
    $region53: #{tpu_custom_call.1} parent=1 // pred_fallthru
      _
    %8090 = vsyncpa [#allocation4], 1
    %8091 = vsyncpa [#allocation5], 1

</llo_original>
